<compile_context>
chip_gen: v5e
topology: v5e:2x2
jax: 0.10.0
libtpu: 0.0.40
codegen_flags: <defaults>
</compile_context>

<pallas_src>
import functools

import jax
import jax.numpy as jnp
from jax import lax
from jax.experimental import pallas as pl
from jax.experimental.pallas import tpu as pltpu

# 8th-order centered second-derivative coefficients (space_order=8, as in devito).
_C8 = (-205.0 / 72.0, 8.0 / 5.0, -1.0 / 5.0, 8.0 / 315.0, -1.0 / 560.0)


def _circulant_d2(n, inv_h2):
    """n x n circulant 8th-order second-derivative matrix (periodic wrap), scaled by 1/h^2."""
    d = _C8[0] * jnp.eye(n, dtype=jnp.float32)
    for k in range(1, 5):
        d = d + _C8[k] * (jnp.eye(n, k=k, dtype=jnp.float32)
                          + jnp.eye(n, k=-k, dtype=jnp.float32)
                          + jnp.eye(n, k=n - k, dtype=jnp.float32)
                          + jnp.eye(n, k=-(n - k), dtype=jnp.float32))
    return (d * inv_h2).astype(jnp.float32)


def _laplacian_mxu(u, dx_mat, dz_mat):
    """8th-order periodic 2D Laplacian as two MXU matmuls (Dx @ u + u @ Dz)."""
    lap_x = jnp.dot(dx_mat, u, precision=lax.Precision.HIGHEST,
                    preferred_element_type=jnp.float32)
    lap_z = jnp.dot(u, dz_mat, precision=lax.Precision.HIGHEST,
                    preferred_element_type=jnp.float32)
    return lap_x + lap_z


def _forward_prop_kernel(vel_dt2_ref, dx_mat_ref, dz_mat_ref, src_row_ref,
                         u_out_ref, up_ref, uc_ref, *, src_ix, t_chunk):
    """t_chunk acoustic time steps per grid iteration; writes u[t] (bf16) to HBM."""
    c = pl.program_id(0)

    @pl.when(c == 0)
    def _():
        up_ref[...] = jnp.zeros_like(up_ref)
        uc_ref[...] = jnp.zeros_like(uc_ref)

    # Loop-invariant reads / broadcasts hoisted out of the time loop.
    vel_dt2 = vel_dt2_ref[...]
    dx_mat = dx_mat_ref[...]
    dz_mat = dz_mat_ref[...]
    row_ids = lax.broadcasted_iota(jnp.int32, vel_dt2.shape, 0)
    src_mask = (row_ids == src_ix).astype(jnp.float32)

    up = up_ref[...]
    uc = uc_ref[...]
    for i in range(t_chunk):                       # statically unrolled inner time loop
        lap = _laplacian_mxu(uc, dx_mat, dz_mat)
        inj = src_mask * src_row_ref[i]            # (nx,nz) * (1,nz) -> point source row
        u_new = 2.0 * uc - up + vel_dt2 * (lap + inj)
        u_out_ref[i] = u_new.astype(u_out_ref.dtype)
        up, uc = uc, u_new
    up_ref[...] = up
    uc_ref[...] = uc


def _adjoint_imaging_kernel(vel_dt2_ref, dx_mat_ref, dz_mat_ref, rec_row_ref,
                            u_fwd_ref, img_ref, vp_ref, vc_ref, *,
                            rec_ix, t_chunk, inv_dt2):
    """Time-reversed adjoint propagation fused with the imaging condition (t_chunk steps)."""
    c = pl.program_id(0)

    @pl.when(c == 0)
    def _():
        vp_ref[...] = jnp.zeros_like(vp_ref)
        vc_ref[...] = jnp.zeros_like(vc_ref)
        img_ref[...] = jnp.zeros_like(img_ref)

    vel_dt2 = vel_dt2_ref[...]
    dx_mat = dx_mat_ref[...]
    dz_mat = dz_mat_ref[...]
    row_ids = lax.broadcasted_iota(jnp.int32, vel_dt2.shape, 0)
    rec_mask = (row_ids == rec_ix).astype(jnp.float32)

    vp = vp_ref[...]
    vc = vc_ref[...]
    img = img_ref[...]
    # Physical chunks arrive in reverse order via the index_map; steps inside the
    # chunk are also consumed in reverse physical time.
    for i in range(t_chunk - 1, -1, -1):
        lap = _laplacian_mxu(vc, dx_mat, dz_mat)
        inj = rec_mask * rec_row_ref[i]
        force = vel_dt2 * (lap + inj)
        v_new = 2.0 * vc - vp + force
        # Exact identity: v_new - 2*vc + vp == force  =>  dtt_v = force / dt^2.
        dtt_v = force * inv_dt2
        # Zero-lag cross-correlation imaging condition (accumulated over all t).
        img = img - u_fwd_ref[i].astype(jnp.float32) * dtt_v
        vp, vc = vc, v_new
    vp_ref[...] = vp
    vc_ref[...] = vc
    img_ref[...] = img


class AdjointBornLayer:
    """JAX/Pallas equivalent of the devito-backed AdjointBornLayer."""

    def __init__(self, vel, src_ix, src_iz, rec_ix, rec_iz, dx, dz, dt, nt, f0=0.1):
        self.vel = jnp.asarray(vel, jnp.float32)          # (nx, nz) velocity model
        self.nx, self.nz = self.vel.shape
        self.nt = int(nt)
        self.dx, self.dz, self.dt = float(dx), float(dz), float(dt)
        self.src_ix, self.src_iz = int(src_ix), int(src_iz)
        self.rec_ix = int(rec_ix)
        self.rec_iz = jnp.asarray(rec_iz, jnp.int32)       # (nrec,)
        # Ricker source wavelet (deterministic "geometry" / source term).
        t_axis = jnp.arange(self.nt, dtype=jnp.float32) * self.dt
        t0 = 1.0 / f0
        arg = (jnp.pi * f0 * (t_axis - t0)) ** 2
        self.wavelet = (1.0 - 2.0 * arg) * jnp.exp(-arg)   # (nt,)
        # (v * dt)^2 factor of the explicit update.
        self.vel_dt2 = (self.vel * self.dt) ** 2
        # Pre-scaled circulant FD second-derivative matrices for the MXU Laplacian.
        self.dx_mat = _circulant_d2(self.nx, 1.0 / self.dx ** 2)   # (nx, nx)
        self.dz_mat = _circulant_d2(self.nz, 1.0 / self.dz ** 2)   # (nz, nz)
        # Time steps batched per grid iteration (largest divisor of nt up to 8).
        self.t_chunk = next(c for c in (8, 4, 2, 1) if self.nt % c == 0)

    def _propagate_forward(self):
        nt, nx, nz, tc = self.nt, self.nx, self.nz, self.t_chunk
        n_chunks = nt // tc
        # Source term as a tiny (nt, 1, nz) row stream; expanded in-kernel at row src_ix.
        src_row = jnp.zeros((nt, 1, nz), jnp.float32).at[
            :, 0, self.src_iz].set(self.wavelet)
        kern = functools.partial(_forward_prop_kernel, src_ix=self.src_ix, t_chunk=tc)
        return pl.pallas_call(
            kern,
            out_shape=jax.ShapeDtypeStruct((nt, nx, nz), jnp.bfloat16),
            grid_spec=pltpu.PrefetchScalarGridSpec(
                num_scalar_prefetch=0,
                grid=(n_chunks,),
                in_specs=[
                    pl.BlockSpec((nx, nz), lambda c: (0, 0)),
                    pl.BlockSpec((nx, nx), lambda c: (0, 0)),
                    pl.BlockSpec((nz, nz), lambda c: (0, 0)),
                    pl.BlockSpec((tc, 1, nz), lambda c: (c, 0, 0)),
                ],
                out_specs=pl.BlockSpec((tc, nx, nz), lambda c: (c, 0, 0)),
                scratch_shapes=[pltpu.VMEM((nx, nz), jnp.float32),
                                pltpu.VMEM((nx, nz), jnp.float32)],
            ),
            compiler_params=pltpu.CompilerParams(
                dimension_semantics=("arbitrary",)),
        )(self.vel_dt2, self.dx_mat, self.dz_mat, src_row)

    def __call__(self, x):
        """x: (nt, nrec) receiver-data residual -> (nx, nz) gradient image."""
        nt, nx, nz, tc = self.nt, self.nx, self.nz, self.t_chunk
        n_chunks = nt // tc
        x = jnp.asarray(x, jnp.float32)
        # Receiver residuals as a tiny (nt, 1, nz) row stream (scatter along z only);
        # expanded in-kernel at row rec_ix.
        rec_row = jnp.zeros((nt, 1, nz), jnp.float32).at[:, 0, self.rec_iz].set(x)

        u_fwd = self._propagate_forward()                   # (nt, nx, nz) bf16

        kern = functools.partial(_adjoint_imaging_kernel,
                                 rec_ix=self.rec_ix,
                                 t_chunk=tc,
                                 inv_dt2=1.0 / self.dt ** 2)
        # Adjoint propagation consumes physical time in reverse: chunk c -> physical
        # chunk n_chunks-1-c; within the kernel steps run from last to first.
        image = pl.pallas_call(
            kern,
            out_shape=jax.ShapeDtypeStruct((nx, nz), jnp.float32),
            grid_spec=pltpu.PrefetchScalarGridSpec(
                num_scalar_prefetch=0,
                grid=(n_chunks,),
                in_specs=[
                    pl.BlockSpec((nx, nz), lambda c: (0, 0)),
                    pl.BlockSpec((nx, nx), lambda c: (0, 0)),
                    pl.BlockSpec((nz, nz), lambda c: (0, 0)),
                    pl.BlockSpec((tc, 1, nz), lambda c: (n_chunks - 1 - c, 0, 0)),
                    pl.BlockSpec((tc, nx, nz), lambda c: (n_chunks - 1 - c, 0, 0)),
                ],
                out_specs=pl.BlockSpec((nx, nz), lambda c: (0, 0)),
                scratch_shapes=[pltpu.VMEM((nx, nz), jnp.float32),
                                pltpu.VMEM((nx, nz), jnp.float32)],
            ),
            compiler_params=pltpu.CompilerParams(
                dimension_semantics=("arbitrary",)),
        )(self.vel_dt2, self.dx_mat, self.dz_mat, rec_row, u_fwd)
        return image


if __name__ == "__main__":
    # Small deterministic setup: 64 x 128 grid, 32 time steps, 16 receivers.
    nx, nz = 64, 128
    nt, nrec = 32, 16
    dx = dz = 1.0
    dt = 0.2

    # Deterministic velocity model: 1.5 km/s at top, 2.0 km/s at bottom.
    depth = jnp.arange(nz, dtype=jnp.float32) / float(nz - 1)
    vel = 1.5 + 0.5 * jnp.broadcast_to(depth[None, :], (nx, nz))

    # Geometry: point source mid-model near the surface, receivers along a shallow row.
    src_ix, src_iz = 4, nz // 2
    rec_ix = 4
    rec_iz = jnp.linspace(8, nz - 9, nrec).astype(jnp.int32)

    layer = AdjointBornLayer(vel, src_ix, src_iz, rec_ix, rec_iz,
                             dx=dx, dz=dz, dt=dt, nt=nt)

    key = jax.random.PRNGKey(0)
    x = jax.random.normal(key, (nt, nrec), dtype=jnp.float32)  # receiver residuals

    image = layer(x)
    jax.block_until_ready(image)
    assert image.shape == (nx, nz) and image.dtype == jnp.float32
    assert bool(jnp.all(jnp.isfinite(image)))
    print("KERNEL_OK")
</pallas_src>

<mosaic_0001>
module attributes {stable_mosaic.version = 11 : i64} {
  func.func @_forward_prop_kernel(%arg0: i32, %arg1: memref<64x128xf32, #tpu.memory_space<vmem>>, %arg2: memref<64x64xf32, #tpu.memory_space<vmem>>, %arg3: memref<128x128xf32, #tpu.memory_space<vmem>>, %arg4: memref<8x1x128xf32, #tpu.memory_space<vmem>>, %arg5: memref<8x64x128xbf16, #tpu.memory_space<vmem>>, %arg6: memref<64x128xf32, #tpu.memory_space<vmem>>, %arg7: memref<64x128xf32, #tpu.memory_space<vmem>>) attributes {dimension_semantics = [#tpu.dimension_semantics<arbitrary>], iteration_bounds = array<i64: 4>, scalar_prefetch = 0 : i64, scratch_operands = 2 : i64, tpu.core_type = #tpu.core_type<tc>, window_params = [{pipeline_mode = #tpu.pipeline_mode<synchronous>, transform_indices = @transform_0, window_bounds = array<i64: 64, 128>}, {pipeline_mode = #tpu.pipeline_mode<synchronous>, transform_indices = @transform_1, window_bounds = array<i64: 64, 64>}, {pipeline_mode = #tpu.pipeline_mode<synchronous>, transform_indices = @transform_2, window_bounds = array<i64: 128, 128>}, {transform_indices = @transform_3, window_bounds = array<i64: 8, 1, 128>}, {transform_indices = @transform_4, window_bounds = array<i64: 8, 64, 128>}]} {
    %c0_i32 = arith.constant 0 : i32
    %0 = arith.cmpi eq, %arg0, %c0_i32 : i32
    %1 = arith.extui %0 : i1 to i32
    %c0_i32_0 = arith.constant 0 : i32
    %2 = arith.cmpi ne, %1, %c0_i32_0 : i32
    scf.if %2 {
      %cst_78 = arith.constant 0.000000e+00 : f32
      %151 = vector.broadcast %cst_78 : f32 to vector<64x128xf32>
      %c0_79 = arith.constant 0 : index
      %c0_80 = arith.constant 0 : index
      %152 = vector.load %arg6[%c0_79, %c0_80] : memref<64x128xf32, #tpu.memory_space<vmem>>, vector<64x128xf32>
      tpu.vector_store %arg6[%c0_79, %c0_80], %151 {strides = array<i32>} : memref<64x128xf32, #tpu.memory_space<vmem>>, vector<64x128xf32>,
      %cst_81 = arith.constant 0.000000e+00 : f32
      %153 = vector.broadcast %cst_81 : f32 to vector<64x128xf32>
      %c0_82 = arith.constant 0 : index
      %c0_83 = arith.constant 0 : index
      %154 = vector.load %arg7[%c0_82, %c0_83] : memref<64x128xf32, #tpu.memory_space<vmem>>, vector<64x128xf32>
      tpu.vector_store %arg7[%c0_82, %c0_83], %153 {strides = array<i32>} : memref<64x128xf32, #tpu.memory_space<vmem>>, vector<64x128xf32>,
    } else {
    }
    %c0 = arith.constant 0 : index
    %c0_1 = arith.constant 0 : index
    %3 = vector.load %arg1[%c0, %c0_1] : memref<64x128xf32, #tpu.memory_space<vmem>>, vector<64x128xf32>
    %c0_2 = arith.constant 0 : index
    %c0_3 = arith.constant 0 : index
    %4 = vector.load %arg2[%c0_2, %c0_3] : memref<64x64xf32, #tpu.memory_space<vmem>>, vector<64x64xf32>
    %c0_4 = arith.constant 0 : index
    %c0_5 = arith.constant 0 : index
    %5 = vector.load %arg3[%c0_4, %c0_5] : memref<128x128xf32, #tpu.memory_space<vmem>>, vector<128x128xf32>
    %6 = tpu.iota {dimensions = array<i32: 0>} : vector<64x128xi32>
    %c4_i32 = arith.constant 4 : i32
    %7 = vector.broadcast %c4_i32 : i32 to vector<64x128xi32>
    %8 = arith.cmpi eq, %6, %7 : vector<64x128xi32>
    %9 = arith.extui %8 : vector<64x128xi1> to vector<64x128xi32>
    %10 = arith.sitofp %9 : vector<64x128xi32> to vector<64x128xf32>
    %c0_6 = arith.constant 0 : index
    %c0_7 = arith.constant 0 : index
    %11 = vector.load %arg6[%c0_6, %c0_7] : memref<64x128xf32, #tpu.memory_space<vmem>>, vector<64x128xf32>
    %c0_8 = arith.constant 0 : index
    %c0_9 = arith.constant 0 : index
    %12 = vector.load %arg7[%c0_8, %c0_9] : memref<64x128xf32, #tpu.memory_space<vmem>>, vector<64x128xf32>
    %cst = arith.constant dense<0.000000e+00> : vector<64x128xf32>
    %13 = tpu.matmul %4, %12, %cst {dimension_numbers = #tpu.dot_dimension_numbers<[1], [0], [0], [1], [0, 0, 1, 1], [], []>, precision = #tpu.contract_precision<fp32>} : vector<64x64xf32>, vector<64x128xf32>, vector<64x128xf32> -> vector<64x128xf32>
    %cst_10 = arith.constant dense<0.000000e+00> : vector<64x128xf32>
    %14 = tpu.matmul %12, %5, %cst_10 {dimension_numbers = #tpu.dot_dimension_numbers<[1], [0], [0], [1], [0, 0, 1, 1], [], []>, precision = #tpu.contract_precision<fp32>} : vector<64x128xf32>, vector<128x128xf32>, vector<64x128xf32> -> vector<64x128xf32>
    %15 = arith.addf %13, %14 : vector<64x128xf32>
    %c0_11 = arith.constant 0 : index
    %c0_12 = arith.constant 0 : index
    %c0_13 = arith.constant 0 : index
    %16 = vector.load %arg4[%c0_11, %c0_12, %c0_13] : memref<8x1x128xf32, #tpu.memory_space<vmem>>, vector<1x1x128xf32>
    %17 = vector.shape_cast %16 : vector<1x1x128xf32> to vector<1x128xf32>
    %18 = vector.broadcast %17 : vector<1x128xf32> to vector<64x128xf32>
    %19 = arith.mulf %10, %18 : vector<64x128xf32>
    %cst_14 = arith.constant 2.000000e+00 : f32
    %20 = vector.broadcast %cst_14 : f32 to vector<64x128xf32>
    %21 = arith.mulf %20, %12 : vector<64x128xf32>
    %22 = arith.subf %21, %11 : vector<64x128xf32>
    %23 = arith.addf %15, %19 : vector<64x128xf32>
    %24 = arith.mulf %3, %23 : vector<64x128xf32>
    %25 = arith.addf %22, %24 : vector<64x128xf32>
    %26 = arith.truncf %25 : vector<64x128xf32> to vector<64x128xbf16>
    %c0_15 = arith.constant 0 : index
    %c0_16 = arith.constant 0 : index
    %c0_17 = arith.constant 0 : index
    %27 = vector.load %arg5[%c0_15, %c0_16, %c0_17] : memref<8x64x128xbf16, #tpu.memory_space<vmem>>, vector<1x64x128xbf16>
    %28 = vector.shape_cast %27 : vector<1x64x128xbf16> to vector<64x128xbf16>
    %29 = vector.shape_cast %26 : vector<64x128xbf16> to vector<1x64x128xbf16>
    tpu.vector_store %arg5[%c0_15, %c0_16, %c0_17], %29 {strides = array<i32>} : memref<8x64x128xbf16, #tpu.memory_space<vmem>>, vector<1x64x128xbf16>,
    %cst_18 = arith.constant dense<0.000000e+00> : vector<64x128xf32>
    %30 = tpu.matmul %4, %25, %cst_18 {dimension_numbers = #tpu.dot_dimension_numbers<[1], [0], [0], [1], [0, 0, 1, 1], [], []>, precision = #tpu.contract_precision<fp32>} : vector<64x64xf32>, vector<64x128xf32>, vector<64x128xf32> -> vector<64x128xf32>
    %cst_19 = arith.constant dense<0.000000e+00> : vector<64x128xf32>
    %31 = tpu.matmul %25, %5, %cst_19 {dimension_numbers = #tpu.dot_dimension_numbers<[1], [0], [0], [1], [0, 0, 1, 1], [], []>, precision = #tpu.contract_precision<fp32>} : vector<64x128xf32>, vector<128x128xf32>, vector<64x128xf32> -> vector<64x128xf32>
    %32 = arith.addf %30, %31 : vector<64x128xf32>
    %c1 = arith.constant 1 : index
    %c0_20 = arith.constant 0 : index
    %c0_21 = arith.constant 0 : index
    %33 = vector.load %arg4[%c1, %c0_20, %c0_21] : memref<8x1x128xf32, #tpu.memory_space<vmem>>, vector<1x1x128xf32>
    %34 = vector.shape_cast %33 : vector<1x1x128xf32> to vector<1x128xf32>
    %35 = vector.broadcast %34 : vector<1x128xf32> to vector<64x128xf32>
    %36 = arith.mulf %10, %35 : vector<64x128xf32>
    %cst_22 = arith.constant 2.000000e+00 : f32
    %37 = vector.broadcast %cst_22 : f32 to vector<64x128xf32>
    %38 = arith.mulf %37, %25 : vector<64x128xf32>
    %39 = arith.subf %38, %12 : vector<64x128xf32>
    %40 = arith.addf %32, %36 : vector<64x128xf32>
    %41 = arith.mulf %3, %40 : vector<64x128xf32>
    %42 = arith.addf %39, %41 : vector<64x128xf32>
    %43 = arith.truncf %42 : vector<64x128xf32> to vector<64x128xbf16>
    %c1_23 = arith.constant 1 : index
    %c0_24 = arith.constant 0 : index
    %c0_25 = arith.constant 0 : index
    %44 = vector.load %arg5[%c1_23, %c0_24, %c0_25] : memref<8x64x128xbf16, #tpu.memory_space<vmem>>, vector<1x64x128xbf16>
    %45 = vector.shape_cast %44 : vector<1x64x128xbf16> to vector<64x128xbf16>
    %46 = vector.shape_cast %43 : vector<64x128xbf16> to vector<1x64x128xbf16>
    tpu.vector_store %arg5[%c1_23, %c0_24, %c0_25], %46 {strides = array<i32>} : memref<8x64x128xbf16, #tpu.memory_space<vmem>>, vector<1x64x128xbf16>,
    %cst_26 = arith.constant dense<0.000000e+00> : vector<64x128xf32>
    %47 = tpu.matmul %4, %42, %cst_26 {dimension_numbers = #tpu.dot_dimension_numbers<[1], [0], [0], [1], [0, 0, 1, 1], [], []>, precision = #tpu.contract_precision<fp32>} : vector<64x64xf32>, vector<64x128xf32>, vector<64x128xf32> -> vector<64x128xf32>
    %cst_27 = arith.constant dense<0.000000e+00> : vector<64x128xf32>
    %48 = tpu.matmul %42, %5, %cst_27 {dimension_numbers = #tpu.dot_dimension_numbers<[1], [0], [0], [1], [0, 0, 1, 1], [], []>, precision = #tpu.contract_precision<fp32>} : vector<64x128xf32>, vector<128x128xf32>, vector<64x128xf32> -> vector<64x128xf32>
    %49 = arith.addf %47, %48 : vector<64x128xf32>
    %c2 = arith.constant 2 : index
    %c0_28 = arith.constant 0 : index
    %c0_29 = arith.constant 0 : index
    %50 = vector.load %arg4[%c2, %c0_28, %c0_29] : memref<8x1x128xf32, #tpu.memory_space<vmem>>, vector<1x1x128xf32>
    %51 = vector.shape_cast %50 : vector<1x1x128xf32> to vector<1x128xf32>
    %52 = vector.broadcast %51 : vector<1x128xf32> to vector<64x128xf32>
    %53 = arith.mulf %10, %52 : vector<64x128xf32>
    %cst_30 = arith.constant 2.000000e+00 : f32
    %54 = vector.broadcast %cst_30 : f32 to vector<64x128xf32>
    %55 = arith.mulf %54, %42 : vector<64x128xf32>
    %56 = arith.subf %55, %25 : vector<64x128xf32>
    %57 = arith.addf %49, %53 : vector<64x128xf32>
    %58 = arith.mulf %3, %57 : vector<64x128xf32>
    %59 = arith.addf %56, %58 : vector<64x128xf32>
    %60 = arith.truncf %59 : vector<64x128xf32> to vector<64x128xbf16>
    %c2_31 = arith.constant 2 : index
    %c0_32 = arith.constant 0 : index
    %c0_33 = arith.constant 0 : index
    %61 = vector.load %arg5[%c2_31, %c0_32, %c0_33] : memref<8x64x128xbf16, #tpu.memory_space<vmem>>, vector<1x64x128xbf16>
    %62 = vector.shape_cast %61 : vector<1x64x128xbf16> to vector<64x128xbf16>
    %63 = vector.shape_cast %60 : vector<64x128xbf16> to vector<1x64x128xbf16>
    tpu.vector_store %arg5[%c2_31, %c0_32, %c0_33], %63 {strides = array<i32>} : memref<8x64x128xbf16, #tpu.memory_space<vmem>>, vector<1x64x128xbf16>,
    %cst_34 = arith.constant dense<0.000000e+00> : vector<64x128xf32>
    %64 = tpu.matmul %4, %59, %cst_34 {dimension_numbers = #tpu.dot_dimension_numbers<[1], [0], [0], [1], [0, 0, 1, 1], [], []>, precision = #tpu.contract_precision<fp32>} : vector<64x64xf32>, vector<64x128xf32>, vector<64x128xf32> -> vector<64x128xf32>
    %cst_35 = arith.constant dense<0.000000e+00> : vector<64x128xf32>
    %65 = tpu.matmul %59, %5, %cst_35 {dimension_numbers = #tpu.dot_dimension_numbers<[1], [0], [0], [1], [0, 0, 1, 1], [], []>, precision = #tpu.contract_precision<fp32>} : vector<64x128xf32>, vector<128x128xf32>, vector<64x128xf32> -> vector<64x128xf32>
    %66 = arith.addf %64, %65 : vector<64x128xf32>
    %c3 = arith.constant 3 : index
    %c0_36 = arith.constant 0 : index
    %c0_37 = arith.constant 0 : index
    %67 = vector.load %arg4[%c3, %c0_36, %c0_37] : memref<8x1x128xf32, #tpu.memory_space<vmem>>, vector<1x1x128xf32>
    %68 = vector.shape_cast %67 : vector<1x1x128xf32> to vector<1x128xf32>
    %69 = vector.broadcast %68 : vector<1x128xf32> to vector<64x128xf32>
    %70 = arith.mulf %10, %69 : vector<64x128xf32>
    %cst_38 = arith.constant 2.000000e+00 : f32
    %71 = vector.broadcast %cst_38 : f32 to vector<64x128xf32>
    %72 = arith.mulf %71, %59 : vector<64x128xf32>
    %73 = arith.subf %72, %42 : vector<64x128xf32>
    %74 = arith.addf %66, %70 : vector<64x128xf32>
    %75 = arith.mulf %3, %74 : vector<64x128xf32>
    %76 = arith.addf %73, %75 : vector<64x128xf32>
    %77 = arith.truncf %76 : vector<64x128xf32> to vector<64x128xbf16>
    %c3_39 = arith.constant 3 : index
    %c0_40 = arith.constant 0 : index
    %c0_41 = arith.constant 0 : index
    %78 = vector.load %arg5[%c3_39, %c0_40, %c0_41] : memref<8x64x128xbf16, #tpu.memory_space<vmem>>, vector<1x64x128xbf16>
    %79 = vector.shape_cast %78 : vector<1x64x128xbf16> to vector<64x128xbf16>
    %80 = vector.shape_cast %77 : vector<64x128xbf16> to vector<1x64x128xbf16>
    tpu.vector_store %arg5[%c3_39, %c0_40, %c0_41], %80 {strides = array<i32>} : memref<8x64x128xbf16, #tpu.memory_space<vmem>>, vector<1x64x128xbf16>,
    %cst_42 = arith.constant dense<0.000000e+00> : vector<64x128xf32>
    %81 = tpu.matmul %4, %76, %cst_42 {dimension_numbers = #tpu.dot_dimension_numbers<[1], [0], [0], [1], [0, 0, 1, 1], [], []>, precision = #tpu.contract_precision<fp32>} : vector<64x64xf32>, vector<64x128xf32>, vector<64x128xf32> -> vector<64x128xf32>
    %cst_43 = arith.constant dense<0.000000e+00> : vector<64x128xf32>
    %82 = tpu.matmul %76, %5, %cst_43 {dimension_numbers = #tpu.dot_dimension_numbers<[1], [0], [0], [1], [0, 0, 1, 1], [], []>, precision = #tpu.contract_precision<fp32>} : vector<64x128xf32>, vector<128x128xf32>, vector<64x128xf32> -> vector<64x128xf32>
    %83 = arith.addf %81, %82 : vector<64x128xf32>
    %c4 = arith.constant 4 : index
    %c0_44 = arith.constant 0 : index
    %c0_45 = arith.constant 0 : index
    %84 = vector.load %arg4[%c4, %c0_44, %c0_45] : memref<8x1x128xf32, #tpu.memory_space<vmem>>, vector<1x1x128xf32>
    %85 = vector.shape_cast %84 : vector<1x1x128xf32> to vector<1x128xf32>
    %86 = vector.broadcast %85 : vector<1x128xf32> to vector<64x128xf32>
    %87 = arith.mulf %10, %86 : vector<64x128xf32>
    %cst_46 = arith.constant 2.000000e+00 : f32
    %88 = vector.broadcast %cst_46 : f32 to vector<64x128xf32>
    %89 = arith.mulf %88, %76 : vector<64x128xf32>
    %90 = arith.subf %89, %59 : vector<64x128xf32>
    %91 = arith.addf %83, %87 : vector<64x128xf32>
    %92 = arith.mulf %3, %91 : vector<64x128xf32>
    %93 = arith.addf %90, %92 : vector<64x128xf32>
    %94 = arith.truncf %93 : vector<64x128xf32> to vector<64x128xbf16>
    %c4_47 = arith.constant 4 : index
    %c0_48 = arith.constant 0 : index
    %c0_49 = arith.constant 0 : index
    %95 = vector.load %arg5[%c4_47, %c0_48, %c0_49] : memref<8x64x128xbf16, #tpu.memory_space<vmem>>, vector<1x64x128xbf16>
    %96 = vector.shape_cast %95 : vector<1x64x128xbf16> to vector<64x128xbf16>
    %97 = vector.shape_cast %94 : vector<64x128xbf16> to vector<1x64x128xbf16>
    tpu.vector_store %arg5[%c4_47, %c0_48, %c0_49], %97 {strides = array<i32>} : memref<8x64x128xbf16, #tpu.memory_space<vmem>>, vector<1x64x128xbf16>,
    %cst_50 = arith.constant dense<0.000000e+00> : vector<64x128xf32>
    %98 = tpu.matmul %4, %93, %cst_50 {dimension_numbers = #tpu.dot_dimension_numbers<[1], [0], [0], [1], [0, 0, 1, 1], [], []>, precision = #tpu.contract_precision<fp32>} : vector<64x64xf32>, vector<64x128xf32>, vector<64x128xf32> -> vector<64x128xf32>
    %cst_51 = arith.constant dense<0.000000e+00> : vector<64x128xf32>
    %99 = tpu.matmul %93, %5, %cst_51 {dimension_numbers = #tpu.dot_dimension_numbers<[1], [0], [0], [1], [0, 0, 1, 1], [], []>, precision = #tpu.contract_precision<fp32>} : vector<64x128xf32>, vector<128x128xf32>, vector<64x128xf32> -> vector<64x128xf32>
    %100 = arith.addf %98, %99 : vector<64x128xf32>
    %c5 = arith.constant 5 : index
    %c0_52 = arith.constant 0 : index
    %c0_53 = arith.constant 0 : index
    %101 = vector.load %arg4[%c5, %c0_52, %c0_53] : memref<8x1x128xf32, #tpu.memory_space<vmem>>, vector<1x1x128xf32>
    %102 = vector.shape_cast %101 : vector<1x1x128xf32> to vector<1x128xf32>
    %103 = vector.broadcast %102 : vector<1x128xf32> to vector<64x128xf32>
    %104 = arith.mulf %10, %103 : vector<64x128xf32>
    %cst_54 = arith.constant 2.000000e+00 : f32
    %105 = vector.broadcast %cst_54 : f32 to vector<64x128xf32>
    %106 = arith.mulf %105, %93 : vector<64x128xf32>
    %107 = arith.subf %106, %76 : vector<64x128xf32>
    %108 = arith.addf %100, %104 : vector<64x128xf32>
    %109 = arith.mulf %3, %108 : vector<64x128xf32>
    %110 = arith.addf %107, %109 : vector<64x128xf32>
    %111 = arith.truncf %110 : vector<64x128xf32> to vector<64x128xbf16>
    %c5_55 = arith.constant 5 : index
    %c0_56 = arith.constant 0 : index
    %c0_57 = arith.constant 0 : index
    %112 = vector.load %arg5[%c5_55, %c0_56, %c0_57] : memref<8x64x128xbf16, #tpu.memory_space<vmem>>, vector<1x64x128xbf16>
    %113 = vector.shape_cast %112 : vector<1x64x128xbf16> to vector<64x128xbf16>
    %114 = vector.shape_cast %111 : vector<64x128xbf16> to vector<1x64x128xbf16>
    tpu.vector_store %arg5[%c5_55, %c0_56, %c0_57], %114 {strides = array<i32>} : memref<8x64x128xbf16, #tpu.memory_space<vmem>>, vector<1x64x128xbf16>,
    %cst_58 = arith.constant dense<0.000000e+00> : vector<64x128xf32>
    %115 = tpu.matmul %4, %110, %cst_58 {dimension_numbers = #tpu.dot_dimension_numbers<[1], [0], [0], [1], [0, 0, 1, 1], [], []>, precision = #tpu.contract_precision<fp32>} : vector<64x64xf32>, vector<64x128xf32>, vector<64x128xf32> -> vector<64x128xf32>
    %cst_59 = arith.constant dense<0.000000e+00> : vector<64x128xf32>
    %116 = tpu.matmul %110, %5, %cst_59 {dimension_numbers = #tpu.dot_dimension_numbers<[1], [0], [0], [1], [0, 0, 1, 1], [], []>, precision = #tpu.contract_precision<fp32>} : vector<64x128xf32>, vector<128x128xf32>, vector<64x128xf32> -> vector<64x128xf32>
    %117 = arith.addf %115, %116 : vector<64x128xf32>
    %c6 = arith.constant 6 : index
    %c0_60 = arith.constant 0 : index
    %c0_61 = arith.constant 0 : index
    %118 = vector.load %arg4[%c6, %c0_60, %c0_61] : memref<8x1x128xf32, #tpu.memory_space<vmem>>, vector<1x1x128xf32>
    %119 = vector.shape_cast %118 : vector<1x1x128xf32> to vector<1x128xf32>
    %120 = vector.broadcast %119 : vector<1x128xf32> to vector<64x128xf32>
    %121 = arith.mulf %10, %120 : vector<64x128xf32>
    %cst_62 = arith.constant 2.000000e+00 : f32
    %122 = vector.broadcast %cst_62 : f32 to vector<64x128xf32>
    %123 = arith.mulf %122, %110 : vector<64x128xf32>
    %124 = arith.subf %123, %93 : vector<64x128xf32>
    %125 = arith.addf %117, %121 : vector<64x128xf32>
    %126 = arith.mulf %3, %125 : vector<64x128xf32>
    %127 = arith.addf %124, %126 : vector<64x128xf32>
    %128 = arith.truncf %127 : vector<64x128xf32> to vector<64x128xbf16>
    %c6_63 = arith.constant 6 : index
    %c0_64 = arith.constant 0 : index
    %c0_65 = arith.constant 0 : index
    %129 = vector.load %arg5[%c6_63, %c0_64, %c0_65] : memref<8x64x128xbf16, #tpu.memory_space<vmem>>, vector<1x64x128xbf16>
    %130 = vector.shape_cast %129 : vector<1x64x128xbf16> to vector<64x128xbf16>
    %131 = vector.shape_cast %128 : vector<64x128xbf16> to vector<1x64x128xbf16>
    tpu.vector_store %arg5[%c6_63, %c0_64, %c0_65], %131 {strides = array<i32>} : memref<8x64x128xbf16, #tpu.memory_space<vmem>>, vector<1x64x128xbf16>,
    %cst_66 = arith.constant dense<0.000000e+00> : vector<64x128xf32>
    %132 = tpu.matmul %4, %127, %cst_66 {dimension_numbers = #tpu.dot_dimension_numbers<[1], [0], [0], [1], [0, 0, 1, 1], [], []>, precision = #tpu.contract_precision<fp32>} : vector<64x64xf32>, vector<64x128xf32>, vector<64x128xf32> -> vector<64x128xf32>
    %cst_67 = arith.constant dense<0.000000e+00> : vector<64x128xf32>
    %133 = tpu.matmul %127, %5, %cst_67 {dimension_numbers = #tpu.dot_dimension_numbers<[1], [0], [0], [1], [0, 0, 1, 1], [], []>, precision = #tpu.contract_precision<fp32>} : vector<64x128xf32>, vector<128x128xf32>, vector<64x128xf32> -> vector<64x128xf32>
    %134 = arith.addf %132, %133 : vector<64x128xf32>
    %c7 = arith.constant 7 : index
    %c0_68 = arith.constant 0 : index
    %c0_69 = arith.constant 0 : index
    %135 = vector.load %arg4[%c7, %c0_68, %c0_69] : memref<8x1x128xf32, #tpu.memory_space<vmem>>, vector<1x1x128xf32>
    %136 = vector.shape_cast %135 : vector<1x1x128xf32> to vector<1x128xf32>
    %137 = vector.broadcast %136 : vector<1x128xf32> to vector<64x128xf32>
    %138 = arith.mulf %10, %137 : vector<64x128xf32>
    %cst_70 = arith.constant 2.000000e+00 : f32
    %139 = vector.broadcast %cst_70 : f32 to vector<64x128xf32>
    %140 = arith.mulf %139, %127 : vector<64x128xf32>
    %141 = arith.subf %140, %110 : vector<64x128xf32>
    %142 = arith.addf %134, %138 : vector<64x128xf32>
    %143 = arith.mulf %3, %142 : vector<64x128xf32>
    %144 = arith.addf %141, %143 : vector<64x128xf32>
    %145 = arith.truncf %144 : vector<64x128xf32> to vector<64x128xbf16>
    %c7_71 = arith.constant 7 : index
    %c0_72 = arith.constant 0 : index
    %c0_73 = arith.constant 0 : index
    %146 = vector.load %arg5[%c7_71, %c0_72, %c0_73] : memref<8x64x128xbf16, #tpu.memory_space<vmem>>, vector<1x64x128xbf16>
    %147 = vector.shape_cast %146 : vector<1x64x128xbf16> to vector<64x128xbf16>
    %148 = vector.shape_cast %145 : vector<64x128xbf16> to vector<1x64x128xbf16>
    tpu.vector_store %arg5[%c7_71, %c0_72, %c0_73], %148 {strides = array<i32>} : memref<8x64x128xbf16, #tpu.memory_space<vmem>>, vector<1x64x128xbf16>,
    %c0_74 = arith.constant 0 : index
    %c0_75 = arith.constant 0 : index
    %149 = vector.load %arg6[%c0_74, %c0_75] : memref<64x128xf32, #tpu.memory_space<vmem>>, vector<64x128xf32>
    tpu.vector_store %arg6[%c0_74, %c0_75], %127 {strides = array<i32>} : memref<64x128xf32, #tpu.memory_space<vmem>>, vector<64x128xf32>,
    %c0_76 = arith.constant 0 : index
    %c0_77 = arith.constant 0 : index
    %150 = vector.load %arg7[%c0_76, %c0_77] : memref<64x128xf32, #tpu.memory_space<vmem>>, vector<64x128xf32>
    tpu.vector_store %arg7[%c0_76, %c0_77], %144 {strides = array<i32>} : memref<64x128xf32, #tpu.memory_space<vmem>>, vector<64x128xf32>,
    return
  }
  func.func @transform_0(%arg0: i32) -> (i32, i32) {
    %c0_i32 = arith.constant 0 : i32
    %c0_i32_0 = arith.constant 0 : i32
    %c0_i32_1 = arith.constant 0 : i32
    return %c0_i32, %c0_i32_0 : i32, i32
  }
  func.func @transform_1(%arg0: i32) -> (i32, i32) {
    %c0_i32 = arith.constant 0 : i32
    %c0_i32_0 = arith.constant 0 : i32
    %c0_i32_1 = arith.constant 0 : i32
    return %c0_i32, %c0_i32_0 : i32, i32
  }
  func.func @transform_2(%arg0: i32) -> (i32, i32) {
    %c0_i32 = arith.constant 0 : i32
    %c0_i32_0 = arith.constant 0 : i32
    %c0_i32_1 = arith.constant 0 : i32
    return %c0_i32, %c0_i32_0 : i32, i32
  }
  func.func @transform_3(%arg0: i32) -> (i32, i32, i32) {
    %c0_i32 = arith.constant 0 : i32
    %c0_i32_0 = arith.constant 0 : i32
    %c0_i32_1 = arith.constant 0 : i32
    return %arg0, %c0_i32, %c0_i32_0 : i32, i32, i32
  }
  func.func @transform_4(%arg0: i32) -> (i32, i32, i32) {
    %c0_i32 = arith.constant 0 : i32
    %c0_i32_0 = arith.constant 0 : i32
    %c0_i32_1 = arith.constant 0 : i32
    return %arg0, %c0_i32, %c0_i32_0 : i32, i32, i32
  }
}

</mosaic_0001>

<llo_original>
// kernel: tpu_custom_call.1
$region0: #{tpu_custom_call.1}
  #allocation0 [shape = 'u32[]', space=smem, size = 0x4, offset = 0x4, fixed_abs, tag = 'smem constant byte address 0x4 - core index']
  #allocation1 [shape = 'u32[72,128]{1,0:T(1,128)}', space=vmem, size = 0x9000, scoped, tag = 'internal scratch']
  #allocation2 [shape = 'f32[64,128]{1,0:T(8,128)}', space=vmem, size = 0x8000, scoped, tag = 'scratch operand']
  #allocation3 [shape = 'f32[64,128]{1,0:T(8,128)}', space=vmem, size = 0x8000, scoped, tag = 'scratch operand']
  %s0 = inlined_call_operand.hbm [shape: f32[64,128], index: 0, kind: input, shape index: {}]
  %s1 = inlined_call_operand.hbm [shape: f32[64,64], index: 1, kind: input, shape index: {}]
  %s2 = inlined_call_operand.hbm [shape: f32[128,128], index: 2, kind: input, shape index: {}]
  %s3 = inlined_call_operand.hbm [shape: f32[32,1,128], index: 3, kind: input, shape index: {}]
  %s4 = inlined_call_operand.hbm [shape: bf16[32,64,128], index: 4, kind: output, shape index: {}]
  %s5 = sld [smem:[#allocation0]]
  $region69: #{tpu_custom_call.1} parent=0
    _
  %s7 = ssub.s32 1, %s5
  %s8 = scalar_select 0, %s7, %s5
  $region1: #{tpu_custom_call.1} parent=0
    #allocation4 [shape = 'u8[32768]{0}', space=vmem, size = 0x8000, scoped, tag = 'input window, operand 0, single buffered']
    #allocation5 [shape = 's32[2]{0}', space=sflag, size = 0x8, scoped, tag = 'scoped memory for tpu_custom_call.1']
    #allocation6 [shape = 's32[2]{0}', space=sflag, size = 0x8, scoped, tag = 'scoped memory for tpu_custom_call.1']
    #allocation7 [shape = 'u8[32768]{0}', space=vmem, size = 0x8000, scoped, tag = 'input window, operand 1, single buffered']
    #allocation8 [shape = 's32[1]{0}', space=sflag, size = 0x4, scoped, tag = 'scoped memory for tpu_custom_call.1']
    #allocation9 [shape = 'u8[65536]{0}', space=vmem, size = 0x10000, scoped, tag = 'input window, operand 2, single buffered']
    #allocation10 [shape = 'u8[8192]{0}', space=vmem, size = 0x2000, scoped, tag = 'input window, operand 3']
    #allocation11 [shape = 's32[2]{0}', space=sflag, size = 0x8, scoped, tag = 'scoped memory for tpu_custom_call.1']
    #allocation12 [shape = 'u8[262144]{0}', space=vmem, size = 0x40000, scoped, tag = 'output window, operand 0']
    %9 = vsyncpa [#allocation5], 0
    %10 = vsyncpa [#allocation8], 0
    %11 = vsyncpa [#allocation11], 0
    %s12 = scalar_lea.sflag [#allocation11], 1
    %13 = vsyncpa %s12, 0
    %14 = vsyncpa [#allocation6], 0
    %s15 = scalar_lea.sflag [#allocation6], 1
    %16 = vsyncpa %s15, 0
    loop: start=0, step=1, limit=6
    $region2: #{tpu_custom_call.1} parent=1 // loop_pre_header
      _
    $region3: #{tpu_custom_call.1} parent=1 // loop_header
      %s18 = sphi 0, %s22
      %p19 = scmp.ge.s32.totalorder %s18, 6
      %s26 = sphi 0, %s26
      %s28 = sphi 0, %s26
      %s29 = sphi 0, %s28
      %s43 = sphi 0, %s29
      %s47 = sphi 0, %s47
      %s49 = sphi 0, %s47
      %s50 = sphi 0, %s49
      %s64 = sphi 0, %s50
      %s68 = sphi 0, %s68
      %s70 = sphi 0, %s68
      %s71 = sphi 0, %s70
      %s85 = sphi 0, %s71
      %s91 = sphi 0, %s93
      %s94 = sphi 0, %s91
      %s95 = sphi 0, %s94
      %s111 = sphi 0, %s95
      %s117 = sphi 0, %s119
      %s120 = sphi 0, %s117
      %s121 = sphi 0, %s120
      %s137 = sphi 0, %s121
    $region4: #{tpu_custom_call.1} parent=1 // loop_header_branch
      %21 = sbr.rel (%p19) target = $region8
    $region5: #{tpu_custom_call.1} parent=1 // loop_body
      %s23 = ssub.s32 %s18, 1
      %s24 = ssub.s32 %s18, 2
      %s25 = sadd.s32 %s18, 1
      %s27 = sadd.s32 %s26, 1
      %p30 = scmp.eq.s32.totalorder %s18, 3
      %p31 = scmp.ne.s32.totalorder %s26, %s28
      %p32 = scmp.eq.s32.totalorder %s18, 0
      %p33 = por %p31, %p32
      %p34 = scmp.ne.s32.totalorder %s26, %s28
      %p35 = scmp.eq.s32.totalorder %s23, 3
      %p36 = por %p34, %p35
      %p37 = scmp.ne.s32.totalorder %s28, %s29
      %p38 = scmp.eq.s32.totalorder %s23, 0
      %p39 = por %p37, %p38
      %p40 = scmp.ne.s32.totalorder %s28, %s29
      %p41 = scmp.eq.s32.totalorder %s24, 3
      %p42 = por %p40, %p41
      %p44 = scmp.ne.s32.totalorder %s29, %s43
      %p45 = scmp.eq.s32.totalorder %s24, 0
      %p46 = por %p44, %p45
      %s48 = sadd.s32 %s47, 1
      %p51 = scmp.eq.s32.totalorder %s18, 3
      %p52 = scmp.ne.s32.totalorder %s47, %s49
      %p53 = scmp.eq.s32.totalorder %s18, 0
      %p54 = por %p52, %p53
      %p55 = scmp.ne.s32.totalorder %s47, %s49
      %p56 = scmp.eq.s32.totalorder %s23, 3
      %p57 = por %p55, %p56
      %p58 = scmp.ne.s32.totalorder %s49, %s50
      %p59 = scmp.eq.s32.totalorder %s23, 0
      %p60 = por %p58, %p59
      %p61 = scmp.ne.s32.totalorder %s49, %s50
      %p62 = scmp.eq.s32.totalorder %s24, 3
      %p63 = por %p61, %p62
      %p65 = scmp.ne.s32.totalorder %s50, %s64
      %p66 = scmp.eq.s32.totalorder %s24, 0
      %p67 = por %p65, %p66
      %s69 = sadd.s32 %s68, 1
      %p72 = scmp.eq.s32.totalorder %s18, 3
      %p73 = scmp.ne.s32.totalorder %s68, %s70
      %p74 = scmp.eq.s32.totalorder %s18, 0
      %p75 = por %p73, %p74
      %p76 = scmp.ne.s32.totalorder %s68, %s70
      %p77 = scmp.eq.s32.totalorder %s23, 3
      %p78 = por %p76, %p77
      %p79 = scmp.ne.s32.totalorder %s70, %s71
      %p80 = scmp.eq.s32.totalorder %s23, 0
      %p81 = por %p79, %p80
      %p82 = scmp.ne.s32.totalorder %s70, %s71
      %p83 = scmp.eq.s32.totalorder %s24, 3
      %p84 = por %p82, %p83
      %p86 = scmp.ne.s32.totalorder %s71, %s85
      %p87 = scmp.eq.s32.totalorder %s24, 0
      %p88 = por %p86, %p87
      %s89 = ssub.s32 %s18, %s25
      %p90 = scmp.eq.s32.totalorder %s89, 0
      %s92 = sadd.s32 %s91, 1
      %s93 = scalar_select %p90, %s91, %s92
      %p96 = pneg %p90
      %p97 = scmp.eq.s32.totalorder %s18, 3
      %p98 = por %p96, %p97
      %p99 = scmp.ne.s32.totalorder %s91, %s94
      %p100 = scmp.eq.s32.totalorder %s18, 0
      %p101 = por %p99, %p100
      %p102 = scmp.ne.s32.totalorder %s91, %s94
      %p103 = scmp.eq.s32.totalorder %s23, 3
      %p104 = por %p102, %p103
      %p105 = scmp.ne.s32.totalorder %s94, %s95
      %p106 = scmp.eq.s32.totalorder %s23, 0
      %p107 = por %p105, %p106
      %p108 = scmp.ne.s32.totalorder %s94, %s95
      %p109 = scmp.eq.s32.totalorder %s24, 3
      %p110 = por %p108, %p109
      %p112 = scmp.ne.s32.totalorder %s95, %s111
      %p113 = scmp.eq.s32.totalorder %s24, 0
      %p114 = por %p112, %p113
      %s115 = ssub.s32 %s18, %s25
      %p116 = scmp.eq.s32.totalorder %s115, 0
      %s118 = sadd.s32 %s117, 1
      %s119 = scalar_select %p116, %s117, %s118
      %p122 = pneg %p116
      %p123 = scmp.eq.s32.totalorder %s18, 3
      %p124 = por %p122, %p123
      %p125 = scmp.ne.s32.totalorder %s117, %s120
      %p126 = scmp.eq.s32.totalorder %s18, 0
      %p127 = por %p125, %p126
      %p128 = scmp.ne.s32.totalorder %s117, %s120
      %p129 = scmp.eq.s32.totalorder %s23, 3
      %p130 = por %p128, %p129
      %p131 = scmp.ne.s32.totalorder %s120, %s121
      %p132 = scmp.eq.s32.totalorder %s23, 0
      %p133 = por %p131, %p132
      %p134 = scmp.ne.s32.totalorder %s120, %s121
      %p135 = scmp.eq.s32.totalorder %s24, 3
      %p136 = por %p134, %p135
      %p138 = scmp.ne.s32.totalorder %s121, %s137
      %p139 = scmp.eq.s32.totalorder %s24, 0
      %p140 = por %p138, %p139
      %p141 = scmp.le.s32.totalorder 1, %s18
      %p142 = scmp.lt.s32.totalorder %s18, 5
      %p143 = pnand %p141, %p142
      %p144 = pneg %p143
      // Predicated region
      $region9: #{tpu_custom_call.1} parent=5 // pred_check
        _
      $region10: #{tpu_custom_call.1} parent=5 // pred_check_branch
        %146 = sbr.rel (%p143) target = $region12
      $region11: #{tpu_custom_call.1} parent=5 // pred_region
        %s147 = ssub.s32 %s18, 1
        // Predicated region
        $region13: #{tpu_custom_call.1} parent=11 // pred_check
          %p148 = pneg %p39
        $region14: #{tpu_custom_call.1} parent=11 // pred_check_branch
          %150 = sbr.rel (%p148) target = $region16
        $region15: #{tpu_custom_call.1} parent=11 // pred_region
          %152 = vsyncadd [#allocation5], 0
          %s153 = sshll.u32 %s0, 4
          %s154 = int_to_ptr.hbm [resolvable:$true] %s153
          %s155 = sshll.u32 [#allocation4], 4
          %s156 = int_to_ptr.vmem [resolvable:$true] %s155
          %161 = dma.hbm_to_vmem [thread:$0]  %s154, 1024, %s156, [#allocation5], 128, 128, 8
        $region16: #{tpu_custom_call.1} parent=11 // pred_fallthru
          _
        // Predicated region
        $region17: #{tpu_custom_call.1} parent=11 // pred_check
          %p162 = pneg %p60
        $region18: #{tpu_custom_call.1} parent=11 // pred_check_branch
          %164 = sbr.rel (%p162) target = $region20
        $region19: #{tpu_custom_call.1} parent=11 // pred_region
          %166 = vsyncadd [#allocation8], 0
          %s167 = sshll.u32 %s1, 4
          %s168 = int_to_ptr.hbm [resolvable:$true] %s167
          %s169 = sshll.u32 [#allocation7], 4
          %s170 = int_to_ptr.vmem [resolvable:$true] %s169
          %175 = dma.hbm_to_vmem [thread:$0]  %s168, 1024, %s170, [#allocation8], 128, 128, 8
        $region20: #{tpu_custom_call.1} parent=11 // pred_fallthru
          _
        // Predicated region
        $region21: #{tpu_custom_call.1} parent=11 // pred_check
          %p176 = pneg %p81
        $region22: #{tpu_custom_call.1} parent=11 // pred_check_branch
          %178 = sbr.rel (%p176) target = $region24
        $region23: #{tpu_custom_call.1} parent=11 // pred_region
          %180 = vsyncadd [#allocation8], 0
          %s181 = sshll.u32 %s2, 4
          %s182 = int_to_ptr.hbm [resolvable:$true] %s181
          %s183 = sshll.u32 [#allocation9], 4
          %s184 = int_to_ptr.vmem [resolvable:$true] %s183
          %189 = dma.hbm_to_vmem [thread:$0]  %s182, 2048, %s184, [#allocation8], 128, 128, 8
        $region24: #{tpu_custom_call.1} parent=11 // pred_fallthru
          _
      $region12: #{tpu_custom_call.1} parent=5 // pred_fallthru
        _
      %p190 = scmp.lt.s32.totalorder %s18, 4
      // Predicated region
      $region25: #{tpu_custom_call.1} parent=5 // pred_check
        %p191 = pneg %p190
      $region26: #{tpu_custom_call.1} parent=5 // pred_check_branch
        %193 = sbr.rel (%p191) target = $region28
      $region27: #{tpu_custom_call.1} parent=5 // pred_region
        // Predicated region
        $region29: #{tpu_custom_call.1} parent=27 // pred_check
          %p194 = pneg %p101
        $region30: #{tpu_custom_call.1} parent=27 // pred_check_branch
          %196 = sbr.rel (%p194) target = $region32
        $region31: #{tpu_custom_call.1} parent=27 // pred_region
          %s197 = sand.u32 %s91, 1
          %s198 = scalar_lea.sflag [#allocation11], %s197
          %s199 = sand.u32 %s91, 1
          %s200 = smul.addr %s199, 8
          %s201 = scalar_lea.vmem [#allocation10], %s200
          %s202 = smul.u32 8, %s18
          %204 = vsyncadd %s198, 0
          %s205 = scalar_lea.hbm %s3, %s202
          %s206 = sshll.u32 %s205, 4
          %s207 = int_to_ptr.hbm [resolvable:$true] %s206
          %s208 = sshll.u32 %s201, 4
          %s209 = int_to_ptr.vmem [resolvable:$true] %s208
          %214 = dma.hbm_to_vmem [thread:$0]  %s207, 128, %s209, %s198, 16, 16, 1
        $region32: #{tpu_custom_call.1} parent=27 // pred_fallthru
          _
      $region28: #{tpu_custom_call.1} parent=5 // pred_fallthru
        _
      %p215 = scmp.le.s32.totalorder 1, %s18
      %p216 = scmp.lt.s32.totalorder %s18, 5
      %p217 = pnand %p215, %p216
      %p218 = pneg %p217
      // Predicated region
      $region33: #{tpu_custom_call.1} parent=5 // pred_check
        _
      $region34: #{tpu_custom_call.1} parent=5 // pred_check_branch
        %220 = sbr.rel (%p217) target = $region36
      $region35: #{tpu_custom_call.1} parent=5 // pred_region
        %s221 = ssub.s32 %s18, 1
        // Predicated region
        $region37: #{tpu_custom_call.1} parent=35 // pred_check
          %p222 = pneg %p39
        $region38: #{tpu_custom_call.1} parent=35 // pred_check_branch
          %224 = sbr.rel (%p222) target = $region40
        $region39: #{tpu_custom_call.1} parent=35 // pred_region
          %226 = dma.done [#allocation5], 1024
        $region40: #{tpu_custom_call.1} parent=35 // pred_fallthru
          _
        // Predicated region
        $region41: #{tpu_custom_call.1} parent=35 // pred_check
          %p227 = pneg %p60
        $region42: #{tpu_custom_call.1} parent=35 // pred_check_branch
          %229 = sbr.rel (%p227) target = $region44
        $region43: #{tpu_custom_call.1} parent=35 // pred_region
          %231 = dma.done [#allocation8], 1024
        $region44: #{tpu_custom_call.1} parent=35 // pred_fallthru
          _
        // Predicated region
        $region45: #{tpu_custom_call.1} parent=35 // pred_check
          %p232 = pneg %p81
        $region46: #{tpu_custom_call.1} parent=35 // pred_check_branch
          %234 = sbr.rel (%p232) target = $region48
        $region47: #{tpu_custom_call.1} parent=35 // pred_region
          %236 = dma.done [#allocation8], 2048
        $region48: #{tpu_custom_call.1} parent=35 // pred_fallthru
          _
        %s237 = sand.u32 %s94, 1
        %s238 = scalar_lea.sflag [#allocation11], %s237
        %s239 = sand.u32 %s94, 1
        %s240 = smul.addr %s239, 8
        %s241 = scalar_lea.vmem [#allocation10], %s240
        // Predicated region
        $region49: #{tpu_custom_call.1} parent=35 // pred_check
          %p242 = pneg %p107
        $region50: #{tpu_custom_call.1} parent=35 // pred_check_branch
          %244 = sbr.rel (%p242) target = $region52
        $region51: #{tpu_custom_call.1} parent=35 // pred_region
          %246 = dma.done %s238, 128
        $region52: #{tpu_custom_call.1} parent=35 // pred_fallthru
          _
        %p247 = pneg %p39
        %p248 = pneg %p36
        %p249 = pneg %p60
        %p250 = pneg %p57
        %p251 = pneg %p81
        %p252 = pneg %p78
        %s253 = sand.u32 %s94, 1
        %s254 = scalar_lea.sflag [#allocation11], %s253
        %s255 = sand.u32 %s94, 1
        %s256 = smul.addr %s255, 8
        %s257 = scalar_lea.vmem [#allocation10], %s256
        %p258 = pneg %p107
        %p259 = pneg %p104
        %p260 = pneg %p133
        %p261 = pneg %p130
        %s262 = sand.u32 %s120, 1
        %s263 = scalar_lea.sflag [#allocation6], %s262
        %s264 = sand.u32 %s120, 1
        %s265 = smul.addr %s264, 256
        %s266 = scalar_lea.vmem [#allocation12], %s265
        %s267 = smul.u32 8, %s23
        %s268 = smul.u32 8, %s23
        %p269 = scmp.eq.s32.totalorder %s23, 0
        // Predicated region
        $region53: #{tpu_custom_call.1} parent=35 // pred_check
          %p270 = pneg %p269
        $region54: #{tpu_custom_call.1} parent=35 // pred_check_branch
          %272 = sbr.rel (%p270) target = $region56
        $region55: #{tpu_custom_call.1} parent=35 // pred_region
          %273 = vst [vmem:[#allocation2] sm:$0xff] 0.0
          %274 = vst [vmem:[#allocation2 + $0x8] sm:$0xff] 0.0
          %275 = vst [vmem:[#allocation2 + $0x10] sm:$0xff] 0.0
          %276 = vst [vmem:[#allocation2 + $0x18] sm:$0xff] 0.0
          %277 = vst [vmem:[#allocation2 + $0x20] sm:$0xff] 0.0
          %278 = vst [vmem:[#allocation2 + $0x28] sm:$0xff] 0.0
          %279 = vst [vmem:[#allocation2 + $0x30] sm:$0xff] 0.0
          %280 = vst [vmem:[#allocation2 + $0x38] sm:$0xff] 0.0
          %281 = vst [vmem:[#allocation3] sm:$0xff] 0.0
          %282 = vst [vmem:[#allocation3 + $0x8] sm:$0xff] 0.0
          %283 = vst [vmem:[#allocation3 + $0x10] sm:$0xff] 0.0
          %284 = vst [vmem:[#allocation3 + $0x18] sm:$0xff] 0.0
          %285 = vst [vmem:[#allocation3 + $0x20] sm:$0xff] 0.0
          %286 = vst [vmem:[#allocation3 + $0x28] sm:$0xff] 0.0
          %287 = vst [vmem:[#allocation3 + $0x30] sm:$0xff] 0.0
          %288 = vst [vmem:[#allocation3 + $0x38] sm:$0xff] 0.0
        $region56: #{tpu_custom_call.1} parent=35 // pred_fallthru
          _
        %v289 = vld [vmem:[#allocation4] sm:$0xff]
        %v290 = vld [vmem:[#allocation4 + $0x8] sm:$0xff]
        %v291 = vld [vmem:[#allocation4 + $0x10] sm:$0xff]
        %v292 = vld [vmem:[#allocation4 + $0x18] sm:$0xff]
        %v293 = vld [vmem:[#allocation4 + $0x20] sm:$0xff]
        %v294 = vld [vmem:[#allocation4 + $0x28] sm:$0xff]
        %v295 = vld [vmem:[#allocation4 + $0x30] sm:$0xff]
        %v296 = vld [vmem:[#allocation4 + $0x38] sm:$0xff]
        %v297 = vld [vmem:[#allocation7] sm:$0xff]
        %v298 = vld [vmem:[#allocation7 + $0x8] sm:$0xff]
        %v299 = vld [vmem:[#allocation7 + $0x10] sm:$0xff]
        %v300 = vld [vmem:[#allocation7 + $0x18] sm:$0xff]
        %v301 = vld [vmem:[#allocation7 + $0x20] sm:$0xff]
        %v302 = vld [vmem:[#allocation7 + $0x28] sm:$0xff]
        %v303 = vld [vmem:[#allocation7 + $0x30] sm:$0xff]
        %v304 = vld [vmem:[#allocation7 + $0x38] sm:$0xff]
        %v305 = vld [vmem:[#allocation9] sm:$0xff]
        %v306 = vld [vmem:[#allocation9 + $0x8] sm:$0xff]
        %v307 = vld [vmem:[#allocation9 + $0x10] sm:$0xff]
        %v308 = vld [vmem:[#allocation9 + $0x18] sm:$0xff]
        %v309 = vld [vmem:[#allocation9 + $0x20] sm:$0xff]
        %v310 = vld [vmem:[#allocation9 + $0x28] sm:$0xff]
        %v311 = vld [vmem:[#allocation9 + $0x30] sm:$0xff]
        %v312 = vld [vmem:[#allocation9 + $0x38] sm:$0xff]
        %v313 = vld [vmem:[#allocation9 + $0x40] sm:$0xff]
        %v314 = vld [vmem:[#allocation9 + $0x48] sm:$0xff]
        %v315 = vld [vmem:[#allocation9 + $0x50] sm:$0xff]
        %v316 = vld [vmem:[#allocation9 + $0x58] sm:$0xff]
        %v317 = vld [vmem:[#allocation9 + $0x60] sm:$0xff]
        %v318 = vld [vmem:[#allocation9 + $0x68] sm:$0xff]
        %v319 = vld [vmem:[#allocation9 + $0x70] sm:$0xff]
        %v320 = vld [vmem:[#allocation9 + $0x78] sm:$0xff]
        %v321 = vlaneseq
        %v322 = vshrl.u32 %v321, 7
        %v323 = vadd.s32 %v322, 8
        %v324 = vadd.s32 %v322, 16
        %v325 = vadd.s32 %v322, 24
        %v326 = vadd.s32 %v322, 32
        %v327 = vadd.s32 %v322, 40
        %v328 = vadd.s32 %v322, 48
        %v329 = vadd.s32 %v322, 56
        %vm330 = vcmp.eq.s32.totalorder %v322, 4
        %vm331 = vcmp.eq.s32.totalorder %v323, 4
        %vm332 = vcmp.eq.s32.totalorder %v324, 4
        %vm333 = vcmp.eq.s32.totalorder %v325, 4
        %vm334 = vcmp.eq.s32.totalorder %v326, 4
        %vm335 = vcmp.eq.s32.totalorder %v327, 4
        %vm336 = vcmp.eq.s32.totalorder %v328, 4
        %vm337 = vcmp.eq.s32.totalorder %v329, 4
        %v338 = vsel %vm330, 1, 0
        %v339 = vsel %vm331, 1, 0
        %v340 = vsel %vm332, 1, 0
        %v341 = vsel %vm333, 1, 0
        %v342 = vsel %vm334, 1, 0
        %v343 = vsel %vm335, 1, 0
        %v344 = vsel %vm336, 1, 0
        %v345 = vsel %vm337, 1, 0
        %v346 = vcvt.s32.f32 %v338
        %v347 = vcvt.s32.f32 %v339
        %v348 = vcvt.s32.f32 %v340
        %v349 = vcvt.s32.f32 %v341
        %v350 = vcvt.s32.f32 %v342
        %v351 = vcvt.s32.f32 %v343
        %v352 = vcvt.s32.f32 %v344
        %v353 = vcvt.s32.f32 %v345
        %v354 = vld [vmem:[#allocation2] sm:$0xff]
        %v355 = vld [vmem:[#allocation2 + $0x8] sm:$0xff]
        %v356 = vld [vmem:[#allocation2 + $0x10] sm:$0xff]
        %v357 = vld [vmem:[#allocation2 + $0x18] sm:$0xff]
        %v358 = vld [vmem:[#allocation2 + $0x20] sm:$0xff]
        %v359 = vld [vmem:[#allocation2 + $0x28] sm:$0xff]
        %v360 = vld [vmem:[#allocation2 + $0x30] sm:$0xff]
        %v361 = vld [vmem:[#allocation2 + $0x38] sm:$0xff]
        %v362 = vld [vmem:[#allocation3] sm:$0xff]
        %v363 = vld [vmem:[#allocation3 + $0x8] sm:$0xff]
        %v364 = vld [vmem:[#allocation3 + $0x10] sm:$0xff]
        %v365 = vld [vmem:[#allocation3 + $0x18] sm:$0xff]
        %v366 = vld [vmem:[#allocation3 + $0x20] sm:$0xff]
        %v367 = vld [vmem:[#allocation3 + $0x28] sm:$0xff]
        %v368 = vld [vmem:[#allocation3 + $0x30] sm:$0xff]
        %v369 = vld [vmem:[#allocation3 + $0x38] sm:$0xff]
        %v370 = vand.u32 %v320, 4294901760
        %371 = vmatpush.msra.mxu0 %v370
        %v372 = vand.u32 %v319, 4294901760
        %373 = vmatpush.msra.mxu0 %v372
        %v374 = vand.u32 %v318, 4294901760
        %375 = vmatpush.msra.mxu0 %v374
        %v376 = vand.u32 %v317, 4294901760
        %377 = vmatpush.msra.mxu0 %v376
        %v378 = vand.u32 %v316, 4294901760
        %379 = vmatpush.msra.mxu0 %v378
        %v380 = vand.u32 %v315, 4294901760
        %381 = vmatpush.msra.mxu0 %v380
        %v382 = vand.u32 %v314, 4294901760
        %383 = vmatpush.msra.mxu0 %v382
        %v384 = vand.u32 %v313, 4294901760
        %385 = vmatpush.msra.mxu0 %v384
        %v386 = vand.u32 %v312, 4294901760
        %387 = vmatpush.msra.mxu0 %v386
        %v388 = vand.u32 %v311, 4294901760
        %389 = vmatpush.msra.mxu0 %v388
        %v390 = vand.u32 %v310, 4294901760
        %391 = vmatpush.msra.mxu0 %v390
        %v392 = vand.u32 %v309, 4294901760
        %393 = vmatpush.msra.mxu0 %v392
        %v394 = vand.u32 %v308, 4294901760
        %395 = vmatpush.msra.mxu0 %v394
        %v396 = vand.u32 %v307, 4294901760
        %397 = vmatpush.msra.mxu0 %v396
        %v398 = vand.u32 %v306, 4294901760
        %399 = vmatpush.msra.mxu0 %v398
        %v400 = vand.u32 %v305, 4294901760
        %401 = vmatpush.msra.mxu0 %v400
        %v402 = vand.u32 %v362, 4294901760
        %v403 = vsub.f32 %v362, %v402
        %v404 = vand.u32 %v403, 4294901760
        %v405 = vsub.f32 %v403, %v404
        %v406 = vand.u32 %v405, 4294901760
        %407 = vmatmul.f32.gmra.mxu0 %v406
        %v408 = vpop.f32.mrf.mxu0
        %v409 = vadd.f32 0.0, %v408
        %v410 = vand.u32 %v363, 4294901760
        %v411 = vsub.f32 %v363, %v410
        %v412 = vand.u32 %v411, 4294901760
        %v413 = vsub.f32 %v411, %v412
        %v414 = vand.u32 %v413, 4294901760
        %415 = vmatmul.f32.gmra.mxu0 %v414
        %v416 = vpop.f32.mrf.mxu0
        %v417 = vadd.f32 0.0, %v416
        %v418 = vand.u32 %v364, 4294901760
        %v419 = vsub.f32 %v364, %v418
        %v420 = vand.u32 %v419, 4294901760
        %v421 = vsub.f32 %v419, %v420
        %v422 = vand.u32 %v421, 4294901760
        %423 = vmatmul.f32.gmra.mxu0 %v422
        %v424 = vpop.f32.mrf.mxu0
        %v425 = vadd.f32 0.0, %v424
        %v426 = vand.u32 %v365, 4294901760
        %v427 = vsub.f32 %v365, %v426
        %v428 = vand.u32 %v427, 4294901760
        %v429 = vsub.f32 %v427, %v428
        %v430 = vand.u32 %v429, 4294901760
        %431 = vmatmul.f32.gmra.mxu0 %v430
        %v432 = vpop.f32.mrf.mxu0
        %v433 = vadd.f32 0.0, %v432
        %v434 = vand.u32 %v366, 4294901760
        %v435 = vsub.f32 %v366, %v434
        %v436 = vand.u32 %v435, 4294901760
        %v437 = vsub.f32 %v435, %v436
        %v438 = vand.u32 %v437, 4294901760
        %439 = vmatmul.f32.gmra.mxu0 %v438
        %v440 = vpop.f32.mrf.mxu0
        %v441 = vadd.f32 0.0, %v440
        %v442 = vand.u32 %v367, 4294901760
        %v443 = vsub.f32 %v367, %v442
        %v444 = vand.u32 %v443, 4294901760
        %v445 = vsub.f32 %v443, %v444
        %v446 = vand.u32 %v445, 4294901760
        %447 = vmatmul.f32.gmra.mxu0 %v446
        %v448 = vpop.f32.mrf.mxu0
        %v449 = vadd.f32 0.0, %v448
        %v450 = vand.u32 %v368, 4294901760
        %v451 = vsub.f32 %v368, %v450
        %v452 = vand.u32 %v451, 4294901760
        %v453 = vsub.f32 %v451, %v452
        %v454 = vand.u32 %v453, 4294901760
        %455 = vmatmul.f32.gmra.mxu0 %v454
        %v456 = vpop.f32.mrf.mxu0
        %v457 = vadd.f32 0.0, %v456
        %v458 = vand.u32 %v369, 4294901760
        %v459 = vsub.f32 %v369, %v458
        %v460 = vand.u32 %v459, 4294901760
        %v461 = vsub.f32 %v459, %v460
        %v462 = vand.u32 %v461, 4294901760
        %463 = vmatmul.f32.gmra.mxu0 %v462
        %v464 = vpop.f32.mrf.mxu0
        %v465 = vadd.f32 0.0, %v464
        %466 = vdwg.mxu0
        %v467 = vand.u32 %v320, 4294901760
        %v468 = vsub.f32 %v320, %v467
        %v469 = vand.u32 %v468, 4294901760
        %v470 = vsub.f32 %v468, %v469
        %v471 = vand.u32 %v470, 4294901760
        %472 = vmatpush.msra.mxu0 %v471
        %v473 = vand.u32 %v319, 4294901760
        %v474 = vsub.f32 %v319, %v473
        %v475 = vand.u32 %v474, 4294901760
        %v476 = vsub.f32 %v474, %v475
        %v477 = vand.u32 %v476, 4294901760
        %478 = vmatpush.msra.mxu0 %v477
        %v479 = vand.u32 %v318, 4294901760
        %v480 = vsub.f32 %v318, %v479
        %v481 = vand.u32 %v480, 4294901760
        %v482 = vsub.f32 %v480, %v481
        %v483 = vand.u32 %v482, 4294901760
        %484 = vmatpush.msra.mxu0 %v483
        %v485 = vand.u32 %v317, 4294901760
        %v486 = vsub.f32 %v317, %v485
        %v487 = vand.u32 %v486, 4294901760
        %v488 = vsub.f32 %v486, %v487
        %v489 = vand.u32 %v488, 4294901760
        %490 = vmatpush.msra.mxu0 %v489
        %v491 = vand.u32 %v316, 4294901760
        %v492 = vsub.f32 %v316, %v491
        %v493 = vand.u32 %v492, 4294901760
        %v494 = vsub.f32 %v492, %v493
        %v495 = vand.u32 %v494, 4294901760
        %496 = vmatpush.msra.mxu0 %v495
        %v497 = vand.u32 %v315, 4294901760
        %v498 = vsub.f32 %v315, %v497
        %v499 = vand.u32 %v498, 4294901760
        %v500 = vsub.f32 %v498, %v499
        %v501 = vand.u32 %v500, 4294901760
        %502 = vmatpush.msra.mxu0 %v501
        %v503 = vand.u32 %v314, 4294901760
        %v504 = vsub.f32 %v314, %v503
        %v505 = vand.u32 %v504, 4294901760
        %v506 = vsub.f32 %v504, %v505
        %v507 = vand.u32 %v506, 4294901760
        %508 = vmatpush.msra.mxu0 %v507
        %v509 = vand.u32 %v313, 4294901760
        %v510 = vsub.f32 %v313, %v509
        %v511 = vand.u32 %v510, 4294901760
        %v512 = vsub.f32 %v510, %v511
        %v513 = vand.u32 %v512, 4294901760
        %514 = vmatpush.msra.mxu0 %v513
        %v515 = vand.u32 %v312, 4294901760
        %v516 = vsub.f32 %v312, %v515
        %v517 = vand.u32 %v516, 4294901760
        %v518 = vsub.f32 %v516, %v517
        %v519 = vand.u32 %v518, 4294901760
        %520 = vmatpush.msra.mxu0 %v519
        %v521 = vand.u32 %v311, 4294901760
        %v522 = vsub.f32 %v311, %v521
        %v523 = vand.u32 %v522, 4294901760
        %v524 = vsub.f32 %v522, %v523
        %v525 = vand.u32 %v524, 4294901760
        %526 = vmatpush.msra.mxu0 %v525
        %v527 = vand.u32 %v310, 4294901760
        %v528 = vsub.f32 %v310, %v527
        %v529 = vand.u32 %v528, 4294901760
        %v530 = vsub.f32 %v528, %v529
        %v531 = vand.u32 %v530, 4294901760
        %532 = vmatpush.msra.mxu0 %v531
        %v533 = vand.u32 %v309, 4294901760
        %v534 = vsub.f32 %v309, %v533
        %v535 = vand.u32 %v534, 4294901760
        %v536 = vsub.f32 %v534, %v535
        %v537 = vand.u32 %v536, 4294901760
        %538 = vmatpush.msra.mxu0 %v537
        %v539 = vand.u32 %v308, 4294901760
        %v540 = vsub.f32 %v308, %v539
        %v541 = vand.u32 %v540, 4294901760
        %v542 = vsub.f32 %v540, %v541
        %v543 = vand.u32 %v542, 4294901760
        %544 = vmatpush.msra.mxu0 %v543
        %v545 = vand.u32 %v307, 4294901760
        %v546 = vsub.f32 %v307, %v545
        %v547 = vand.u32 %v546, 4294901760
        %v548 = vsub.f32 %v546, %v547
        %v549 = vand.u32 %v548, 4294901760
        %550 = vmatpush.msra.mxu0 %v549
        %v551 = vand.u32 %v306, 4294901760
        %v552 = vsub.f32 %v306, %v551
        %v553 = vand.u32 %v552, 4294901760
        %v554 = vsub.f32 %v552, %v553
        %v555 = vand.u32 %v554, 4294901760
        %556 = vmatpush.msra.mxu0 %v555
        %v557 = vand.u32 %v305, 4294901760
        %v558 = vsub.f32 %v305, %v557
        %v559 = vand.u32 %v558, 4294901760
        %v560 = vsub.f32 %v558, %v559
        %v561 = vand.u32 %v560, 4294901760
        %562 = vmatpush.msra.mxu0 %v561
        %v563 = vand.u32 %v362, 4294901760
        %564 = vmatmul.f32.gmra.mxu0 %v563
        %v565 = vpop.f32.mrf.mxu0
        %v566 = vadd.f32 %v409, %v565
        %v567 = vand.u32 %v363, 4294901760
        %568 = vmatmul.f32.gmra.mxu0 %v567
        %v569 = vpop.f32.mrf.mxu0
        %v570 = vadd.f32 %v417, %v569
        %v571 = vand.u32 %v364, 4294901760
        %572 = vmatmul.f32.gmra.mxu0 %v571
        %v573 = vpop.f32.mrf.mxu0
        %v574 = vadd.f32 %v425, %v573
        %v575 = vand.u32 %v365, 4294901760
        %576 = vmatmul.f32.gmra.mxu0 %v575
        %v577 = vpop.f32.mrf.mxu0
        %v578 = vadd.f32 %v433, %v577
        %v579 = vand.u32 %v366, 4294901760
        %580 = vmatmul.f32.gmra.mxu0 %v579
        %v581 = vpop.f32.mrf.mxu0
        %v582 = vadd.f32 %v441, %v581
        %v583 = vand.u32 %v367, 4294901760
        %584 = vmatmul.f32.gmra.mxu0 %v583
        %v585 = vpop.f32.mrf.mxu0
        %v586 = vadd.f32 %v449, %v585
        %v587 = vand.u32 %v368, 4294901760
        %588 = vmatmul.f32.gmra.mxu0 %v587
        %v589 = vpop.f32.mrf.mxu0
        %v590 = vadd.f32 %v457, %v589
        %v591 = vand.u32 %v369, 4294901760
        %592 = vmatmul.f32.gmra.mxu0 %v591
        %v593 = vpop.f32.mrf.mxu0
        %v594 = vadd.f32 %v465, %v593
        %595 = vdwg.mxu0
        %v596 = vand.u32 %v320, 4294901760
        %v597 = vsub.f32 %v320, %v596
        %598 = vmatpush.msra.mxu0 %v597
        %v599 = vand.u32 %v319, 4294901760
        %v600 = vsub.f32 %v319, %v599
        %601 = vmatpush.msra.mxu0 %v600
        %v602 = vand.u32 %v318, 4294901760
        %v603 = vsub.f32 %v318, %v602
        %604 = vmatpush.msra.mxu0 %v603
        %v605 = vand.u32 %v317, 4294901760
        %v606 = vsub.f32 %v317, %v605
        %607 = vmatpush.msra.mxu0 %v606
        %v608 = vand.u32 %v316, 4294901760
        %v609 = vsub.f32 %v316, %v608
        %610 = vmatpush.msra.mxu0 %v609
        %v611 = vand.u32 %v315, 4294901760
        %v612 = vsub.f32 %v315, %v611
        %613 = vmatpush.msra.mxu0 %v612
        %v614 = vand.u32 %v314, 4294901760
        %v615 = vsub.f32 %v314, %v614
        %616 = vmatpush.msra.mxu0 %v615
        %v617 = vand.u32 %v313, 4294901760
        %v618 = vsub.f32 %v313, %v617
        %619 = vmatpush.msra.mxu0 %v618
        %v620 = vand.u32 %v312, 4294901760
        %v621 = vsub.f32 %v312, %v620
        %622 = vmatpush.msra.mxu0 %v621
        %v623 = vand.u32 %v311, 4294901760
        %v624 = vsub.f32 %v311, %v623
        %625 = vmatpush.msra.mxu0 %v624
        %v626 = vand.u32 %v310, 4294901760
        %v627 = vsub.f32 %v310, %v626
        %628 = vmatpush.msra.mxu0 %v627
        %v629 = vand.u32 %v309, 4294901760
        %v630 = vsub.f32 %v309, %v629
        %631 = vmatpush.msra.mxu0 %v630
        %v632 = vand.u32 %v308, 4294901760
        %v633 = vsub.f32 %v308, %v632
        %634 = vmatpush.msra.mxu0 %v633
        %v635 = vand.u32 %v307, 4294901760
        %v636 = vsub.f32 %v307, %v635
        %637 = vmatpush.msra.mxu0 %v636
        %v638 = vand.u32 %v306, 4294901760
        %v639 = vsub.f32 %v306, %v638
        %640 = vmatpush.msra.mxu0 %v639
        %v641 = vand.u32 %v305, 4294901760
        %v642 = vsub.f32 %v305, %v641
        %643 = vmatpush.msra.mxu0 %v642
        %v644 = vand.u32 %v362, 4294901760
        %v645 = vsub.f32 %v362, %v644
        %646 = vmatmul.f32.gmra.mxu0 %v645
        %v647 = vpop.f32.mrf.mxu0
        %v648 = vadd.f32 %v566, %v647
        %v649 = vand.u32 %v363, 4294901760
        %v650 = vsub.f32 %v363, %v649
        %651 = vmatmul.f32.gmra.mxu0 %v650
        %v652 = vpop.f32.mrf.mxu0
        %v653 = vadd.f32 %v570, %v652
        %v654 = vand.u32 %v364, 4294901760
        %v655 = vsub.f32 %v364, %v654
        %656 = vmatmul.f32.gmra.mxu0 %v655
        %v657 = vpop.f32.mrf.mxu0
        %v658 = vadd.f32 %v574, %v657
        %v659 = vand.u32 %v365, 4294901760
        %v660 = vsub.f32 %v365, %v659
        %661 = vmatmul.f32.gmra.mxu0 %v660
        %v662 = vpop.f32.mrf.mxu0
        %v663 = vadd.f32 %v578, %v662
        %v664 = vand.u32 %v366, 4294901760
        %v665 = vsub.f32 %v366, %v664
        %666 = vmatmul.f32.gmra.mxu0 %v665
        %v667 = vpop.f32.mrf.mxu0
        %v668 = vadd.f32 %v582, %v667
        %v669 = vand.u32 %v367, 4294901760
        %v670 = vsub.f32 %v367, %v669
        %671 = vmatmul.f32.gmra.mxu0 %v670
        %v672 = vpop.f32.mrf.mxu0
        %v673 = vadd.f32 %v586, %v672
        %v674 = vand.u32 %v368, 4294901760
        %v675 = vsub.f32 %v368, %v674
        %676 = vmatmul.f32.gmra.mxu0 %v675
        %v677 = vpop.f32.mrf.mxu0
        %v678 = vadd.f32 %v590, %v677
        %v679 = vand.u32 %v369, 4294901760
        %v680 = vsub.f32 %v369, %v679
        %681 = vmatmul.f32.gmra.mxu0 %v680
        %v682 = vpop.f32.mrf.mxu0
        %v683 = vadd.f32 %v594, %v682
        %684 = vdwg.mxu0
        %v685 = vand.u32 %v320, 4294901760
        %686 = vmatpush.msra.mxu0 %v685
        %v687 = vand.u32 %v319, 4294901760
        %688 = vmatpush.msra.mxu0 %v687
        %v689 = vand.u32 %v318, 4294901760
        %690 = vmatpush.msra.mxu0 %v689
        %v691 = vand.u32 %v317, 4294901760
        %692 = vmatpush.msra.mxu0 %v691
        %v693 = vand.u32 %v316, 4294901760
        %694 = vmatpush.msra.mxu0 %v693
        %v695 = vand.u32 %v315, 4294901760
        %696 = vmatpush.msra.mxu0 %v695
        %v697 = vand.u32 %v314, 4294901760
        %698 = vmatpush.msra.mxu0 %v697
        %v699 = vand.u32 %v313, 4294901760
        %700 = vmatpush.msra.mxu0 %v699
        %v701 = vand.u32 %v312, 4294901760
        %702 = vmatpush.msra.mxu0 %v701
        %v703 = vand.u32 %v311, 4294901760
        %704 = vmatpush.msra.mxu0 %v703
        %v705 = vand.u32 %v310, 4294901760
        %706 = vmatpush.msra.mxu0 %v705
        %v707 = vand.u32 %v309, 4294901760
        %708 = vmatpush.msra.mxu0 %v707
        %v709 = vand.u32 %v308, 4294901760
        %710 = vmatpush.msra.mxu0 %v709
        %v711 = vand.u32 %v307, 4294901760
        %712 = vmatpush.msra.mxu0 %v711
        %v713 = vand.u32 %v306, 4294901760
        %714 = vmatpush.msra.mxu0 %v713
        %v715 = vand.u32 %v305, 4294901760
        %716 = vmatpush.msra.mxu0 %v715
        %v717 = vand.u32 %v362, 4294901760
        %v718 = vsub.f32 %v362, %v717
        %v719 = vand.u32 %v718, 4294901760
        %720 = vmatmul.f32.gmra.mxu0 %v719
        %v721 = vpop.f32.mrf.mxu0
        %v722 = vadd.f32 %v648, %v721
        %v723 = vand.u32 %v363, 4294901760
        %v724 = vsub.f32 %v363, %v723
        %v725 = vand.u32 %v724, 4294901760
        %726 = vmatmul.f32.gmra.mxu0 %v725
        %v727 = vpop.f32.mrf.mxu0
        %v728 = vadd.f32 %v653, %v727
        %v729 = vand.u32 %v364, 4294901760
        %v730 = vsub.f32 %v364, %v729
        %v731 = vand.u32 %v730, 4294901760
        %732 = vmatmul.f32.gmra.mxu0 %v731
        %v733 = vpop.f32.mrf.mxu0
        %v734 = vadd.f32 %v658, %v733
        %v735 = vand.u32 %v365, 4294901760
        %v736 = vsub.f32 %v365, %v735
        %v737 = vand.u32 %v736, 4294901760
        %738 = vmatmul.f32.gmra.mxu0 %v737
        %v739 = vpop.f32.mrf.mxu0
        %v740 = vadd.f32 %v663, %v739
        %v741 = vand.u32 %v366, 4294901760
        %v742 = vsub.f32 %v366, %v741
        %v743 = vand.u32 %v742, 4294901760
        %744 = vmatmul.f32.gmra.mxu0 %v743
        %v745 = vpop.f32.mrf.mxu0
        %v746 = vadd.f32 %v668, %v745
        %v747 = vand.u32 %v367, 4294901760
        %v748 = vsub.f32 %v367, %v747
        %v749 = vand.u32 %v748, 4294901760
        %750 = vmatmul.f32.gmra.mxu0 %v749
        %v751 = vpop.f32.mrf.mxu0
        %v752 = vadd.f32 %v673, %v751
        %v753 = vand.u32 %v368, 4294901760
        %v754 = vsub.f32 %v368, %v753
        %v755 = vand.u32 %v754, 4294901760
        %756 = vmatmul.f32.gmra.mxu0 %v755
        %v757 = vpop.f32.mrf.mxu0
        %v758 = vadd.f32 %v678, %v757
        %v759 = vand.u32 %v369, 4294901760
        %v760 = vsub.f32 %v369, %v759
        %v761 = vand.u32 %v760, 4294901760
        %762 = vmatmul.f32.gmra.mxu0 %v761
        %v763 = vpop.f32.mrf.mxu0
        %v764 = vadd.f32 %v683, %v763
        %765 = vdwg.mxu0
        %v766 = vand.u32 %v320, 4294901760
        %v767 = vsub.f32 %v320, %v766
        %v768 = vand.u32 %v767, 4294901760
        %769 = vmatpush.msra.mxu0 %v768
        %v770 = vand.u32 %v319, 4294901760
        %v771 = vsub.f32 %v319, %v770
        %v772 = vand.u32 %v771, 4294901760
        %773 = vmatpush.msra.mxu0 %v772
        %v774 = vand.u32 %v318, 4294901760
        %v775 = vsub.f32 %v318, %v774
        %v776 = vand.u32 %v775, 4294901760
        %777 = vmatpush.msra.mxu0 %v776
        %v778 = vand.u32 %v317, 4294901760
        %v779 = vsub.f32 %v317, %v778
        %v780 = vand.u32 %v779, 4294901760
        %781 = vmatpush.msra.mxu0 %v780
        %v782 = vand.u32 %v316, 4294901760
        %v783 = vsub.f32 %v316, %v782
        %v784 = vand.u32 %v783, 4294901760
        %785 = vmatpush.msra.mxu0 %v784
        %v786 = vand.u32 %v315, 4294901760
        %v787 = vsub.f32 %v315, %v786
        %v788 = vand.u32 %v787, 4294901760
        %789 = vmatpush.msra.mxu0 %v788
        %v790 = vand.u32 %v314, 4294901760
        %v791 = vsub.f32 %v314, %v790
        %v792 = vand.u32 %v791, 4294901760
        %793 = vmatpush.msra.mxu0 %v792
        %v794 = vand.u32 %v313, 4294901760
        %v795 = vsub.f32 %v313, %v794
        %v796 = vand.u32 %v795, 4294901760
        %797 = vmatpush.msra.mxu0 %v796
        %v798 = vand.u32 %v312, 4294901760
        %v799 = vsub.f32 %v312, %v798
        %v800 = vand.u32 %v799, 4294901760
        %801 = vmatpush.msra.mxu0 %v800
        %v802 = vand.u32 %v311, 4294901760
        %v803 = vsub.f32 %v311, %v802
        %v804 = vand.u32 %v803, 4294901760
        %805 = vmatpush.msra.mxu0 %v804
        %v806 = vand.u32 %v310, 4294901760
        %v807 = vsub.f32 %v310, %v806
        %v808 = vand.u32 %v807, 4294901760
        %809 = vmatpush.msra.mxu0 %v808
        %v810 = vand.u32 %v309, 4294901760
        %v811 = vsub.f32 %v309, %v810
        %v812 = vand.u32 %v811, 4294901760
        %813 = vmatpush.msra.mxu0 %v812
        %v814 = vand.u32 %v308, 4294901760
        %v815 = vsub.f32 %v308, %v814
        %v816 = vand.u32 %v815, 4294901760
        %817 = vmatpush.msra.mxu0 %v816
        %v818 = vand.u32 %v307, 4294901760
        %v819 = vsub.f32 %v307, %v818
        %v820 = vand.u32 %v819, 4294901760
        %821 = vmatpush.msra.mxu0 %v820
        %v822 = vand.u32 %v306, 4294901760
        %v823 = vsub.f32 %v306, %v822
        %v824 = vand.u32 %v823, 4294901760
        %825 = vmatpush.msra.mxu0 %v824
        %v826 = vand.u32 %v305, 4294901760
        %v827 = vsub.f32 %v305, %v826
        %v828 = vand.u32 %v827, 4294901760
        %829 = vmatpush.msra.mxu0 %v828
        %v830 = vand.u32 %v362, 4294901760
        %831 = vmatmul.f32.gmra.mxu0 %v830
        %v832 = vpop.f32.mrf.mxu0
        %v833 = vadd.f32 %v722, %v832
        %v834 = vand.u32 %v363, 4294901760
        %835 = vmatmul.f32.gmra.mxu0 %v834
        %v836 = vpop.f32.mrf.mxu0
        %v837 = vadd.f32 %v728, %v836
        %v838 = vand.u32 %v364, 4294901760
        %839 = vmatmul.f32.gmra.mxu0 %v838
        %v840 = vpop.f32.mrf.mxu0
        %v841 = vadd.f32 %v734, %v840
        %v842 = vand.u32 %v365, 4294901760
        %843 = vmatmul.f32.gmra.mxu0 %v842
        %v844 = vpop.f32.mrf.mxu0
        %v845 = vadd.f32 %v740, %v844
        %v846 = vand.u32 %v366, 4294901760
        %847 = vmatmul.f32.gmra.mxu0 %v846
        %v848 = vpop.f32.mrf.mxu0
        %v849 = vadd.f32 %v746, %v848
        %v850 = vand.u32 %v367, 4294901760
        %851 = vmatmul.f32.gmra.mxu0 %v850
        %v852 = vpop.f32.mrf.mxu0
        %v853 = vadd.f32 %v752, %v852
        %v854 = vand.u32 %v368, 4294901760
        %855 = vmatmul.f32.gmra.mxu0 %v854
        %v856 = vpop.f32.mrf.mxu0
        %v857 = vadd.f32 %v758, %v856
        %v858 = vand.u32 %v369, 4294901760
        %859 = vmatmul.f32.gmra.mxu0 %v858
        %v860 = vpop.f32.mrf.mxu0
        %v861 = vadd.f32 %v764, %v860
        %862 = vdwg.mxu0
        %v863 = vand.u32 %v320, 4294901760
        %864 = vmatpush.msra.mxu0 %v863
        %v865 = vand.u32 %v319, 4294901760
        %866 = vmatpush.msra.mxu0 %v865
        %v867 = vand.u32 %v318, 4294901760
        %868 = vmatpush.msra.mxu0 %v867
        %v869 = vand.u32 %v317, 4294901760
        %870 = vmatpush.msra.mxu0 %v869
        %v871 = vand.u32 %v316, 4294901760
        %872 = vmatpush.msra.mxu0 %v871
        %v873 = vand.u32 %v315, 4294901760
        %874 = vmatpush.msra.mxu0 %v873
        %v875 = vand.u32 %v314, 4294901760
        %876 = vmatpush.msra.mxu0 %v875
        %v877 = vand.u32 %v313, 4294901760
        %878 = vmatpush.msra.mxu0 %v877
        %v879 = vand.u32 %v312, 4294901760
        %880 = vmatpush.msra.mxu0 %v879
        %v881 = vand.u32 %v311, 4294901760
        %882 = vmatpush.msra.mxu0 %v881
        %v883 = vand.u32 %v310, 4294901760
        %884 = vmatpush.msra.mxu0 %v883
        %v885 = vand.u32 %v309, 4294901760
        %886 = vmatpush.msra.mxu0 %v885
        %v887 = vand.u32 %v308, 4294901760
        %888 = vmatpush.msra.mxu0 %v887
        %v889 = vand.u32 %v307, 4294901760
        %890 = vmatpush.msra.mxu0 %v889
        %v891 = vand.u32 %v306, 4294901760
        %892 = vmatpush.msra.mxu0 %v891
        %v893 = vand.u32 %v305, 4294901760
        %894 = vmatpush.msra.mxu0 %v893
        %v895 = vand.u32 %v362, 4294901760
        %896 = vmatmul.f32.gmra.mxu0 %v895
        %v897 = vpop.f32.mrf.mxu0
        %v898 = vadd.f32 %v833, %v897
        %v899 = vand.u32 %v363, 4294901760
        %900 = vmatmul.f32.gmra.mxu0 %v899
        %v901 = vpop.f32.mrf.mxu0
        %v902 = vadd.f32 %v837, %v901
        %v903 = vand.u32 %v364, 4294901760
        %904 = vmatmul.f32.gmra.mxu0 %v903
        %v905 = vpop.f32.mrf.mxu0
        %v906 = vadd.f32 %v841, %v905
        %v907 = vand.u32 %v365, 4294901760
        %908 = vmatmul.f32.gmra.mxu0 %v907
        %v909 = vpop.f32.mrf.mxu0
        %v910 = vadd.f32 %v845, %v909
        %v911 = vand.u32 %v366, 4294901760
        %912 = vmatmul.f32.gmra.mxu0 %v911
        %v913 = vpop.f32.mrf.mxu0
        %v914 = vadd.f32 %v849, %v913
        %v915 = vand.u32 %v367, 4294901760
        %916 = vmatmul.f32.gmra.mxu0 %v915
        %v917 = vpop.f32.mrf.mxu0
        %v918 = vadd.f32 %v853, %v917
        %v919 = vand.u32 %v368, 4294901760
        %920 = vmatmul.f32.gmra.mxu0 %v919
        %v921 = vpop.f32.mrf.mxu0
        %v922 = vadd.f32 %v857, %v921
        %v923 = vand.u32 %v369, 4294901760
        %924 = vmatmul.f32.gmra.mxu0 %v923
        %v925 = vpop.f32.mrf.mxu0
        %v926 = vadd.f32 %v861, %v925
        %927 = vdwg.mxu0
        %vm928 = vcmask 523264
        %v930 = vsel %vm928, %v297, 0
        %v933 = vsel %vm928, %v298, 0
        %v936 = vsel %vm928, %v299, 0
        %v939 = vsel %vm928, %v300, 0
        %v942 = vsel %vm928, %v301, 0
        %v945 = vsel %vm928, %v302, 0
        %v948 = vsel %vm928, %v303, 0
        %v951 = vsel %vm928, %v304, 0
        %953 = vmatpush.msra.mxu0 0.0
        %954 = vmatpush.msra.mxu0 0.0
        %955 = vmatpush.msra.mxu0 0.0
        %956 = vmatpush.msra.mxu0 0.0
        %957 = vmatpush.msra.mxu0 0.0
        %958 = vmatpush.msra.mxu0 0.0
        %959 = vmatpush.msra.mxu0 0.0
        %960 = vmatpush.msra.mxu0 0.0
        %v961 = vand.u32 %v369, 4294901760
        %962 = vmatpush.msra.mxu0 %v961
        %v963 = vand.u32 %v368, 4294901760
        %964 = vmatpush.msra.mxu0 %v963
        %v965 = vand.u32 %v367, 4294901760
        %966 = vmatpush.msra.mxu0 %v965
        %v967 = vand.u32 %v366, 4294901760
        %968 = vmatpush.msra.mxu0 %v967
        %v969 = vand.u32 %v365, 4294901760
        %970 = vmatpush.msra.mxu0 %v969
        %v971 = vand.u32 %v364, 4294901760
        %972 = vmatpush.msra.mxu0 %v971
        %v973 = vand.u32 %v363, 4294901760
        %974 = vmatpush.msra.mxu0 %v973
        %v975 = vand.u32 %v362, 4294901760
        %976 = vmatpush.msra.mxu0 %v975
        %v977 = vand.u32 %v930, 4294901760
        %v978 = vsub.f32 %v930, %v977
        %v979 = vand.u32 %v978, 4294901760
        %v980 = vsub.f32 %v978, %v979
        %v981 = vand.u32 %v980, 4294901760
        %982 = vmatmul.f32.gmra.mxu0 %v981
        %v983 = vpop.f32.mrf.mxu0
        %v984 = vadd.f32 %v898, %v983
        %v985 = vand.u32 %v933, 4294901760
        %v986 = vsub.f32 %v933, %v985
        %v987 = vand.u32 %v986, 4294901760
        %v988 = vsub.f32 %v986, %v987
        %v989 = vand.u32 %v988, 4294901760
        %990 = vmatmul.f32.gmra.mxu0 %v989
        %v991 = vpop.f32.mrf.mxu0
        %v992 = vadd.f32 %v902, %v991
        %v993 = vand.u32 %v936, 4294901760
        %v994 = vsub.f32 %v936, %v993
        %v995 = vand.u32 %v994, 4294901760
        %v996 = vsub.f32 %v994, %v995
        %v997 = vand.u32 %v996, 4294901760
        %998 = vmatmul.f32.gmra.mxu0 %v997
        %v999 = vpop.f32.mrf.mxu0
        %v1000 = vadd.f32 %v906, %v999
        %v1001 = vand.u32 %v939, 4294901760
        %v1002 = vsub.f32 %v939, %v1001
        %v1003 = vand.u32 %v1002, 4294901760
        %v1004 = vsub.f32 %v1002, %v1003
        %v1005 = vand.u32 %v1004, 4294901760
        %1006 = vmatmul.f32.gmra.mxu0 %v1005
        %v1007 = vpop.f32.mrf.mxu0
        %v1008 = vadd.f32 %v910, %v1007
        %v1009 = vand.u32 %v942, 4294901760
        %v1010 = vsub.f32 %v942, %v1009
        %v1011 = vand.u32 %v1010, 4294901760
        %v1012 = vsub.f32 %v1010, %v1011
        %v1013 = vand.u32 %v1012, 4294901760
        %1014 = vmatmul.f32.gmra.mxu0 %v1013
        %v1015 = vpop.f32.mrf.mxu0
        %v1016 = vadd.f32 %v914, %v1015
        %v1017 = vand.u32 %v945, 4294901760
        %v1018 = vsub.f32 %v945, %v1017
        %v1019 = vand.u32 %v1018, 4294901760
        %v1020 = vsub.f32 %v1018, %v1019
        %v1021 = vand.u32 %v1020, 4294901760
        %1022 = vmatmul.f32.gmra.mxu0 %v1021
        %v1023 = vpop.f32.mrf.mxu0
        %v1024 = vadd.f32 %v918, %v1023
        %v1025 = vand.u32 %v948, 4294901760
        %v1026 = vsub.f32 %v948, %v1025
        %v1027 = vand.u32 %v1026, 4294901760
        %v1028 = vsub.f32 %v1026, %v1027
        %v1029 = vand.u32 %v1028, 4294901760
        %1030 = vmatmul.f32.gmra.mxu0 %v1029
        %v1031 = vpop.f32.mrf.mxu0
        %v1032 = vadd.f32 %v922, %v1031
        %v1033 = vand.u32 %v951, 4294901760
        %v1034 = vsub.f32 %v951, %v1033
        %v1035 = vand.u32 %v1034, 4294901760
        %v1036 = vsub.f32 %v1034, %v1035
        %v1037 = vand.u32 %v1036, 4294901760
        %1038 = vmatmul.f32.gmra.mxu0 %v1037
        %v1039 = vpop.f32.mrf.mxu0
        %v1040 = vadd.f32 %v926, %v1039
        %1041 = vdwg.mxu0
        %1042 = vmatpush.msra.mxu0 0.0
        %1043 = vmatpush.msra.mxu0 0.0
        %1044 = vmatpush.msra.mxu0 0.0
        %1045 = vmatpush.msra.mxu0 0.0
        %1046 = vmatpush.msra.mxu0 0.0
        %1047 = vmatpush.msra.mxu0 0.0
        %1048 = vmatpush.msra.mxu0 0.0
        %1049 = vmatpush.msra.mxu0 0.0
        %v1050 = vand.u32 %v369, 4294901760
        %v1051 = vsub.f32 %v369, %v1050
        %v1052 = vand.u32 %v1051, 4294901760
        %v1053 = vsub.f32 %v1051, %v1052
        %v1054 = vand.u32 %v1053, 4294901760
        %1055 = vmatpush.msra.mxu0 %v1054
        %v1056 = vand.u32 %v368, 4294901760
        %v1057 = vsub.f32 %v368, %v1056
        %v1058 = vand.u32 %v1057, 4294901760
        %v1059 = vsub.f32 %v1057, %v1058
        %v1060 = vand.u32 %v1059, 4294901760
        %1061 = vmatpush.msra.mxu0 %v1060
        %v1062 = vand.u32 %v367, 4294901760
        %v1063 = vsub.f32 %v367, %v1062
        %v1064 = vand.u32 %v1063, 4294901760
        %v1065 = vsub.f32 %v1063, %v1064
        %v1066 = vand.u32 %v1065, 4294901760
        %1067 = vmatpush.msra.mxu0 %v1066
        %v1068 = vand.u32 %v366, 4294901760
        %v1069 = vsub.f32 %v366, %v1068
        %v1070 = vand.u32 %v1069, 4294901760
        %v1071 = vsub.f32 %v1069, %v1070
        %v1072 = vand.u32 %v1071, 4294901760
        %1073 = vmatpush.msra.mxu0 %v1072
        %v1074 = vand.u32 %v365, 4294901760
        %v1075 = vsub.f32 %v365, %v1074
        %v1076 = vand.u32 %v1075, 4294901760
        %v1077 = vsub.f32 %v1075, %v1076
        %v1078 = vand.u32 %v1077, 4294901760
        %1079 = vmatpush.msra.mxu0 %v1078
        %v1080 = vand.u32 %v364, 4294901760
        %v1081 = vsub.f32 %v364, %v1080
        %v1082 = vand.u32 %v1081, 4294901760
        %v1083 = vsub.f32 %v1081, %v1082
        %v1084 = vand.u32 %v1083, 4294901760
        %1085 = vmatpush.msra.mxu0 %v1084
        %v1086 = vand.u32 %v363, 4294901760
        %v1087 = vsub.f32 %v363, %v1086
        %v1088 = vand.u32 %v1087, 4294901760
        %v1089 = vsub.f32 %v1087, %v1088
        %v1090 = vand.u32 %v1089, 4294901760
        %1091 = vmatpush.msra.mxu0 %v1090
        %v1092 = vand.u32 %v362, 4294901760
        %v1093 = vsub.f32 %v362, %v1092
        %v1094 = vand.u32 %v1093, 4294901760
        %v1095 = vsub.f32 %v1093, %v1094
        %v1096 = vand.u32 %v1095, 4294901760
        %1097 = vmatpush.msra.mxu0 %v1096
        %v1098 = vand.u32 %v930, 4294901760
        %1099 = vmatmul.f32.gmra.mxu0 %v1098
        %v1100 = vpop.f32.mrf.mxu0
        %v1101 = vadd.f32 %v984, %v1100
        %v1102 = vand.u32 %v933, 4294901760
        %1103 = vmatmul.f32.gmra.mxu0 %v1102
        %v1104 = vpop.f32.mrf.mxu0
        %v1105 = vadd.f32 %v992, %v1104
        %v1106 = vand.u32 %v936, 4294901760
        %1107 = vmatmul.f32.gmra.mxu0 %v1106
        %v1108 = vpop.f32.mrf.mxu0
        %v1109 = vadd.f32 %v1000, %v1108
        %v1110 = vand.u32 %v939, 4294901760
        %1111 = vmatmul.f32.gmra.mxu0 %v1110
        %v1112 = vpop.f32.mrf.mxu0
        %v1113 = vadd.f32 %v1008, %v1112
        %v1114 = vand.u32 %v942, 4294901760
        %1115 = vmatmul.f32.gmra.mxu0 %v1114
        %v1116 = vpop.f32.mrf.mxu0
        %v1117 = vadd.f32 %v1016, %v1116
        %v1118 = vand.u32 %v945, 4294901760
        %1119 = vmatmul.f32.gmra.mxu0 %v1118
        %v1120 = vpop.f32.mrf.mxu0
        %v1121 = vadd.f32 %v1024, %v1120
        %v1122 = vand.u32 %v948, 4294901760
        %1123 = vmatmul.f32.gmra.mxu0 %v1122
        %v1124 = vpop.f32.mrf.mxu0
        %v1125 = vadd.f32 %v1032, %v1124
        %v1126 = vand.u32 %v951, 4294901760
        %1127 = vmatmul.f32.gmra.mxu0 %v1126
        %v1128 = vpop.f32.mrf.mxu0
        %v1129 = vadd.f32 %v1040, %v1128
        %1130 = vdwg.mxu0
        %1131 = vmatpush.msra.mxu0 0.0
        %1132 = vmatpush.msra.mxu0 0.0
        %1133 = vmatpush.msra.mxu0 0.0
        %1134 = vmatpush.msra.mxu0 0.0
        %1135 = vmatpush.msra.mxu0 0.0
        %1136 = vmatpush.msra.mxu0 0.0
        %1137 = vmatpush.msra.mxu0 0.0
        %1138 = vmatpush.msra.mxu0 0.0
        %v1139 = vand.u32 %v369, 4294901760
        %v1140 = vsub.f32 %v369, %v1139
        %1141 = vmatpush.msra.mxu0 %v1140
        %v1142 = vand.u32 %v368, 4294901760
        %v1143 = vsub.f32 %v368, %v1142
        %1144 = vmatpush.msra.mxu0 %v1143
        %v1145 = vand.u32 %v367, 4294901760
        %v1146 = vsub.f32 %v367, %v1145
        %1147 = vmatpush.msra.mxu0 %v1146
        %v1148 = vand.u32 %v366, 4294901760
        %v1149 = vsub.f32 %v366, %v1148
        %1150 = vmatpush.msra.mxu0 %v1149
        %v1151 = vand.u32 %v365, 4294901760
        %v1152 = vsub.f32 %v365, %v1151
        %1153 = vmatpush.msra.mxu0 %v1152
        %v1154 = vand.u32 %v364, 4294901760
        %v1155 = vsub.f32 %v364, %v1154
        %1156 = vmatpush.msra.mxu0 %v1155
        %v1157 = vand.u32 %v363, 4294901760
        %v1158 = vsub.f32 %v363, %v1157
        %1159 = vmatpush.msra.mxu0 %v1158
        %v1160 = vand.u32 %v362, 4294901760
        %v1161 = vsub.f32 %v362, %v1160
        %1162 = vmatpush.msra.mxu0 %v1161
        %v1163 = vand.u32 %v930, 4294901760
        %v1164 = vsub.f32 %v930, %v1163
        %1165 = vmatmul.f32.gmra.mxu0 %v1164
        %v1166 = vpop.f32.mrf.mxu0
        %v1167 = vadd.f32 %v1101, %v1166
        %v1168 = vand.u32 %v933, 4294901760
        %v1169 = vsub.f32 %v933, %v1168
        %1170 = vmatmul.f32.gmra.mxu0 %v1169
        %v1171 = vpop.f32.mrf.mxu0
        %v1172 = vadd.f32 %v1105, %v1171
        %v1173 = vand.u32 %v936, 4294901760
        %v1174 = vsub.f32 %v936, %v1173
        %1175 = vmatmul.f32.gmra.mxu0 %v1174
        %v1176 = vpop.f32.mrf.mxu0
        %v1177 = vadd.f32 %v1109, %v1176
        %v1178 = vand.u32 %v939, 4294901760
        %v1179 = vsub.f32 %v939, %v1178
        %1180 = vmatmul.f32.gmra.mxu0 %v1179
        %v1181 = vpop.f32.mrf.mxu0
        %v1182 = vadd.f32 %v1113, %v1181
        %v1183 = vand.u32 %v942, 4294901760
        %v1184 = vsub.f32 %v942, %v1183
        %1185 = vmatmul.f32.gmra.mxu0 %v1184
        %v1186 = vpop.f32.mrf.mxu0
        %v1187 = vadd.f32 %v1117, %v1186
        %v1188 = vand.u32 %v945, 4294901760
        %v1189 = vsub.f32 %v945, %v1188
        %1190 = vmatmul.f32.gmra.mxu0 %v1189
        %v1191 = vpop.f32.mrf.mxu0
        %v1192 = vadd.f32 %v1121, %v1191
        %v1193 = vand.u32 %v948, 4294901760
        %v1194 = vsub.f32 %v948, %v1193
        %1195 = vmatmul.f32.gmra.mxu0 %v1194
        %v1196 = vpop.f32.mrf.mxu0
        %v1197 = vadd.f32 %v1125, %v1196
        %v1198 = vand.u32 %v951, 4294901760
        %v1199 = vsub.f32 %v951, %v1198
        %1200 = vmatmul.f32.gmra.mxu0 %v1199
        %v1201 = vpop.f32.mrf.mxu0
        %v1202 = vadd.f32 %v1129, %v1201
        %1203 = vdwg.mxu0
        %1204 = vmatpush.msra.mxu0 0.0
        %1205 = vmatpush.msra.mxu0 0.0
        %1206 = vmatpush.msra.mxu0 0.0
        %1207 = vmatpush.msra.mxu0 0.0
        %1208 = vmatpush.msra.mxu0 0.0
        %1209 = vmatpush.msra.mxu0 0.0
        %1210 = vmatpush.msra.mxu0 0.0
        %1211 = vmatpush.msra.mxu0 0.0
        %v1212 = vand.u32 %v369, 4294901760
        %1213 = vmatpush.msra.mxu0 %v1212
        %v1214 = vand.u32 %v368, 4294901760
        %1215 = vmatpush.msra.mxu0 %v1214
        %v1216 = vand.u32 %v367, 4294901760
        %1217 = vmatpush.msra.mxu0 %v1216
        %v1218 = vand.u32 %v366, 4294901760
        %1219 = vmatpush.msra.mxu0 %v1218
        %v1220 = vand.u32 %v365, 4294901760
        %1221 = vmatpush.msra.mxu0 %v1220
        %v1222 = vand.u32 %v364, 4294901760
        %1223 = vmatpush.msra.mxu0 %v1222
        %v1224 = vand.u32 %v363, 4294901760
        %1225 = vmatpush.msra.mxu0 %v1224
        %v1226 = vand.u32 %v362, 4294901760
        %1227 = vmatpush.msra.mxu0 %v1226
        %v1228 = vand.u32 %v930, 4294901760
        %v1229 = vsub.f32 %v930, %v1228
        %v1230 = vand.u32 %v1229, 4294901760
        %1231 = vmatmul.f32.gmra.mxu0 %v1230
        %v1232 = vpop.f32.mrf.mxu0
        %v1233 = vadd.f32 %v1167, %v1232
        %v1234 = vand.u32 %v933, 4294901760
        %v1235 = vsub.f32 %v933, %v1234
        %v1236 = vand.u32 %v1235, 4294901760
        %1237 = vmatmul.f32.gmra.mxu0 %v1236
        %v1238 = vpop.f32.mrf.mxu0
        %v1239 = vadd.f32 %v1172, %v1238
        %v1240 = vand.u32 %v936, 4294901760
        %v1241 = vsub.f32 %v936, %v1240
        %v1242 = vand.u32 %v1241, 4294901760
        %1243 = vmatmul.f32.gmra.mxu0 %v1242
        %v1244 = vpop.f32.mrf.mxu0
        %v1245 = vadd.f32 %v1177, %v1244
        %v1246 = vand.u32 %v939, 4294901760
        %v1247 = vsub.f32 %v939, %v1246
        %v1248 = vand.u32 %v1247, 4294901760
        %1249 = vmatmul.f32.gmra.mxu0 %v1248
        %v1250 = vpop.f32.mrf.mxu0
        %v1251 = vadd.f32 %v1182, %v1250
        %v1252 = vand.u32 %v942, 4294901760
        %v1253 = vsub.f32 %v942, %v1252
        %v1254 = vand.u32 %v1253, 4294901760
        %1255 = vmatmul.f32.gmra.mxu0 %v1254
        %v1256 = vpop.f32.mrf.mxu0
        %v1257 = vadd.f32 %v1187, %v1256
        %v1258 = vand.u32 %v945, 4294901760
        %v1259 = vsub.f32 %v945, %v1258
        %v1260 = vand.u32 %v1259, 4294901760
        %1261 = vmatmul.f32.gmra.mxu0 %v1260
        %v1262 = vpop.f32.mrf.mxu0
        %v1263 = vadd.f32 %v1192, %v1262
        %v1264 = vand.u32 %v948, 4294901760
        %v1265 = vsub.f32 %v948, %v1264
        %v1266 = vand.u32 %v1265, 4294901760
        %1267 = vmatmul.f32.gmra.mxu0 %v1266
        %v1268 = vpop.f32.mrf.mxu0
        %v1269 = vadd.f32 %v1197, %v1268
        %v1270 = vand.u32 %v951, 4294901760
        %v1271 = vsub.f32 %v951, %v1270
        %v1272 = vand.u32 %v1271, 4294901760
        %1273 = vmatmul.f32.gmra.mxu0 %v1272
        %v1274 = vpop.f32.mrf.mxu0
        %v1275 = vadd.f32 %v1202, %v1274
        %1276 = vdwg.mxu0
        %1277 = vmatpush.msra.mxu0 0.0
        %1278 = vmatpush.msra.mxu0 0.0
        %1279 = vmatpush.msra.mxu0 0.0
        %1280 = vmatpush.msra.mxu0 0.0
        %1281 = vmatpush.msra.mxu0 0.0
        %1282 = vmatpush.msra.mxu0 0.0
        %1283 = vmatpush.msra.mxu0 0.0
        %1284 = vmatpush.msra.mxu0 0.0
        %v1285 = vand.u32 %v369, 4294901760
        %v1286 = vsub.f32 %v369, %v1285
        %v1287 = vand.u32 %v1286, 4294901760
        %1288 = vmatpush.msra.mxu0 %v1287
        %v1289 = vand.u32 %v368, 4294901760
        %v1290 = vsub.f32 %v368, %v1289
        %v1291 = vand.u32 %v1290, 4294901760
        %1292 = vmatpush.msra.mxu0 %v1291
        %v1293 = vand.u32 %v367, 4294901760
        %v1294 = vsub.f32 %v367, %v1293
        %v1295 = vand.u32 %v1294, 4294901760
        %1296 = vmatpush.msra.mxu0 %v1295
        %v1297 = vand.u32 %v366, 4294901760
        %v1298 = vsub.f32 %v366, %v1297
        %v1299 = vand.u32 %v1298, 4294901760
        %1300 = vmatpush.msra.mxu0 %v1299
        %v1301 = vand.u32 %v365, 4294901760
        %v1302 = vsub.f32 %v365, %v1301
        %v1303 = vand.u32 %v1302, 4294901760
        %1304 = vmatpush.msra.mxu0 %v1303
        %v1305 = vand.u32 %v364, 4294901760
        %v1306 = vsub.f32 %v364, %v1305
        %v1307 = vand.u32 %v1306, 4294901760
        %1308 = vmatpush.msra.mxu0 %v1307
        %v1309 = vand.u32 %v363, 4294901760
        %v1310 = vsub.f32 %v363, %v1309
        %v1311 = vand.u32 %v1310, 4294901760
        %1312 = vmatpush.msra.mxu0 %v1311
        %v1313 = vand.u32 %v362, 4294901760
        %v1314 = vsub.f32 %v362, %v1313
        %v1315 = vand.u32 %v1314, 4294901760
        %1316 = vmatpush.msra.mxu0 %v1315
        %v1317 = vand.u32 %v930, 4294901760
        %1318 = vmatmul.f32.gmra.mxu0 %v1317
        %v1319 = vpop.f32.mrf.mxu0
        %v1320 = vadd.f32 %v1233, %v1319
        %v1321 = vand.u32 %v933, 4294901760
        %1322 = vmatmul.f32.gmra.mxu0 %v1321
        %v1323 = vpop.f32.mrf.mxu0
        %v1324 = vadd.f32 %v1239, %v1323
        %v1325 = vand.u32 %v936, 4294901760
        %1326 = vmatmul.f32.gmra.mxu0 %v1325
        %v1327 = vpop.f32.mrf.mxu0
        %v1328 = vadd.f32 %v1245, %v1327
        %v1329 = vand.u32 %v939, 4294901760
        %1330 = vmatmul.f32.gmra.mxu0 %v1329
        %v1331 = vpop.f32.mrf.mxu0
        %v1332 = vadd.f32 %v1251, %v1331
        %v1333 = vand.u32 %v942, 4294901760
        %1334 = vmatmul.f32.gmra.mxu0 %v1333
        %v1335 = vpop.f32.mrf.mxu0
        %v1336 = vadd.f32 %v1257, %v1335
        %v1337 = vand.u32 %v945, 4294901760
        %1338 = vmatmul.f32.gmra.mxu0 %v1337
        %v1339 = vpop.f32.mrf.mxu0
        %v1340 = vadd.f32 %v1263, %v1339
        %v1341 = vand.u32 %v948, 4294901760
        %1342 = vmatmul.f32.gmra.mxu0 %v1341
        %v1343 = vpop.f32.mrf.mxu0
        %v1344 = vadd.f32 %v1269, %v1343
        %v1345 = vand.u32 %v951, 4294901760
        %1346 = vmatmul.f32.gmra.mxu0 %v1345
        %v1347 = vpop.f32.mrf.mxu0
        %v1348 = vadd.f32 %v1275, %v1347
        %1349 = vdwg.mxu0
        %1350 = vmatpush.msra.mxu0 0.0
        %1351 = vmatpush.msra.mxu0 0.0
        %1352 = vmatpush.msra.mxu0 0.0
        %1353 = vmatpush.msra.mxu0 0.0
        %1354 = vmatpush.msra.mxu0 0.0
        %1355 = vmatpush.msra.mxu0 0.0
        %1356 = vmatpush.msra.mxu0 0.0
        %1357 = vmatpush.msra.mxu0 0.0
        %v1358 = vand.u32 %v369, 4294901760
        %1359 = vmatpush.msra.mxu0 %v1358
        %v1360 = vand.u32 %v368, 4294901760
        %1361 = vmatpush.msra.mxu0 %v1360
        %v1362 = vand.u32 %v367, 4294901760
        %1363 = vmatpush.msra.mxu0 %v1362
        %v1364 = vand.u32 %v366, 4294901760
        %1365 = vmatpush.msra.mxu0 %v1364
        %v1366 = vand.u32 %v365, 4294901760
        %1367 = vmatpush.msra.mxu0 %v1366
        %v1368 = vand.u32 %v364, 4294901760
        %1369 = vmatpush.msra.mxu0 %v1368
        %v1370 = vand.u32 %v363, 4294901760
        %1371 = vmatpush.msra.mxu0 %v1370
        %v1372 = vand.u32 %v362, 4294901760
        %1373 = vmatpush.msra.mxu0 %v1372
        %v1374 = vand.u32 %v930, 4294901760
        %1375 = vmatmul.f32.gmra.mxu0 %v1374
        %v1376 = vpop.f32.mrf.mxu0
        %v1377 = vadd.f32 %v1320, %v1376
        %v1378 = vand.u32 %v933, 4294901760
        %1379 = vmatmul.f32.gmra.mxu0 %v1378
        %v1380 = vpop.f32.mrf.mxu0
        %v1381 = vadd.f32 %v1324, %v1380
        %v1382 = vand.u32 %v936, 4294901760
        %1383 = vmatmul.f32.gmra.mxu0 %v1382
        %v1384 = vpop.f32.mrf.mxu0
        %v1385 = vadd.f32 %v1328, %v1384
        %v1386 = vand.u32 %v939, 4294901760
        %1387 = vmatmul.f32.gmra.mxu0 %v1386
        %v1388 = vpop.f32.mrf.mxu0
        %v1389 = vadd.f32 %v1332, %v1388
        %v1390 = vand.u32 %v942, 4294901760
        %1391 = vmatmul.f32.gmra.mxu0 %v1390
        %v1392 = vpop.f32.mrf.mxu0
        %v1393 = vadd.f32 %v1336, %v1392
        %v1394 = vand.u32 %v945, 4294901760
        %1395 = vmatmul.f32.gmra.mxu0 %v1394
        %v1396 = vpop.f32.mrf.mxu0
        %v1397 = vadd.f32 %v1340, %v1396
        %v1398 = vand.u32 %v948, 4294901760
        %1399 = vmatmul.f32.gmra.mxu0 %v1398
        %v1400 = vpop.f32.mrf.mxu0
        %v1401 = vadd.f32 %v1344, %v1400
        %v1402 = vand.u32 %v951, 4294901760
        %1403 = vmatmul.f32.gmra.mxu0 %v1402
        %v1404 = vpop.f32.mrf.mxu0
        %v1405 = vadd.f32 %v1348, %v1404
        %1406 = vdwg.mxu0
        %v1407 = vld [vmem:[%s241] sm:$0x1]
        %v1409 = vperm.slane %v1407, 0
        %v1411 = vmul.f32 %v346, %v1409
        %v1412 = vmul.f32 %v347, %v1409
        %v1413 = vmul.f32 %v348, %v1409
        %v1414 = vmul.f32 %v349, %v1409
        %v1415 = vmul.f32 %v350, %v1409
        %v1416 = vmul.f32 %v351, %v1409
        %v1417 = vmul.f32 %v352, %v1409
        %v1418 = vmul.f32 %v353, %v1409
        %v1419 = vmul.f32 %v362, 2.0
        %v1420 = vmul.f32 %v363, 2.0
        %v1421 = vmul.f32 %v364, 2.0
        %v1422 = vmul.f32 %v365, 2.0
        %v1423 = vmul.f32 %v366, 2.0
        %v1424 = vmul.f32 %v367, 2.0
        %v1425 = vmul.f32 %v368, 2.0
        %v1426 = vmul.f32 %v369, 2.0
        %v1427 = vsub.f32 %v1419, %v354
        %v1428 = vsub.f32 %v1420, %v355
        %v1429 = vsub.f32 %v1421, %v356
        %v1430 = vsub.f32 %v1422, %v357
        %v1431 = vsub.f32 %v1423, %v358
        %v1432 = vsub.f32 %v1424, %v359
        %v1433 = vsub.f32 %v1425, %v360
        %v1434 = vsub.f32 %v1426, %v361
        %v1435 = vadd.f32 %v1377, %v1411
        %v1436 = vadd.f32 %v1381, %v1412
        %v1437 = vadd.f32 %v1385, %v1413
        %v1438 = vadd.f32 %v1389, %v1414
        %v1439 = vadd.f32 %v1393, %v1415
        %v1440 = vadd.f32 %v1397, %v1416
        %v1441 = vadd.f32 %v1401, %v1417
        %v1442 = vadd.f32 %v1405, %v1418
        %v1443 = vmul.f32 %v289, %v1435
        %v1444 = vmul.f32 %v290, %v1436
        %v1445 = vmul.f32 %v291, %v1437
        %v1446 = vmul.f32 %v292, %v1438
        %v1447 = vmul.f32 %v293, %v1439
        %v1448 = vmul.f32 %v294, %v1440
        %v1449 = vmul.f32 %v295, %v1441
        %v1450 = vmul.f32 %v296, %v1442
        %v1451 = vadd.f32 %v1427, %v1443
        %v1452 = vadd.f32 %v1428, %v1444
        %v1453 = vadd.f32 %v1429, %v1445
        %v1454 = vadd.f32 %v1430, %v1446
        %v1455 = vadd.f32 %v1431, %v1447
        %v1456 = vadd.f32 %v1432, %v1448
        %v1457 = vadd.f32 %v1433, %v1449
        %v1458 = vadd.f32 %v1434, %v1450
        %v1459 = vpack.c.bf16 %v1451, %v1451
        %v1460 = vpack.c.bf16 %v1452, %v1452
        %v1461 = vpack.c.bf16 %v1453, %v1453
        %v1462 = vpack.c.bf16 %v1454, %v1454
        %v1463 = vpack.c.bf16 %v1455, %v1455
        %v1464 = vpack.c.bf16 %v1456, %v1456
        %v1465 = vpack.c.bf16 %v1457, %v1457
        %v1466 = vpack.c.bf16 %v1458, %v1458
        %1467 = vst [vmem:[%s266] sm:$0xf] %v1459
        %1468 = vst [vmem:[%s266 + $0x4] sm:$0xf] %v1460
        %1469 = vst [vmem:[%s266 + $0x8] sm:$0xf] %v1461
        %1470 = vst [vmem:[%s266 + $0xc] sm:$0xf] %v1462
        %1471 = vst [vmem:[%s266 + $0x10] sm:$0xf] %v1463
        %1472 = vst [vmem:[%s266 + $0x14] sm:$0xf] %v1464
        %1473 = vst [vmem:[%s266 + $0x18] sm:$0xf] %v1465
        %1474 = vst [vmem:[%s266 + $0x1c] sm:$0xf] %v1466
        %v1475 = vand.u32 %v320, 4294901760
        %1476 = vmatpush.msra.mxu0 %v1475
        %v1477 = vand.u32 %v319, 4294901760
        %1478 = vmatpush.msra.mxu0 %v1477
        %v1479 = vand.u32 %v318, 4294901760
        %1480 = vmatpush.msra.mxu0 %v1479
        %v1481 = vand.u32 %v317, 4294901760
        %1482 = vmatpush.msra.mxu0 %v1481
        %v1483 = vand.u32 %v316, 4294901760
        %1484 = vmatpush.msra.mxu0 %v1483
        %v1485 = vand.u32 %v315, 4294901760
        %1486 = vmatpush.msra.mxu0 %v1485
        %v1487 = vand.u32 %v314, 4294901760
        %1488 = vmatpush.msra.mxu0 %v1487
        %v1489 = vand.u32 %v313, 4294901760
        %1490 = vmatpush.msra.mxu0 %v1489
        %v1491 = vand.u32 %v312, 4294901760
        %1492 = vmatpush.msra.mxu0 %v1491
        %v1493 = vand.u32 %v311, 4294901760
        %1494 = vmatpush.msra.mxu0 %v1493
        %v1495 = vand.u32 %v310, 4294901760
        %1496 = vmatpush.msra.mxu0 %v1495
        %v1497 = vand.u32 %v309, 4294901760
        %1498 = vmatpush.msra.mxu0 %v1497
        %v1499 = vand.u32 %v308, 4294901760
        %1500 = vmatpush.msra.mxu0 %v1499
        %v1501 = vand.u32 %v307, 4294901760
        %1502 = vmatpush.msra.mxu0 %v1501
        %v1503 = vand.u32 %v306, 4294901760
        %1504 = vmatpush.msra.mxu0 %v1503
        %v1505 = vand.u32 %v305, 4294901760
        %1506 = vmatpush.msra.mxu0 %v1505
        %v1507 = vand.u32 %v1451, 4294901760
        %v1508 = vsub.f32 %v1451, %v1507
        %v1509 = vand.u32 %v1508, 4294901760
        %v1510 = vsub.f32 %v1508, %v1509
        %v1511 = vand.u32 %v1510, 4294901760
        %1512 = vmatmul.f32.gmra.mxu0 %v1511
        %v1513 = vpop.f32.mrf.mxu0
        %v1514 = vadd.f32 0.0, %v1513
        %v1515 = vand.u32 %v1452, 4294901760
        %v1516 = vsub.f32 %v1452, %v1515
        %v1517 = vand.u32 %v1516, 4294901760
        %v1518 = vsub.f32 %v1516, %v1517
        %v1519 = vand.u32 %v1518, 4294901760
        %1520 = vmatmul.f32.gmra.mxu0 %v1519
        %v1521 = vpop.f32.mrf.mxu0
        %v1522 = vadd.f32 0.0, %v1521
        %v1523 = vand.u32 %v1453, 4294901760
        %v1524 = vsub.f32 %v1453, %v1523
        %v1525 = vand.u32 %v1524, 4294901760
        %v1526 = vsub.f32 %v1524, %v1525
        %v1527 = vand.u32 %v1526, 4294901760
        %1528 = vmatmul.f32.gmra.mxu0 %v1527
        %v1529 = vpop.f32.mrf.mxu0
        %v1530 = vadd.f32 0.0, %v1529
        %v1531 = vand.u32 %v1454, 4294901760
        %v1532 = vsub.f32 %v1454, %v1531
        %v1533 = vand.u32 %v1532, 4294901760
        %v1534 = vsub.f32 %v1532, %v1533
        %v1535 = vand.u32 %v1534, 4294901760
        %1536 = vmatmul.f32.gmra.mxu0 %v1535
        %v1537 = vpop.f32.mrf.mxu0
        %v1538 = vadd.f32 0.0, %v1537
        %v1539 = vand.u32 %v1455, 4294901760
        %v1540 = vsub.f32 %v1455, %v1539
        %v1541 = vand.u32 %v1540, 4294901760
        %v1542 = vsub.f32 %v1540, %v1541
        %v1543 = vand.u32 %v1542, 4294901760
        %1544 = vmatmul.f32.gmra.mxu0 %v1543
        %v1545 = vpop.f32.mrf.mxu0
        %v1546 = vadd.f32 0.0, %v1545
        %v1547 = vand.u32 %v1456, 4294901760
        %v1548 = vsub.f32 %v1456, %v1547
        %v1549 = vand.u32 %v1548, 4294901760
        %v1550 = vsub.f32 %v1548, %v1549
        %v1551 = vand.u32 %v1550, 4294901760
        %1552 = vmatmul.f32.gmra.mxu0 %v1551
        %v1553 = vpop.f32.mrf.mxu0
        %v1554 = vadd.f32 0.0, %v1553
        %v1555 = vand.u32 %v1457, 4294901760
        %v1556 = vsub.f32 %v1457, %v1555
        %v1557 = vand.u32 %v1556, 4294901760
        %v1558 = vsub.f32 %v1556, %v1557
        %v1559 = vand.u32 %v1558, 4294901760
        %1560 = vmatmul.f32.gmra.mxu0 %v1559
        %v1561 = vpop.f32.mrf.mxu0
        %v1562 = vadd.f32 0.0, %v1561
        %v1563 = vand.u32 %v1458, 4294901760
        %v1564 = vsub.f32 %v1458, %v1563
        %v1565 = vand.u32 %v1564, 4294901760
        %v1566 = vsub.f32 %v1564, %v1565
        %v1567 = vand.u32 %v1566, 4294901760
        %1568 = vmatmul.f32.gmra.mxu0 %v1567
        %v1569 = vpop.f32.mrf.mxu0
        %v1570 = vadd.f32 0.0, %v1569
        %1571 = vdwg.mxu0
        %v1572 = vand.u32 %v320, 4294901760
        %v1573 = vsub.f32 %v320, %v1572
        %v1574 = vand.u32 %v1573, 4294901760
        %v1575 = vsub.f32 %v1573, %v1574
        %v1576 = vand.u32 %v1575, 4294901760
        %1577 = vmatpush.msra.mxu0 %v1576
        %v1578 = vand.u32 %v319, 4294901760
        %v1579 = vsub.f32 %v319, %v1578
        %v1580 = vand.u32 %v1579, 4294901760
        %v1581 = vsub.f32 %v1579, %v1580
        %v1582 = vand.u32 %v1581, 4294901760
        %1583 = vmatpush.msra.mxu0 %v1582
        %v1584 = vand.u32 %v318, 4294901760
        %v1585 = vsub.f32 %v318, %v1584
        %v1586 = vand.u32 %v1585, 4294901760
        %v1587 = vsub.f32 %v1585, %v1586
        %v1588 = vand.u32 %v1587, 4294901760
        %1589 = vmatpush.msra.mxu0 %v1588
        %v1590 = vand.u32 %v317, 4294901760
        %v1591 = vsub.f32 %v317, %v1590
        %v1592 = vand.u32 %v1591, 4294901760
        %v1593 = vsub.f32 %v1591, %v1592
        %v1594 = vand.u32 %v1593, 4294901760
        %1595 = vmatpush.msra.mxu0 %v1594
        %v1596 = vand.u32 %v316, 4294901760
        %v1597 = vsub.f32 %v316, %v1596
        %v1598 = vand.u32 %v1597, 4294901760
        %v1599 = vsub.f32 %v1597, %v1598
        %v1600 = vand.u32 %v1599, 4294901760
        %1601 = vmatpush.msra.mxu0 %v1600
        %v1602 = vand.u32 %v315, 4294901760
        %v1603 = vsub.f32 %v315, %v1602
        %v1604 = vand.u32 %v1603, 4294901760
        %v1605 = vsub.f32 %v1603, %v1604
        %v1606 = vand.u32 %v1605, 4294901760
        %1607 = vmatpush.msra.mxu0 %v1606
        %v1608 = vand.u32 %v314, 4294901760
        %v1609 = vsub.f32 %v314, %v1608
        %v1610 = vand.u32 %v1609, 4294901760
        %v1611 = vsub.f32 %v1609, %v1610
        %v1612 = vand.u32 %v1611, 4294901760
        %1613 = vmatpush.msra.mxu0 %v1612
        %v1614 = vand.u32 %v313, 4294901760
        %v1615 = vsub.f32 %v313, %v1614
        %v1616 = vand.u32 %v1615, 4294901760
        %v1617 = vsub.f32 %v1615, %v1616
        %v1618 = vand.u32 %v1617, 4294901760
        %1619 = vmatpush.msra.mxu0 %v1618
        %v1620 = vand.u32 %v312, 4294901760
        %v1621 = vsub.f32 %v312, %v1620
        %v1622 = vand.u32 %v1621, 4294901760
        %v1623 = vsub.f32 %v1621, %v1622
        %v1624 = vand.u32 %v1623, 4294901760
        %1625 = vmatpush.msra.mxu0 %v1624
        %v1626 = vand.u32 %v311, 4294901760
        %v1627 = vsub.f32 %v311, %v1626
        %v1628 = vand.u32 %v1627, 4294901760
        %v1629 = vsub.f32 %v1627, %v1628
        %v1630 = vand.u32 %v1629, 4294901760
        %1631 = vmatpush.msra.mxu0 %v1630
        %v1632 = vand.u32 %v310, 4294901760
        %v1633 = vsub.f32 %v310, %v1632
        %v1634 = vand.u32 %v1633, 4294901760
        %v1635 = vsub.f32 %v1633, %v1634
        %v1636 = vand.u32 %v1635, 4294901760
        %1637 = vmatpush.msra.mxu0 %v1636
        %v1638 = vand.u32 %v309, 4294901760
        %v1639 = vsub.f32 %v309, %v1638
        %v1640 = vand.u32 %v1639, 4294901760
        %v1641 = vsub.f32 %v1639, %v1640
        %v1642 = vand.u32 %v1641, 4294901760
        %1643 = vmatpush.msra.mxu0 %v1642
        %v1644 = vand.u32 %v308, 4294901760
        %v1645 = vsub.f32 %v308, %v1644
        %v1646 = vand.u32 %v1645, 4294901760
        %v1647 = vsub.f32 %v1645, %v1646
        %v1648 = vand.u32 %v1647, 4294901760
        %1649 = vmatpush.msra.mxu0 %v1648
        %v1650 = vand.u32 %v307, 4294901760
        %v1651 = vsub.f32 %v307, %v1650
        %v1652 = vand.u32 %v1651, 4294901760
        %v1653 = vsub.f32 %v1651, %v1652
        %v1654 = vand.u32 %v1653, 4294901760
        %1655 = vmatpush.msra.mxu0 %v1654
        %v1656 = vand.u32 %v306, 4294901760
        %v1657 = vsub.f32 %v306, %v1656
        %v1658 = vand.u32 %v1657, 4294901760
        %v1659 = vsub.f32 %v1657, %v1658
        %v1660 = vand.u32 %v1659, 4294901760
        %1661 = vmatpush.msra.mxu0 %v1660
        %v1662 = vand.u32 %v305, 4294901760
        %v1663 = vsub.f32 %v305, %v1662
        %v1664 = vand.u32 %v1663, 4294901760
        %v1665 = vsub.f32 %v1663, %v1664
        %v1666 = vand.u32 %v1665, 4294901760
        %1667 = vmatpush.msra.mxu0 %v1666
        %v1668 = vand.u32 %v1451, 4294901760
        %1669 = vmatmul.f32.gmra.mxu0 %v1668
        %v1670 = vpop.f32.mrf.mxu0
        %v1671 = vadd.f32 %v1514, %v1670
        %v1672 = vand.u32 %v1452, 4294901760
        %1673 = vmatmul.f32.gmra.mxu0 %v1672
        %v1674 = vpop.f32.mrf.mxu0
        %v1675 = vadd.f32 %v1522, %v1674
        %v1676 = vand.u32 %v1453, 4294901760
        %1677 = vmatmul.f32.gmra.mxu0 %v1676
        %v1678 = vpop.f32.mrf.mxu0
        %v1679 = vadd.f32 %v1530, %v1678
        %v1680 = vand.u32 %v1454, 4294901760
        %1681 = vmatmul.f32.gmra.mxu0 %v1680
        %v1682 = vpop.f32.mrf.mxu0
        %v1683 = vadd.f32 %v1538, %v1682
        %v1684 = vand.u32 %v1455, 4294901760
        %1685 = vmatmul.f32.gmra.mxu0 %v1684
        %v1686 = vpop.f32.mrf.mxu0
        %v1687 = vadd.f32 %v1546, %v1686
        %v1688 = vand.u32 %v1456, 4294901760
        %1689 = vmatmul.f32.gmra.mxu0 %v1688
        %v1690 = vpop.f32.mrf.mxu0
        %v1691 = vadd.f32 %v1554, %v1690
        %v1692 = vand.u32 %v1457, 4294901760
        %1693 = vmatmul.f32.gmra.mxu0 %v1692
        %v1694 = vpop.f32.mrf.mxu0
        %v1695 = vadd.f32 %v1562, %v1694
        %v1696 = vand.u32 %v1458, 4294901760
        %1697 = vmatmul.f32.gmra.mxu0 %v1696
        %v1698 = vpop.f32.mrf.mxu0
        %v1699 = vadd.f32 %v1570, %v1698
        %1700 = vdwg.mxu0
        %v1701 = vand.u32 %v320, 4294901760
        %v1702 = vsub.f32 %v320, %v1701
        %1703 = vmatpush.msra.mxu0 %v1702
        %v1704 = vand.u32 %v319, 4294901760
        %v1705 = vsub.f32 %v319, %v1704
        %1706 = vmatpush.msra.mxu0 %v1705
        %v1707 = vand.u32 %v318, 4294901760
        %v1708 = vsub.f32 %v318, %v1707
        %1709 = vmatpush.msra.mxu0 %v1708
        %v1710 = vand.u32 %v317, 4294901760
        %v1711 = vsub.f32 %v317, %v1710
        %1712 = vmatpush.msra.mxu0 %v1711
        %v1713 = vand.u32 %v316, 4294901760
        %v1714 = vsub.f32 %v316, %v1713
        %1715 = vmatpush.msra.mxu0 %v1714
        %v1716 = vand.u32 %v315, 4294901760
        %v1717 = vsub.f32 %v315, %v1716
        %1718 = vmatpush.msra.mxu0 %v1717
        %v1719 = vand.u32 %v314, 4294901760
        %v1720 = vsub.f32 %v314, %v1719
        %1721 = vmatpush.msra.mxu0 %v1720
        %v1722 = vand.u32 %v313, 4294901760
        %v1723 = vsub.f32 %v313, %v1722
        %1724 = vmatpush.msra.mxu0 %v1723
        %v1725 = vand.u32 %v312, 4294901760
        %v1726 = vsub.f32 %v312, %v1725
        %1727 = vmatpush.msra.mxu0 %v1726
        %v1728 = vand.u32 %v311, 4294901760
        %v1729 = vsub.f32 %v311, %v1728
        %1730 = vmatpush.msra.mxu0 %v1729
        %v1731 = vand.u32 %v310, 4294901760
        %v1732 = vsub.f32 %v310, %v1731
        %1733 = vmatpush.msra.mxu0 %v1732
        %v1734 = vand.u32 %v309, 4294901760
        %v1735 = vsub.f32 %v309, %v1734
        %1736 = vmatpush.msra.mxu0 %v1735
        %v1737 = vand.u32 %v308, 4294901760
        %v1738 = vsub.f32 %v308, %v1737
        %1739 = vmatpush.msra.mxu0 %v1738
        %v1740 = vand.u32 %v307, 4294901760
        %v1741 = vsub.f32 %v307, %v1740
        %1742 = vmatpush.msra.mxu0 %v1741
        %v1743 = vand.u32 %v306, 4294901760
        %v1744 = vsub.f32 %v306, %v1743
        %1745 = vmatpush.msra.mxu0 %v1744
        %v1746 = vand.u32 %v305, 4294901760
        %v1747 = vsub.f32 %v305, %v1746
        %1748 = vmatpush.msra.mxu0 %v1747
        %v1749 = vand.u32 %v1451, 4294901760
        %v1750 = vsub.f32 %v1451, %v1749
        %1751 = vmatmul.f32.gmra.mxu0 %v1750
        %v1752 = vpop.f32.mrf.mxu0
        %v1753 = vadd.f32 %v1671, %v1752
        %v1754 = vand.u32 %v1452, 4294901760
        %v1755 = vsub.f32 %v1452, %v1754
        %1756 = vmatmul.f32.gmra.mxu0 %v1755
        %v1757 = vpop.f32.mrf.mxu0
        %v1758 = vadd.f32 %v1675, %v1757
        %v1759 = vand.u32 %v1453, 4294901760
        %v1760 = vsub.f32 %v1453, %v1759
        %1761 = vmatmul.f32.gmra.mxu0 %v1760
        %v1762 = vpop.f32.mrf.mxu0
        %v1763 = vadd.f32 %v1679, %v1762
        %v1764 = vand.u32 %v1454, 4294901760
        %v1765 = vsub.f32 %v1454, %v1764
        %1766 = vmatmul.f32.gmra.mxu0 %v1765
        %v1767 = vpop.f32.mrf.mxu0
        %v1768 = vadd.f32 %v1683, %v1767
        %v1769 = vand.u32 %v1455, 4294901760
        %v1770 = vsub.f32 %v1455, %v1769
        %1771 = vmatmul.f32.gmra.mxu0 %v1770
        %v1772 = vpop.f32.mrf.mxu0
        %v1773 = vadd.f32 %v1687, %v1772
        %v1774 = vand.u32 %v1456, 4294901760
        %v1775 = vsub.f32 %v1456, %v1774
        %1776 = vmatmul.f32.gmra.mxu0 %v1775
        %v1777 = vpop.f32.mrf.mxu0
        %v1778 = vadd.f32 %v1691, %v1777
        %v1779 = vand.u32 %v1457, 4294901760
        %v1780 = vsub.f32 %v1457, %v1779
        %1781 = vmatmul.f32.gmra.mxu0 %v1780
        %v1782 = vpop.f32.mrf.mxu0
        %v1783 = vadd.f32 %v1695, %v1782
        %v1784 = vand.u32 %v1458, 4294901760
        %v1785 = vsub.f32 %v1458, %v1784
        %1786 = vmatmul.f32.gmra.mxu0 %v1785
        %v1787 = vpop.f32.mrf.mxu0
        %v1788 = vadd.f32 %v1699, %v1787
        %1789 = vdwg.mxu0
        %v1790 = vand.u32 %v320, 4294901760
        %1791 = vmatpush.msra.mxu0 %v1790
        %v1792 = vand.u32 %v319, 4294901760
        %1793 = vmatpush.msra.mxu0 %v1792
        %v1794 = vand.u32 %v318, 4294901760
        %1795 = vmatpush.msra.mxu0 %v1794
        %v1796 = vand.u32 %v317, 4294901760
        %1797 = vmatpush.msra.mxu0 %v1796
        %v1798 = vand.u32 %v316, 4294901760
        %1799 = vmatpush.msra.mxu0 %v1798
        %v1800 = vand.u32 %v315, 4294901760
        %1801 = vmatpush.msra.mxu0 %v1800
        %v1802 = vand.u32 %v314, 4294901760
        %1803 = vmatpush.msra.mxu0 %v1802
        %v1804 = vand.u32 %v313, 4294901760
        %1805 = vmatpush.msra.mxu0 %v1804
        %v1806 = vand.u32 %v312, 4294901760
        %1807 = vmatpush.msra.mxu0 %v1806
        %v1808 = vand.u32 %v311, 4294901760
        %1809 = vmatpush.msra.mxu0 %v1808
        %v1810 = vand.u32 %v310, 4294901760
        %1811 = vmatpush.msra.mxu0 %v1810
        %v1812 = vand.u32 %v309, 4294901760
        %1813 = vmatpush.msra.mxu0 %v1812
        %v1814 = vand.u32 %v308, 4294901760
        %1815 = vmatpush.msra.mxu0 %v1814
        %v1816 = vand.u32 %v307, 4294901760
        %1817 = vmatpush.msra.mxu0 %v1816
        %v1818 = vand.u32 %v306, 4294901760
        %1819 = vmatpush.msra.mxu0 %v1818
        %v1820 = vand.u32 %v305, 4294901760
        %1821 = vmatpush.msra.mxu0 %v1820
        %v1822 = vand.u32 %v1451, 4294901760
        %v1823 = vsub.f32 %v1451, %v1822
        %v1824 = vand.u32 %v1823, 4294901760
        %1825 = vmatmul.f32.gmra.mxu0 %v1824
        %v1826 = vpop.f32.mrf.mxu0
        %v1827 = vadd.f32 %v1753, %v1826
        %v1828 = vand.u32 %v1452, 4294901760
        %v1829 = vsub.f32 %v1452, %v1828
        %v1830 = vand.u32 %v1829, 4294901760
        %1831 = vmatmul.f32.gmra.mxu0 %v1830
        %v1832 = vpop.f32.mrf.mxu0
        %v1833 = vadd.f32 %v1758, %v1832
        %v1834 = vand.u32 %v1453, 4294901760
        %v1835 = vsub.f32 %v1453, %v1834
        %v1836 = vand.u32 %v1835, 4294901760
        %1837 = vmatmul.f32.gmra.mxu0 %v1836
        %v1838 = vpop.f32.mrf.mxu0
        %v1839 = vadd.f32 %v1763, %v1838
        %v1840 = vand.u32 %v1454, 4294901760
        %v1841 = vsub.f32 %v1454, %v1840
        %v1842 = vand.u32 %v1841, 4294901760
        %1843 = vmatmul.f32.gmra.mxu0 %v1842
        %v1844 = vpop.f32.mrf.mxu0
        %v1845 = vadd.f32 %v1768, %v1844
        %v1846 = vand.u32 %v1455, 4294901760
        %v1847 = vsub.f32 %v1455, %v1846
        %v1848 = vand.u32 %v1847, 4294901760
        %1849 = vmatmul.f32.gmra.mxu0 %v1848
        %v1850 = vpop.f32.mrf.mxu0
        %v1851 = vadd.f32 %v1773, %v1850
        %v1852 = vand.u32 %v1456, 4294901760
        %v1853 = vsub.f32 %v1456, %v1852
        %v1854 = vand.u32 %v1853, 4294901760
        %1855 = vmatmul.f32.gmra.mxu0 %v1854
        %v1856 = vpop.f32.mrf.mxu0
        %v1857 = vadd.f32 %v1778, %v1856
        %v1858 = vand.u32 %v1457, 4294901760
        %v1859 = vsub.f32 %v1457, %v1858
        %v1860 = vand.u32 %v1859, 4294901760
        %1861 = vmatmul.f32.gmra.mxu0 %v1860
        %v1862 = vpop.f32.mrf.mxu0
        %v1863 = vadd.f32 %v1783, %v1862
        %v1864 = vand.u32 %v1458, 4294901760
        %v1865 = vsub.f32 %v1458, %v1864
        %v1866 = vand.u32 %v1865, 4294901760
        %1867 = vmatmul.f32.gmra.mxu0 %v1866
        %v1868 = vpop.f32.mrf.mxu0
        %v1869 = vadd.f32 %v1788, %v1868
        %1870 = vdwg.mxu0
        %v1871 = vand.u32 %v320, 4294901760
        %v1872 = vsub.f32 %v320, %v1871
        %v1873 = vand.u32 %v1872, 4294901760
        %1874 = vmatpush.msra.mxu0 %v1873
        %v1875 = vand.u32 %v319, 4294901760
        %v1876 = vsub.f32 %v319, %v1875
        %v1877 = vand.u32 %v1876, 4294901760
        %1878 = vmatpush.msra.mxu0 %v1877
        %v1879 = vand.u32 %v318, 4294901760
        %v1880 = vsub.f32 %v318, %v1879
        %v1881 = vand.u32 %v1880, 4294901760
        %1882 = vmatpush.msra.mxu0 %v1881
        %v1883 = vand.u32 %v317, 4294901760
        %v1884 = vsub.f32 %v317, %v1883
        %v1885 = vand.u32 %v1884, 4294901760
        %1886 = vmatpush.msra.mxu0 %v1885
        %v1887 = vand.u32 %v316, 4294901760
        %v1888 = vsub.f32 %v316, %v1887
        %v1889 = vand.u32 %v1888, 4294901760
        %1890 = vmatpush.msra.mxu0 %v1889
        %v1891 = vand.u32 %v315, 4294901760
        %v1892 = vsub.f32 %v315, %v1891
        %v1893 = vand.u32 %v1892, 4294901760
        %1894 = vmatpush.msra.mxu0 %v1893
        %v1895 = vand.u32 %v314, 4294901760
        %v1896 = vsub.f32 %v314, %v1895
        %v1897 = vand.u32 %v1896, 4294901760
        %1898 = vmatpush.msra.mxu0 %v1897
        %v1899 = vand.u32 %v313, 4294901760
        %v1900 = vsub.f32 %v313, %v1899
        %v1901 = vand.u32 %v1900, 4294901760
        %1902 = vmatpush.msra.mxu0 %v1901
        %v1903 = vand.u32 %v312, 4294901760
        %v1904 = vsub.f32 %v312, %v1903
        %v1905 = vand.u32 %v1904, 4294901760
        %1906 = vmatpush.msra.mxu0 %v1905
        %v1907 = vand.u32 %v311, 4294901760
        %v1908 = vsub.f32 %v311, %v1907
        %v1909 = vand.u32 %v1908, 4294901760
        %1910 = vmatpush.msra.mxu0 %v1909
        %v1911 = vand.u32 %v310, 4294901760
        %v1912 = vsub.f32 %v310, %v1911
        %v1913 = vand.u32 %v1912, 4294901760
        %1914 = vmatpush.msra.mxu0 %v1913
        %v1915 = vand.u32 %v309, 4294901760
        %v1916 = vsub.f32 %v309, %v1915
        %v1917 = vand.u32 %v1916, 4294901760
        %1918 = vmatpush.msra.mxu0 %v1917
        %v1919 = vand.u32 %v308, 4294901760
        %v1920 = vsub.f32 %v308, %v1919
        %v1921 = vand.u32 %v1920, 4294901760
        %1922 = vmatpush.msra.mxu0 %v1921
        %v1923 = vand.u32 %v307, 4294901760
        %v1924 = vsub.f32 %v307, %v1923
        %v1925 = vand.u32 %v1924, 4294901760
        %1926 = vmatpush.msra.mxu0 %v1925
        %v1927 = vand.u32 %v306, 4294901760
        %v1928 = vsub.f32 %v306, %v1927
        %v1929 = vand.u32 %v1928, 4294901760
        %1930 = vmatpush.msra.mxu0 %v1929
        %v1931 = vand.u32 %v305, 4294901760
        %v1932 = vsub.f32 %v305, %v1931
        %v1933 = vand.u32 %v1932, 4294901760
        %1934 = vmatpush.msra.mxu0 %v1933
        %v1935 = vand.u32 %v1451, 4294901760
        %1936 = vmatmul.f32.gmra.mxu0 %v1935
        %v1937 = vpop.f32.mrf.mxu0
        %v1938 = vadd.f32 %v1827, %v1937
        %v1939 = vand.u32 %v1452, 4294901760
        %1940 = vmatmul.f32.gmra.mxu0 %v1939
        %v1941 = vpop.f32.mrf.mxu0
        %v1942 = vadd.f32 %v1833, %v1941
        %v1943 = vand.u32 %v1453, 4294901760
        %1944 = vmatmul.f32.gmra.mxu0 %v1943
        %v1945 = vpop.f32.mrf.mxu0
        %v1946 = vadd.f32 %v1839, %v1945
        %v1947 = vand.u32 %v1454, 4294901760
        %1948 = vmatmul.f32.gmra.mxu0 %v1947
        %v1949 = vpop.f32.mrf.mxu0
        %v1950 = vadd.f32 %v1845, %v1949
        %v1951 = vand.u32 %v1455, 4294901760
        %1952 = vmatmul.f32.gmra.mxu0 %v1951
        %v1953 = vpop.f32.mrf.mxu0
        %v1954 = vadd.f32 %v1851, %v1953
        %v1955 = vand.u32 %v1456, 4294901760
        %1956 = vmatmul.f32.gmra.mxu0 %v1955
        %v1957 = vpop.f32.mrf.mxu0
        %v1958 = vadd.f32 %v1857, %v1957
        %v1959 = vand.u32 %v1457, 4294901760
        %1960 = vmatmul.f32.gmra.mxu0 %v1959
        %v1961 = vpop.f32.mrf.mxu0
        %v1962 = vadd.f32 %v1863, %v1961
        %v1963 = vand.u32 %v1458, 4294901760
        %1964 = vmatmul.f32.gmra.mxu0 %v1963
        %v1965 = vpop.f32.mrf.mxu0
        %v1966 = vadd.f32 %v1869, %v1965
        %1967 = vdwg.mxu0
        %v1968 = vand.u32 %v320, 4294901760
        %1969 = vmatpush.msra.mxu0 %v1968
        %v1970 = vand.u32 %v319, 4294901760
        %1971 = vmatpush.msra.mxu0 %v1970
        %v1972 = vand.u32 %v318, 4294901760
        %1973 = vmatpush.msra.mxu0 %v1972
        %v1974 = vand.u32 %v317, 4294901760
        %1975 = vmatpush.msra.mxu0 %v1974
        %v1976 = vand.u32 %v316, 4294901760
        %1977 = vmatpush.msra.mxu0 %v1976
        %v1978 = vand.u32 %v315, 4294901760
        %1979 = vmatpush.msra.mxu0 %v1978
        %v1980 = vand.u32 %v314, 4294901760
        %1981 = vmatpush.msra.mxu0 %v1980
        %v1982 = vand.u32 %v313, 4294901760
        %1983 = vmatpush.msra.mxu0 %v1982
        %v1984 = vand.u32 %v312, 4294901760
        %1985 = vmatpush.msra.mxu0 %v1984
        %v1986 = vand.u32 %v311, 4294901760
        %1987 = vmatpush.msra.mxu0 %v1986
        %v1988 = vand.u32 %v310, 4294901760
        %1989 = vmatpush.msra.mxu0 %v1988
        %v1990 = vand.u32 %v309, 4294901760
        %1991 = vmatpush.msra.mxu0 %v1990
        %v1992 = vand.u32 %v308, 4294901760
        %1993 = vmatpush.msra.mxu0 %v1992
        %v1994 = vand.u32 %v307, 4294901760
        %1995 = vmatpush.msra.mxu0 %v1994
        %v1996 = vand.u32 %v306, 4294901760
        %1997 = vmatpush.msra.mxu0 %v1996
        %v1998 = vand.u32 %v305, 4294901760
        %1999 = vmatpush.msra.mxu0 %v1998
        %v2000 = vand.u32 %v1451, 4294901760
        %2001 = vmatmul.f32.gmra.mxu0 %v2000
        %v2002 = vpop.f32.mrf.mxu0
        %v2003 = vadd.f32 %v1938, %v2002
        %v2004 = vand.u32 %v1452, 4294901760
        %2005 = vmatmul.f32.gmra.mxu0 %v2004
        %v2006 = vpop.f32.mrf.mxu0
        %v2007 = vadd.f32 %v1942, %v2006
        %v2008 = vand.u32 %v1453, 4294901760
        %2009 = vmatmul.f32.gmra.mxu0 %v2008
        %v2010 = vpop.f32.mrf.mxu0
        %v2011 = vadd.f32 %v1946, %v2010
        %v2012 = vand.u32 %v1454, 4294901760
        %2013 = vmatmul.f32.gmra.mxu0 %v2012
        %v2014 = vpop.f32.mrf.mxu0
        %v2015 = vadd.f32 %v1950, %v2014
        %v2016 = vand.u32 %v1455, 4294901760
        %2017 = vmatmul.f32.gmra.mxu0 %v2016
        %v2018 = vpop.f32.mrf.mxu0
        %v2019 = vadd.f32 %v1954, %v2018
        %v2020 = vand.u32 %v1456, 4294901760
        %2021 = vmatmul.f32.gmra.mxu0 %v2020
        %v2022 = vpop.f32.mrf.mxu0
        %v2023 = vadd.f32 %v1958, %v2022
        %v2024 = vand.u32 %v1457, 4294901760
        %2025 = vmatmul.f32.gmra.mxu0 %v2024
        %v2026 = vpop.f32.mrf.mxu0
        %v2027 = vadd.f32 %v1962, %v2026
        %v2028 = vand.u32 %v1458, 4294901760
        %2029 = vmatmul.f32.gmra.mxu0 %v2028
        %v2030 = vpop.f32.mrf.mxu0
        %v2031 = vadd.f32 %v1966, %v2030
        %2032 = vdwg.mxu0
        %2033 = vmatpush.msra.mxu0 0.0
        %2034 = vmatpush.msra.mxu0 0.0
        %2035 = vmatpush.msra.mxu0 0.0
        %2036 = vmatpush.msra.mxu0 0.0
        %2037 = vmatpush.msra.mxu0 0.0
        %2038 = vmatpush.msra.mxu0 0.0
        %2039 = vmatpush.msra.mxu0 0.0
        %2040 = vmatpush.msra.mxu0 0.0
        %v2041 = vand.u32 %v1458, 4294901760
        %2042 = vmatpush.msra.mxu0 %v2041
        %v2043 = vand.u32 %v1457, 4294901760
        %2044 = vmatpush.msra.mxu0 %v2043
        %v2045 = vand.u32 %v1456, 4294901760
        %2046 = vmatpush.msra.mxu0 %v2045
        %v2047 = vand.u32 %v1455, 4294901760
        %2048 = vmatpush.msra.mxu0 %v2047
        %v2049 = vand.u32 %v1454, 4294901760
        %2050 = vmatpush.msra.mxu0 %v2049
        %v2051 = vand.u32 %v1453, 4294901760
        %2052 = vmatpush.msra.mxu0 %v2051
        %v2053 = vand.u32 %v1452, 4294901760
        %2054 = vmatpush.msra.mxu0 %v2053
        %v2055 = vand.u32 %v1451, 4294901760
        %2056 = vmatpush.msra.mxu0 %v2055
        %v2057 = vand.u32 %v930, 4294901760
        %v2058 = vsub.f32 %v930, %v2057
        %v2059 = vand.u32 %v2058, 4294901760
        %v2060 = vsub.f32 %v2058, %v2059
        %v2061 = vand.u32 %v2060, 4294901760
        %2062 = vmatmul.f32.gmra.mxu0 %v2061
        %v2063 = vpop.f32.mrf.mxu0
        %v2064 = vadd.f32 %v2003, %v2063
        %v2065 = vand.u32 %v933, 4294901760
        %v2066 = vsub.f32 %v933, %v2065
        %v2067 = vand.u32 %v2066, 4294901760
        %v2068 = vsub.f32 %v2066, %v2067
        %v2069 = vand.u32 %v2068, 4294901760
        %2070 = vmatmul.f32.gmra.mxu0 %v2069
        %v2071 = vpop.f32.mrf.mxu0
        %v2072 = vadd.f32 %v2007, %v2071
        %v2073 = vand.u32 %v936, 4294901760
        %v2074 = vsub.f32 %v936, %v2073
        %v2075 = vand.u32 %v2074, 4294901760
        %v2076 = vsub.f32 %v2074, %v2075
        %v2077 = vand.u32 %v2076, 4294901760
        %2078 = vmatmul.f32.gmra.mxu0 %v2077
        %v2079 = vpop.f32.mrf.mxu0
        %v2080 = vadd.f32 %v2011, %v2079
        %v2081 = vand.u32 %v939, 4294901760
        %v2082 = vsub.f32 %v939, %v2081
        %v2083 = vand.u32 %v2082, 4294901760
        %v2084 = vsub.f32 %v2082, %v2083
        %v2085 = vand.u32 %v2084, 4294901760
        %2086 = vmatmul.f32.gmra.mxu0 %v2085
        %v2087 = vpop.f32.mrf.mxu0
        %v2088 = vadd.f32 %v2015, %v2087
        %v2089 = vand.u32 %v942, 4294901760
        %v2090 = vsub.f32 %v942, %v2089
        %v2091 = vand.u32 %v2090, 4294901760
        %v2092 = vsub.f32 %v2090, %v2091
        %v2093 = vand.u32 %v2092, 4294901760
        %2094 = vmatmul.f32.gmra.mxu0 %v2093
        %v2095 = vpop.f32.mrf.mxu0
        %v2096 = vadd.f32 %v2019, %v2095
        %v2097 = vand.u32 %v945, 4294901760
        %v2098 = vsub.f32 %v945, %v2097
        %v2099 = vand.u32 %v2098, 4294901760
        %v2100 = vsub.f32 %v2098, %v2099
        %v2101 = vand.u32 %v2100, 4294901760
        %2102 = vmatmul.f32.gmra.mxu0 %v2101
        %v2103 = vpop.f32.mrf.mxu0
        %v2104 = vadd.f32 %v2023, %v2103
        %v2105 = vand.u32 %v948, 4294901760
        %v2106 = vsub.f32 %v948, %v2105
        %v2107 = vand.u32 %v2106, 4294901760
        %v2108 = vsub.f32 %v2106, %v2107
        %v2109 = vand.u32 %v2108, 4294901760
        %2110 = vmatmul.f32.gmra.mxu0 %v2109
        %v2111 = vpop.f32.mrf.mxu0
        %v2112 = vadd.f32 %v2027, %v2111
        %v2113 = vand.u32 %v951, 4294901760
        %v2114 = vsub.f32 %v951, %v2113
        %v2115 = vand.u32 %v2114, 4294901760
        %v2116 = vsub.f32 %v2114, %v2115
        %v2117 = vand.u32 %v2116, 4294901760
        %2118 = vmatmul.f32.gmra.mxu0 %v2117
        %v2119 = vpop.f32.mrf.mxu0
        %v2120 = vadd.f32 %v2031, %v2119
        %2121 = vdwg.mxu0
        %2122 = vmatpush.msra.mxu0 0.0
        %2123 = vmatpush.msra.mxu0 0.0
        %2124 = vmatpush.msra.mxu0 0.0
        %2125 = vmatpush.msra.mxu0 0.0
        %2126 = vmatpush.msra.mxu0 0.0
        %2127 = vmatpush.msra.mxu0 0.0
        %2128 = vmatpush.msra.mxu0 0.0
        %2129 = vmatpush.msra.mxu0 0.0
        %v2130 = vand.u32 %v1458, 4294901760
        %v2131 = vsub.f32 %v1458, %v2130
        %v2132 = vand.u32 %v2131, 4294901760
        %v2133 = vsub.f32 %v2131, %v2132
        %v2134 = vand.u32 %v2133, 4294901760
        %2135 = vmatpush.msra.mxu0 %v2134
        %v2136 = vand.u32 %v1457, 4294901760
        %v2137 = vsub.f32 %v1457, %v2136
        %v2138 = vand.u32 %v2137, 4294901760
        %v2139 = vsub.f32 %v2137, %v2138
        %v2140 = vand.u32 %v2139, 4294901760
        %2141 = vmatpush.msra.mxu0 %v2140
        %v2142 = vand.u32 %v1456, 4294901760
        %v2143 = vsub.f32 %v1456, %v2142
        %v2144 = vand.u32 %v2143, 4294901760
        %v2145 = vsub.f32 %v2143, %v2144
        %v2146 = vand.u32 %v2145, 4294901760
        %2147 = vmatpush.msra.mxu0 %v2146
        %v2148 = vand.u32 %v1455, 4294901760
        %v2149 = vsub.f32 %v1455, %v2148
        %v2150 = vand.u32 %v2149, 4294901760
        %v2151 = vsub.f32 %v2149, %v2150
        %v2152 = vand.u32 %v2151, 4294901760
        %2153 = vmatpush.msra.mxu0 %v2152
        %v2154 = vand.u32 %v1454, 4294901760
        %v2155 = vsub.f32 %v1454, %v2154
        %v2156 = vand.u32 %v2155, 4294901760
        %v2157 = vsub.f32 %v2155, %v2156
        %v2158 = vand.u32 %v2157, 4294901760
        %2159 = vmatpush.msra.mxu0 %v2158
        %v2160 = vand.u32 %v1453, 4294901760
        %v2161 = vsub.f32 %v1453, %v2160
        %v2162 = vand.u32 %v2161, 4294901760
        %v2163 = vsub.f32 %v2161, %v2162
        %v2164 = vand.u32 %v2163, 4294901760
        %2165 = vmatpush.msra.mxu0 %v2164
        %v2166 = vand.u32 %v1452, 4294901760
        %v2167 = vsub.f32 %v1452, %v2166
        %v2168 = vand.u32 %v2167, 4294901760
        %v2169 = vsub.f32 %v2167, %v2168
        %v2170 = vand.u32 %v2169, 4294901760
        %2171 = vmatpush.msra.mxu0 %v2170
        %v2172 = vand.u32 %v1451, 4294901760
        %v2173 = vsub.f32 %v1451, %v2172
        %v2174 = vand.u32 %v2173, 4294901760
        %v2175 = vsub.f32 %v2173, %v2174
        %v2176 = vand.u32 %v2175, 4294901760
        %2177 = vmatpush.msra.mxu0 %v2176
        %v2178 = vand.u32 %v930, 4294901760
        %2179 = vmatmul.f32.gmra.mxu0 %v2178
        %v2180 = vpop.f32.mrf.mxu0
        %v2181 = vadd.f32 %v2064, %v2180
        %v2182 = vand.u32 %v933, 4294901760
        %2183 = vmatmul.f32.gmra.mxu0 %v2182
        %v2184 = vpop.f32.mrf.mxu0
        %v2185 = vadd.f32 %v2072, %v2184
        %v2186 = vand.u32 %v936, 4294901760
        %2187 = vmatmul.f32.gmra.mxu0 %v2186
        %v2188 = vpop.f32.mrf.mxu0
        %v2189 = vadd.f32 %v2080, %v2188
        %v2190 = vand.u32 %v939, 4294901760
        %2191 = vmatmul.f32.gmra.mxu0 %v2190
        %v2192 = vpop.f32.mrf.mxu0
        %v2193 = vadd.f32 %v2088, %v2192
        %v2194 = vand.u32 %v942, 4294901760
        %2195 = vmatmul.f32.gmra.mxu0 %v2194
        %v2196 = vpop.f32.mrf.mxu0
        %v2197 = vadd.f32 %v2096, %v2196
        %v2198 = vand.u32 %v945, 4294901760
        %2199 = vmatmul.f32.gmra.mxu0 %v2198
        %v2200 = vpop.f32.mrf.mxu0
        %v2201 = vadd.f32 %v2104, %v2200
        %v2202 = vand.u32 %v948, 4294901760
        %2203 = vmatmul.f32.gmra.mxu0 %v2202
        %v2204 = vpop.f32.mrf.mxu0
        %v2205 = vadd.f32 %v2112, %v2204
        %v2206 = vand.u32 %v951, 4294901760
        %2207 = vmatmul.f32.gmra.mxu0 %v2206
        %v2208 = vpop.f32.mrf.mxu0
        %v2209 = vadd.f32 %v2120, %v2208
        %2210 = vdwg.mxu0
        %2211 = vmatpush.msra.mxu0 0.0
        %2212 = vmatpush.msra.mxu0 0.0
        %2213 = vmatpush.msra.mxu0 0.0
        %2214 = vmatpush.msra.mxu0 0.0
        %2215 = vmatpush.msra.mxu0 0.0
        %2216 = vmatpush.msra.mxu0 0.0
        %2217 = vmatpush.msra.mxu0 0.0
        %2218 = vmatpush.msra.mxu0 0.0
        %v2219 = vand.u32 %v1458, 4294901760
        %v2220 = vsub.f32 %v1458, %v2219
        %2221 = vmatpush.msra.mxu0 %v2220
        %v2222 = vand.u32 %v1457, 4294901760
        %v2223 = vsub.f32 %v1457, %v2222
        %2224 = vmatpush.msra.mxu0 %v2223
        %v2225 = vand.u32 %v1456, 4294901760
        %v2226 = vsub.f32 %v1456, %v2225
        %2227 = vmatpush.msra.mxu0 %v2226
        %v2228 = vand.u32 %v1455, 4294901760
        %v2229 = vsub.f32 %v1455, %v2228
        %2230 = vmatpush.msra.mxu0 %v2229
        %v2231 = vand.u32 %v1454, 4294901760
        %v2232 = vsub.f32 %v1454, %v2231
        %2233 = vmatpush.msra.mxu0 %v2232
        %v2234 = vand.u32 %v1453, 4294901760
        %v2235 = vsub.f32 %v1453, %v2234
        %2236 = vmatpush.msra.mxu0 %v2235
        %v2237 = vand.u32 %v1452, 4294901760
        %v2238 = vsub.f32 %v1452, %v2237
        %2239 = vmatpush.msra.mxu0 %v2238
        %v2240 = vand.u32 %v1451, 4294901760
        %v2241 = vsub.f32 %v1451, %v2240
        %2242 = vmatpush.msra.mxu0 %v2241
        %v2243 = vand.u32 %v930, 4294901760
        %v2244 = vsub.f32 %v930, %v2243
        %2245 = vmatmul.f32.gmra.mxu0 %v2244
        %v2246 = vpop.f32.mrf.mxu0
        %v2247 = vadd.f32 %v2181, %v2246
        %v2248 = vand.u32 %v933, 4294901760
        %v2249 = vsub.f32 %v933, %v2248
        %2250 = vmatmul.f32.gmra.mxu0 %v2249
        %v2251 = vpop.f32.mrf.mxu0
        %v2252 = vadd.f32 %v2185, %v2251
        %v2253 = vand.u32 %v936, 4294901760
        %v2254 = vsub.f32 %v936, %v2253
        %2255 = vmatmul.f32.gmra.mxu0 %v2254
        %v2256 = vpop.f32.mrf.mxu0
        %v2257 = vadd.f32 %v2189, %v2256
        %v2258 = vand.u32 %v939, 4294901760
        %v2259 = vsub.f32 %v939, %v2258
        %2260 = vmatmul.f32.gmra.mxu0 %v2259
        %v2261 = vpop.f32.mrf.mxu0
        %v2262 = vadd.f32 %v2193, %v2261
        %v2263 = vand.u32 %v942, 4294901760
        %v2264 = vsub.f32 %v942, %v2263
        %2265 = vmatmul.f32.gmra.mxu0 %v2264
        %v2266 = vpop.f32.mrf.mxu0
        %v2267 = vadd.f32 %v2197, %v2266
        %v2268 = vand.u32 %v945, 4294901760
        %v2269 = vsub.f32 %v945, %v2268
        %2270 = vmatmul.f32.gmra.mxu0 %v2269
        %v2271 = vpop.f32.mrf.mxu0
        %v2272 = vadd.f32 %v2201, %v2271
        %v2273 = vand.u32 %v948, 4294901760
        %v2274 = vsub.f32 %v948, %v2273
        %2275 = vmatmul.f32.gmra.mxu0 %v2274
        %v2276 = vpop.f32.mrf.mxu0
        %v2277 = vadd.f32 %v2205, %v2276
        %v2278 = vand.u32 %v951, 4294901760
        %v2279 = vsub.f32 %v951, %v2278
        %2280 = vmatmul.f32.gmra.mxu0 %v2279
        %v2281 = vpop.f32.mrf.mxu0
        %v2282 = vadd.f32 %v2209, %v2281
        %2283 = vdwg.mxu0
        %2284 = vmatpush.msra.mxu0 0.0
        %2285 = vmatpush.msra.mxu0 0.0
        %2286 = vmatpush.msra.mxu0 0.0
        %2287 = vmatpush.msra.mxu0 0.0
        %2288 = vmatpush.msra.mxu0 0.0
        %2289 = vmatpush.msra.mxu0 0.0
        %2290 = vmatpush.msra.mxu0 0.0
        %2291 = vmatpush.msra.mxu0 0.0
        %v2292 = vand.u32 %v1458, 4294901760
        %2293 = vmatpush.msra.mxu0 %v2292
        %v2294 = vand.u32 %v1457, 4294901760
        %2295 = vmatpush.msra.mxu0 %v2294
        %v2296 = vand.u32 %v1456, 4294901760
        %2297 = vmatpush.msra.mxu0 %v2296
        %v2298 = vand.u32 %v1455, 4294901760
        %2299 = vmatpush.msra.mxu0 %v2298
        %v2300 = vand.u32 %v1454, 4294901760
        %2301 = vmatpush.msra.mxu0 %v2300
        %v2302 = vand.u32 %v1453, 4294901760
        %2303 = vmatpush.msra.mxu0 %v2302
        %v2304 = vand.u32 %v1452, 4294901760
        %2305 = vmatpush.msra.mxu0 %v2304
        %v2306 = vand.u32 %v1451, 4294901760
        %2307 = vmatpush.msra.mxu0 %v2306
        %v2308 = vand.u32 %v930, 4294901760
        %v2309 = vsub.f32 %v930, %v2308
        %v2310 = vand.u32 %v2309, 4294901760
        %2311 = vmatmul.f32.gmra.mxu0 %v2310
        %v2312 = vpop.f32.mrf.mxu0
        %v2313 = vadd.f32 %v2247, %v2312
        %v2314 = vand.u32 %v933, 4294901760
        %v2315 = vsub.f32 %v933, %v2314
        %v2316 = vand.u32 %v2315, 4294901760
        %2317 = vmatmul.f32.gmra.mxu0 %v2316
        %v2318 = vpop.f32.mrf.mxu0
        %v2319 = vadd.f32 %v2252, %v2318
        %v2320 = vand.u32 %v936, 4294901760
        %v2321 = vsub.f32 %v936, %v2320
        %v2322 = vand.u32 %v2321, 4294901760
        %2323 = vmatmul.f32.gmra.mxu0 %v2322
        %v2324 = vpop.f32.mrf.mxu0
        %v2325 = vadd.f32 %v2257, %v2324
        %v2326 = vand.u32 %v939, 4294901760
        %v2327 = vsub.f32 %v939, %v2326
        %v2328 = vand.u32 %v2327, 4294901760
        %2329 = vmatmul.f32.gmra.mxu0 %v2328
        %v2330 = vpop.f32.mrf.mxu0
        %v2331 = vadd.f32 %v2262, %v2330
        %v2332 = vand.u32 %v942, 4294901760
        %v2333 = vsub.f32 %v942, %v2332
        %v2334 = vand.u32 %v2333, 4294901760
        %2335 = vmatmul.f32.gmra.mxu0 %v2334
        %v2336 = vpop.f32.mrf.mxu0
        %v2337 = vadd.f32 %v2267, %v2336
        %v2338 = vand.u32 %v945, 4294901760
        %v2339 = vsub.f32 %v945, %v2338
        %v2340 = vand.u32 %v2339, 4294901760
        %2341 = vmatmul.f32.gmra.mxu0 %v2340
        %v2342 = vpop.f32.mrf.mxu0
        %v2343 = vadd.f32 %v2272, %v2342
        %v2344 = vand.u32 %v948, 4294901760
        %v2345 = vsub.f32 %v948, %v2344
        %v2346 = vand.u32 %v2345, 4294901760
        %2347 = vmatmul.f32.gmra.mxu0 %v2346
        %v2348 = vpop.f32.mrf.mxu0
        %v2349 = vadd.f32 %v2277, %v2348
        %v2350 = vand.u32 %v951, 4294901760
        %v2351 = vsub.f32 %v951, %v2350
        %v2352 = vand.u32 %v2351, 4294901760
        %2353 = vmatmul.f32.gmra.mxu0 %v2352
        %v2354 = vpop.f32.mrf.mxu0
        %v2355 = vadd.f32 %v2282, %v2354
        %2356 = vdwg.mxu0
        %2357 = vmatpush.msra.mxu0 0.0
        %2358 = vmatpush.msra.mxu0 0.0
        %2359 = vmatpush.msra.mxu0 0.0
        %2360 = vmatpush.msra.mxu0 0.0
        %2361 = vmatpush.msra.mxu0 0.0
        %2362 = vmatpush.msra.mxu0 0.0
        %2363 = vmatpush.msra.mxu0 0.0
        %2364 = vmatpush.msra.mxu0 0.0
        %v2365 = vand.u32 %v1458, 4294901760
        %v2366 = vsub.f32 %v1458, %v2365
        %v2367 = vand.u32 %v2366, 4294901760
        %2368 = vmatpush.msra.mxu0 %v2367
        %v2369 = vand.u32 %v1457, 4294901760
        %v2370 = vsub.f32 %v1457, %v2369
        %v2371 = vand.u32 %v2370, 4294901760
        %2372 = vmatpush.msra.mxu0 %v2371
        %v2373 = vand.u32 %v1456, 4294901760
        %v2374 = vsub.f32 %v1456, %v2373
        %v2375 = vand.u32 %v2374, 4294901760
        %2376 = vmatpush.msra.mxu0 %v2375
        %v2377 = vand.u32 %v1455, 4294901760
        %v2378 = vsub.f32 %v1455, %v2377
        %v2379 = vand.u32 %v2378, 4294901760
        %2380 = vmatpush.msra.mxu0 %v2379
        %v2381 = vand.u32 %v1454, 4294901760
        %v2382 = vsub.f32 %v1454, %v2381
        %v2383 = vand.u32 %v2382, 4294901760
        %2384 = vmatpush.msra.mxu0 %v2383
        %v2385 = vand.u32 %v1453, 4294901760
        %v2386 = vsub.f32 %v1453, %v2385
        %v2387 = vand.u32 %v2386, 4294901760
        %2388 = vmatpush.msra.mxu0 %v2387
        %v2389 = vand.u32 %v1452, 4294901760
        %v2390 = vsub.f32 %v1452, %v2389
        %v2391 = vand.u32 %v2390, 4294901760
        %2392 = vmatpush.msra.mxu0 %v2391
        %v2393 = vand.u32 %v1451, 4294901760
        %v2394 = vsub.f32 %v1451, %v2393
        %v2395 = vand.u32 %v2394, 4294901760
        %2396 = vmatpush.msra.mxu0 %v2395
        %v2397 = vand.u32 %v930, 4294901760
        %2398 = vmatmul.f32.gmra.mxu0 %v2397
        %v2399 = vpop.f32.mrf.mxu0
        %v2400 = vadd.f32 %v2313, %v2399
        %v2401 = vand.u32 %v933, 4294901760
        %2402 = vmatmul.f32.gmra.mxu0 %v2401
        %v2403 = vpop.f32.mrf.mxu0
        %v2404 = vadd.f32 %v2319, %v2403
        %v2405 = vand.u32 %v936, 4294901760
        %2406 = vmatmul.f32.gmra.mxu0 %v2405
        %v2407 = vpop.f32.mrf.mxu0
        %v2408 = vadd.f32 %v2325, %v2407
        %v2409 = vand.u32 %v939, 4294901760
        %2410 = vmatmul.f32.gmra.mxu0 %v2409
        %v2411 = vpop.f32.mrf.mxu0
        %v2412 = vadd.f32 %v2331, %v2411
        %v2413 = vand.u32 %v942, 4294901760
        %2414 = vmatmul.f32.gmra.mxu0 %v2413
        %v2415 = vpop.f32.mrf.mxu0
        %v2416 = vadd.f32 %v2337, %v2415
        %v2417 = vand.u32 %v945, 4294901760
        %2418 = vmatmul.f32.gmra.mxu0 %v2417
        %v2419 = vpop.f32.mrf.mxu0
        %v2420 = vadd.f32 %v2343, %v2419
        %v2421 = vand.u32 %v948, 4294901760
        %2422 = vmatmul.f32.gmra.mxu0 %v2421
        %v2423 = vpop.f32.mrf.mxu0
        %v2424 = vadd.f32 %v2349, %v2423
        %v2425 = vand.u32 %v951, 4294901760
        %2426 = vmatmul.f32.gmra.mxu0 %v2425
        %v2427 = vpop.f32.mrf.mxu0
        %v2428 = vadd.f32 %v2355, %v2427
        %2429 = vdwg.mxu0
        %2430 = vmatpush.msra.mxu0 0.0
        %2431 = vmatpush.msra.mxu0 0.0
        %2432 = vmatpush.msra.mxu0 0.0
        %2433 = vmatpush.msra.mxu0 0.0
        %2434 = vmatpush.msra.mxu0 0.0
        %2435 = vmatpush.msra.mxu0 0.0
        %2436 = vmatpush.msra.mxu0 0.0
        %2437 = vmatpush.msra.mxu0 0.0
        %v2438 = vand.u32 %v1458, 4294901760
        %2439 = vmatpush.msra.mxu0 %v2438
        %v2440 = vand.u32 %v1457, 4294901760
        %2441 = vmatpush.msra.mxu0 %v2440
        %v2442 = vand.u32 %v1456, 4294901760
        %2443 = vmatpush.msra.mxu0 %v2442
        %v2444 = vand.u32 %v1455, 4294901760
        %2445 = vmatpush.msra.mxu0 %v2444
        %v2446 = vand.u32 %v1454, 4294901760
        %2447 = vmatpush.msra.mxu0 %v2446
        %v2448 = vand.u32 %v1453, 4294901760
        %2449 = vmatpush.msra.mxu0 %v2448
        %v2450 = vand.u32 %v1452, 4294901760
        %2451 = vmatpush.msra.mxu0 %v2450
        %v2452 = vand.u32 %v1451, 4294901760
        %2453 = vmatpush.msra.mxu0 %v2452
        %v2454 = vand.u32 %v930, 4294901760
        %2455 = vmatmul.f32.gmra.mxu0 %v2454
        %v2456 = vpop.f32.mrf.mxu0
        %v2457 = vadd.f32 %v2400, %v2456
        %v2458 = vand.u32 %v933, 4294901760
        %2459 = vmatmul.f32.gmra.mxu0 %v2458
        %v2460 = vpop.f32.mrf.mxu0
        %v2461 = vadd.f32 %v2404, %v2460
        %v2462 = vand.u32 %v936, 4294901760
        %2463 = vmatmul.f32.gmra.mxu0 %v2462
        %v2464 = vpop.f32.mrf.mxu0
        %v2465 = vadd.f32 %v2408, %v2464
        %v2466 = vand.u32 %v939, 4294901760
        %2467 = vmatmul.f32.gmra.mxu0 %v2466
        %v2468 = vpop.f32.mrf.mxu0
        %v2469 = vadd.f32 %v2412, %v2468
        %v2470 = vand.u32 %v942, 4294901760
        %2471 = vmatmul.f32.gmra.mxu0 %v2470
        %v2472 = vpop.f32.mrf.mxu0
        %v2473 = vadd.f32 %v2416, %v2472
        %v2474 = vand.u32 %v945, 4294901760
        %2475 = vmatmul.f32.gmra.mxu0 %v2474
        %v2476 = vpop.f32.mrf.mxu0
        %v2477 = vadd.f32 %v2420, %v2476
        %v2478 = vand.u32 %v948, 4294901760
        %2479 = vmatmul.f32.gmra.mxu0 %v2478
        %v2480 = vpop.f32.mrf.mxu0
        %v2481 = vadd.f32 %v2424, %v2480
        %v2482 = vand.u32 %v951, 4294901760
        %2483 = vmatmul.f32.gmra.mxu0 %v2482
        %v2484 = vpop.f32.mrf.mxu0
        %v2485 = vadd.f32 %v2428, %v2484
        %2486 = vdwg.mxu0
        %s2487 = scalar_lea.vmem %s241, 1 [#allocation10]
        %v2488 = vld [vmem:[%s2487] sm:$0x1]
        %v2490 = vperm.slane %v2488, 0
        %v2492 = vmul.f32 %v346, %v2490
        %v2493 = vmul.f32 %v347, %v2490
        %v2494 = vmul.f32 %v348, %v2490
        %v2495 = vmul.f32 %v349, %v2490
        %v2496 = vmul.f32 %v350, %v2490
        %v2497 = vmul.f32 %v351, %v2490
        %v2498 = vmul.f32 %v352, %v2490
        %v2499 = vmul.f32 %v353, %v2490
        %v2500 = vmul.f32 %v1451, 2.0
        %v2501 = vmul.f32 %v1452, 2.0
        %v2502 = vmul.f32 %v1453, 2.0
        %v2503 = vmul.f32 %v1454, 2.0
        %v2504 = vmul.f32 %v1455, 2.0
        %v2505 = vmul.f32 %v1456, 2.0
        %v2506 = vmul.f32 %v1457, 2.0
        %v2507 = vmul.f32 %v1458, 2.0
        %v2508 = vsub.f32 %v2500, %v362
        %v2509 = vsub.f32 %v2501, %v363
        %v2510 = vsub.f32 %v2502, %v364
        %v2511 = vsub.f32 %v2503, %v365
        %v2512 = vsub.f32 %v2504, %v366
        %v2513 = vsub.f32 %v2505, %v367
        %v2514 = vsub.f32 %v2506, %v368
        %v2515 = vsub.f32 %v2507, %v369
        %v2516 = vadd.f32 %v2457, %v2492
        %v2517 = vadd.f32 %v2461, %v2493
        %v2518 = vadd.f32 %v2465, %v2494
        %v2519 = vadd.f32 %v2469, %v2495
        %v2520 = vadd.f32 %v2473, %v2496
        %v2521 = vadd.f32 %v2477, %v2497
        %v2522 = vadd.f32 %v2481, %v2498
        %v2523 = vadd.f32 %v2485, %v2499
        %v2524 = vmul.f32 %v289, %v2516
        %v2525 = vmul.f32 %v290, %v2517
        %v2526 = vmul.f32 %v291, %v2518
        %v2527 = vmul.f32 %v292, %v2519
        %v2528 = vmul.f32 %v293, %v2520
        %v2529 = vmul.f32 %v294, %v2521
        %v2530 = vmul.f32 %v295, %v2522
        %v2531 = vmul.f32 %v296, %v2523
        %v2532 = vadd.f32 %v2508, %v2524
        %v2533 = vadd.f32 %v2509, %v2525
        %v2534 = vadd.f32 %v2510, %v2526
        %v2535 = vadd.f32 %v2511, %v2527
        %v2536 = vadd.f32 %v2512, %v2528
        %v2537 = vadd.f32 %v2513, %v2529
        %v2538 = vadd.f32 %v2514, %v2530
        %v2539 = vadd.f32 %v2515, %v2531
        %v2540 = vpack.c.bf16 %v2532, %v2532
        %v2541 = vpack.c.bf16 %v2533, %v2533
        %v2542 = vpack.c.bf16 %v2534, %v2534
        %v2543 = vpack.c.bf16 %v2535, %v2535
        %v2544 = vpack.c.bf16 %v2536, %v2536
        %v2545 = vpack.c.bf16 %v2537, %v2537
        %v2546 = vpack.c.bf16 %v2538, %v2538
        %v2547 = vpack.c.bf16 %v2539, %v2539
        %s2548 = scalar_lea.vmem %s266, 32 [#allocation12]
        %2549 = vst [vmem:[%s2548] sm:$0xf] %v2540
        %2550 = vst [vmem:[%s2548 + $0x4] sm:$0xf] %v2541
        %2551 = vst [vmem:[%s2548 + $0x8] sm:$0xf] %v2542
        %2552 = vst [vmem:[%s2548 + $0xc] sm:$0xf] %v2543
        %2553 = vst [vmem:[%s2548 + $0x10] sm:$0xf] %v2544
        %2554 = vst [vmem:[%s2548 + $0x14] sm:$0xf] %v2545
        %2555 = vst [vmem:[%s2548 + $0x18] sm:$0xf] %v2546
        %2556 = vst [vmem:[%s2548 + $0x1c] sm:$0xf] %v2547
        %v2557 = vand.u32 %v320, 4294901760
        %2558 = vmatpush.msra.mxu0 %v2557
        %v2559 = vand.u32 %v319, 4294901760
        %2560 = vmatpush.msra.mxu0 %v2559
        %v2561 = vand.u32 %v318, 4294901760
        %2562 = vmatpush.msra.mxu0 %v2561
        %v2563 = vand.u32 %v317, 4294901760
        %2564 = vmatpush.msra.mxu0 %v2563
        %v2565 = vand.u32 %v316, 4294901760
        %2566 = vmatpush.msra.mxu0 %v2565
        %v2567 = vand.u32 %v315, 4294901760
        %2568 = vmatpush.msra.mxu0 %v2567
        %v2569 = vand.u32 %v314, 4294901760
        %2570 = vmatpush.msra.mxu0 %v2569
        %v2571 = vand.u32 %v313, 4294901760
        %2572 = vmatpush.msra.mxu0 %v2571
        %v2573 = vand.u32 %v312, 4294901760
        %2574 = vmatpush.msra.mxu0 %v2573
        %v2575 = vand.u32 %v311, 4294901760
        %2576 = vmatpush.msra.mxu0 %v2575
        %v2577 = vand.u32 %v310, 4294901760
        %2578 = vmatpush.msra.mxu0 %v2577
        %v2579 = vand.u32 %v309, 4294901760
        %2580 = vmatpush.msra.mxu0 %v2579
        %v2581 = vand.u32 %v308, 4294901760
        %2582 = vmatpush.msra.mxu0 %v2581
        %v2583 = vand.u32 %v307, 4294901760
        %2584 = vmatpush.msra.mxu0 %v2583
        %v2585 = vand.u32 %v306, 4294901760
        %2586 = vmatpush.msra.mxu0 %v2585
        %v2587 = vand.u32 %v305, 4294901760
        %2588 = vmatpush.msra.mxu0 %v2587
        %v2589 = vand.u32 %v2532, 4294901760
        %v2590 = vsub.f32 %v2532, %v2589
        %v2591 = vand.u32 %v2590, 4294901760
        %v2592 = vsub.f32 %v2590, %v2591
        %v2593 = vand.u32 %v2592, 4294901760
        %2594 = vmatmul.f32.gmra.mxu0 %v2593
        %v2595 = vpop.f32.mrf.mxu0
        %v2596 = vadd.f32 0.0, %v2595
        %v2597 = vand.u32 %v2533, 4294901760
        %v2598 = vsub.f32 %v2533, %v2597
        %v2599 = vand.u32 %v2598, 4294901760
        %v2600 = vsub.f32 %v2598, %v2599
        %v2601 = vand.u32 %v2600, 4294901760
        %2602 = vmatmul.f32.gmra.mxu0 %v2601
        %v2603 = vpop.f32.mrf.mxu0
        %v2604 = vadd.f32 0.0, %v2603
        %v2605 = vand.u32 %v2534, 4294901760
        %v2606 = vsub.f32 %v2534, %v2605
        %v2607 = vand.u32 %v2606, 4294901760
        %v2608 = vsub.f32 %v2606, %v2607
        %v2609 = vand.u32 %v2608, 4294901760
        %2610 = vmatmul.f32.gmra.mxu0 %v2609
        %v2611 = vpop.f32.mrf.mxu0
        %v2612 = vadd.f32 0.0, %v2611
        %v2613 = vand.u32 %v2535, 4294901760
        %v2614 = vsub.f32 %v2535, %v2613
        %v2615 = vand.u32 %v2614, 4294901760
        %v2616 = vsub.f32 %v2614, %v2615
        %v2617 = vand.u32 %v2616, 4294901760
        %2618 = vmatmul.f32.gmra.mxu0 %v2617
        %v2619 = vpop.f32.mrf.mxu0
        %v2620 = vadd.f32 0.0, %v2619
        %v2621 = vand.u32 %v2536, 4294901760
        %v2622 = vsub.f32 %v2536, %v2621
        %v2623 = vand.u32 %v2622, 4294901760
        %v2624 = vsub.f32 %v2622, %v2623
        %v2625 = vand.u32 %v2624, 4294901760
        %2626 = vmatmul.f32.gmra.mxu0 %v2625
        %v2627 = vpop.f32.mrf.mxu0
        %v2628 = vadd.f32 0.0, %v2627
        %v2629 = vand.u32 %v2537, 4294901760
        %v2630 = vsub.f32 %v2537, %v2629
        %v2631 = vand.u32 %v2630, 4294901760
        %v2632 = vsub.f32 %v2630, %v2631
        %v2633 = vand.u32 %v2632, 4294901760
        %2634 = vmatmul.f32.gmra.mxu0 %v2633
        %v2635 = vpop.f32.mrf.mxu0
        %v2636 = vadd.f32 0.0, %v2635
        %v2637 = vand.u32 %v2538, 4294901760
        %v2638 = vsub.f32 %v2538, %v2637
        %v2639 = vand.u32 %v2638, 4294901760
        %v2640 = vsub.f32 %v2638, %v2639
        %v2641 = vand.u32 %v2640, 4294901760
        %2642 = vmatmul.f32.gmra.mxu0 %v2641
        %v2643 = vpop.f32.mrf.mxu0
        %v2644 = vadd.f32 0.0, %v2643
        %v2645 = vand.u32 %v2539, 4294901760
        %v2646 = vsub.f32 %v2539, %v2645
        %v2647 = vand.u32 %v2646, 4294901760
        %v2648 = vsub.f32 %v2646, %v2647
        %v2649 = vand.u32 %v2648, 4294901760
        %2650 = vmatmul.f32.gmra.mxu0 %v2649
        %v2651 = vpop.f32.mrf.mxu0
        %v2652 = vadd.f32 0.0, %v2651
        %2653 = vdwg.mxu0
        %v2654 = vand.u32 %v320, 4294901760
        %v2655 = vsub.f32 %v320, %v2654
        %v2656 = vand.u32 %v2655, 4294901760
        %v2657 = vsub.f32 %v2655, %v2656
        %v2658 = vand.u32 %v2657, 4294901760
        %2659 = vmatpush.msra.mxu0 %v2658
        %v2660 = vand.u32 %v319, 4294901760
        %v2661 = vsub.f32 %v319, %v2660
        %v2662 = vand.u32 %v2661, 4294901760
        %v2663 = vsub.f32 %v2661, %v2662
        %v2664 = vand.u32 %v2663, 4294901760
        %2665 = vmatpush.msra.mxu0 %v2664
        %v2666 = vand.u32 %v318, 4294901760
        %v2667 = vsub.f32 %v318, %v2666
        %v2668 = vand.u32 %v2667, 4294901760
        %v2669 = vsub.f32 %v2667, %v2668
        %v2670 = vand.u32 %v2669, 4294901760
        %2671 = vmatpush.msra.mxu0 %v2670
        %v2672 = vand.u32 %v317, 4294901760
        %v2673 = vsub.f32 %v317, %v2672
        %v2674 = vand.u32 %v2673, 4294901760
        %v2675 = vsub.f32 %v2673, %v2674
        %v2676 = vand.u32 %v2675, 4294901760
        %2677 = vmatpush.msra.mxu0 %v2676
        %v2678 = vand.u32 %v316, 4294901760
        %v2679 = vsub.f32 %v316, %v2678
        %v2680 = vand.u32 %v2679, 4294901760
        %v2681 = vsub.f32 %v2679, %v2680
        %v2682 = vand.u32 %v2681, 4294901760
        %2683 = vmatpush.msra.mxu0 %v2682
        %v2684 = vand.u32 %v315, 4294901760
        %v2685 = vsub.f32 %v315, %v2684
        %v2686 = vand.u32 %v2685, 4294901760
        %v2687 = vsub.f32 %v2685, %v2686
        %v2688 = vand.u32 %v2687, 4294901760
        %2689 = vmatpush.msra.mxu0 %v2688
        %v2690 = vand.u32 %v314, 4294901760
        %v2691 = vsub.f32 %v314, %v2690
        %v2692 = vand.u32 %v2691, 4294901760
        %v2693 = vsub.f32 %v2691, %v2692
        %v2694 = vand.u32 %v2693, 4294901760
        %2695 = vmatpush.msra.mxu0 %v2694
        %v2696 = vand.u32 %v313, 4294901760
        %v2697 = vsub.f32 %v313, %v2696
        %v2698 = vand.u32 %v2697, 4294901760
        %v2699 = vsub.f32 %v2697, %v2698
        %v2700 = vand.u32 %v2699, 4294901760
        %2701 = vmatpush.msra.mxu0 %v2700
        %v2702 = vand.u32 %v312, 4294901760
        %v2703 = vsub.f32 %v312, %v2702
        %v2704 = vand.u32 %v2703, 4294901760
        %v2705 = vsub.f32 %v2703, %v2704
        %v2706 = vand.u32 %v2705, 4294901760
        %2707 = vmatpush.msra.mxu0 %v2706
        %v2708 = vand.u32 %v311, 4294901760
        %v2709 = vsub.f32 %v311, %v2708
        %v2710 = vand.u32 %v2709, 4294901760
        %v2711 = vsub.f32 %v2709, %v2710
        %v2712 = vand.u32 %v2711, 4294901760
        %2713 = vmatpush.msra.mxu0 %v2712
        %v2714 = vand.u32 %v310, 4294901760
        %v2715 = vsub.f32 %v310, %v2714
        %v2716 = vand.u32 %v2715, 4294901760
        %v2717 = vsub.f32 %v2715, %v2716
        %v2718 = vand.u32 %v2717, 4294901760
        %2719 = vmatpush.msra.mxu0 %v2718
        %v2720 = vand.u32 %v309, 4294901760
        %v2721 = vsub.f32 %v309, %v2720
        %v2722 = vand.u32 %v2721, 4294901760
        %v2723 = vsub.f32 %v2721, %v2722
        %v2724 = vand.u32 %v2723, 4294901760
        %2725 = vmatpush.msra.mxu0 %v2724
        %v2726 = vand.u32 %v308, 4294901760
        %v2727 = vsub.f32 %v308, %v2726
        %v2728 = vand.u32 %v2727, 4294901760
        %v2729 = vsub.f32 %v2727, %v2728
        %v2730 = vand.u32 %v2729, 4294901760
        %2731 = vmatpush.msra.mxu0 %v2730
        %v2732 = vand.u32 %v307, 4294901760
        %v2733 = vsub.f32 %v307, %v2732
        %v2734 = vand.u32 %v2733, 4294901760
        %v2735 = vsub.f32 %v2733, %v2734
        %v2736 = vand.u32 %v2735, 4294901760
        %2737 = vmatpush.msra.mxu0 %v2736
        %v2738 = vand.u32 %v306, 4294901760
        %v2739 = vsub.f32 %v306, %v2738
        %v2740 = vand.u32 %v2739, 4294901760
        %v2741 = vsub.f32 %v2739, %v2740
        %v2742 = vand.u32 %v2741, 4294901760
        %2743 = vmatpush.msra.mxu0 %v2742
        %v2744 = vand.u32 %v305, 4294901760
        %v2745 = vsub.f32 %v305, %v2744
        %v2746 = vand.u32 %v2745, 4294901760
        %v2747 = vsub.f32 %v2745, %v2746
        %v2748 = vand.u32 %v2747, 4294901760
        %2749 = vmatpush.msra.mxu0 %v2748
        %v2750 = vand.u32 %v2532, 4294901760
        %2751 = vmatmul.f32.gmra.mxu0 %v2750
        %v2752 = vpop.f32.mrf.mxu0
        %v2753 = vadd.f32 %v2596, %v2752
        %v2754 = vand.u32 %v2533, 4294901760
        %2755 = vmatmul.f32.gmra.mxu0 %v2754
        %v2756 = vpop.f32.mrf.mxu0
        %v2757 = vadd.f32 %v2604, %v2756
        %v2758 = vand.u32 %v2534, 4294901760
        %2759 = vmatmul.f32.gmra.mxu0 %v2758
        %v2760 = vpop.f32.mrf.mxu0
        %v2761 = vadd.f32 %v2612, %v2760
        %v2762 = vand.u32 %v2535, 4294901760
        %2763 = vmatmul.f32.gmra.mxu0 %v2762
        %v2764 = vpop.f32.mrf.mxu0
        %v2765 = vadd.f32 %v2620, %v2764
        %v2766 = vand.u32 %v2536, 4294901760
        %2767 = vmatmul.f32.gmra.mxu0 %v2766
        %v2768 = vpop.f32.mrf.mxu0
        %v2769 = vadd.f32 %v2628, %v2768
        %v2770 = vand.u32 %v2537, 4294901760
        %2771 = vmatmul.f32.gmra.mxu0 %v2770
        %v2772 = vpop.f32.mrf.mxu0
        %v2773 = vadd.f32 %v2636, %v2772
        %v2774 = vand.u32 %v2538, 4294901760
        %2775 = vmatmul.f32.gmra.mxu0 %v2774
        %v2776 = vpop.f32.mrf.mxu0
        %v2777 = vadd.f32 %v2644, %v2776
        %v2778 = vand.u32 %v2539, 4294901760
        %2779 = vmatmul.f32.gmra.mxu0 %v2778
        %v2780 = vpop.f32.mrf.mxu0
        %v2781 = vadd.f32 %v2652, %v2780
        %2782 = vdwg.mxu0
        %v2783 = vand.u32 %v320, 4294901760
        %v2784 = vsub.f32 %v320, %v2783
        %2785 = vmatpush.msra.mxu0 %v2784
        %v2786 = vand.u32 %v319, 4294901760
        %v2787 = vsub.f32 %v319, %v2786
        %2788 = vmatpush.msra.mxu0 %v2787
        %v2789 = vand.u32 %v318, 4294901760
        %v2790 = vsub.f32 %v318, %v2789
        %2791 = vmatpush.msra.mxu0 %v2790
        %v2792 = vand.u32 %v317, 4294901760
        %v2793 = vsub.f32 %v317, %v2792
        %2794 = vmatpush.msra.mxu0 %v2793
        %v2795 = vand.u32 %v316, 4294901760
        %v2796 = vsub.f32 %v316, %v2795
        %2797 = vmatpush.msra.mxu0 %v2796
        %v2798 = vand.u32 %v315, 4294901760
        %v2799 = vsub.f32 %v315, %v2798
        %2800 = vmatpush.msra.mxu0 %v2799
        %v2801 = vand.u32 %v314, 4294901760
        %v2802 = vsub.f32 %v314, %v2801
        %2803 = vmatpush.msra.mxu0 %v2802
        %v2804 = vand.u32 %v313, 4294901760
        %v2805 = vsub.f32 %v313, %v2804
        %2806 = vmatpush.msra.mxu0 %v2805
        %v2807 = vand.u32 %v312, 4294901760
        %v2808 = vsub.f32 %v312, %v2807
        %2809 = vmatpush.msra.mxu0 %v2808
        %v2810 = vand.u32 %v311, 4294901760
        %v2811 = vsub.f32 %v311, %v2810
        %2812 = vmatpush.msra.mxu0 %v2811
        %v2813 = vand.u32 %v310, 4294901760
        %v2814 = vsub.f32 %v310, %v2813
        %2815 = vmatpush.msra.mxu0 %v2814
        %v2816 = vand.u32 %v309, 4294901760
        %v2817 = vsub.f32 %v309, %v2816
        %2818 = vmatpush.msra.mxu0 %v2817
        %v2819 = vand.u32 %v308, 4294901760
        %v2820 = vsub.f32 %v308, %v2819
        %2821 = vmatpush.msra.mxu0 %v2820
        %v2822 = vand.u32 %v307, 4294901760
        %v2823 = vsub.f32 %v307, %v2822
        %2824 = vmatpush.msra.mxu0 %v2823
        %v2825 = vand.u32 %v306, 4294901760
        %v2826 = vsub.f32 %v306, %v2825
        %2827 = vmatpush.msra.mxu0 %v2826
        %v2828 = vand.u32 %v305, 4294901760
        %v2829 = vsub.f32 %v305, %v2828
        %2830 = vmatpush.msra.mxu0 %v2829
        %v2831 = vand.u32 %v2532, 4294901760
        %v2832 = vsub.f32 %v2532, %v2831
        %2833 = vmatmul.f32.gmra.mxu0 %v2832
        %v2834 = vpop.f32.mrf.mxu0
        %v2835 = vadd.f32 %v2753, %v2834
        %v2836 = vand.u32 %v2533, 4294901760
        %v2837 = vsub.f32 %v2533, %v2836
        %2838 = vmatmul.f32.gmra.mxu0 %v2837
        %v2839 = vpop.f32.mrf.mxu0
        %v2840 = vadd.f32 %v2757, %v2839
        %v2841 = vand.u32 %v2534, 4294901760
        %v2842 = vsub.f32 %v2534, %v2841
        %2843 = vmatmul.f32.gmra.mxu0 %v2842
        %v2844 = vpop.f32.mrf.mxu0
        %v2845 = vadd.f32 %v2761, %v2844
        %v2846 = vand.u32 %v2535, 4294901760
        %v2847 = vsub.f32 %v2535, %v2846
        %2848 = vmatmul.f32.gmra.mxu0 %v2847
        %v2849 = vpop.f32.mrf.mxu0
        %v2850 = vadd.f32 %v2765, %v2849
        %v2851 = vand.u32 %v2536, 4294901760
        %v2852 = vsub.f32 %v2536, %v2851
        %2853 = vmatmul.f32.gmra.mxu0 %v2852
        %v2854 = vpop.f32.mrf.mxu0
        %v2855 = vadd.f32 %v2769, %v2854
        %v2856 = vand.u32 %v2537, 4294901760
        %v2857 = vsub.f32 %v2537, %v2856
        %2858 = vmatmul.f32.gmra.mxu0 %v2857
        %v2859 = vpop.f32.mrf.mxu0
        %v2860 = vadd.f32 %v2773, %v2859
        %v2861 = vand.u32 %v2538, 4294901760
        %v2862 = vsub.f32 %v2538, %v2861
        %2863 = vmatmul.f32.gmra.mxu0 %v2862
        %v2864 = vpop.f32.mrf.mxu0
        %v2865 = vadd.f32 %v2777, %v2864
        %v2866 = vand.u32 %v2539, 4294901760
        %v2867 = vsub.f32 %v2539, %v2866
        %2868 = vmatmul.f32.gmra.mxu0 %v2867
        %v2869 = vpop.f32.mrf.mxu0
        %v2870 = vadd.f32 %v2781, %v2869
        %2871 = vdwg.mxu0
        %v2872 = vand.u32 %v320, 4294901760
        %2873 = vmatpush.msra.mxu0 %v2872
        %v2874 = vand.u32 %v319, 4294901760
        %2875 = vmatpush.msra.mxu0 %v2874
        %v2876 = vand.u32 %v318, 4294901760
        %2877 = vmatpush.msra.mxu0 %v2876
        %v2878 = vand.u32 %v317, 4294901760
        %2879 = vmatpush.msra.mxu0 %v2878
        %v2880 = vand.u32 %v316, 4294901760
        %2881 = vmatpush.msra.mxu0 %v2880
        %v2882 = vand.u32 %v315, 4294901760
        %2883 = vmatpush.msra.mxu0 %v2882
        %v2884 = vand.u32 %v314, 4294901760
        %2885 = vmatpush.msra.mxu0 %v2884
        %v2886 = vand.u32 %v313, 4294901760
        %2887 = vmatpush.msra.mxu0 %v2886
        %v2888 = vand.u32 %v312, 4294901760
        %2889 = vmatpush.msra.mxu0 %v2888
        %v2890 = vand.u32 %v311, 4294901760
        %2891 = vmatpush.msra.mxu0 %v2890
        %v2892 = vand.u32 %v310, 4294901760
        %2893 = vmatpush.msra.mxu0 %v2892
        %v2894 = vand.u32 %v309, 4294901760
        %2895 = vmatpush.msra.mxu0 %v2894
        %v2896 = vand.u32 %v308, 4294901760
        %2897 = vmatpush.msra.mxu0 %v2896
        %v2898 = vand.u32 %v307, 4294901760
        %2899 = vmatpush.msra.mxu0 %v2898
        %v2900 = vand.u32 %v306, 4294901760
        %2901 = vmatpush.msra.mxu0 %v2900
        %v2902 = vand.u32 %v305, 4294901760
        %2903 = vmatpush.msra.mxu0 %v2902
        %v2904 = vand.u32 %v2532, 4294901760
        %v2905 = vsub.f32 %v2532, %v2904
        %v2906 = vand.u32 %v2905, 4294901760
        %2907 = vmatmul.f32.gmra.mxu0 %v2906
        %v2908 = vpop.f32.mrf.mxu0
        %v2909 = vadd.f32 %v2835, %v2908
        %v2910 = vand.u32 %v2533, 4294901760
        %v2911 = vsub.f32 %v2533, %v2910
        %v2912 = vand.u32 %v2911, 4294901760
        %2913 = vmatmul.f32.gmra.mxu0 %v2912
        %v2914 = vpop.f32.mrf.mxu0
        %v2915 = vadd.f32 %v2840, %v2914
        %v2916 = vand.u32 %v2534, 4294901760
        %v2917 = vsub.f32 %v2534, %v2916
        %v2918 = vand.u32 %v2917, 4294901760
        %2919 = vmatmul.f32.gmra.mxu0 %v2918
        %v2920 = vpop.f32.mrf.mxu0
        %v2921 = vadd.f32 %v2845, %v2920
        %v2922 = vand.u32 %v2535, 4294901760
        %v2923 = vsub.f32 %v2535, %v2922
        %v2924 = vand.u32 %v2923, 4294901760
        %2925 = vmatmul.f32.gmra.mxu0 %v2924
        %v2926 = vpop.f32.mrf.mxu0
        %v2927 = vadd.f32 %v2850, %v2926
        %v2928 = vand.u32 %v2536, 4294901760
        %v2929 = vsub.f32 %v2536, %v2928
        %v2930 = vand.u32 %v2929, 4294901760
        %2931 = vmatmul.f32.gmra.mxu0 %v2930
        %v2932 = vpop.f32.mrf.mxu0
        %v2933 = vadd.f32 %v2855, %v2932
        %v2934 = vand.u32 %v2537, 4294901760
        %v2935 = vsub.f32 %v2537, %v2934
        %v2936 = vand.u32 %v2935, 4294901760
        %2937 = vmatmul.f32.gmra.mxu0 %v2936
        %v2938 = vpop.f32.mrf.mxu0
        %v2939 = vadd.f32 %v2860, %v2938
        %v2940 = vand.u32 %v2538, 4294901760
        %v2941 = vsub.f32 %v2538, %v2940
        %v2942 = vand.u32 %v2941, 4294901760
        %2943 = vmatmul.f32.gmra.mxu0 %v2942
        %v2944 = vpop.f32.mrf.mxu0
        %v2945 = vadd.f32 %v2865, %v2944
        %v2946 = vand.u32 %v2539, 4294901760
        %v2947 = vsub.f32 %v2539, %v2946
        %v2948 = vand.u32 %v2947, 4294901760
        %2949 = vmatmul.f32.gmra.mxu0 %v2948
        %v2950 = vpop.f32.mrf.mxu0
        %v2951 = vadd.f32 %v2870, %v2950
        %2952 = vdwg.mxu0
        %v2953 = vand.u32 %v320, 4294901760
        %v2954 = vsub.f32 %v320, %v2953
        %v2955 = vand.u32 %v2954, 4294901760
        %2956 = vmatpush.msra.mxu0 %v2955
        %v2957 = vand.u32 %v319, 4294901760
        %v2958 = vsub.f32 %v319, %v2957
        %v2959 = vand.u32 %v2958, 4294901760
        %2960 = vmatpush.msra.mxu0 %v2959
        %v2961 = vand.u32 %v318, 4294901760
        %v2962 = vsub.f32 %v318, %v2961
        %v2963 = vand.u32 %v2962, 4294901760
        %2964 = vmatpush.msra.mxu0 %v2963
        %v2965 = vand.u32 %v317, 4294901760
        %v2966 = vsub.f32 %v317, %v2965
        %v2967 = vand.u32 %v2966, 4294901760
        %2968 = vmatpush.msra.mxu0 %v2967
        %v2969 = vand.u32 %v316, 4294901760
        %v2970 = vsub.f32 %v316, %v2969
        %v2971 = vand.u32 %v2970, 4294901760
        %2972 = vmatpush.msra.mxu0 %v2971
        %v2973 = vand.u32 %v315, 4294901760
        %v2974 = vsub.f32 %v315, %v2973
        %v2975 = vand.u32 %v2974, 4294901760
        %2976 = vmatpush.msra.mxu0 %v2975
        %v2977 = vand.u32 %v314, 4294901760
        %v2978 = vsub.f32 %v314, %v2977
        %v2979 = vand.u32 %v2978, 4294901760
        %2980 = vmatpush.msra.mxu0 %v2979
        %v2981 = vand.u32 %v313, 4294901760
        %v2982 = vsub.f32 %v313, %v2981
        %v2983 = vand.u32 %v2982, 4294901760
        %2984 = vmatpush.msra.mxu0 %v2983
        %v2985 = vand.u32 %v312, 4294901760
        %v2986 = vsub.f32 %v312, %v2985
        %v2987 = vand.u32 %v2986, 4294901760
        %2988 = vmatpush.msra.mxu0 %v2987
        %v2989 = vand.u32 %v311, 4294901760
        %v2990 = vsub.f32 %v311, %v2989
        %v2991 = vand.u32 %v2990, 4294901760
        %2992 = vmatpush.msra.mxu0 %v2991
        %v2993 = vand.u32 %v310, 4294901760
        %v2994 = vsub.f32 %v310, %v2993
        %v2995 = vand.u32 %v2994, 4294901760
        %2996 = vmatpush.msra.mxu0 %v2995
        %v2997 = vand.u32 %v309, 4294901760
        %v2998 = vsub.f32 %v309, %v2997
        %v2999 = vand.u32 %v2998, 4294901760
        %3000 = vmatpush.msra.mxu0 %v2999
        %v3001 = vand.u32 %v308, 4294901760
        %v3002 = vsub.f32 %v308, %v3001
        %v3003 = vand.u32 %v3002, 4294901760
        %3004 = vmatpush.msra.mxu0 %v3003
        %v3005 = vand.u32 %v307, 4294901760
        %v3006 = vsub.f32 %v307, %v3005
        %v3007 = vand.u32 %v3006, 4294901760
        %3008 = vmatpush.msra.mxu0 %v3007
        %v3009 = vand.u32 %v306, 4294901760
        %v3010 = vsub.f32 %v306, %v3009
        %v3011 = vand.u32 %v3010, 4294901760
        %3012 = vmatpush.msra.mxu0 %v3011
        %v3013 = vand.u32 %v305, 4294901760
        %v3014 = vsub.f32 %v305, %v3013
        %v3015 = vand.u32 %v3014, 4294901760
        %3016 = vmatpush.msra.mxu0 %v3015
        %v3017 = vand.u32 %v2532, 4294901760
        %3018 = vmatmul.f32.gmra.mxu0 %v3017
        %v3019 = vpop.f32.mrf.mxu0
        %v3020 = vadd.f32 %v2909, %v3019
        %v3021 = vand.u32 %v2533, 4294901760
        %3022 = vmatmul.f32.gmra.mxu0 %v3021
        %v3023 = vpop.f32.mrf.mxu0
        %v3024 = vadd.f32 %v2915, %v3023
        %v3025 = vand.u32 %v2534, 4294901760
        %3026 = vmatmul.f32.gmra.mxu0 %v3025
        %v3027 = vpop.f32.mrf.mxu0
        %v3028 = vadd.f32 %v2921, %v3027
        %v3029 = vand.u32 %v2535, 4294901760
        %3030 = vmatmul.f32.gmra.mxu0 %v3029
        %v3031 = vpop.f32.mrf.mxu0
        %v3032 = vadd.f32 %v2927, %v3031
        %v3033 = vand.u32 %v2536, 4294901760
        %3034 = vmatmul.f32.gmra.mxu0 %v3033
        %v3035 = vpop.f32.mrf.mxu0
        %v3036 = vadd.f32 %v2933, %v3035
        %v3037 = vand.u32 %v2537, 4294901760
        %3038 = vmatmul.f32.gmra.mxu0 %v3037
        %v3039 = vpop.f32.mrf.mxu0
        %v3040 = vadd.f32 %v2939, %v3039
        %v3041 = vand.u32 %v2538, 4294901760
        %3042 = vmatmul.f32.gmra.mxu0 %v3041
        %v3043 = vpop.f32.mrf.mxu0
        %v3044 = vadd.f32 %v2945, %v3043
        %v3045 = vand.u32 %v2539, 4294901760
        %3046 = vmatmul.f32.gmra.mxu0 %v3045
        %v3047 = vpop.f32.mrf.mxu0
        %v3048 = vadd.f32 %v2951, %v3047
        %3049 = vdwg.mxu0
        %v3050 = vand.u32 %v320, 4294901760
        %3051 = vmatpush.msra.mxu0 %v3050
        %v3052 = vand.u32 %v319, 4294901760
        %3053 = vmatpush.msra.mxu0 %v3052
        %v3054 = vand.u32 %v318, 4294901760
        %3055 = vmatpush.msra.mxu0 %v3054
        %v3056 = vand.u32 %v317, 4294901760
        %3057 = vmatpush.msra.mxu0 %v3056
        %v3058 = vand.u32 %v316, 4294901760
        %3059 = vmatpush.msra.mxu0 %v3058
        %v3060 = vand.u32 %v315, 4294901760
        %3061 = vmatpush.msra.mxu0 %v3060
        %v3062 = vand.u32 %v314, 4294901760
        %3063 = vmatpush.msra.mxu0 %v3062
        %v3064 = vand.u32 %v313, 4294901760
        %3065 = vmatpush.msra.mxu0 %v3064
        %v3066 = vand.u32 %v312, 4294901760
        %3067 = vmatpush.msra.mxu0 %v3066
        %v3068 = vand.u32 %v311, 4294901760
        %3069 = vmatpush.msra.mxu0 %v3068
        %v3070 = vand.u32 %v310, 4294901760
        %3071 = vmatpush.msra.mxu0 %v3070
        %v3072 = vand.u32 %v309, 4294901760
        %3073 = vmatpush.msra.mxu0 %v3072
        %v3074 = vand.u32 %v308, 4294901760
        %3075 = vmatpush.msra.mxu0 %v3074
        %v3076 = vand.u32 %v307, 4294901760
        %3077 = vmatpush.msra.mxu0 %v3076
        %v3078 = vand.u32 %v306, 4294901760
        %3079 = vmatpush.msra.mxu0 %v3078
        %v3080 = vand.u32 %v305, 4294901760
        %3081 = vmatpush.msra.mxu0 %v3080
        %v3082 = vand.u32 %v2532, 4294901760
        %3083 = vmatmul.f32.gmra.mxu0 %v3082
        %v3084 = vpop.f32.mrf.mxu0
        %v3085 = vadd.f32 %v3020, %v3084
        %v3086 = vand.u32 %v2533, 4294901760
        %3087 = vmatmul.f32.gmra.mxu0 %v3086
        %v3088 = vpop.f32.mrf.mxu0
        %v3089 = vadd.f32 %v3024, %v3088
        %v3090 = vand.u32 %v2534, 4294901760
        %3091 = vmatmul.f32.gmra.mxu0 %v3090
        %v3092 = vpop.f32.mrf.mxu0
        %v3093 = vadd.f32 %v3028, %v3092
        %v3094 = vand.u32 %v2535, 4294901760
        %3095 = vmatmul.f32.gmra.mxu0 %v3094
        %v3096 = vpop.f32.mrf.mxu0
        %v3097 = vadd.f32 %v3032, %v3096
        %v3098 = vand.u32 %v2536, 4294901760
        %3099 = vmatmul.f32.gmra.mxu0 %v3098
        %v3100 = vpop.f32.mrf.mxu0
        %v3101 = vadd.f32 %v3036, %v3100
        %v3102 = vand.u32 %v2537, 4294901760
        %3103 = vmatmul.f32.gmra.mxu0 %v3102
        %v3104 = vpop.f32.mrf.mxu0
        %v3105 = vadd.f32 %v3040, %v3104
        %v3106 = vand.u32 %v2538, 4294901760
        %3107 = vmatmul.f32.gmra.mxu0 %v3106
        %v3108 = vpop.f32.mrf.mxu0
        %v3109 = vadd.f32 %v3044, %v3108
        %v3110 = vand.u32 %v2539, 4294901760
        %3111 = vmatmul.f32.gmra.mxu0 %v3110
        %v3112 = vpop.f32.mrf.mxu0
        %v3113 = vadd.f32 %v3048, %v3112
        %3114 = vdwg.mxu0
        %3115 = vmatpush.msra.mxu0 0.0
        %3116 = vmatpush.msra.mxu0 0.0
        %3117 = vmatpush.msra.mxu0 0.0
        %3118 = vmatpush.msra.mxu0 0.0
        %3119 = vmatpush.msra.mxu0 0.0
        %3120 = vmatpush.msra.mxu0 0.0
        %3121 = vmatpush.msra.mxu0 0.0
        %3122 = vmatpush.msra.mxu0 0.0
        %v3123 = vand.u32 %v2539, 4294901760
        %3124 = vmatpush.msra.mxu0 %v3123
        %v3125 = vand.u32 %v2538, 4294901760
        %3126 = vmatpush.msra.mxu0 %v3125
        %v3127 = vand.u32 %v2537, 4294901760
        %3128 = vmatpush.msra.mxu0 %v3127
        %v3129 = vand.u32 %v2536, 4294901760
        %3130 = vmatpush.msra.mxu0 %v3129
        %v3131 = vand.u32 %v2535, 4294901760
        %3132 = vmatpush.msra.mxu0 %v3131
        %v3133 = vand.u32 %v2534, 4294901760
        %3134 = vmatpush.msra.mxu0 %v3133
        %v3135 = vand.u32 %v2533, 4294901760
        %3136 = vmatpush.msra.mxu0 %v3135
        %v3137 = vand.u32 %v2532, 4294901760
        %3138 = vmatpush.msra.mxu0 %v3137
        %v3139 = vand.u32 %v930, 4294901760
        %v3140 = vsub.f32 %v930, %v3139
        %v3141 = vand.u32 %v3140, 4294901760
        %v3142 = vsub.f32 %v3140, %v3141
        %v3143 = vand.u32 %v3142, 4294901760
        %3144 = vmatmul.f32.gmra.mxu0 %v3143
        %v3145 = vpop.f32.mrf.mxu0
        %v3146 = vadd.f32 %v3085, %v3145
        %v3147 = vand.u32 %v933, 4294901760
        %v3148 = vsub.f32 %v933, %v3147
        %v3149 = vand.u32 %v3148, 4294901760
        %v3150 = vsub.f32 %v3148, %v3149
        %v3151 = vand.u32 %v3150, 4294901760
        %3152 = vmatmul.f32.gmra.mxu0 %v3151
        %v3153 = vpop.f32.mrf.mxu0
        %v3154 = vadd.f32 %v3089, %v3153
        %v3155 = vand.u32 %v936, 4294901760
        %v3156 = vsub.f32 %v936, %v3155
        %v3157 = vand.u32 %v3156, 4294901760
        %v3158 = vsub.f32 %v3156, %v3157
        %v3159 = vand.u32 %v3158, 4294901760
        %3160 = vmatmul.f32.gmra.mxu0 %v3159
        %v3161 = vpop.f32.mrf.mxu0
        %v3162 = vadd.f32 %v3093, %v3161
        %v3163 = vand.u32 %v939, 4294901760
        %v3164 = vsub.f32 %v939, %v3163
        %v3165 = vand.u32 %v3164, 4294901760
        %v3166 = vsub.f32 %v3164, %v3165
        %v3167 = vand.u32 %v3166, 4294901760
        %3168 = vmatmul.f32.gmra.mxu0 %v3167
        %v3169 = vpop.f32.mrf.mxu0
        %v3170 = vadd.f32 %v3097, %v3169
        %v3171 = vand.u32 %v942, 4294901760
        %v3172 = vsub.f32 %v942, %v3171
        %v3173 = vand.u32 %v3172, 4294901760
        %v3174 = vsub.f32 %v3172, %v3173
        %v3175 = vand.u32 %v3174, 4294901760
        %3176 = vmatmul.f32.gmra.mxu0 %v3175
        %v3177 = vpop.f32.mrf.mxu0
        %v3178 = vadd.f32 %v3101, %v3177
        %v3179 = vand.u32 %v945, 4294901760
        %v3180 = vsub.f32 %v945, %v3179
        %v3181 = vand.u32 %v3180, 4294901760
        %v3182 = vsub.f32 %v3180, %v3181
        %v3183 = vand.u32 %v3182, 4294901760
        %3184 = vmatmul.f32.gmra.mxu0 %v3183
        %v3185 = vpop.f32.mrf.mxu0
        %v3186 = vadd.f32 %v3105, %v3185
        %v3187 = vand.u32 %v948, 4294901760
        %v3188 = vsub.f32 %v948, %v3187
        %v3189 = vand.u32 %v3188, 4294901760
        %v3190 = vsub.f32 %v3188, %v3189
        %v3191 = vand.u32 %v3190, 4294901760
        %3192 = vmatmul.f32.gmra.mxu0 %v3191
        %v3193 = vpop.f32.mrf.mxu0
        %v3194 = vadd.f32 %v3109, %v3193
        %v3195 = vand.u32 %v951, 4294901760
        %v3196 = vsub.f32 %v951, %v3195
        %v3197 = vand.u32 %v3196, 4294901760
        %v3198 = vsub.f32 %v3196, %v3197
        %v3199 = vand.u32 %v3198, 4294901760
        %3200 = vmatmul.f32.gmra.mxu0 %v3199
        %v3201 = vpop.f32.mrf.mxu0
        %v3202 = vadd.f32 %v3113, %v3201
        %3203 = vdwg.mxu0
        %3204 = vmatpush.msra.mxu0 0.0
        %3205 = vmatpush.msra.mxu0 0.0
        %3206 = vmatpush.msra.mxu0 0.0
        %3207 = vmatpush.msra.mxu0 0.0
        %3208 = vmatpush.msra.mxu0 0.0
        %3209 = vmatpush.msra.mxu0 0.0
        %3210 = vmatpush.msra.mxu0 0.0
        %3211 = vmatpush.msra.mxu0 0.0
        %v3212 = vand.u32 %v2539, 4294901760
        %v3213 = vsub.f32 %v2539, %v3212
        %v3214 = vand.u32 %v3213, 4294901760
        %v3215 = vsub.f32 %v3213, %v3214
        %v3216 = vand.u32 %v3215, 4294901760
        %3217 = vmatpush.msra.mxu0 %v3216
        %v3218 = vand.u32 %v2538, 4294901760
        %v3219 = vsub.f32 %v2538, %v3218
        %v3220 = vand.u32 %v3219, 4294901760
        %v3221 = vsub.f32 %v3219, %v3220
        %v3222 = vand.u32 %v3221, 4294901760
        %3223 = vmatpush.msra.mxu0 %v3222
        %v3224 = vand.u32 %v2537, 4294901760
        %v3225 = vsub.f32 %v2537, %v3224
        %v3226 = vand.u32 %v3225, 4294901760
        %v3227 = vsub.f32 %v3225, %v3226
        %v3228 = vand.u32 %v3227, 4294901760
        %3229 = vmatpush.msra.mxu0 %v3228
        %v3230 = vand.u32 %v2536, 4294901760
        %v3231 = vsub.f32 %v2536, %v3230
        %v3232 = vand.u32 %v3231, 4294901760
        %v3233 = vsub.f32 %v3231, %v3232
        %v3234 = vand.u32 %v3233, 4294901760
        %3235 = vmatpush.msra.mxu0 %v3234
        %v3236 = vand.u32 %v2535, 4294901760
        %v3237 = vsub.f32 %v2535, %v3236
        %v3238 = vand.u32 %v3237, 4294901760
        %v3239 = vsub.f32 %v3237, %v3238
        %v3240 = vand.u32 %v3239, 4294901760
        %3241 = vmatpush.msra.mxu0 %v3240
        %v3242 = vand.u32 %v2534, 4294901760
        %v3243 = vsub.f32 %v2534, %v3242
        %v3244 = vand.u32 %v3243, 4294901760
        %v3245 = vsub.f32 %v3243, %v3244
        %v3246 = vand.u32 %v3245, 4294901760
        %3247 = vmatpush.msra.mxu0 %v3246
        %v3248 = vand.u32 %v2533, 4294901760
        %v3249 = vsub.f32 %v2533, %v3248
        %v3250 = vand.u32 %v3249, 4294901760
        %v3251 = vsub.f32 %v3249, %v3250
        %v3252 = vand.u32 %v3251, 4294901760
        %3253 = vmatpush.msra.mxu0 %v3252
        %v3254 = vand.u32 %v2532, 4294901760
        %v3255 = vsub.f32 %v2532, %v3254
        %v3256 = vand.u32 %v3255, 4294901760
        %v3257 = vsub.f32 %v3255, %v3256
        %v3258 = vand.u32 %v3257, 4294901760
        %3259 = vmatpush.msra.mxu0 %v3258
        %v3260 = vand.u32 %v930, 4294901760
        %3261 = vmatmul.f32.gmra.mxu0 %v3260
        %v3262 = vpop.f32.mrf.mxu0
        %v3263 = vadd.f32 %v3146, %v3262
        %v3264 = vand.u32 %v933, 4294901760
        %3265 = vmatmul.f32.gmra.mxu0 %v3264
        %v3266 = vpop.f32.mrf.mxu0
        %v3267 = vadd.f32 %v3154, %v3266
        %v3268 = vand.u32 %v936, 4294901760
        %3269 = vmatmul.f32.gmra.mxu0 %v3268
        %v3270 = vpop.f32.mrf.mxu0
        %v3271 = vadd.f32 %v3162, %v3270
        %v3272 = vand.u32 %v939, 4294901760
        %3273 = vmatmul.f32.gmra.mxu0 %v3272
        %v3274 = vpop.f32.mrf.mxu0
        %v3275 = vadd.f32 %v3170, %v3274
        %v3276 = vand.u32 %v942, 4294901760
        %3277 = vmatmul.f32.gmra.mxu0 %v3276
        %v3278 = vpop.f32.mrf.mxu0
        %v3279 = vadd.f32 %v3178, %v3278
        %v3280 = vand.u32 %v945, 4294901760
        %3281 = vmatmul.f32.gmra.mxu0 %v3280
        %v3282 = vpop.f32.mrf.mxu0
        %v3283 = vadd.f32 %v3186, %v3282
        %v3284 = vand.u32 %v948, 4294901760
        %3285 = vmatmul.f32.gmra.mxu0 %v3284
        %v3286 = vpop.f32.mrf.mxu0
        %v3287 = vadd.f32 %v3194, %v3286
        %v3288 = vand.u32 %v951, 4294901760
        %3289 = vmatmul.f32.gmra.mxu0 %v3288
        %v3290 = vpop.f32.mrf.mxu0
        %v3291 = vadd.f32 %v3202, %v3290
        %3292 = vdwg.mxu0
        %3293 = vmatpush.msra.mxu0 0.0
        %3294 = vmatpush.msra.mxu0 0.0
        %3295 = vmatpush.msra.mxu0 0.0
        %3296 = vmatpush.msra.mxu0 0.0
        %3297 = vmatpush.msra.mxu0 0.0
        %3298 = vmatpush.msra.mxu0 0.0
        %3299 = vmatpush.msra.mxu0 0.0
        %3300 = vmatpush.msra.mxu0 0.0
        %v3301 = vand.u32 %v2539, 4294901760
        %v3302 = vsub.f32 %v2539, %v3301
        %3303 = vmatpush.msra.mxu0 %v3302
        %v3304 = vand.u32 %v2538, 4294901760
        %v3305 = vsub.f32 %v2538, %v3304
        %3306 = vmatpush.msra.mxu0 %v3305
        %v3307 = vand.u32 %v2537, 4294901760
        %v3308 = vsub.f32 %v2537, %v3307
        %3309 = vmatpush.msra.mxu0 %v3308
        %v3310 = vand.u32 %v2536, 4294901760
        %v3311 = vsub.f32 %v2536, %v3310
        %3312 = vmatpush.msra.mxu0 %v3311
        %v3313 = vand.u32 %v2535, 4294901760
        %v3314 = vsub.f32 %v2535, %v3313
        %3315 = vmatpush.msra.mxu0 %v3314
        %v3316 = vand.u32 %v2534, 4294901760
        %v3317 = vsub.f32 %v2534, %v3316
        %3318 = vmatpush.msra.mxu0 %v3317
        %v3319 = vand.u32 %v2533, 4294901760
        %v3320 = vsub.f32 %v2533, %v3319
        %3321 = vmatpush.msra.mxu0 %v3320
        %v3322 = vand.u32 %v2532, 4294901760
        %v3323 = vsub.f32 %v2532, %v3322
        %3324 = vmatpush.msra.mxu0 %v3323
        %v3325 = vand.u32 %v930, 4294901760
        %v3326 = vsub.f32 %v930, %v3325
        %3327 = vmatmul.f32.gmra.mxu0 %v3326
        %v3328 = vpop.f32.mrf.mxu0
        %v3329 = vadd.f32 %v3263, %v3328
        %v3330 = vand.u32 %v933, 4294901760
        %v3331 = vsub.f32 %v933, %v3330
        %3332 = vmatmul.f32.gmra.mxu0 %v3331
        %v3333 = vpop.f32.mrf.mxu0
        %v3334 = vadd.f32 %v3267, %v3333
        %v3335 = vand.u32 %v936, 4294901760
        %v3336 = vsub.f32 %v936, %v3335
        %3337 = vmatmul.f32.gmra.mxu0 %v3336
        %v3338 = vpop.f32.mrf.mxu0
        %v3339 = vadd.f32 %v3271, %v3338
        %v3340 = vand.u32 %v939, 4294901760
        %v3341 = vsub.f32 %v939, %v3340
        %3342 = vmatmul.f32.gmra.mxu0 %v3341
        %v3343 = vpop.f32.mrf.mxu0
        %v3344 = vadd.f32 %v3275, %v3343
        %v3345 = vand.u32 %v942, 4294901760
        %v3346 = vsub.f32 %v942, %v3345
        %3347 = vmatmul.f32.gmra.mxu0 %v3346
        %v3348 = vpop.f32.mrf.mxu0
        %v3349 = vadd.f32 %v3279, %v3348
        %v3350 = vand.u32 %v945, 4294901760
        %v3351 = vsub.f32 %v945, %v3350
        %3352 = vmatmul.f32.gmra.mxu0 %v3351
        %v3353 = vpop.f32.mrf.mxu0
        %v3354 = vadd.f32 %v3283, %v3353
        %v3355 = vand.u32 %v948, 4294901760
        %v3356 = vsub.f32 %v948, %v3355
        %3357 = vmatmul.f32.gmra.mxu0 %v3356
        %v3358 = vpop.f32.mrf.mxu0
        %v3359 = vadd.f32 %v3287, %v3358
        %v3360 = vand.u32 %v951, 4294901760
        %v3361 = vsub.f32 %v951, %v3360
        %3362 = vmatmul.f32.gmra.mxu0 %v3361
        %v3363 = vpop.f32.mrf.mxu0
        %v3364 = vadd.f32 %v3291, %v3363
        %3365 = vdwg.mxu0
        %3366 = vmatpush.msra.mxu0 0.0
        %3367 = vmatpush.msra.mxu0 0.0
        %3368 = vmatpush.msra.mxu0 0.0
        %3369 = vmatpush.msra.mxu0 0.0
        %3370 = vmatpush.msra.mxu0 0.0
        %3371 = vmatpush.msra.mxu0 0.0
        %3372 = vmatpush.msra.mxu0 0.0
        %3373 = vmatpush.msra.mxu0 0.0
        %v3374 = vand.u32 %v2539, 4294901760
        %3375 = vmatpush.msra.mxu0 %v3374
        %v3376 = vand.u32 %v2538, 4294901760
        %3377 = vmatpush.msra.mxu0 %v3376
        %v3378 = vand.u32 %v2537, 4294901760
        %3379 = vmatpush.msra.mxu0 %v3378
        %v3380 = vand.u32 %v2536, 4294901760
        %3381 = vmatpush.msra.mxu0 %v3380
        %v3382 = vand.u32 %v2535, 4294901760
        %3383 = vmatpush.msra.mxu0 %v3382
        %v3384 = vand.u32 %v2534, 4294901760
        %3385 = vmatpush.msra.mxu0 %v3384
        %v3386 = vand.u32 %v2533, 4294901760
        %3387 = vmatpush.msra.mxu0 %v3386
        %v3388 = vand.u32 %v2532, 4294901760
        %3389 = vmatpush.msra.mxu0 %v3388
        %v3390 = vand.u32 %v930, 4294901760
        %v3391 = vsub.f32 %v930, %v3390
        %v3392 = vand.u32 %v3391, 4294901760
        %3393 = vmatmul.f32.gmra.mxu0 %v3392
        %v3394 = vpop.f32.mrf.mxu0
        %v3395 = vadd.f32 %v3329, %v3394
        %v3396 = vand.u32 %v933, 4294901760
        %v3397 = vsub.f32 %v933, %v3396
        %v3398 = vand.u32 %v3397, 4294901760
        %3399 = vmatmul.f32.gmra.mxu0 %v3398
        %v3400 = vpop.f32.mrf.mxu0
        %v3401 = vadd.f32 %v3334, %v3400
        %v3402 = vand.u32 %v936, 4294901760
        %v3403 = vsub.f32 %v936, %v3402
        %v3404 = vand.u32 %v3403, 4294901760
        %3405 = vmatmul.f32.gmra.mxu0 %v3404
        %v3406 = vpop.f32.mrf.mxu0
        %v3407 = vadd.f32 %v3339, %v3406
        %v3408 = vand.u32 %v939, 4294901760
        %v3409 = vsub.f32 %v939, %v3408
        %v3410 = vand.u32 %v3409, 4294901760
        %3411 = vmatmul.f32.gmra.mxu0 %v3410
        %v3412 = vpop.f32.mrf.mxu0
        %v3413 = vadd.f32 %v3344, %v3412
        %v3414 = vand.u32 %v942, 4294901760
        %v3415 = vsub.f32 %v942, %v3414
        %v3416 = vand.u32 %v3415, 4294901760
        %3417 = vmatmul.f32.gmra.mxu0 %v3416
        %v3418 = vpop.f32.mrf.mxu0
        %v3419 = vadd.f32 %v3349, %v3418
        %v3420 = vand.u32 %v945, 4294901760
        %v3421 = vsub.f32 %v945, %v3420
        %v3422 = vand.u32 %v3421, 4294901760
        %3423 = vmatmul.f32.gmra.mxu0 %v3422
        %v3424 = vpop.f32.mrf.mxu0
        %v3425 = vadd.f32 %v3354, %v3424
        %v3426 = vand.u32 %v948, 4294901760
        %v3427 = vsub.f32 %v948, %v3426
        %v3428 = vand.u32 %v3427, 4294901760
        %3429 = vmatmul.f32.gmra.mxu0 %v3428
        %v3430 = vpop.f32.mrf.mxu0
        %v3431 = vadd.f32 %v3359, %v3430
        %v3432 = vand.u32 %v951, 4294901760
        %v3433 = vsub.f32 %v951, %v3432
        %v3434 = vand.u32 %v3433, 4294901760
        %3435 = vmatmul.f32.gmra.mxu0 %v3434
        %v3436 = vpop.f32.mrf.mxu0
        %v3437 = vadd.f32 %v3364, %v3436
        %3438 = vdwg.mxu0
        %3439 = vmatpush.msra.mxu0 0.0
        %3440 = vmatpush.msra.mxu0 0.0
        %3441 = vmatpush.msra.mxu0 0.0
        %3442 = vmatpush.msra.mxu0 0.0
        %3443 = vmatpush.msra.mxu0 0.0
        %3444 = vmatpush.msra.mxu0 0.0
        %3445 = vmatpush.msra.mxu0 0.0
        %3446 = vmatpush.msra.mxu0 0.0
        %v3447 = vand.u32 %v2539, 4294901760
        %v3448 = vsub.f32 %v2539, %v3447
        %v3449 = vand.u32 %v3448, 4294901760
        %3450 = vmatpush.msra.mxu0 %v3449
        %v3451 = vand.u32 %v2538, 4294901760
        %v3452 = vsub.f32 %v2538, %v3451
        %v3453 = vand.u32 %v3452, 4294901760
        %3454 = vmatpush.msra.mxu0 %v3453
        %v3455 = vand.u32 %v2537, 4294901760
        %v3456 = vsub.f32 %v2537, %v3455
        %v3457 = vand.u32 %v3456, 4294901760
        %3458 = vmatpush.msra.mxu0 %v3457
        %v3459 = vand.u32 %v2536, 4294901760
        %v3460 = vsub.f32 %v2536, %v3459
        %v3461 = vand.u32 %v3460, 4294901760
        %3462 = vmatpush.msra.mxu0 %v3461
        %v3463 = vand.u32 %v2535, 4294901760
        %v3464 = vsub.f32 %v2535, %v3463
        %v3465 = vand.u32 %v3464, 4294901760
        %3466 = vmatpush.msra.mxu0 %v3465
        %v3467 = vand.u32 %v2534, 4294901760
        %v3468 = vsub.f32 %v2534, %v3467
        %v3469 = vand.u32 %v3468, 4294901760
        %3470 = vmatpush.msra.mxu0 %v3469
        %v3471 = vand.u32 %v2533, 4294901760
        %v3472 = vsub.f32 %v2533, %v3471
        %v3473 = vand.u32 %v3472, 4294901760
        %3474 = vmatpush.msra.mxu0 %v3473
        %v3475 = vand.u32 %v2532, 4294901760
        %v3476 = vsub.f32 %v2532, %v3475
        %v3477 = vand.u32 %v3476, 4294901760
        %3478 = vmatpush.msra.mxu0 %v3477
        %v3479 = vand.u32 %v930, 4294901760
        %3480 = vmatmul.f32.gmra.mxu0 %v3479
        %v3481 = vpop.f32.mrf.mxu0
        %v3482 = vadd.f32 %v3395, %v3481
        %v3483 = vand.u32 %v933, 4294901760
        %3484 = vmatmul.f32.gmra.mxu0 %v3483
        %v3485 = vpop.f32.mrf.mxu0
        %v3486 = vadd.f32 %v3401, %v3485
        %v3487 = vand.u32 %v936, 4294901760
        %3488 = vmatmul.f32.gmra.mxu0 %v3487
        %v3489 = vpop.f32.mrf.mxu0
        %v3490 = vadd.f32 %v3407, %v3489
        %v3491 = vand.u32 %v939, 4294901760
        %3492 = vmatmul.f32.gmra.mxu0 %v3491
        %v3493 = vpop.f32.mrf.mxu0
        %v3494 = vadd.f32 %v3413, %v3493
        %v3495 = vand.u32 %v942, 4294901760
        %3496 = vmatmul.f32.gmra.mxu0 %v3495
        %v3497 = vpop.f32.mrf.mxu0
        %v3498 = vadd.f32 %v3419, %v3497
        %v3499 = vand.u32 %v945, 4294901760
        %3500 = vmatmul.f32.gmra.mxu0 %v3499
        %v3501 = vpop.f32.mrf.mxu0
        %v3502 = vadd.f32 %v3425, %v3501
        %v3503 = vand.u32 %v948, 4294901760
        %3504 = vmatmul.f32.gmra.mxu0 %v3503
        %v3505 = vpop.f32.mrf.mxu0
        %v3506 = vadd.f32 %v3431, %v3505
        %v3507 = vand.u32 %v951, 4294901760
        %3508 = vmatmul.f32.gmra.mxu0 %v3507
        %v3509 = vpop.f32.mrf.mxu0
        %v3510 = vadd.f32 %v3437, %v3509
        %3511 = vdwg.mxu0
        %3512 = vmatpush.msra.mxu0 0.0
        %3513 = vmatpush.msra.mxu0 0.0
        %3514 = vmatpush.msra.mxu0 0.0
        %3515 = vmatpush.msra.mxu0 0.0
        %3516 = vmatpush.msra.mxu0 0.0
        %3517 = vmatpush.msra.mxu0 0.0
        %3518 = vmatpush.msra.mxu0 0.0
        %3519 = vmatpush.msra.mxu0 0.0
        %v3520 = vand.u32 %v2539, 4294901760
        %3521 = vmatpush.msra.mxu0 %v3520
        %v3522 = vand.u32 %v2538, 4294901760
        %3523 = vmatpush.msra.mxu0 %v3522
        %v3524 = vand.u32 %v2537, 4294901760
        %3525 = vmatpush.msra.mxu0 %v3524
        %v3526 = vand.u32 %v2536, 4294901760
        %3527 = vmatpush.msra.mxu0 %v3526
        %v3528 = vand.u32 %v2535, 4294901760
        %3529 = vmatpush.msra.mxu0 %v3528
        %v3530 = vand.u32 %v2534, 4294901760
        %3531 = vmatpush.msra.mxu0 %v3530
        %v3532 = vand.u32 %v2533, 4294901760
        %3533 = vmatpush.msra.mxu0 %v3532
        %v3534 = vand.u32 %v2532, 4294901760
        %3535 = vmatpush.msra.mxu0 %v3534
        %v3536 = vand.u32 %v930, 4294901760
        %3537 = vmatmul.f32.gmra.mxu0 %v3536
        %v3538 = vpop.f32.mrf.mxu0
        %v3539 = vadd.f32 %v3482, %v3538
        %v3540 = vand.u32 %v933, 4294901760
        %3541 = vmatmul.f32.gmra.mxu0 %v3540
        %v3542 = vpop.f32.mrf.mxu0
        %v3543 = vadd.f32 %v3486, %v3542
        %v3544 = vand.u32 %v936, 4294901760
        %3545 = vmatmul.f32.gmra.mxu0 %v3544
        %v3546 = vpop.f32.mrf.mxu0
        %v3547 = vadd.f32 %v3490, %v3546
        %v3548 = vand.u32 %v939, 4294901760
        %3549 = vmatmul.f32.gmra.mxu0 %v3548
        %v3550 = vpop.f32.mrf.mxu0
        %v3551 = vadd.f32 %v3494, %v3550
        %v3552 = vand.u32 %v942, 4294901760
        %3553 = vmatmul.f32.gmra.mxu0 %v3552
        %v3554 = vpop.f32.mrf.mxu0
        %v3555 = vadd.f32 %v3498, %v3554
        %v3556 = vand.u32 %v945, 4294901760
        %3557 = vmatmul.f32.gmra.mxu0 %v3556
        %v3558 = vpop.f32.mrf.mxu0
        %v3559 = vadd.f32 %v3502, %v3558
        %v3560 = vand.u32 %v948, 4294901760
        %3561 = vmatmul.f32.gmra.mxu0 %v3560
        %v3562 = vpop.f32.mrf.mxu0
        %v3563 = vadd.f32 %v3506, %v3562
        %v3564 = vand.u32 %v951, 4294901760
        %3565 = vmatmul.f32.gmra.mxu0 %v3564
        %v3566 = vpop.f32.mrf.mxu0
        %v3567 = vadd.f32 %v3510, %v3566
        %3568 = vdwg.mxu0
        %s3569 = scalar_lea.vmem %s241, 2 [#allocation10]
        %v3570 = vld [vmem:[%s3569] sm:$0x1]
        %v3572 = vperm.slane %v3570, 0
        %v3574 = vmul.f32 %v346, %v3572
        %v3575 = vmul.f32 %v347, %v3572
        %v3576 = vmul.f32 %v348, %v3572
        %v3577 = vmul.f32 %v349, %v3572
        %v3578 = vmul.f32 %v350, %v3572
        %v3579 = vmul.f32 %v351, %v3572
        %v3580 = vmul.f32 %v352, %v3572
        %v3581 = vmul.f32 %v353, %v3572
        %v3582 = vmul.f32 %v2532, 2.0
        %v3583 = vmul.f32 %v2533, 2.0
        %v3584 = vmul.f32 %v2534, 2.0
        %v3585 = vmul.f32 %v2535, 2.0
        %v3586 = vmul.f32 %v2536, 2.0
        %v3587 = vmul.f32 %v2537, 2.0
        %v3588 = vmul.f32 %v2538, 2.0
        %v3589 = vmul.f32 %v2539, 2.0
        %v3590 = vsub.f32 %v3582, %v1451
        %v3591 = vsub.f32 %v3583, %v1452
        %v3592 = vsub.f32 %v3584, %v1453
        %v3593 = vsub.f32 %v3585, %v1454
        %v3594 = vsub.f32 %v3586, %v1455
        %v3595 = vsub.f32 %v3587, %v1456
        %v3596 = vsub.f32 %v3588, %v1457
        %v3597 = vsub.f32 %v3589, %v1458
        %v3598 = vadd.f32 %v3539, %v3574
        %v3599 = vadd.f32 %v3543, %v3575
        %v3600 = vadd.f32 %v3547, %v3576
        %v3601 = vadd.f32 %v3551, %v3577
        %v3602 = vadd.f32 %v3555, %v3578
        %v3603 = vadd.f32 %v3559, %v3579
        %v3604 = vadd.f32 %v3563, %v3580
        %v3605 = vadd.f32 %v3567, %v3581
        %v3606 = vmul.f32 %v289, %v3598
        %v3607 = vmul.f32 %v290, %v3599
        %v3608 = vmul.f32 %v291, %v3600
        %v3609 = vmul.f32 %v292, %v3601
        %v3610 = vmul.f32 %v293, %v3602
        %v3611 = vmul.f32 %v294, %v3603
        %v3612 = vmul.f32 %v295, %v3604
        %v3613 = vmul.f32 %v296, %v3605
        %v3614 = vadd.f32 %v3590, %v3606
        %v3615 = vadd.f32 %v3591, %v3607
        %v3616 = vadd.f32 %v3592, %v3608
        %v3617 = vadd.f32 %v3593, %v3609
        %v3618 = vadd.f32 %v3594, %v3610
        %v3619 = vadd.f32 %v3595, %v3611
        %v3620 = vadd.f32 %v3596, %v3612
        %v3621 = vadd.f32 %v3597, %v3613
        %v3622 = vpack.c.bf16 %v3614, %v3614
        %v3623 = vpack.c.bf16 %v3615, %v3615
        %v3624 = vpack.c.bf16 %v3616, %v3616
        %v3625 = vpack.c.bf16 %v3617, %v3617
        %v3626 = vpack.c.bf16 %v3618, %v3618
        %v3627 = vpack.c.bf16 %v3619, %v3619
        %v3628 = vpack.c.bf16 %v3620, %v3620
        %v3629 = vpack.c.bf16 %v3621, %v3621
        %s3630 = scalar_lea.vmem %s266, 64 [#allocation12]
        %3631 = vst [vmem:[%s3630] sm:$0xf] %v3622
        %3632 = vst [vmem:[%s3630 + $0x4] sm:$0xf] %v3623
        %3633 = vst [vmem:[%s3630 + $0x8] sm:$0xf] %v3624
        %3634 = vst [vmem:[%s3630 + $0xc] sm:$0xf] %v3625
        %3635 = vst [vmem:[%s3630 + $0x10] sm:$0xf] %v3626
        %3636 = vst [vmem:[%s3630 + $0x14] sm:$0xf] %v3627
        %3637 = vst [vmem:[%s3630 + $0x18] sm:$0xf] %v3628
        %3638 = vst [vmem:[%s3630 + $0x1c] sm:$0xf] %v3629
        %v3639 = vand.u32 %v320, 4294901760
        %3640 = vmatpush.msra.mxu0 %v3639
        %v3641 = vand.u32 %v319, 4294901760
        %3642 = vmatpush.msra.mxu0 %v3641
        %v3643 = vand.u32 %v318, 4294901760
        %3644 = vmatpush.msra.mxu0 %v3643
        %v3645 = vand.u32 %v317, 4294901760
        %3646 = vmatpush.msra.mxu0 %v3645
        %v3647 = vand.u32 %v316, 4294901760
        %3648 = vmatpush.msra.mxu0 %v3647
        %v3649 = vand.u32 %v315, 4294901760
        %3650 = vmatpush.msra.mxu0 %v3649
        %v3651 = vand.u32 %v314, 4294901760
        %3652 = vmatpush.msra.mxu0 %v3651
        %v3653 = vand.u32 %v313, 4294901760
        %3654 = vmatpush.msra.mxu0 %v3653
        %v3655 = vand.u32 %v312, 4294901760
        %3656 = vmatpush.msra.mxu0 %v3655
        %v3657 = vand.u32 %v311, 4294901760
        %3658 = vmatpush.msra.mxu0 %v3657
        %v3659 = vand.u32 %v310, 4294901760
        %3660 = vmatpush.msra.mxu0 %v3659
        %v3661 = vand.u32 %v309, 4294901760
        %3662 = vmatpush.msra.mxu0 %v3661
        %v3663 = vand.u32 %v308, 4294901760
        %3664 = vmatpush.msra.mxu0 %v3663
        %v3665 = vand.u32 %v307, 4294901760
        %3666 = vmatpush.msra.mxu0 %v3665
        %v3667 = vand.u32 %v306, 4294901760
        %3668 = vmatpush.msra.mxu0 %v3667
        %v3669 = vand.u32 %v305, 4294901760
        %3670 = vmatpush.msra.mxu0 %v3669
        %v3671 = vand.u32 %v3614, 4294901760
        %v3672 = vsub.f32 %v3614, %v3671
        %v3673 = vand.u32 %v3672, 4294901760
        %v3674 = vsub.f32 %v3672, %v3673
        %v3675 = vand.u32 %v3674, 4294901760
        %3676 = vmatmul.f32.gmra.mxu0 %v3675
        %v3677 = vpop.f32.mrf.mxu0
        %v3678 = vadd.f32 0.0, %v3677
        %v3679 = vand.u32 %v3615, 4294901760
        %v3680 = vsub.f32 %v3615, %v3679
        %v3681 = vand.u32 %v3680, 4294901760
        %v3682 = vsub.f32 %v3680, %v3681
        %v3683 = vand.u32 %v3682, 4294901760
        %3684 = vmatmul.f32.gmra.mxu0 %v3683
        %v3685 = vpop.f32.mrf.mxu0
        %v3686 = vadd.f32 0.0, %v3685
        %v3687 = vand.u32 %v3616, 4294901760
        %v3688 = vsub.f32 %v3616, %v3687
        %v3689 = vand.u32 %v3688, 4294901760
        %v3690 = vsub.f32 %v3688, %v3689
        %v3691 = vand.u32 %v3690, 4294901760
        %3692 = vmatmul.f32.gmra.mxu0 %v3691
        %v3693 = vpop.f32.mrf.mxu0
        %v3694 = vadd.f32 0.0, %v3693
        %v3695 = vand.u32 %v3617, 4294901760
        %v3696 = vsub.f32 %v3617, %v3695
        %v3697 = vand.u32 %v3696, 4294901760
        %v3698 = vsub.f32 %v3696, %v3697
        %v3699 = vand.u32 %v3698, 4294901760
        %3700 = vmatmul.f32.gmra.mxu0 %v3699
        %v3701 = vpop.f32.mrf.mxu0
        %v3702 = vadd.f32 0.0, %v3701
        %v3703 = vand.u32 %v3618, 4294901760
        %v3704 = vsub.f32 %v3618, %v3703
        %v3705 = vand.u32 %v3704, 4294901760
        %v3706 = vsub.f32 %v3704, %v3705
        %v3707 = vand.u32 %v3706, 4294901760
        %3708 = vmatmul.f32.gmra.mxu0 %v3707
        %v3709 = vpop.f32.mrf.mxu0
        %v3710 = vadd.f32 0.0, %v3709
        %v3711 = vand.u32 %v3619, 4294901760
        %v3712 = vsub.f32 %v3619, %v3711
        %v3713 = vand.u32 %v3712, 4294901760
        %v3714 = vsub.f32 %v3712, %v3713
        %v3715 = vand.u32 %v3714, 4294901760
        %3716 = vmatmul.f32.gmra.mxu0 %v3715
        %v3717 = vpop.f32.mrf.mxu0
        %v3718 = vadd.f32 0.0, %v3717
        %v3719 = vand.u32 %v3620, 4294901760
        %v3720 = vsub.f32 %v3620, %v3719
        %v3721 = vand.u32 %v3720, 4294901760
        %v3722 = vsub.f32 %v3720, %v3721
        %v3723 = vand.u32 %v3722, 4294901760
        %3724 = vmatmul.f32.gmra.mxu0 %v3723
        %v3725 = vpop.f32.mrf.mxu0
        %v3726 = vadd.f32 0.0, %v3725
        %v3727 = vand.u32 %v3621, 4294901760
        %v3728 = vsub.f32 %v3621, %v3727
        %v3729 = vand.u32 %v3728, 4294901760
        %v3730 = vsub.f32 %v3728, %v3729
        %v3731 = vand.u32 %v3730, 4294901760
        %3732 = vmatmul.f32.gmra.mxu0 %v3731
        %v3733 = vpop.f32.mrf.mxu0
        %v3734 = vadd.f32 0.0, %v3733
        %3735 = vdwg.mxu0
        %v3736 = vand.u32 %v320, 4294901760
        %v3737 = vsub.f32 %v320, %v3736
        %v3738 = vand.u32 %v3737, 4294901760
        %v3739 = vsub.f32 %v3737, %v3738
        %v3740 = vand.u32 %v3739, 4294901760
        %3741 = vmatpush.msra.mxu0 %v3740
        %v3742 = vand.u32 %v319, 4294901760
        %v3743 = vsub.f32 %v319, %v3742
        %v3744 = vand.u32 %v3743, 4294901760
        %v3745 = vsub.f32 %v3743, %v3744
        %v3746 = vand.u32 %v3745, 4294901760
        %3747 = vmatpush.msra.mxu0 %v3746
        %v3748 = vand.u32 %v318, 4294901760
        %v3749 = vsub.f32 %v318, %v3748
        %v3750 = vand.u32 %v3749, 4294901760
        %v3751 = vsub.f32 %v3749, %v3750
        %v3752 = vand.u32 %v3751, 4294901760
        %3753 = vmatpush.msra.mxu0 %v3752
        %v3754 = vand.u32 %v317, 4294901760
        %v3755 = vsub.f32 %v317, %v3754
        %v3756 = vand.u32 %v3755, 4294901760
        %v3757 = vsub.f32 %v3755, %v3756
        %v3758 = vand.u32 %v3757, 4294901760
        %3759 = vmatpush.msra.mxu0 %v3758
        %v3760 = vand.u32 %v316, 4294901760
        %v3761 = vsub.f32 %v316, %v3760
        %v3762 = vand.u32 %v3761, 4294901760
        %v3763 = vsub.f32 %v3761, %v3762
        %v3764 = vand.u32 %v3763, 4294901760
        %3765 = vmatpush.msra.mxu0 %v3764
        %v3766 = vand.u32 %v315, 4294901760
        %v3767 = vsub.f32 %v315, %v3766
        %v3768 = vand.u32 %v3767, 4294901760
        %v3769 = vsub.f32 %v3767, %v3768
        %v3770 = vand.u32 %v3769, 4294901760
        %3771 = vmatpush.msra.mxu0 %v3770
        %v3772 = vand.u32 %v314, 4294901760
        %v3773 = vsub.f32 %v314, %v3772
        %v3774 = vand.u32 %v3773, 4294901760
        %v3775 = vsub.f32 %v3773, %v3774
        %v3776 = vand.u32 %v3775, 4294901760
        %3777 = vmatpush.msra.mxu0 %v3776
        %v3778 = vand.u32 %v313, 4294901760
        %v3779 = vsub.f32 %v313, %v3778
        %v3780 = vand.u32 %v3779, 4294901760
        %v3781 = vsub.f32 %v3779, %v3780
        %v3782 = vand.u32 %v3781, 4294901760
        %3783 = vmatpush.msra.mxu0 %v3782
        %v3784 = vand.u32 %v312, 4294901760
        %v3785 = vsub.f32 %v312, %v3784
        %v3786 = vand.u32 %v3785, 4294901760
        %v3787 = vsub.f32 %v3785, %v3786
        %v3788 = vand.u32 %v3787, 4294901760
        %3789 = vmatpush.msra.mxu0 %v3788
        %v3790 = vand.u32 %v311, 4294901760
        %v3791 = vsub.f32 %v311, %v3790
        %v3792 = vand.u32 %v3791, 4294901760
        %v3793 = vsub.f32 %v3791, %v3792
        %v3794 = vand.u32 %v3793, 4294901760
        %3795 = vmatpush.msra.mxu0 %v3794
        %v3796 = vand.u32 %v310, 4294901760
        %v3797 = vsub.f32 %v310, %v3796
        %v3798 = vand.u32 %v3797, 4294901760
        %v3799 = vsub.f32 %v3797, %v3798
        %v3800 = vand.u32 %v3799, 4294901760
        %3801 = vmatpush.msra.mxu0 %v3800
        %v3802 = vand.u32 %v309, 4294901760
        %v3803 = vsub.f32 %v309, %v3802
        %v3804 = vand.u32 %v3803, 4294901760
        %v3805 = vsub.f32 %v3803, %v3804
        %v3806 = vand.u32 %v3805, 4294901760
        %3807 = vmatpush.msra.mxu0 %v3806
        %v3808 = vand.u32 %v308, 4294901760
        %v3809 = vsub.f32 %v308, %v3808
        %v3810 = vand.u32 %v3809, 4294901760
        %v3811 = vsub.f32 %v3809, %v3810
        %v3812 = vand.u32 %v3811, 4294901760
        %3813 = vmatpush.msra.mxu0 %v3812
        %v3814 = vand.u32 %v307, 4294901760
        %v3815 = vsub.f32 %v307, %v3814
        %v3816 = vand.u32 %v3815, 4294901760
        %v3817 = vsub.f32 %v3815, %v3816
        %v3818 = vand.u32 %v3817, 4294901760
        %3819 = vmatpush.msra.mxu0 %v3818
        %v3820 = vand.u32 %v306, 4294901760
        %v3821 = vsub.f32 %v306, %v3820
        %v3822 = vand.u32 %v3821, 4294901760
        %v3823 = vsub.f32 %v3821, %v3822
        %v3824 = vand.u32 %v3823, 4294901760
        %3825 = vmatpush.msra.mxu0 %v3824
        %v3826 = vand.u32 %v305, 4294901760
        %v3827 = vsub.f32 %v305, %v3826
        %v3828 = vand.u32 %v3827, 4294901760
        %v3829 = vsub.f32 %v3827, %v3828
        %v3830 = vand.u32 %v3829, 4294901760
        %3831 = vmatpush.msra.mxu0 %v3830
        %v3832 = vand.u32 %v3614, 4294901760
        %3833 = vmatmul.f32.gmra.mxu0 %v3832
        %v3834 = vpop.f32.mrf.mxu0
        %v3835 = vadd.f32 %v3678, %v3834
        %v3836 = vand.u32 %v3615, 4294901760
        %3837 = vmatmul.f32.gmra.mxu0 %v3836
        %v3838 = vpop.f32.mrf.mxu0
        %v3839 = vadd.f32 %v3686, %v3838
        %v3840 = vand.u32 %v3616, 4294901760
        %3841 = vmatmul.f32.gmra.mxu0 %v3840
        %v3842 = vpop.f32.mrf.mxu0
        %v3843 = vadd.f32 %v3694, %v3842
        %v3844 = vand.u32 %v3617, 4294901760
        %3845 = vmatmul.f32.gmra.mxu0 %v3844
        %v3846 = vpop.f32.mrf.mxu0
        %v3847 = vadd.f32 %v3702, %v3846
        %v3848 = vand.u32 %v3618, 4294901760
        %3849 = vmatmul.f32.gmra.mxu0 %v3848
        %v3850 = vpop.f32.mrf.mxu0
        %v3851 = vadd.f32 %v3710, %v3850
        %v3852 = vand.u32 %v3619, 4294901760
        %3853 = vmatmul.f32.gmra.mxu0 %v3852
        %v3854 = vpop.f32.mrf.mxu0
        %v3855 = vadd.f32 %v3718, %v3854
        %v3856 = vand.u32 %v3620, 4294901760
        %3857 = vmatmul.f32.gmra.mxu0 %v3856
        %v3858 = vpop.f32.mrf.mxu0
        %v3859 = vadd.f32 %v3726, %v3858
        %v3860 = vand.u32 %v3621, 4294901760
        %3861 = vmatmul.f32.gmra.mxu0 %v3860
        %v3862 = vpop.f32.mrf.mxu0
        %v3863 = vadd.f32 %v3734, %v3862
        %3864 = vdwg.mxu0
        %v3865 = vand.u32 %v320, 4294901760
        %v3866 = vsub.f32 %v320, %v3865
        %3867 = vmatpush.msra.mxu0 %v3866
        %v3868 = vand.u32 %v319, 4294901760
        %v3869 = vsub.f32 %v319, %v3868
        %3870 = vmatpush.msra.mxu0 %v3869
        %v3871 = vand.u32 %v318, 4294901760
        %v3872 = vsub.f32 %v318, %v3871
        %3873 = vmatpush.msra.mxu0 %v3872
        %v3874 = vand.u32 %v317, 4294901760
        %v3875 = vsub.f32 %v317, %v3874
        %3876 = vmatpush.msra.mxu0 %v3875
        %v3877 = vand.u32 %v316, 4294901760
        %v3878 = vsub.f32 %v316, %v3877
        %3879 = vmatpush.msra.mxu0 %v3878
        %v3880 = vand.u32 %v315, 4294901760
        %v3881 = vsub.f32 %v315, %v3880
        %3882 = vmatpush.msra.mxu0 %v3881
        %v3883 = vand.u32 %v314, 4294901760
        %v3884 = vsub.f32 %v314, %v3883
        %3885 = vmatpush.msra.mxu0 %v3884
        %v3886 = vand.u32 %v313, 4294901760
        %v3887 = vsub.f32 %v313, %v3886
        %3888 = vmatpush.msra.mxu0 %v3887
        %v3889 = vand.u32 %v312, 4294901760
        %v3890 = vsub.f32 %v312, %v3889
        %3891 = vmatpush.msra.mxu0 %v3890
        %v3892 = vand.u32 %v311, 4294901760
        %v3893 = vsub.f32 %v311, %v3892
        %3894 = vmatpush.msra.mxu0 %v3893
        %v3895 = vand.u32 %v310, 4294901760
        %v3896 = vsub.f32 %v310, %v3895
        %3897 = vmatpush.msra.mxu0 %v3896
        %v3898 = vand.u32 %v309, 4294901760
        %v3899 = vsub.f32 %v309, %v3898
        %3900 = vmatpush.msra.mxu0 %v3899
        %v3901 = vand.u32 %v308, 4294901760
        %v3902 = vsub.f32 %v308, %v3901
        %3903 = vmatpush.msra.mxu0 %v3902
        %v3904 = vand.u32 %v307, 4294901760
        %v3905 = vsub.f32 %v307, %v3904
        %3906 = vmatpush.msra.mxu0 %v3905
        %v3907 = vand.u32 %v306, 4294901760
        %v3908 = vsub.f32 %v306, %v3907
        %3909 = vmatpush.msra.mxu0 %v3908
        %v3910 = vand.u32 %v305, 4294901760
        %v3911 = vsub.f32 %v305, %v3910
        %3912 = vmatpush.msra.mxu0 %v3911
        %v3913 = vand.u32 %v3614, 4294901760
        %v3914 = vsub.f32 %v3614, %v3913
        %3915 = vmatmul.f32.gmra.mxu0 %v3914
        %v3916 = vpop.f32.mrf.mxu0
        %v3917 = vadd.f32 %v3835, %v3916
        %v3918 = vand.u32 %v3615, 4294901760
        %v3919 = vsub.f32 %v3615, %v3918
        %3920 = vmatmul.f32.gmra.mxu0 %v3919
        %v3921 = vpop.f32.mrf.mxu0
        %v3922 = vadd.f32 %v3839, %v3921
        %v3923 = vand.u32 %v3616, 4294901760
        %v3924 = vsub.f32 %v3616, %v3923
        %3925 = vmatmul.f32.gmra.mxu0 %v3924
        %v3926 = vpop.f32.mrf.mxu0
        %v3927 = vadd.f32 %v3843, %v3926
        %v3928 = vand.u32 %v3617, 4294901760
        %v3929 = vsub.f32 %v3617, %v3928
        %3930 = vmatmul.f32.gmra.mxu0 %v3929
        %v3931 = vpop.f32.mrf.mxu0
        %v3932 = vadd.f32 %v3847, %v3931
        %v3933 = vand.u32 %v3618, 4294901760
        %v3934 = vsub.f32 %v3618, %v3933
        %3935 = vmatmul.f32.gmra.mxu0 %v3934
        %v3936 = vpop.f32.mrf.mxu0
        %v3937 = vadd.f32 %v3851, %v3936
        %v3938 = vand.u32 %v3619, 4294901760
        %v3939 = vsub.f32 %v3619, %v3938
        %3940 = vmatmul.f32.gmra.mxu0 %v3939
        %v3941 = vpop.f32.mrf.mxu0
        %v3942 = vadd.f32 %v3855, %v3941
        %v3943 = vand.u32 %v3620, 4294901760
        %v3944 = vsub.f32 %v3620, %v3943
        %3945 = vmatmul.f32.gmra.mxu0 %v3944
        %v3946 = vpop.f32.mrf.mxu0
        %v3947 = vadd.f32 %v3859, %v3946
        %v3948 = vand.u32 %v3621, 4294901760
        %v3949 = vsub.f32 %v3621, %v3948
        %3950 = vmatmul.f32.gmra.mxu0 %v3949
        %v3951 = vpop.f32.mrf.mxu0
        %v3952 = vadd.f32 %v3863, %v3951
        %3953 = vdwg.mxu0
        %v3954 = vand.u32 %v320, 4294901760
        %3955 = vmatpush.msra.mxu0 %v3954
        %v3956 = vand.u32 %v319, 4294901760
        %3957 = vmatpush.msra.mxu0 %v3956
        %v3958 = vand.u32 %v318, 4294901760
        %3959 = vmatpush.msra.mxu0 %v3958
        %v3960 = vand.u32 %v317, 4294901760
        %3961 = vmatpush.msra.mxu0 %v3960
        %v3962 = vand.u32 %v316, 4294901760
        %3963 = vmatpush.msra.mxu0 %v3962
        %v3964 = vand.u32 %v315, 4294901760
        %3965 = vmatpush.msra.mxu0 %v3964
        %v3966 = vand.u32 %v314, 4294901760
        %3967 = vmatpush.msra.mxu0 %v3966
        %v3968 = vand.u32 %v313, 4294901760
        %3969 = vmatpush.msra.mxu0 %v3968
        %v3970 = vand.u32 %v312, 4294901760
        %3971 = vmatpush.msra.mxu0 %v3970
        %v3972 = vand.u32 %v311, 4294901760
        %3973 = vmatpush.msra.mxu0 %v3972
        %v3974 = vand.u32 %v310, 4294901760
        %3975 = vmatpush.msra.mxu0 %v3974
        %v3976 = vand.u32 %v309, 4294901760
        %3977 = vmatpush.msra.mxu0 %v3976
        %v3978 = vand.u32 %v308, 4294901760
        %3979 = vmatpush.msra.mxu0 %v3978
        %v3980 = vand.u32 %v307, 4294901760
        %3981 = vmatpush.msra.mxu0 %v3980
        %v3982 = vand.u32 %v306, 4294901760
        %3983 = vmatpush.msra.mxu0 %v3982
        %v3984 = vand.u32 %v305, 4294901760
        %3985 = vmatpush.msra.mxu0 %v3984
        %v3986 = vand.u32 %v3614, 4294901760
        %v3987 = vsub.f32 %v3614, %v3986
        %v3988 = vand.u32 %v3987, 4294901760
        %3989 = vmatmul.f32.gmra.mxu0 %v3988
        %v3990 = vpop.f32.mrf.mxu0
        %v3991 = vadd.f32 %v3917, %v3990
        %v3992 = vand.u32 %v3615, 4294901760
        %v3993 = vsub.f32 %v3615, %v3992
        %v3994 = vand.u32 %v3993, 4294901760
        %3995 = vmatmul.f32.gmra.mxu0 %v3994
        %v3996 = vpop.f32.mrf.mxu0
        %v3997 = vadd.f32 %v3922, %v3996
        %v3998 = vand.u32 %v3616, 4294901760
        %v3999 = vsub.f32 %v3616, %v3998
        %v4000 = vand.u32 %v3999, 4294901760
        %4001 = vmatmul.f32.gmra.mxu0 %v4000
        %v4002 = vpop.f32.mrf.mxu0
        %v4003 = vadd.f32 %v3927, %v4002
        %v4004 = vand.u32 %v3617, 4294901760
        %v4005 = vsub.f32 %v3617, %v4004
        %v4006 = vand.u32 %v4005, 4294901760
        %4007 = vmatmul.f32.gmra.mxu0 %v4006
        %v4008 = vpop.f32.mrf.mxu0
        %v4009 = vadd.f32 %v3932, %v4008
        %v4010 = vand.u32 %v3618, 4294901760
        %v4011 = vsub.f32 %v3618, %v4010
        %v4012 = vand.u32 %v4011, 4294901760
        %4013 = vmatmul.f32.gmra.mxu0 %v4012
        %v4014 = vpop.f32.mrf.mxu0
        %v4015 = vadd.f32 %v3937, %v4014
        %v4016 = vand.u32 %v3619, 4294901760
        %v4017 = vsub.f32 %v3619, %v4016
        %v4018 = vand.u32 %v4017, 4294901760
        %4019 = vmatmul.f32.gmra.mxu0 %v4018
        %v4020 = vpop.f32.mrf.mxu0
        %v4021 = vadd.f32 %v3942, %v4020
        %v4022 = vand.u32 %v3620, 4294901760
        %v4023 = vsub.f32 %v3620, %v4022
        %v4024 = vand.u32 %v4023, 4294901760
        %4025 = vmatmul.f32.gmra.mxu0 %v4024
        %v4026 = vpop.f32.mrf.mxu0
        %v4027 = vadd.f32 %v3947, %v4026
        %v4028 = vand.u32 %v3621, 4294901760
        %v4029 = vsub.f32 %v3621, %v4028
        %v4030 = vand.u32 %v4029, 4294901760
        %4031 = vmatmul.f32.gmra.mxu0 %v4030
        %v4032 = vpop.f32.mrf.mxu0
        %v4033 = vadd.f32 %v3952, %v4032
        %4034 = vdwg.mxu0
        %v4035 = vand.u32 %v320, 4294901760
        %v4036 = vsub.f32 %v320, %v4035
        %v4037 = vand.u32 %v4036, 4294901760
        %4038 = vmatpush.msra.mxu0 %v4037
        %v4039 = vand.u32 %v319, 4294901760
        %v4040 = vsub.f32 %v319, %v4039
        %v4041 = vand.u32 %v4040, 4294901760
        %4042 = vmatpush.msra.mxu0 %v4041
        %v4043 = vand.u32 %v318, 4294901760
        %v4044 = vsub.f32 %v318, %v4043
        %v4045 = vand.u32 %v4044, 4294901760
        %4046 = vmatpush.msra.mxu0 %v4045
        %v4047 = vand.u32 %v317, 4294901760
        %v4048 = vsub.f32 %v317, %v4047
        %v4049 = vand.u32 %v4048, 4294901760
        %4050 = vmatpush.msra.mxu0 %v4049
        %v4051 = vand.u32 %v316, 4294901760
        %v4052 = vsub.f32 %v316, %v4051
        %v4053 = vand.u32 %v4052, 4294901760
        %4054 = vmatpush.msra.mxu0 %v4053
        %v4055 = vand.u32 %v315, 4294901760
        %v4056 = vsub.f32 %v315, %v4055
        %v4057 = vand.u32 %v4056, 4294901760
        %4058 = vmatpush.msra.mxu0 %v4057
        %v4059 = vand.u32 %v314, 4294901760
        %v4060 = vsub.f32 %v314, %v4059
        %v4061 = vand.u32 %v4060, 4294901760
        %4062 = vmatpush.msra.mxu0 %v4061
        %v4063 = vand.u32 %v313, 4294901760
        %v4064 = vsub.f32 %v313, %v4063
        %v4065 = vand.u32 %v4064, 4294901760
        %4066 = vmatpush.msra.mxu0 %v4065
        %v4067 = vand.u32 %v312, 4294901760
        %v4068 = vsub.f32 %v312, %v4067
        %v4069 = vand.u32 %v4068, 4294901760
        %4070 = vmatpush.msra.mxu0 %v4069
        %v4071 = vand.u32 %v311, 4294901760
        %v4072 = vsub.f32 %v311, %v4071
        %v4073 = vand.u32 %v4072, 4294901760
        %4074 = vmatpush.msra.mxu0 %v4073
        %v4075 = vand.u32 %v310, 4294901760
        %v4076 = vsub.f32 %v310, %v4075
        %v4077 = vand.u32 %v4076, 4294901760
        %4078 = vmatpush.msra.mxu0 %v4077
        %v4079 = vand.u32 %v309, 4294901760
        %v4080 = vsub.f32 %v309, %v4079
        %v4081 = vand.u32 %v4080, 4294901760
        %4082 = vmatpush.msra.mxu0 %v4081
        %v4083 = vand.u32 %v308, 4294901760
        %v4084 = vsub.f32 %v308, %v4083
        %v4085 = vand.u32 %v4084, 4294901760
        %4086 = vmatpush.msra.mxu0 %v4085
        %v4087 = vand.u32 %v307, 4294901760
        %v4088 = vsub.f32 %v307, %v4087
        %v4089 = vand.u32 %v4088, 4294901760
        %4090 = vmatpush.msra.mxu0 %v4089
        %v4091 = vand.u32 %v306, 4294901760
        %v4092 = vsub.f32 %v306, %v4091
        %v4093 = vand.u32 %v4092, 4294901760
        %4094 = vmatpush.msra.mxu0 %v4093
        %v4095 = vand.u32 %v305, 4294901760
        %v4096 = vsub.f32 %v305, %v4095
        %v4097 = vand.u32 %v4096, 4294901760
        %4098 = vmatpush.msra.mxu0 %v4097
        %v4099 = vand.u32 %v3614, 4294901760
        %4100 = vmatmul.f32.gmra.mxu0 %v4099
        %v4101 = vpop.f32.mrf.mxu0
        %v4102 = vadd.f32 %v3991, %v4101
        %v4103 = vand.u32 %v3615, 4294901760
        %4104 = vmatmul.f32.gmra.mxu0 %v4103
        %v4105 = vpop.f32.mrf.mxu0
        %v4106 = vadd.f32 %v3997, %v4105
        %v4107 = vand.u32 %v3616, 4294901760
        %4108 = vmatmul.f32.gmra.mxu0 %v4107
        %v4109 = vpop.f32.mrf.mxu0
        %v4110 = vadd.f32 %v4003, %v4109
        %v4111 = vand.u32 %v3617, 4294901760
        %4112 = vmatmul.f32.gmra.mxu0 %v4111
        %v4113 = vpop.f32.mrf.mxu0
        %v4114 = vadd.f32 %v4009, %v4113
        %v4115 = vand.u32 %v3618, 4294901760
        %4116 = vmatmul.f32.gmra.mxu0 %v4115
        %v4117 = vpop.f32.mrf.mxu0
        %v4118 = vadd.f32 %v4015, %v4117
        %v4119 = vand.u32 %v3619, 4294901760
        %4120 = vmatmul.f32.gmra.mxu0 %v4119
        %v4121 = vpop.f32.mrf.mxu0
        %v4122 = vadd.f32 %v4021, %v4121
        %v4123 = vand.u32 %v3620, 4294901760
        %4124 = vmatmul.f32.gmra.mxu0 %v4123
        %v4125 = vpop.f32.mrf.mxu0
        %v4126 = vadd.f32 %v4027, %v4125
        %v4127 = vand.u32 %v3621, 4294901760
        %4128 = vmatmul.f32.gmra.mxu0 %v4127
        %v4129 = vpop.f32.mrf.mxu0
        %v4130 = vadd.f32 %v4033, %v4129
        %4131 = vdwg.mxu0
        %v4132 = vand.u32 %v320, 4294901760
        %4133 = vmatpush.msra.mxu0 %v4132
        %v4134 = vand.u32 %v319, 4294901760
        %4135 = vmatpush.msra.mxu0 %v4134
        %v4136 = vand.u32 %v318, 4294901760
        %4137 = vmatpush.msra.mxu0 %v4136
        %v4138 = vand.u32 %v317, 4294901760
        %4139 = vmatpush.msra.mxu0 %v4138
        %v4140 = vand.u32 %v316, 4294901760
        %4141 = vmatpush.msra.mxu0 %v4140
        %v4142 = vand.u32 %v315, 4294901760
        %4143 = vmatpush.msra.mxu0 %v4142
        %v4144 = vand.u32 %v314, 4294901760
        %4145 = vmatpush.msra.mxu0 %v4144
        %v4146 = vand.u32 %v313, 4294901760
        %4147 = vmatpush.msra.mxu0 %v4146
        %v4148 = vand.u32 %v312, 4294901760
        %4149 = vmatpush.msra.mxu0 %v4148
        %v4150 = vand.u32 %v311, 4294901760
        %4151 = vmatpush.msra.mxu0 %v4150
        %v4152 = vand.u32 %v310, 4294901760
        %4153 = vmatpush.msra.mxu0 %v4152
        %v4154 = vand.u32 %v309, 4294901760
        %4155 = vmatpush.msra.mxu0 %v4154
        %v4156 = vand.u32 %v308, 4294901760
        %4157 = vmatpush.msra.mxu0 %v4156
        %v4158 = vand.u32 %v307, 4294901760
        %4159 = vmatpush.msra.mxu0 %v4158
        %v4160 = vand.u32 %v306, 4294901760
        %4161 = vmatpush.msra.mxu0 %v4160
        %v4162 = vand.u32 %v305, 4294901760
        %4163 = vmatpush.msra.mxu0 %v4162
        %v4164 = vand.u32 %v3614, 4294901760
        %4165 = vmatmul.f32.gmra.mxu0 %v4164
        %v4166 = vpop.f32.mrf.mxu0
        %v4167 = vadd.f32 %v4102, %v4166
        %v4168 = vand.u32 %v3615, 4294901760
        %4169 = vmatmul.f32.gmra.mxu0 %v4168
        %v4170 = vpop.f32.mrf.mxu0
        %v4171 = vadd.f32 %v4106, %v4170
        %v4172 = vand.u32 %v3616, 4294901760
        %4173 = vmatmul.f32.gmra.mxu0 %v4172
        %v4174 = vpop.f32.mrf.mxu0
        %v4175 = vadd.f32 %v4110, %v4174
        %v4176 = vand.u32 %v3617, 4294901760
        %4177 = vmatmul.f32.gmra.mxu0 %v4176
        %v4178 = vpop.f32.mrf.mxu0
        %v4179 = vadd.f32 %v4114, %v4178
        %v4180 = vand.u32 %v3618, 4294901760
        %4181 = vmatmul.f32.gmra.mxu0 %v4180
        %v4182 = vpop.f32.mrf.mxu0
        %v4183 = vadd.f32 %v4118, %v4182
        %v4184 = vand.u32 %v3619, 4294901760
        %4185 = vmatmul.f32.gmra.mxu0 %v4184
        %v4186 = vpop.f32.mrf.mxu0
        %v4187 = vadd.f32 %v4122, %v4186
        %v4188 = vand.u32 %v3620, 4294901760
        %4189 = vmatmul.f32.gmra.mxu0 %v4188
        %v4190 = vpop.f32.mrf.mxu0
        %v4191 = vadd.f32 %v4126, %v4190
        %v4192 = vand.u32 %v3621, 4294901760
        %4193 = vmatmul.f32.gmra.mxu0 %v4192
        %v4194 = vpop.f32.mrf.mxu0
        %v4195 = vadd.f32 %v4130, %v4194
        %4196 = vdwg.mxu0
        %4197 = vmatpush.msra.mxu0 0.0
        %4198 = vmatpush.msra.mxu0 0.0
        %4199 = vmatpush.msra.mxu0 0.0
        %4200 = vmatpush.msra.mxu0 0.0
        %4201 = vmatpush.msra.mxu0 0.0
        %4202 = vmatpush.msra.mxu0 0.0
        %4203 = vmatpush.msra.mxu0 0.0
        %4204 = vmatpush.msra.mxu0 0.0
        %v4205 = vand.u32 %v3621, 4294901760
        %4206 = vmatpush.msra.mxu0 %v4205
        %v4207 = vand.u32 %v3620, 4294901760
        %4208 = vmatpush.msra.mxu0 %v4207
        %v4209 = vand.u32 %v3619, 4294901760
        %4210 = vmatpush.msra.mxu0 %v4209
        %v4211 = vand.u32 %v3618, 4294901760
        %4212 = vmatpush.msra.mxu0 %v4211
        %v4213 = vand.u32 %v3617, 4294901760
        %4214 = vmatpush.msra.mxu0 %v4213
        %v4215 = vand.u32 %v3616, 4294901760
        %4216 = vmatpush.msra.mxu0 %v4215
        %v4217 = vand.u32 %v3615, 4294901760
        %4218 = vmatpush.msra.mxu0 %v4217
        %v4219 = vand.u32 %v3614, 4294901760
        %4220 = vmatpush.msra.mxu0 %v4219
        %v4221 = vand.u32 %v930, 4294901760
        %v4222 = vsub.f32 %v930, %v4221
        %v4223 = vand.u32 %v4222, 4294901760
        %v4224 = vsub.f32 %v4222, %v4223
        %v4225 = vand.u32 %v4224, 4294901760
        %4226 = vmatmul.f32.gmra.mxu0 %v4225
        %v4227 = vpop.f32.mrf.mxu0
        %v4228 = vadd.f32 %v4167, %v4227
        %v4229 = vand.u32 %v933, 4294901760
        %v4230 = vsub.f32 %v933, %v4229
        %v4231 = vand.u32 %v4230, 4294901760
        %v4232 = vsub.f32 %v4230, %v4231
        %v4233 = vand.u32 %v4232, 4294901760
        %4234 = vmatmul.f32.gmra.mxu0 %v4233
        %v4235 = vpop.f32.mrf.mxu0
        %v4236 = vadd.f32 %v4171, %v4235
        %v4237 = vand.u32 %v936, 4294901760
        %v4238 = vsub.f32 %v936, %v4237
        %v4239 = vand.u32 %v4238, 4294901760
        %v4240 = vsub.f32 %v4238, %v4239
        %v4241 = vand.u32 %v4240, 4294901760
        %4242 = vmatmul.f32.gmra.mxu0 %v4241
        %v4243 = vpop.f32.mrf.mxu0
        %v4244 = vadd.f32 %v4175, %v4243
        %v4245 = vand.u32 %v939, 4294901760
        %v4246 = vsub.f32 %v939, %v4245
        %v4247 = vand.u32 %v4246, 4294901760
        %v4248 = vsub.f32 %v4246, %v4247
        %v4249 = vand.u32 %v4248, 4294901760
        %4250 = vmatmul.f32.gmra.mxu0 %v4249
        %v4251 = vpop.f32.mrf.mxu0
        %v4252 = vadd.f32 %v4179, %v4251
        %v4253 = vand.u32 %v942, 4294901760
        %v4254 = vsub.f32 %v942, %v4253
        %v4255 = vand.u32 %v4254, 4294901760
        %v4256 = vsub.f32 %v4254, %v4255
        %v4257 = vand.u32 %v4256, 4294901760
        %4258 = vmatmul.f32.gmra.mxu0 %v4257
        %v4259 = vpop.f32.mrf.mxu0
        %v4260 = vadd.f32 %v4183, %v4259
        %v4261 = vand.u32 %v945, 4294901760
        %v4262 = vsub.f32 %v945, %v4261
        %v4263 = vand.u32 %v4262, 4294901760
        %v4264 = vsub.f32 %v4262, %v4263
        %v4265 = vand.u32 %v4264, 4294901760
        %4266 = vmatmul.f32.gmra.mxu0 %v4265
        %v4267 = vpop.f32.mrf.mxu0
        %v4268 = vadd.f32 %v4187, %v4267
        %v4269 = vand.u32 %v948, 4294901760
        %v4270 = vsub.f32 %v948, %v4269
        %v4271 = vand.u32 %v4270, 4294901760
        %v4272 = vsub.f32 %v4270, %v4271
        %v4273 = vand.u32 %v4272, 4294901760
        %4274 = vmatmul.f32.gmra.mxu0 %v4273
        %v4275 = vpop.f32.mrf.mxu0
        %v4276 = vadd.f32 %v4191, %v4275
        %v4277 = vand.u32 %v951, 4294901760
        %v4278 = vsub.f32 %v951, %v4277
        %v4279 = vand.u32 %v4278, 4294901760
        %v4280 = vsub.f32 %v4278, %v4279
        %v4281 = vand.u32 %v4280, 4294901760
        %4282 = vmatmul.f32.gmra.mxu0 %v4281
        %v4283 = vpop.f32.mrf.mxu0
        %v4284 = vadd.f32 %v4195, %v4283
        %4285 = vdwg.mxu0
        %4286 = vmatpush.msra.mxu0 0.0
        %4287 = vmatpush.msra.mxu0 0.0
        %4288 = vmatpush.msra.mxu0 0.0
        %4289 = vmatpush.msra.mxu0 0.0
        %4290 = vmatpush.msra.mxu0 0.0
        %4291 = vmatpush.msra.mxu0 0.0
        %4292 = vmatpush.msra.mxu0 0.0
        %4293 = vmatpush.msra.mxu0 0.0
        %v4294 = vand.u32 %v3621, 4294901760
        %v4295 = vsub.f32 %v3621, %v4294
        %v4296 = vand.u32 %v4295, 4294901760
        %v4297 = vsub.f32 %v4295, %v4296
        %v4298 = vand.u32 %v4297, 4294901760
        %4299 = vmatpush.msra.mxu0 %v4298
        %v4300 = vand.u32 %v3620, 4294901760
        %v4301 = vsub.f32 %v3620, %v4300
        %v4302 = vand.u32 %v4301, 4294901760
        %v4303 = vsub.f32 %v4301, %v4302
        %v4304 = vand.u32 %v4303, 4294901760
        %4305 = vmatpush.msra.mxu0 %v4304
        %v4306 = vand.u32 %v3619, 4294901760
        %v4307 = vsub.f32 %v3619, %v4306
        %v4308 = vand.u32 %v4307, 4294901760
        %v4309 = vsub.f32 %v4307, %v4308
        %v4310 = vand.u32 %v4309, 4294901760
        %4311 = vmatpush.msra.mxu0 %v4310
        %v4312 = vand.u32 %v3618, 4294901760
        %v4313 = vsub.f32 %v3618, %v4312
        %v4314 = vand.u32 %v4313, 4294901760
        %v4315 = vsub.f32 %v4313, %v4314
        %v4316 = vand.u32 %v4315, 4294901760
        %4317 = vmatpush.msra.mxu0 %v4316
        %v4318 = vand.u32 %v3617, 4294901760
        %v4319 = vsub.f32 %v3617, %v4318
        %v4320 = vand.u32 %v4319, 4294901760
        %v4321 = vsub.f32 %v4319, %v4320
        %v4322 = vand.u32 %v4321, 4294901760
        %4323 = vmatpush.msra.mxu0 %v4322
        %v4324 = vand.u32 %v3616, 4294901760
        %v4325 = vsub.f32 %v3616, %v4324
        %v4326 = vand.u32 %v4325, 4294901760
        %v4327 = vsub.f32 %v4325, %v4326
        %v4328 = vand.u32 %v4327, 4294901760
        %4329 = vmatpush.msra.mxu0 %v4328
        %v4330 = vand.u32 %v3615, 4294901760
        %v4331 = vsub.f32 %v3615, %v4330
        %v4332 = vand.u32 %v4331, 4294901760
        %v4333 = vsub.f32 %v4331, %v4332
        %v4334 = vand.u32 %v4333, 4294901760
        %4335 = vmatpush.msra.mxu0 %v4334
        %v4336 = vand.u32 %v3614, 4294901760
        %v4337 = vsub.f32 %v3614, %v4336
        %v4338 = vand.u32 %v4337, 4294901760
        %v4339 = vsub.f32 %v4337, %v4338
        %v4340 = vand.u32 %v4339, 4294901760
        %4341 = vmatpush.msra.mxu0 %v4340
        %v4342 = vand.u32 %v930, 4294901760
        %4343 = vmatmul.f32.gmra.mxu0 %v4342
        %v4344 = vpop.f32.mrf.mxu0
        %v4345 = vadd.f32 %v4228, %v4344
        %v4346 = vand.u32 %v933, 4294901760
        %4347 = vmatmul.f32.gmra.mxu0 %v4346
        %v4348 = vpop.f32.mrf.mxu0
        %v4349 = vadd.f32 %v4236, %v4348
        %v4350 = vand.u32 %v936, 4294901760
        %4351 = vmatmul.f32.gmra.mxu0 %v4350
        %v4352 = vpop.f32.mrf.mxu0
        %v4353 = vadd.f32 %v4244, %v4352
        %v4354 = vand.u32 %v939, 4294901760
        %4355 = vmatmul.f32.gmra.mxu0 %v4354
        %v4356 = vpop.f32.mrf.mxu0
        %v4357 = vadd.f32 %v4252, %v4356
        %v4358 = vand.u32 %v942, 4294901760
        %4359 = vmatmul.f32.gmra.mxu0 %v4358
        %v4360 = vpop.f32.mrf.mxu0
        %v4361 = vadd.f32 %v4260, %v4360
        %v4362 = vand.u32 %v945, 4294901760
        %4363 = vmatmul.f32.gmra.mxu0 %v4362
        %v4364 = vpop.f32.mrf.mxu0
        %v4365 = vadd.f32 %v4268, %v4364
        %v4366 = vand.u32 %v948, 4294901760
        %4367 = vmatmul.f32.gmra.mxu0 %v4366
        %v4368 = vpop.f32.mrf.mxu0
        %v4369 = vadd.f32 %v4276, %v4368
        %v4370 = vand.u32 %v951, 4294901760
        %4371 = vmatmul.f32.gmra.mxu0 %v4370
        %v4372 = vpop.f32.mrf.mxu0
        %v4373 = vadd.f32 %v4284, %v4372
        %4374 = vdwg.mxu0
        %4375 = vmatpush.msra.mxu0 0.0
        %4376 = vmatpush.msra.mxu0 0.0
        %4377 = vmatpush.msra.mxu0 0.0
        %4378 = vmatpush.msra.mxu0 0.0
        %4379 = vmatpush.msra.mxu0 0.0
        %4380 = vmatpush.msra.mxu0 0.0
        %4381 = vmatpush.msra.mxu0 0.0
        %4382 = vmatpush.msra.mxu0 0.0
        %v4383 = vand.u32 %v3621, 4294901760
        %v4384 = vsub.f32 %v3621, %v4383
        %4385 = vmatpush.msra.mxu0 %v4384
        %v4386 = vand.u32 %v3620, 4294901760
        %v4387 = vsub.f32 %v3620, %v4386
        %4388 = vmatpush.msra.mxu0 %v4387
        %v4389 = vand.u32 %v3619, 4294901760
        %v4390 = vsub.f32 %v3619, %v4389
        %4391 = vmatpush.msra.mxu0 %v4390
        %v4392 = vand.u32 %v3618, 4294901760
        %v4393 = vsub.f32 %v3618, %v4392
        %4394 = vmatpush.msra.mxu0 %v4393
        %v4395 = vand.u32 %v3617, 4294901760
        %v4396 = vsub.f32 %v3617, %v4395
        %4397 = vmatpush.msra.mxu0 %v4396
        %v4398 = vand.u32 %v3616, 4294901760
        %v4399 = vsub.f32 %v3616, %v4398
        %4400 = vmatpush.msra.mxu0 %v4399
        %v4401 = vand.u32 %v3615, 4294901760
        %v4402 = vsub.f32 %v3615, %v4401
        %4403 = vmatpush.msra.mxu0 %v4402
        %v4404 = vand.u32 %v3614, 4294901760
        %v4405 = vsub.f32 %v3614, %v4404
        %4406 = vmatpush.msra.mxu0 %v4405
        %v4407 = vand.u32 %v930, 4294901760
        %v4408 = vsub.f32 %v930, %v4407
        %4409 = vmatmul.f32.gmra.mxu0 %v4408
        %v4410 = vpop.f32.mrf.mxu0
        %v4411 = vadd.f32 %v4345, %v4410
        %v4412 = vand.u32 %v933, 4294901760
        %v4413 = vsub.f32 %v933, %v4412
        %4414 = vmatmul.f32.gmra.mxu0 %v4413
        %v4415 = vpop.f32.mrf.mxu0
        %v4416 = vadd.f32 %v4349, %v4415
        %v4417 = vand.u32 %v936, 4294901760
        %v4418 = vsub.f32 %v936, %v4417
        %4419 = vmatmul.f32.gmra.mxu0 %v4418
        %v4420 = vpop.f32.mrf.mxu0
        %v4421 = vadd.f32 %v4353, %v4420
        %v4422 = vand.u32 %v939, 4294901760
        %v4423 = vsub.f32 %v939, %v4422
        %4424 = vmatmul.f32.gmra.mxu0 %v4423
        %v4425 = vpop.f32.mrf.mxu0
        %v4426 = vadd.f32 %v4357, %v4425
        %v4427 = vand.u32 %v942, 4294901760
        %v4428 = vsub.f32 %v942, %v4427
        %4429 = vmatmul.f32.gmra.mxu0 %v4428
        %v4430 = vpop.f32.mrf.mxu0
        %v4431 = vadd.f32 %v4361, %v4430
        %v4432 = vand.u32 %v945, 4294901760
        %v4433 = vsub.f32 %v945, %v4432
        %4434 = vmatmul.f32.gmra.mxu0 %v4433
        %v4435 = vpop.f32.mrf.mxu0
        %v4436 = vadd.f32 %v4365, %v4435
        %v4437 = vand.u32 %v948, 4294901760
        %v4438 = vsub.f32 %v948, %v4437
        %4439 = vmatmul.f32.gmra.mxu0 %v4438
        %v4440 = vpop.f32.mrf.mxu0
        %v4441 = vadd.f32 %v4369, %v4440
        %v4442 = vand.u32 %v951, 4294901760
        %v4443 = vsub.f32 %v951, %v4442
        %4444 = vmatmul.f32.gmra.mxu0 %v4443
        %v4445 = vpop.f32.mrf.mxu0
        %v4446 = vadd.f32 %v4373, %v4445
        %4447 = vdwg.mxu0
        %4448 = vmatpush.msra.mxu0 0.0
        %4449 = vmatpush.msra.mxu0 0.0
        %4450 = vmatpush.msra.mxu0 0.0
        %4451 = vmatpush.msra.mxu0 0.0
        %4452 = vmatpush.msra.mxu0 0.0
        %4453 = vmatpush.msra.mxu0 0.0
        %4454 = vmatpush.msra.mxu0 0.0
        %4455 = vmatpush.msra.mxu0 0.0
        %v4456 = vand.u32 %v3621, 4294901760
        %4457 = vmatpush.msra.mxu0 %v4456
        %v4458 = vand.u32 %v3620, 4294901760
        %4459 = vmatpush.msra.mxu0 %v4458
        %v4460 = vand.u32 %v3619, 4294901760
        %4461 = vmatpush.msra.mxu0 %v4460
        %v4462 = vand.u32 %v3618, 4294901760
        %4463 = vmatpush.msra.mxu0 %v4462
        %v4464 = vand.u32 %v3617, 4294901760
        %4465 = vmatpush.msra.mxu0 %v4464
        %v4466 = vand.u32 %v3616, 4294901760
        %4467 = vmatpush.msra.mxu0 %v4466
        %v4468 = vand.u32 %v3615, 4294901760
        %4469 = vmatpush.msra.mxu0 %v4468
        %v4470 = vand.u32 %v3614, 4294901760
        %4471 = vmatpush.msra.mxu0 %v4470
        %v4472 = vand.u32 %v930, 4294901760
        %v4473 = vsub.f32 %v930, %v4472
        %v4474 = vand.u32 %v4473, 4294901760
        %4475 = vmatmul.f32.gmra.mxu0 %v4474
        %v4476 = vpop.f32.mrf.mxu0
        %v4477 = vadd.f32 %v4411, %v4476
        %v4478 = vand.u32 %v933, 4294901760
        %v4479 = vsub.f32 %v933, %v4478
        %v4480 = vand.u32 %v4479, 4294901760
        %4481 = vmatmul.f32.gmra.mxu0 %v4480
        %v4482 = vpop.f32.mrf.mxu0
        %v4483 = vadd.f32 %v4416, %v4482
        %v4484 = vand.u32 %v936, 4294901760
        %v4485 = vsub.f32 %v936, %v4484
        %v4486 = vand.u32 %v4485, 4294901760
        %4487 = vmatmul.f32.gmra.mxu0 %v4486
        %v4488 = vpop.f32.mrf.mxu0
        %v4489 = vadd.f32 %v4421, %v4488
        %v4490 = vand.u32 %v939, 4294901760
        %v4491 = vsub.f32 %v939, %v4490
        %v4492 = vand.u32 %v4491, 4294901760
        %4493 = vmatmul.f32.gmra.mxu0 %v4492
        %v4494 = vpop.f32.mrf.mxu0
        %v4495 = vadd.f32 %v4426, %v4494
        %v4496 = vand.u32 %v942, 4294901760
        %v4497 = vsub.f32 %v942, %v4496
        %v4498 = vand.u32 %v4497, 4294901760
        %4499 = vmatmul.f32.gmra.mxu0 %v4498
        %v4500 = vpop.f32.mrf.mxu0
        %v4501 = vadd.f32 %v4431, %v4500
        %v4502 = vand.u32 %v945, 4294901760
        %v4503 = vsub.f32 %v945, %v4502
        %v4504 = vand.u32 %v4503, 4294901760
        %4505 = vmatmul.f32.gmra.mxu0 %v4504
        %v4506 = vpop.f32.mrf.mxu0
        %v4507 = vadd.f32 %v4436, %v4506
        %v4508 = vand.u32 %v948, 4294901760
        %v4509 = vsub.f32 %v948, %v4508
        %v4510 = vand.u32 %v4509, 4294901760
        %4511 = vmatmul.f32.gmra.mxu0 %v4510
        %v4512 = vpop.f32.mrf.mxu0
        %v4513 = vadd.f32 %v4441, %v4512
        %v4514 = vand.u32 %v951, 4294901760
        %v4515 = vsub.f32 %v951, %v4514
        %v4516 = vand.u32 %v4515, 4294901760
        %4517 = vmatmul.f32.gmra.mxu0 %v4516
        %v4518 = vpop.f32.mrf.mxu0
        %v4519 = vadd.f32 %v4446, %v4518
        %4520 = vdwg.mxu0
        %4521 = vmatpush.msra.mxu0 0.0
        %4522 = vmatpush.msra.mxu0 0.0
        %4523 = vmatpush.msra.mxu0 0.0
        %4524 = vmatpush.msra.mxu0 0.0
        %4525 = vmatpush.msra.mxu0 0.0
        %4526 = vmatpush.msra.mxu0 0.0
        %4527 = vmatpush.msra.mxu0 0.0
        %4528 = vmatpush.msra.mxu0 0.0
        %v4529 = vand.u32 %v3621, 4294901760
        %v4530 = vsub.f32 %v3621, %v4529
        %v4531 = vand.u32 %v4530, 4294901760
        %4532 = vmatpush.msra.mxu0 %v4531
        %v4533 = vand.u32 %v3620, 4294901760
        %v4534 = vsub.f32 %v3620, %v4533
        %v4535 = vand.u32 %v4534, 4294901760
        %4536 = vmatpush.msra.mxu0 %v4535
        %v4537 = vand.u32 %v3619, 4294901760
        %v4538 = vsub.f32 %v3619, %v4537
        %v4539 = vand.u32 %v4538, 4294901760
        %4540 = vmatpush.msra.mxu0 %v4539
        %v4541 = vand.u32 %v3618, 4294901760
        %v4542 = vsub.f32 %v3618, %v4541
        %v4543 = vand.u32 %v4542, 4294901760
        %4544 = vmatpush.msra.mxu0 %v4543
        %v4545 = vand.u32 %v3617, 4294901760
        %v4546 = vsub.f32 %v3617, %v4545
        %v4547 = vand.u32 %v4546, 4294901760
        %4548 = vmatpush.msra.mxu0 %v4547
        %v4549 = vand.u32 %v3616, 4294901760
        %v4550 = vsub.f32 %v3616, %v4549
        %v4551 = vand.u32 %v4550, 4294901760
        %4552 = vmatpush.msra.mxu0 %v4551
        %v4553 = vand.u32 %v3615, 4294901760
        %v4554 = vsub.f32 %v3615, %v4553
        %v4555 = vand.u32 %v4554, 4294901760
        %4556 = vmatpush.msra.mxu0 %v4555
        %v4557 = vand.u32 %v3614, 4294901760
        %v4558 = vsub.f32 %v3614, %v4557
        %v4559 = vand.u32 %v4558, 4294901760
        %4560 = vmatpush.msra.mxu0 %v4559
        %v4561 = vand.u32 %v930, 4294901760
        %4562 = vmatmul.f32.gmra.mxu0 %v4561
        %v4563 = vpop.f32.mrf.mxu0
        %v4564 = vadd.f32 %v4477, %v4563
        %v4565 = vand.u32 %v933, 4294901760
        %4566 = vmatmul.f32.gmra.mxu0 %v4565
        %v4567 = vpop.f32.mrf.mxu0
        %v4568 = vadd.f32 %v4483, %v4567
        %v4569 = vand.u32 %v936, 4294901760
        %4570 = vmatmul.f32.gmra.mxu0 %v4569
        %v4571 = vpop.f32.mrf.mxu0
        %v4572 = vadd.f32 %v4489, %v4571
        %v4573 = vand.u32 %v939, 4294901760
        %4574 = vmatmul.f32.gmra.mxu0 %v4573
        %v4575 = vpop.f32.mrf.mxu0
        %v4576 = vadd.f32 %v4495, %v4575
        %v4577 = vand.u32 %v942, 4294901760
        %4578 = vmatmul.f32.gmra.mxu0 %v4577
        %v4579 = vpop.f32.mrf.mxu0
        %v4580 = vadd.f32 %v4501, %v4579
        %v4581 = vand.u32 %v945, 4294901760
        %4582 = vmatmul.f32.gmra.mxu0 %v4581
        %v4583 = vpop.f32.mrf.mxu0
        %v4584 = vadd.f32 %v4507, %v4583
        %v4585 = vand.u32 %v948, 4294901760
        %4586 = vmatmul.f32.gmra.mxu0 %v4585
        %v4587 = vpop.f32.mrf.mxu0
        %v4588 = vadd.f32 %v4513, %v4587
        %v4589 = vand.u32 %v951, 4294901760
        %4590 = vmatmul.f32.gmra.mxu0 %v4589
        %v4591 = vpop.f32.mrf.mxu0
        %v4592 = vadd.f32 %v4519, %v4591
        %4593 = vdwg.mxu0
        %4594 = vmatpush.msra.mxu0 0.0
        %4595 = vmatpush.msra.mxu0 0.0
        %4596 = vmatpush.msra.mxu0 0.0
        %4597 = vmatpush.msra.mxu0 0.0
        %4598 = vmatpush.msra.mxu0 0.0
        %4599 = vmatpush.msra.mxu0 0.0
        %4600 = vmatpush.msra.mxu0 0.0
        %4601 = vmatpush.msra.mxu0 0.0
        %v4602 = vand.u32 %v3621, 4294901760
        %4603 = vmatpush.msra.mxu0 %v4602
        %v4604 = vand.u32 %v3620, 4294901760
        %4605 = vmatpush.msra.mxu0 %v4604
        %v4606 = vand.u32 %v3619, 4294901760
        %4607 = vmatpush.msra.mxu0 %v4606
        %v4608 = vand.u32 %v3618, 4294901760
        %4609 = vmatpush.msra.mxu0 %v4608
        %v4610 = vand.u32 %v3617, 4294901760
        %4611 = vmatpush.msra.mxu0 %v4610
        %v4612 = vand.u32 %v3616, 4294901760
        %4613 = vmatpush.msra.mxu0 %v4612
        %v4614 = vand.u32 %v3615, 4294901760
        %4615 = vmatpush.msra.mxu0 %v4614
        %v4616 = vand.u32 %v3614, 4294901760
        %4617 = vmatpush.msra.mxu0 %v4616
        %v4618 = vand.u32 %v930, 4294901760
        %4619 = vmatmul.f32.gmra.mxu0 %v4618
        %v4620 = vpop.f32.mrf.mxu0
        %v4621 = vadd.f32 %v4564, %v4620
        %v4622 = vand.u32 %v933, 4294901760
        %4623 = vmatmul.f32.gmra.mxu0 %v4622
        %v4624 = vpop.f32.mrf.mxu0
        %v4625 = vadd.f32 %v4568, %v4624
        %v4626 = vand.u32 %v936, 4294901760
        %4627 = vmatmul.f32.gmra.mxu0 %v4626
        %v4628 = vpop.f32.mrf.mxu0
        %v4629 = vadd.f32 %v4572, %v4628
        %v4630 = vand.u32 %v939, 4294901760
        %4631 = vmatmul.f32.gmra.mxu0 %v4630
        %v4632 = vpop.f32.mrf.mxu0
        %v4633 = vadd.f32 %v4576, %v4632
        %v4634 = vand.u32 %v942, 4294901760
        %4635 = vmatmul.f32.gmra.mxu0 %v4634
        %v4636 = vpop.f32.mrf.mxu0
        %v4637 = vadd.f32 %v4580, %v4636
        %v4638 = vand.u32 %v945, 4294901760
        %4639 = vmatmul.f32.gmra.mxu0 %v4638
        %v4640 = vpop.f32.mrf.mxu0
        %v4641 = vadd.f32 %v4584, %v4640
        %v4642 = vand.u32 %v948, 4294901760
        %4643 = vmatmul.f32.gmra.mxu0 %v4642
        %v4644 = vpop.f32.mrf.mxu0
        %v4645 = vadd.f32 %v4588, %v4644
        %v4646 = vand.u32 %v951, 4294901760
        %4647 = vmatmul.f32.gmra.mxu0 %v4646
        %v4648 = vpop.f32.mrf.mxu0
        %v4649 = vadd.f32 %v4592, %v4648
        %4650 = vdwg.mxu0
        %s4651 = scalar_lea.vmem %s241, 3 [#allocation10]
        %v4652 = vld [vmem:[%s4651] sm:$0x1]
        %v4654 = vperm.slane %v4652, 0
        %v4656 = vmul.f32 %v346, %v4654
        %v4657 = vmul.f32 %v347, %v4654
        %v4658 = vmul.f32 %v348, %v4654
        %v4659 = vmul.f32 %v349, %v4654
        %v4660 = vmul.f32 %v350, %v4654
        %v4661 = vmul.f32 %v351, %v4654
        %v4662 = vmul.f32 %v352, %v4654
        %v4663 = vmul.f32 %v353, %v4654
        %v4664 = vmul.f32 %v3614, 2.0
        %v4665 = vmul.f32 %v3615, 2.0
        %v4666 = vmul.f32 %v3616, 2.0
        %v4667 = vmul.f32 %v3617, 2.0
        %v4668 = vmul.f32 %v3618, 2.0
        %v4669 = vmul.f32 %v3619, 2.0
        %v4670 = vmul.f32 %v3620, 2.0
        %v4671 = vmul.f32 %v3621, 2.0
        %v4672 = vsub.f32 %v4664, %v2532
        %v4673 = vsub.f32 %v4665, %v2533
        %v4674 = vsub.f32 %v4666, %v2534
        %v4675 = vsub.f32 %v4667, %v2535
        %v4676 = vsub.f32 %v4668, %v2536
        %v4677 = vsub.f32 %v4669, %v2537
        %v4678 = vsub.f32 %v4670, %v2538
        %v4679 = vsub.f32 %v4671, %v2539
        %v4680 = vadd.f32 %v4621, %v4656
        %v4681 = vadd.f32 %v4625, %v4657
        %v4682 = vadd.f32 %v4629, %v4658
        %v4683 = vadd.f32 %v4633, %v4659
        %v4684 = vadd.f32 %v4637, %v4660
        %v4685 = vadd.f32 %v4641, %v4661
        %v4686 = vadd.f32 %v4645, %v4662
        %v4687 = vadd.f32 %v4649, %v4663
        %v4688 = vmul.f32 %v289, %v4680
        %v4689 = vmul.f32 %v290, %v4681
        %v4690 = vmul.f32 %v291, %v4682
        %v4691 = vmul.f32 %v292, %v4683
        %v4692 = vmul.f32 %v293, %v4684
        %v4693 = vmul.f32 %v294, %v4685
        %v4694 = vmul.f32 %v295, %v4686
        %v4695 = vmul.f32 %v296, %v4687
        %v4696 = vadd.f32 %v4672, %v4688
        %v4697 = vadd.f32 %v4673, %v4689
        %v4698 = vadd.f32 %v4674, %v4690
        %v4699 = vadd.f32 %v4675, %v4691
        %v4700 = vadd.f32 %v4676, %v4692
        %v4701 = vadd.f32 %v4677, %v4693
        %v4702 = vadd.f32 %v4678, %v4694
        %v4703 = vadd.f32 %v4679, %v4695
        %v4704 = vpack.c.bf16 %v4696, %v4696
        %v4705 = vpack.c.bf16 %v4697, %v4697
        %v4706 = vpack.c.bf16 %v4698, %v4698
        %v4707 = vpack.c.bf16 %v4699, %v4699
        %v4708 = vpack.c.bf16 %v4700, %v4700
        %v4709 = vpack.c.bf16 %v4701, %v4701
        %v4710 = vpack.c.bf16 %v4702, %v4702
        %v4711 = vpack.c.bf16 %v4703, %v4703
        %s4712 = scalar_lea.vmem %s266, 96 [#allocation12]
        %4713 = vst [vmem:[%s4712] sm:$0xf] %v4704
        %4714 = vst [vmem:[%s4712 + $0x4] sm:$0xf] %v4705
        %4715 = vst [vmem:[%s4712 + $0x8] sm:$0xf] %v4706
        %4716 = vst [vmem:[%s4712 + $0xc] sm:$0xf] %v4707
        %4717 = vst [vmem:[%s4712 + $0x10] sm:$0xf] %v4708
        %4718 = vst [vmem:[%s4712 + $0x14] sm:$0xf] %v4709
        %4719 = vst [vmem:[%s4712 + $0x18] sm:$0xf] %v4710
        %4720 = vst [vmem:[%s4712 + $0x1c] sm:$0xf] %v4711
        %v4721 = vand.u32 %v320, 4294901760
        %4722 = vmatpush.msra.mxu0 %v4721
        %v4723 = vand.u32 %v319, 4294901760
        %4724 = vmatpush.msra.mxu0 %v4723
        %v4725 = vand.u32 %v318, 4294901760
        %4726 = vmatpush.msra.mxu0 %v4725
        %v4727 = vand.u32 %v317, 4294901760
        %4728 = vmatpush.msra.mxu0 %v4727
        %v4729 = vand.u32 %v316, 4294901760
        %4730 = vmatpush.msra.mxu0 %v4729
        %v4731 = vand.u32 %v315, 4294901760
        %4732 = vmatpush.msra.mxu0 %v4731
        %v4733 = vand.u32 %v314, 4294901760
        %4734 = vmatpush.msra.mxu0 %v4733
        %v4735 = vand.u32 %v313, 4294901760
        %4736 = vmatpush.msra.mxu0 %v4735
        %v4737 = vand.u32 %v312, 4294901760
        %4738 = vmatpush.msra.mxu0 %v4737
        %v4739 = vand.u32 %v311, 4294901760
        %4740 = vmatpush.msra.mxu0 %v4739
        %v4741 = vand.u32 %v310, 4294901760
        %4742 = vmatpush.msra.mxu0 %v4741
        %v4743 = vand.u32 %v309, 4294901760
        %4744 = vmatpush.msra.mxu0 %v4743
        %v4745 = vand.u32 %v308, 4294901760
        %4746 = vmatpush.msra.mxu0 %v4745
        %v4747 = vand.u32 %v307, 4294901760
        %4748 = vmatpush.msra.mxu0 %v4747
        %v4749 = vand.u32 %v306, 4294901760
        %4750 = vmatpush.msra.mxu0 %v4749
        %v4751 = vand.u32 %v305, 4294901760
        %4752 = vmatpush.msra.mxu0 %v4751
        %v4753 = vand.u32 %v4696, 4294901760
        %v4754 = vsub.f32 %v4696, %v4753
        %v4755 = vand.u32 %v4754, 4294901760
        %v4756 = vsub.f32 %v4754, %v4755
        %v4757 = vand.u32 %v4756, 4294901760
        %4758 = vmatmul.f32.gmra.mxu0 %v4757
        %v4759 = vpop.f32.mrf.mxu0
        %v4760 = vadd.f32 0.0, %v4759
        %v4761 = vand.u32 %v4697, 4294901760
        %v4762 = vsub.f32 %v4697, %v4761
        %v4763 = vand.u32 %v4762, 4294901760
        %v4764 = vsub.f32 %v4762, %v4763
        %v4765 = vand.u32 %v4764, 4294901760
        %4766 = vmatmul.f32.gmra.mxu0 %v4765
        %v4767 = vpop.f32.mrf.mxu0
        %v4768 = vadd.f32 0.0, %v4767
        %v4769 = vand.u32 %v4698, 4294901760
        %v4770 = vsub.f32 %v4698, %v4769
        %v4771 = vand.u32 %v4770, 4294901760
        %v4772 = vsub.f32 %v4770, %v4771
        %v4773 = vand.u32 %v4772, 4294901760
        %4774 = vmatmul.f32.gmra.mxu0 %v4773
        %v4775 = vpop.f32.mrf.mxu0
        %v4776 = vadd.f32 0.0, %v4775
        %v4777 = vand.u32 %v4699, 4294901760
        %v4778 = vsub.f32 %v4699, %v4777
        %v4779 = vand.u32 %v4778, 4294901760
        %v4780 = vsub.f32 %v4778, %v4779
        %v4781 = vand.u32 %v4780, 4294901760
        %4782 = vmatmul.f32.gmra.mxu0 %v4781
        %v4783 = vpop.f32.mrf.mxu0
        %v4784 = vadd.f32 0.0, %v4783
        %v4785 = vand.u32 %v4700, 4294901760
        %v4786 = vsub.f32 %v4700, %v4785
        %v4787 = vand.u32 %v4786, 4294901760
        %v4788 = vsub.f32 %v4786, %v4787
        %v4789 = vand.u32 %v4788, 4294901760
        %4790 = vmatmul.f32.gmra.mxu0 %v4789
        %v4791 = vpop.f32.mrf.mxu0
        %v4792 = vadd.f32 0.0, %v4791
        %v4793 = vand.u32 %v4701, 4294901760
        %v4794 = vsub.f32 %v4701, %v4793
        %v4795 = vand.u32 %v4794, 4294901760
        %v4796 = vsub.f32 %v4794, %v4795
        %v4797 = vand.u32 %v4796, 4294901760
        %4798 = vmatmul.f32.gmra.mxu0 %v4797
        %v4799 = vpop.f32.mrf.mxu0
        %v4800 = vadd.f32 0.0, %v4799
        %v4801 = vand.u32 %v4702, 4294901760
        %v4802 = vsub.f32 %v4702, %v4801
        %v4803 = vand.u32 %v4802, 4294901760
        %v4804 = vsub.f32 %v4802, %v4803
        %v4805 = vand.u32 %v4804, 4294901760
        %4806 = vmatmul.f32.gmra.mxu0 %v4805
        %v4807 = vpop.f32.mrf.mxu0
        %v4808 = vadd.f32 0.0, %v4807
        %v4809 = vand.u32 %v4703, 4294901760
        %v4810 = vsub.f32 %v4703, %v4809
        %v4811 = vand.u32 %v4810, 4294901760
        %v4812 = vsub.f32 %v4810, %v4811
        %v4813 = vand.u32 %v4812, 4294901760
        %4814 = vmatmul.f32.gmra.mxu0 %v4813
        %v4815 = vpop.f32.mrf.mxu0
        %v4816 = vadd.f32 0.0, %v4815
        %4817 = vdwg.mxu0
        %v4818 = vand.u32 %v320, 4294901760
        %v4819 = vsub.f32 %v320, %v4818
        %v4820 = vand.u32 %v4819, 4294901760
        %v4821 = vsub.f32 %v4819, %v4820
        %v4822 = vand.u32 %v4821, 4294901760
        %4823 = vmatpush.msra.mxu0 %v4822
        %v4824 = vand.u32 %v319, 4294901760
        %v4825 = vsub.f32 %v319, %v4824
        %v4826 = vand.u32 %v4825, 4294901760
        %v4827 = vsub.f32 %v4825, %v4826
        %v4828 = vand.u32 %v4827, 4294901760
        %4829 = vmatpush.msra.mxu0 %v4828
        %v4830 = vand.u32 %v318, 4294901760
        %v4831 = vsub.f32 %v318, %v4830
        %v4832 = vand.u32 %v4831, 4294901760
        %v4833 = vsub.f32 %v4831, %v4832
        %v4834 = vand.u32 %v4833, 4294901760
        %4835 = vmatpush.msra.mxu0 %v4834
        %v4836 = vand.u32 %v317, 4294901760
        %v4837 = vsub.f32 %v317, %v4836
        %v4838 = vand.u32 %v4837, 4294901760
        %v4839 = vsub.f32 %v4837, %v4838
        %v4840 = vand.u32 %v4839, 4294901760
        %4841 = vmatpush.msra.mxu0 %v4840
        %v4842 = vand.u32 %v316, 4294901760
        %v4843 = vsub.f32 %v316, %v4842
        %v4844 = vand.u32 %v4843, 4294901760
        %v4845 = vsub.f32 %v4843, %v4844
        %v4846 = vand.u32 %v4845, 4294901760
        %4847 = vmatpush.msra.mxu0 %v4846
        %v4848 = vand.u32 %v315, 4294901760
        %v4849 = vsub.f32 %v315, %v4848
        %v4850 = vand.u32 %v4849, 4294901760
        %v4851 = vsub.f32 %v4849, %v4850
        %v4852 = vand.u32 %v4851, 4294901760
        %4853 = vmatpush.msra.mxu0 %v4852
        %v4854 = vand.u32 %v314, 4294901760
        %v4855 = vsub.f32 %v314, %v4854
        %v4856 = vand.u32 %v4855, 4294901760
        %v4857 = vsub.f32 %v4855, %v4856
        %v4858 = vand.u32 %v4857, 4294901760
        %4859 = vmatpush.msra.mxu0 %v4858
        %v4860 = vand.u32 %v313, 4294901760
        %v4861 = vsub.f32 %v313, %v4860
        %v4862 = vand.u32 %v4861, 4294901760
        %v4863 = vsub.f32 %v4861, %v4862
        %v4864 = vand.u32 %v4863, 4294901760
        %4865 = vmatpush.msra.mxu0 %v4864
        %v4866 = vand.u32 %v312, 4294901760
        %v4867 = vsub.f32 %v312, %v4866
        %v4868 = vand.u32 %v4867, 4294901760
        %v4869 = vsub.f32 %v4867, %v4868
        %v4870 = vand.u32 %v4869, 4294901760
        %4871 = vmatpush.msra.mxu0 %v4870
        %v4872 = vand.u32 %v311, 4294901760
        %v4873 = vsub.f32 %v311, %v4872
        %v4874 = vand.u32 %v4873, 4294901760
        %v4875 = vsub.f32 %v4873, %v4874
        %v4876 = vand.u32 %v4875, 4294901760
        %4877 = vmatpush.msra.mxu0 %v4876
        %v4878 = vand.u32 %v310, 4294901760
        %v4879 = vsub.f32 %v310, %v4878
        %v4880 = vand.u32 %v4879, 4294901760
        %v4881 = vsub.f32 %v4879, %v4880
        %v4882 = vand.u32 %v4881, 4294901760
        %4883 = vmatpush.msra.mxu0 %v4882
        %v4884 = vand.u32 %v309, 4294901760
        %v4885 = vsub.f32 %v309, %v4884
        %v4886 = vand.u32 %v4885, 4294901760
        %v4887 = vsub.f32 %v4885, %v4886
        %v4888 = vand.u32 %v4887, 4294901760
        %4889 = vmatpush.msra.mxu0 %v4888
        %v4890 = vand.u32 %v308, 4294901760
        %v4891 = vsub.f32 %v308, %v4890
        %v4892 = vand.u32 %v4891, 4294901760
        %v4893 = vsub.f32 %v4891, %v4892
        %v4894 = vand.u32 %v4893, 4294901760
        %4895 = vmatpush.msra.mxu0 %v4894
        %v4896 = vand.u32 %v307, 4294901760
        %v4897 = vsub.f32 %v307, %v4896
        %v4898 = vand.u32 %v4897, 4294901760
        %v4899 = vsub.f32 %v4897, %v4898
        %v4900 = vand.u32 %v4899, 4294901760
        %4901 = vmatpush.msra.mxu0 %v4900
        %v4902 = vand.u32 %v306, 4294901760
        %v4903 = vsub.f32 %v306, %v4902
        %v4904 = vand.u32 %v4903, 4294901760
        %v4905 = vsub.f32 %v4903, %v4904
        %v4906 = vand.u32 %v4905, 4294901760
        %4907 = vmatpush.msra.mxu0 %v4906
        %v4908 = vand.u32 %v305, 4294901760
        %v4909 = vsub.f32 %v305, %v4908
        %v4910 = vand.u32 %v4909, 4294901760
        %v4911 = vsub.f32 %v4909, %v4910
        %v4912 = vand.u32 %v4911, 4294901760
        %4913 = vmatpush.msra.mxu0 %v4912
        %v4914 = vand.u32 %v4696, 4294901760
        %4915 = vmatmul.f32.gmra.mxu0 %v4914
        %v4916 = vpop.f32.mrf.mxu0
        %v4917 = vadd.f32 %v4760, %v4916
        %v4918 = vand.u32 %v4697, 4294901760
        %4919 = vmatmul.f32.gmra.mxu0 %v4918
        %v4920 = vpop.f32.mrf.mxu0
        %v4921 = vadd.f32 %v4768, %v4920
        %v4922 = vand.u32 %v4698, 4294901760
        %4923 = vmatmul.f32.gmra.mxu0 %v4922
        %v4924 = vpop.f32.mrf.mxu0
        %v4925 = vadd.f32 %v4776, %v4924
        %v4926 = vand.u32 %v4699, 4294901760
        %4927 = vmatmul.f32.gmra.mxu0 %v4926
        %v4928 = vpop.f32.mrf.mxu0
        %v4929 = vadd.f32 %v4784, %v4928
        %v4930 = vand.u32 %v4700, 4294901760
        %4931 = vmatmul.f32.gmra.mxu0 %v4930
        %v4932 = vpop.f32.mrf.mxu0
        %v4933 = vadd.f32 %v4792, %v4932
        %v4934 = vand.u32 %v4701, 4294901760
        %4935 = vmatmul.f32.gmra.mxu0 %v4934
        %v4936 = vpop.f32.mrf.mxu0
        %v4937 = vadd.f32 %v4800, %v4936
        %v4938 = vand.u32 %v4702, 4294901760
        %4939 = vmatmul.f32.gmra.mxu0 %v4938
        %v4940 = vpop.f32.mrf.mxu0
        %v4941 = vadd.f32 %v4808, %v4940
        %v4942 = vand.u32 %v4703, 4294901760
        %4943 = vmatmul.f32.gmra.mxu0 %v4942
        %v4944 = vpop.f32.mrf.mxu0
        %v4945 = vadd.f32 %v4816, %v4944
        %4946 = vdwg.mxu0
        %v4947 = vand.u32 %v320, 4294901760
        %v4948 = vsub.f32 %v320, %v4947
        %4949 = vmatpush.msra.mxu0 %v4948
        %v4950 = vand.u32 %v319, 4294901760
        %v4951 = vsub.f32 %v319, %v4950
        %4952 = vmatpush.msra.mxu0 %v4951
        %v4953 = vand.u32 %v318, 4294901760
        %v4954 = vsub.f32 %v318, %v4953
        %4955 = vmatpush.msra.mxu0 %v4954
        %v4956 = vand.u32 %v317, 4294901760
        %v4957 = vsub.f32 %v317, %v4956
        %4958 = vmatpush.msra.mxu0 %v4957
        %v4959 = vand.u32 %v316, 4294901760
        %v4960 = vsub.f32 %v316, %v4959
        %4961 = vmatpush.msra.mxu0 %v4960
        %v4962 = vand.u32 %v315, 4294901760
        %v4963 = vsub.f32 %v315, %v4962
        %4964 = vmatpush.msra.mxu0 %v4963
        %v4965 = vand.u32 %v314, 4294901760
        %v4966 = vsub.f32 %v314, %v4965
        %4967 = vmatpush.msra.mxu0 %v4966
        %v4968 = vand.u32 %v313, 4294901760
        %v4969 = vsub.f32 %v313, %v4968
        %4970 = vmatpush.msra.mxu0 %v4969
        %v4971 = vand.u32 %v312, 4294901760
        %v4972 = vsub.f32 %v312, %v4971
        %4973 = vmatpush.msra.mxu0 %v4972
        %v4974 = vand.u32 %v311, 4294901760
        %v4975 = vsub.f32 %v311, %v4974
        %4976 = vmatpush.msra.mxu0 %v4975
        %v4977 = vand.u32 %v310, 4294901760
        %v4978 = vsub.f32 %v310, %v4977
        %4979 = vmatpush.msra.mxu0 %v4978
        %v4980 = vand.u32 %v309, 4294901760
        %v4981 = vsub.f32 %v309, %v4980
        %4982 = vmatpush.msra.mxu0 %v4981
        %v4983 = vand.u32 %v308, 4294901760
        %v4984 = vsub.f32 %v308, %v4983
        %4985 = vmatpush.msra.mxu0 %v4984
        %v4986 = vand.u32 %v307, 4294901760
        %v4987 = vsub.f32 %v307, %v4986
        %4988 = vmatpush.msra.mxu0 %v4987
        %v4989 = vand.u32 %v306, 4294901760
        %v4990 = vsub.f32 %v306, %v4989
        %4991 = vmatpush.msra.mxu0 %v4990
        %v4992 = vand.u32 %v305, 4294901760
        %v4993 = vsub.f32 %v305, %v4992
        %4994 = vmatpush.msra.mxu0 %v4993
        %v4995 = vand.u32 %v4696, 4294901760
        %v4996 = vsub.f32 %v4696, %v4995
        %4997 = vmatmul.f32.gmra.mxu0 %v4996
        %v4998 = vpop.f32.mrf.mxu0
        %v4999 = vadd.f32 %v4917, %v4998
        %v5000 = vand.u32 %v4697, 4294901760
        %v5001 = vsub.f32 %v4697, %v5000
        %5002 = vmatmul.f32.gmra.mxu0 %v5001
        %v5003 = vpop.f32.mrf.mxu0
        %v5004 = vadd.f32 %v4921, %v5003
        %v5005 = vand.u32 %v4698, 4294901760
        %v5006 = vsub.f32 %v4698, %v5005
        %5007 = vmatmul.f32.gmra.mxu0 %v5006
        %v5008 = vpop.f32.mrf.mxu0
        %v5009 = vadd.f32 %v4925, %v5008
        %v5010 = vand.u32 %v4699, 4294901760
        %v5011 = vsub.f32 %v4699, %v5010
        %5012 = vmatmul.f32.gmra.mxu0 %v5011
        %v5013 = vpop.f32.mrf.mxu0
        %v5014 = vadd.f32 %v4929, %v5013
        %v5015 = vand.u32 %v4700, 4294901760
        %v5016 = vsub.f32 %v4700, %v5015
        %5017 = vmatmul.f32.gmra.mxu0 %v5016
        %v5018 = vpop.f32.mrf.mxu0
        %v5019 = vadd.f32 %v4933, %v5018
        %v5020 = vand.u32 %v4701, 4294901760
        %v5021 = vsub.f32 %v4701, %v5020
        %5022 = vmatmul.f32.gmra.mxu0 %v5021
        %v5023 = vpop.f32.mrf.mxu0
        %v5024 = vadd.f32 %v4937, %v5023
        %v5025 = vand.u32 %v4702, 4294901760
        %v5026 = vsub.f32 %v4702, %v5025
        %5027 = vmatmul.f32.gmra.mxu0 %v5026
        %v5028 = vpop.f32.mrf.mxu0
        %v5029 = vadd.f32 %v4941, %v5028
        %v5030 = vand.u32 %v4703, 4294901760
        %v5031 = vsub.f32 %v4703, %v5030
        %5032 = vmatmul.f32.gmra.mxu0 %v5031
        %v5033 = vpop.f32.mrf.mxu0
        %v5034 = vadd.f32 %v4945, %v5033
        %5035 = vdwg.mxu0
        %v5036 = vand.u32 %v320, 4294901760
        %5037 = vmatpush.msra.mxu0 %v5036
        %v5038 = vand.u32 %v319, 4294901760
        %5039 = vmatpush.msra.mxu0 %v5038
        %v5040 = vand.u32 %v318, 4294901760
        %5041 = vmatpush.msra.mxu0 %v5040
        %v5042 = vand.u32 %v317, 4294901760
        %5043 = vmatpush.msra.mxu0 %v5042
        %v5044 = vand.u32 %v316, 4294901760
        %5045 = vmatpush.msra.mxu0 %v5044
        %v5046 = vand.u32 %v315, 4294901760
        %5047 = vmatpush.msra.mxu0 %v5046
        %v5048 = vand.u32 %v314, 4294901760
        %5049 = vmatpush.msra.mxu0 %v5048
        %v5050 = vand.u32 %v313, 4294901760
        %5051 = vmatpush.msra.mxu0 %v5050
        %v5052 = vand.u32 %v312, 4294901760
        %5053 = vmatpush.msra.mxu0 %v5052
        %v5054 = vand.u32 %v311, 4294901760
        %5055 = vmatpush.msra.mxu0 %v5054
        %v5056 = vand.u32 %v310, 4294901760
        %5057 = vmatpush.msra.mxu0 %v5056
        %v5058 = vand.u32 %v309, 4294901760
        %5059 = vmatpush.msra.mxu0 %v5058
        %v5060 = vand.u32 %v308, 4294901760
        %5061 = vmatpush.msra.mxu0 %v5060
        %v5062 = vand.u32 %v307, 4294901760
        %5063 = vmatpush.msra.mxu0 %v5062
        %v5064 = vand.u32 %v306, 4294901760
        %5065 = vmatpush.msra.mxu0 %v5064
        %v5066 = vand.u32 %v305, 4294901760
        %5067 = vmatpush.msra.mxu0 %v5066
        %v5068 = vand.u32 %v4696, 4294901760
        %v5069 = vsub.f32 %v4696, %v5068
        %v5070 = vand.u32 %v5069, 4294901760
        %5071 = vmatmul.f32.gmra.mxu0 %v5070
        %v5072 = vpop.f32.mrf.mxu0
        %v5073 = vadd.f32 %v4999, %v5072
        %v5074 = vand.u32 %v4697, 4294901760
        %v5075 = vsub.f32 %v4697, %v5074
        %v5076 = vand.u32 %v5075, 4294901760
        %5077 = vmatmul.f32.gmra.mxu0 %v5076
        %v5078 = vpop.f32.mrf.mxu0
        %v5079 = vadd.f32 %v5004, %v5078
        %v5080 = vand.u32 %v4698, 4294901760
        %v5081 = vsub.f32 %v4698, %v5080
        %v5082 = vand.u32 %v5081, 4294901760
        %5083 = vmatmul.f32.gmra.mxu0 %v5082
        %v5084 = vpop.f32.mrf.mxu0
        %v5085 = vadd.f32 %v5009, %v5084
        %v5086 = vand.u32 %v4699, 4294901760
        %v5087 = vsub.f32 %v4699, %v5086
        %v5088 = vand.u32 %v5087, 4294901760
        %5089 = vmatmul.f32.gmra.mxu0 %v5088
        %v5090 = vpop.f32.mrf.mxu0
        %v5091 = vadd.f32 %v5014, %v5090
        %v5092 = vand.u32 %v4700, 4294901760
        %v5093 = vsub.f32 %v4700, %v5092
        %v5094 = vand.u32 %v5093, 4294901760
        %5095 = vmatmul.f32.gmra.mxu0 %v5094
        %v5096 = vpop.f32.mrf.mxu0
        %v5097 = vadd.f32 %v5019, %v5096
        %v5098 = vand.u32 %v4701, 4294901760
        %v5099 = vsub.f32 %v4701, %v5098
        %v5100 = vand.u32 %v5099, 4294901760
        %5101 = vmatmul.f32.gmra.mxu0 %v5100
        %v5102 = vpop.f32.mrf.mxu0
        %v5103 = vadd.f32 %v5024, %v5102
        %v5104 = vand.u32 %v4702, 4294901760
        %v5105 = vsub.f32 %v4702, %v5104
        %v5106 = vand.u32 %v5105, 4294901760
        %5107 = vmatmul.f32.gmra.mxu0 %v5106
        %v5108 = vpop.f32.mrf.mxu0
        %v5109 = vadd.f32 %v5029, %v5108
        %v5110 = vand.u32 %v4703, 4294901760
        %v5111 = vsub.f32 %v4703, %v5110
        %v5112 = vand.u32 %v5111, 4294901760
        %5113 = vmatmul.f32.gmra.mxu0 %v5112
        %v5114 = vpop.f32.mrf.mxu0
        %v5115 = vadd.f32 %v5034, %v5114
        %5116 = vdwg.mxu0
        %v5117 = vand.u32 %v320, 4294901760
        %v5118 = vsub.f32 %v320, %v5117
        %v5119 = vand.u32 %v5118, 4294901760
        %5120 = vmatpush.msra.mxu0 %v5119
        %v5121 = vand.u32 %v319, 4294901760
        %v5122 = vsub.f32 %v319, %v5121
        %v5123 = vand.u32 %v5122, 4294901760
        %5124 = vmatpush.msra.mxu0 %v5123
        %v5125 = vand.u32 %v318, 4294901760
        %v5126 = vsub.f32 %v318, %v5125
        %v5127 = vand.u32 %v5126, 4294901760
        %5128 = vmatpush.msra.mxu0 %v5127
        %v5129 = vand.u32 %v317, 4294901760
        %v5130 = vsub.f32 %v317, %v5129
        %v5131 = vand.u32 %v5130, 4294901760
        %5132 = vmatpush.msra.mxu0 %v5131
        %v5133 = vand.u32 %v316, 4294901760
        %v5134 = vsub.f32 %v316, %v5133
        %v5135 = vand.u32 %v5134, 4294901760
        %5136 = vmatpush.msra.mxu0 %v5135
        %v5137 = vand.u32 %v315, 4294901760
        %v5138 = vsub.f32 %v315, %v5137
        %v5139 = vand.u32 %v5138, 4294901760
        %5140 = vmatpush.msra.mxu0 %v5139
        %v5141 = vand.u32 %v314, 4294901760
        %v5142 = vsub.f32 %v314, %v5141
        %v5143 = vand.u32 %v5142, 4294901760
        %5144 = vmatpush.msra.mxu0 %v5143
        %v5145 = vand.u32 %v313, 4294901760
        %v5146 = vsub.f32 %v313, %v5145
        %v5147 = vand.u32 %v5146, 4294901760
        %5148 = vmatpush.msra.mxu0 %v5147
        %v5149 = vand.u32 %v312, 4294901760
        %v5150 = vsub.f32 %v312, %v5149
        %v5151 = vand.u32 %v5150, 4294901760
        %5152 = vmatpush.msra.mxu0 %v5151
        %v5153 = vand.u32 %v311, 4294901760
        %v5154 = vsub.f32 %v311, %v5153
        %v5155 = vand.u32 %v5154, 4294901760
        %5156 = vmatpush.msra.mxu0 %v5155
        %v5157 = vand.u32 %v310, 4294901760
        %v5158 = vsub.f32 %v310, %v5157
        %v5159 = vand.u32 %v5158, 4294901760
        %5160 = vmatpush.msra.mxu0 %v5159
        %v5161 = vand.u32 %v309, 4294901760
        %v5162 = vsub.f32 %v309, %v5161
        %v5163 = vand.u32 %v5162, 4294901760
        %5164 = vmatpush.msra.mxu0 %v5163
        %v5165 = vand.u32 %v308, 4294901760
        %v5166 = vsub.f32 %v308, %v5165
        %v5167 = vand.u32 %v5166, 4294901760
        %5168 = vmatpush.msra.mxu0 %v5167
        %v5169 = vand.u32 %v307, 4294901760
        %v5170 = vsub.f32 %v307, %v5169
        %v5171 = vand.u32 %v5170, 4294901760
        %5172 = vmatpush.msra.mxu0 %v5171
        %v5173 = vand.u32 %v306, 4294901760
        %v5174 = vsub.f32 %v306, %v5173
        %v5175 = vand.u32 %v5174, 4294901760
        %5176 = vmatpush.msra.mxu0 %v5175
        %v5177 = vand.u32 %v305, 4294901760
        %v5178 = vsub.f32 %v305, %v5177
        %v5179 = vand.u32 %v5178, 4294901760
        %5180 = vmatpush.msra.mxu0 %v5179
        %v5181 = vand.u32 %v4696, 4294901760
        %5182 = vmatmul.f32.gmra.mxu0 %v5181
        %v5183 = vpop.f32.mrf.mxu0
        %v5184 = vadd.f32 %v5073, %v5183
        %v5185 = vand.u32 %v4697, 4294901760
        %5186 = vmatmul.f32.gmra.mxu0 %v5185
        %v5187 = vpop.f32.mrf.mxu0
        %v5188 = vadd.f32 %v5079, %v5187
        %v5189 = vand.u32 %v4698, 4294901760
        %5190 = vmatmul.f32.gmra.mxu0 %v5189
        %v5191 = vpop.f32.mrf.mxu0
        %v5192 = vadd.f32 %v5085, %v5191
        %v5193 = vand.u32 %v4699, 4294901760
        %5194 = vmatmul.f32.gmra.mxu0 %v5193
        %v5195 = vpop.f32.mrf.mxu0
        %v5196 = vadd.f32 %v5091, %v5195
        %v5197 = vand.u32 %v4700, 4294901760
        %5198 = vmatmul.f32.gmra.mxu0 %v5197
        %v5199 = vpop.f32.mrf.mxu0
        %v5200 = vadd.f32 %v5097, %v5199
        %v5201 = vand.u32 %v4701, 4294901760
        %5202 = vmatmul.f32.gmra.mxu0 %v5201
        %v5203 = vpop.f32.mrf.mxu0
        %v5204 = vadd.f32 %v5103, %v5203
        %v5205 = vand.u32 %v4702, 4294901760
        %5206 = vmatmul.f32.gmra.mxu0 %v5205
        %v5207 = vpop.f32.mrf.mxu0
        %v5208 = vadd.f32 %v5109, %v5207
        %v5209 = vand.u32 %v4703, 4294901760
        %5210 = vmatmul.f32.gmra.mxu0 %v5209
        %v5211 = vpop.f32.mrf.mxu0
        %v5212 = vadd.f32 %v5115, %v5211
        %5213 = vdwg.mxu0
        %v5214 = vand.u32 %v320, 4294901760
        %5215 = vmatpush.msra.mxu0 %v5214
        %v5216 = vand.u32 %v319, 4294901760
        %5217 = vmatpush.msra.mxu0 %v5216
        %v5218 = vand.u32 %v318, 4294901760
        %5219 = vmatpush.msra.mxu0 %v5218
        %v5220 = vand.u32 %v317, 4294901760
        %5221 = vmatpush.msra.mxu0 %v5220
        %v5222 = vand.u32 %v316, 4294901760
        %5223 = vmatpush.msra.mxu0 %v5222
        %v5224 = vand.u32 %v315, 4294901760
        %5225 = vmatpush.msra.mxu0 %v5224
        %v5226 = vand.u32 %v314, 4294901760
        %5227 = vmatpush.msra.mxu0 %v5226
        %v5228 = vand.u32 %v313, 4294901760
        %5229 = vmatpush.msra.mxu0 %v5228
        %v5230 = vand.u32 %v312, 4294901760
        %5231 = vmatpush.msra.mxu0 %v5230
        %v5232 = vand.u32 %v311, 4294901760
        %5233 = vmatpush.msra.mxu0 %v5232
        %v5234 = vand.u32 %v310, 4294901760
        %5235 = vmatpush.msra.mxu0 %v5234
        %v5236 = vand.u32 %v309, 4294901760
        %5237 = vmatpush.msra.mxu0 %v5236
        %v5238 = vand.u32 %v308, 4294901760
        %5239 = vmatpush.msra.mxu0 %v5238
        %v5240 = vand.u32 %v307, 4294901760
        %5241 = vmatpush.msra.mxu0 %v5240
        %v5242 = vand.u32 %v306, 4294901760
        %5243 = vmatpush.msra.mxu0 %v5242
        %v5244 = vand.u32 %v305, 4294901760
        %5245 = vmatpush.msra.mxu0 %v5244
        %v5246 = vand.u32 %v4696, 4294901760
        %5247 = vmatmul.f32.gmra.mxu0 %v5246
        %v5248 = vpop.f32.mrf.mxu0
        %v5249 = vadd.f32 %v5184, %v5248
        %v5250 = vand.u32 %v4697, 4294901760
        %5251 = vmatmul.f32.gmra.mxu0 %v5250
        %v5252 = vpop.f32.mrf.mxu0
        %v5253 = vadd.f32 %v5188, %v5252
        %v5254 = vand.u32 %v4698, 4294901760
        %5255 = vmatmul.f32.gmra.mxu0 %v5254
        %v5256 = vpop.f32.mrf.mxu0
        %v5257 = vadd.f32 %v5192, %v5256
        %v5258 = vand.u32 %v4699, 4294901760
        %5259 = vmatmul.f32.gmra.mxu0 %v5258
        %v5260 = vpop.f32.mrf.mxu0
        %v5261 = vadd.f32 %v5196, %v5260
        %v5262 = vand.u32 %v4700, 4294901760
        %5263 = vmatmul.f32.gmra.mxu0 %v5262
        %v5264 = vpop.f32.mrf.mxu0
        %v5265 = vadd.f32 %v5200, %v5264
        %v5266 = vand.u32 %v4701, 4294901760
        %5267 = vmatmul.f32.gmra.mxu0 %v5266
        %v5268 = vpop.f32.mrf.mxu0
        %v5269 = vadd.f32 %v5204, %v5268
        %v5270 = vand.u32 %v4702, 4294901760
        %5271 = vmatmul.f32.gmra.mxu0 %v5270
        %v5272 = vpop.f32.mrf.mxu0
        %v5273 = vadd.f32 %v5208, %v5272
        %v5274 = vand.u32 %v4703, 4294901760
        %5275 = vmatmul.f32.gmra.mxu0 %v5274
        %v5276 = vpop.f32.mrf.mxu0
        %v5277 = vadd.f32 %v5212, %v5276
        %5278 = vdwg.mxu0
        %5279 = vmatpush.msra.mxu0 0.0
        %5280 = vmatpush.msra.mxu0 0.0
        %5281 = vmatpush.msra.mxu0 0.0
        %5282 = vmatpush.msra.mxu0 0.0
        %5283 = vmatpush.msra.mxu0 0.0
        %5284 = vmatpush.msra.mxu0 0.0
        %5285 = vmatpush.msra.mxu0 0.0
        %5286 = vmatpush.msra.mxu0 0.0
        %v5287 = vand.u32 %v4703, 4294901760
        %5288 = vmatpush.msra.mxu0 %v5287
        %v5289 = vand.u32 %v4702, 4294901760
        %5290 = vmatpush.msra.mxu0 %v5289
        %v5291 = vand.u32 %v4701, 4294901760
        %5292 = vmatpush.msra.mxu0 %v5291
        %v5293 = vand.u32 %v4700, 4294901760
        %5294 = vmatpush.msra.mxu0 %v5293
        %v5295 = vand.u32 %v4699, 4294901760
        %5296 = vmatpush.msra.mxu0 %v5295
        %v5297 = vand.u32 %v4698, 4294901760
        %5298 = vmatpush.msra.mxu0 %v5297
        %v5299 = vand.u32 %v4697, 4294901760
        %5300 = vmatpush.msra.mxu0 %v5299
        %v5301 = vand.u32 %v4696, 4294901760
        %5302 = vmatpush.msra.mxu0 %v5301
        %v5303 = vand.u32 %v930, 4294901760
        %v5304 = vsub.f32 %v930, %v5303
        %v5305 = vand.u32 %v5304, 4294901760
        %v5306 = vsub.f32 %v5304, %v5305
        %v5307 = vand.u32 %v5306, 4294901760
        %5308 = vmatmul.f32.gmra.mxu0 %v5307
        %v5309 = vpop.f32.mrf.mxu0
        %v5310 = vadd.f32 %v5249, %v5309
        %v5311 = vand.u32 %v933, 4294901760
        %v5312 = vsub.f32 %v933, %v5311
        %v5313 = vand.u32 %v5312, 4294901760
        %v5314 = vsub.f32 %v5312, %v5313
        %v5315 = vand.u32 %v5314, 4294901760
        %5316 = vmatmul.f32.gmra.mxu0 %v5315
        %v5317 = vpop.f32.mrf.mxu0
        %v5318 = vadd.f32 %v5253, %v5317
        %v5319 = vand.u32 %v936, 4294901760
        %v5320 = vsub.f32 %v936, %v5319
        %v5321 = vand.u32 %v5320, 4294901760
        %v5322 = vsub.f32 %v5320, %v5321
        %v5323 = vand.u32 %v5322, 4294901760
        %5324 = vmatmul.f32.gmra.mxu0 %v5323
        %v5325 = vpop.f32.mrf.mxu0
        %v5326 = vadd.f32 %v5257, %v5325
        %v5327 = vand.u32 %v939, 4294901760
        %v5328 = vsub.f32 %v939, %v5327
        %v5329 = vand.u32 %v5328, 4294901760
        %v5330 = vsub.f32 %v5328, %v5329
        %v5331 = vand.u32 %v5330, 4294901760
        %5332 = vmatmul.f32.gmra.mxu0 %v5331
        %v5333 = vpop.f32.mrf.mxu0
        %v5334 = vadd.f32 %v5261, %v5333
        %v5335 = vand.u32 %v942, 4294901760
        %v5336 = vsub.f32 %v942, %v5335
        %v5337 = vand.u32 %v5336, 4294901760
        %v5338 = vsub.f32 %v5336, %v5337
        %v5339 = vand.u32 %v5338, 4294901760
        %5340 = vmatmul.f32.gmra.mxu0 %v5339
        %v5341 = vpop.f32.mrf.mxu0
        %v5342 = vadd.f32 %v5265, %v5341
        %v5343 = vand.u32 %v945, 4294901760
        %v5344 = vsub.f32 %v945, %v5343
        %v5345 = vand.u32 %v5344, 4294901760
        %v5346 = vsub.f32 %v5344, %v5345
        %v5347 = vand.u32 %v5346, 4294901760
        %5348 = vmatmul.f32.gmra.mxu0 %v5347
        %v5349 = vpop.f32.mrf.mxu0
        %v5350 = vadd.f32 %v5269, %v5349
        %v5351 = vand.u32 %v948, 4294901760
        %v5352 = vsub.f32 %v948, %v5351
        %v5353 = vand.u32 %v5352, 4294901760
        %v5354 = vsub.f32 %v5352, %v5353
        %v5355 = vand.u32 %v5354, 4294901760
        %5356 = vmatmul.f32.gmra.mxu0 %v5355
        %v5357 = vpop.f32.mrf.mxu0
        %v5358 = vadd.f32 %v5273, %v5357
        %v5359 = vand.u32 %v951, 4294901760
        %v5360 = vsub.f32 %v951, %v5359
        %v5361 = vand.u32 %v5360, 4294901760
        %v5362 = vsub.f32 %v5360, %v5361
        %v5363 = vand.u32 %v5362, 4294901760
        %5364 = vmatmul.f32.gmra.mxu0 %v5363
        %v5365 = vpop.f32.mrf.mxu0
        %v5366 = vadd.f32 %v5277, %v5365
        %5367 = vdwg.mxu0
        %5368 = vmatpush.msra.mxu0 0.0
        %5369 = vmatpush.msra.mxu0 0.0
        %5370 = vmatpush.msra.mxu0 0.0
        %5371 = vmatpush.msra.mxu0 0.0
        %5372 = vmatpush.msra.mxu0 0.0
        %5373 = vmatpush.msra.mxu0 0.0
        %5374 = vmatpush.msra.mxu0 0.0
        %5375 = vmatpush.msra.mxu0 0.0
        %v5376 = vand.u32 %v4703, 4294901760
        %v5377 = vsub.f32 %v4703, %v5376
        %v5378 = vand.u32 %v5377, 4294901760
        %v5379 = vsub.f32 %v5377, %v5378
        %v5380 = vand.u32 %v5379, 4294901760
        %5381 = vmatpush.msra.mxu0 %v5380
        %v5382 = vand.u32 %v4702, 4294901760
        %v5383 = vsub.f32 %v4702, %v5382
        %v5384 = vand.u32 %v5383, 4294901760
        %v5385 = vsub.f32 %v5383, %v5384
        %v5386 = vand.u32 %v5385, 4294901760
        %5387 = vmatpush.msra.mxu0 %v5386
        %v5388 = vand.u32 %v4701, 4294901760
        %v5389 = vsub.f32 %v4701, %v5388
        %v5390 = vand.u32 %v5389, 4294901760
        %v5391 = vsub.f32 %v5389, %v5390
        %v5392 = vand.u32 %v5391, 4294901760
        %5393 = vmatpush.msra.mxu0 %v5392
        %v5394 = vand.u32 %v4700, 4294901760
        %v5395 = vsub.f32 %v4700, %v5394
        %v5396 = vand.u32 %v5395, 4294901760
        %v5397 = vsub.f32 %v5395, %v5396
        %v5398 = vand.u32 %v5397, 4294901760
        %5399 = vmatpush.msra.mxu0 %v5398
        %v5400 = vand.u32 %v4699, 4294901760
        %v5401 = vsub.f32 %v4699, %v5400
        %v5402 = vand.u32 %v5401, 4294901760
        %v5403 = vsub.f32 %v5401, %v5402
        %v5404 = vand.u32 %v5403, 4294901760
        %5405 = vmatpush.msra.mxu0 %v5404
        %v5406 = vand.u32 %v4698, 4294901760
        %v5407 = vsub.f32 %v4698, %v5406
        %v5408 = vand.u32 %v5407, 4294901760
        %v5409 = vsub.f32 %v5407, %v5408
        %v5410 = vand.u32 %v5409, 4294901760
        %5411 = vmatpush.msra.mxu0 %v5410
        %v5412 = vand.u32 %v4697, 4294901760
        %v5413 = vsub.f32 %v4697, %v5412
        %v5414 = vand.u32 %v5413, 4294901760
        %v5415 = vsub.f32 %v5413, %v5414
        %v5416 = vand.u32 %v5415, 4294901760
        %5417 = vmatpush.msra.mxu0 %v5416
        %v5418 = vand.u32 %v4696, 4294901760
        %v5419 = vsub.f32 %v4696, %v5418
        %v5420 = vand.u32 %v5419, 4294901760
        %v5421 = vsub.f32 %v5419, %v5420
        %v5422 = vand.u32 %v5421, 4294901760
        %5423 = vmatpush.msra.mxu0 %v5422
        %v5424 = vand.u32 %v930, 4294901760
        %5425 = vmatmul.f32.gmra.mxu0 %v5424
        %v5426 = vpop.f32.mrf.mxu0
        %v5427 = vadd.f32 %v5310, %v5426
        %v5428 = vand.u32 %v933, 4294901760
        %5429 = vmatmul.f32.gmra.mxu0 %v5428
        %v5430 = vpop.f32.mrf.mxu0
        %v5431 = vadd.f32 %v5318, %v5430
        %v5432 = vand.u32 %v936, 4294901760
        %5433 = vmatmul.f32.gmra.mxu0 %v5432
        %v5434 = vpop.f32.mrf.mxu0
        %v5435 = vadd.f32 %v5326, %v5434
        %v5436 = vand.u32 %v939, 4294901760
        %5437 = vmatmul.f32.gmra.mxu0 %v5436
        %v5438 = vpop.f32.mrf.mxu0
        %v5439 = vadd.f32 %v5334, %v5438
        %v5440 = vand.u32 %v942, 4294901760
        %5441 = vmatmul.f32.gmra.mxu0 %v5440
        %v5442 = vpop.f32.mrf.mxu0
        %v5443 = vadd.f32 %v5342, %v5442
        %v5444 = vand.u32 %v945, 4294901760
        %5445 = vmatmul.f32.gmra.mxu0 %v5444
        %v5446 = vpop.f32.mrf.mxu0
        %v5447 = vadd.f32 %v5350, %v5446
        %v5448 = vand.u32 %v948, 4294901760
        %5449 = vmatmul.f32.gmra.mxu0 %v5448
        %v5450 = vpop.f32.mrf.mxu0
        %v5451 = vadd.f32 %v5358, %v5450
        %v5452 = vand.u32 %v951, 4294901760
        %5453 = vmatmul.f32.gmra.mxu0 %v5452
        %v5454 = vpop.f32.mrf.mxu0
        %v5455 = vadd.f32 %v5366, %v5454
        %5456 = vdwg.mxu0
        %5457 = vmatpush.msra.mxu0 0.0
        %5458 = vmatpush.msra.mxu0 0.0
        %5459 = vmatpush.msra.mxu0 0.0
        %5460 = vmatpush.msra.mxu0 0.0
        %5461 = vmatpush.msra.mxu0 0.0
        %5462 = vmatpush.msra.mxu0 0.0
        %5463 = vmatpush.msra.mxu0 0.0
        %5464 = vmatpush.msra.mxu0 0.0
        %v5465 = vand.u32 %v4703, 4294901760
        %v5466 = vsub.f32 %v4703, %v5465
        %5467 = vmatpush.msra.mxu0 %v5466
        %v5468 = vand.u32 %v4702, 4294901760
        %v5469 = vsub.f32 %v4702, %v5468
        %5470 = vmatpush.msra.mxu0 %v5469
        %v5471 = vand.u32 %v4701, 4294901760
        %v5472 = vsub.f32 %v4701, %v5471
        %5473 = vmatpush.msra.mxu0 %v5472
        %v5474 = vand.u32 %v4700, 4294901760
        %v5475 = vsub.f32 %v4700, %v5474
        %5476 = vmatpush.msra.mxu0 %v5475
        %v5477 = vand.u32 %v4699, 4294901760
        %v5478 = vsub.f32 %v4699, %v5477
        %5479 = vmatpush.msra.mxu0 %v5478
        %v5480 = vand.u32 %v4698, 4294901760
        %v5481 = vsub.f32 %v4698, %v5480
        %5482 = vmatpush.msra.mxu0 %v5481
        %v5483 = vand.u32 %v4697, 4294901760
        %v5484 = vsub.f32 %v4697, %v5483
        %5485 = vmatpush.msra.mxu0 %v5484
        %v5486 = vand.u32 %v4696, 4294901760
        %v5487 = vsub.f32 %v4696, %v5486
        %5488 = vmatpush.msra.mxu0 %v5487
        %v5489 = vand.u32 %v930, 4294901760
        %v5490 = vsub.f32 %v930, %v5489
        %5491 = vmatmul.f32.gmra.mxu0 %v5490
        %v5492 = vpop.f32.mrf.mxu0
        %v5493 = vadd.f32 %v5427, %v5492
        %v5494 = vand.u32 %v933, 4294901760
        %v5495 = vsub.f32 %v933, %v5494
        %5496 = vmatmul.f32.gmra.mxu0 %v5495
        %v5497 = vpop.f32.mrf.mxu0
        %v5498 = vadd.f32 %v5431, %v5497
        %v5499 = vand.u32 %v936, 4294901760
        %v5500 = vsub.f32 %v936, %v5499
        %5501 = vmatmul.f32.gmra.mxu0 %v5500
        %v5502 = vpop.f32.mrf.mxu0
        %v5503 = vadd.f32 %v5435, %v5502
        %v5504 = vand.u32 %v939, 4294901760
        %v5505 = vsub.f32 %v939, %v5504
        %5506 = vmatmul.f32.gmra.mxu0 %v5505
        %v5507 = vpop.f32.mrf.mxu0
        %v5508 = vadd.f32 %v5439, %v5507
        %v5509 = vand.u32 %v942, 4294901760
        %v5510 = vsub.f32 %v942, %v5509
        %5511 = vmatmul.f32.gmra.mxu0 %v5510
        %v5512 = vpop.f32.mrf.mxu0
        %v5513 = vadd.f32 %v5443, %v5512
        %v5514 = vand.u32 %v945, 4294901760
        %v5515 = vsub.f32 %v945, %v5514
        %5516 = vmatmul.f32.gmra.mxu0 %v5515
        %v5517 = vpop.f32.mrf.mxu0
        %v5518 = vadd.f32 %v5447, %v5517
        %v5519 = vand.u32 %v948, 4294901760
        %v5520 = vsub.f32 %v948, %v5519
        %5521 = vmatmul.f32.gmra.mxu0 %v5520
        %v5522 = vpop.f32.mrf.mxu0
        %v5523 = vadd.f32 %v5451, %v5522
        %v5524 = vand.u32 %v951, 4294901760
        %v5525 = vsub.f32 %v951, %v5524
        %5526 = vmatmul.f32.gmra.mxu0 %v5525
        %v5527 = vpop.f32.mrf.mxu0
        %v5528 = vadd.f32 %v5455, %v5527
        %5529 = vdwg.mxu0
        %5530 = vmatpush.msra.mxu0 0.0
        %5531 = vmatpush.msra.mxu0 0.0
        %5532 = vmatpush.msra.mxu0 0.0
        %5533 = vmatpush.msra.mxu0 0.0
        %5534 = vmatpush.msra.mxu0 0.0
        %5535 = vmatpush.msra.mxu0 0.0
        %5536 = vmatpush.msra.mxu0 0.0
        %5537 = vmatpush.msra.mxu0 0.0
        %v5538 = vand.u32 %v4703, 4294901760
        %5539 = vmatpush.msra.mxu0 %v5538
        %v5540 = vand.u32 %v4702, 4294901760
        %5541 = vmatpush.msra.mxu0 %v5540
        %v5542 = vand.u32 %v4701, 4294901760
        %5543 = vmatpush.msra.mxu0 %v5542
        %v5544 = vand.u32 %v4700, 4294901760
        %5545 = vmatpush.msra.mxu0 %v5544
        %v5546 = vand.u32 %v4699, 4294901760
        %5547 = vmatpush.msra.mxu0 %v5546
        %v5548 = vand.u32 %v4698, 4294901760
        %5549 = vmatpush.msra.mxu0 %v5548
        %v5550 = vand.u32 %v4697, 4294901760
        %5551 = vmatpush.msra.mxu0 %v5550
        %v5552 = vand.u32 %v4696, 4294901760
        %5553 = vmatpush.msra.mxu0 %v5552
        %v5554 = vand.u32 %v930, 4294901760
        %v5555 = vsub.f32 %v930, %v5554
        %v5556 = vand.u32 %v5555, 4294901760
        %5557 = vmatmul.f32.gmra.mxu0 %v5556
        %v5558 = vpop.f32.mrf.mxu0
        %v5559 = vadd.f32 %v5493, %v5558
        %v5560 = vand.u32 %v933, 4294901760
        %v5561 = vsub.f32 %v933, %v5560
        %v5562 = vand.u32 %v5561, 4294901760
        %5563 = vmatmul.f32.gmra.mxu0 %v5562
        %v5564 = vpop.f32.mrf.mxu0
        %v5565 = vadd.f32 %v5498, %v5564
        %v5566 = vand.u32 %v936, 4294901760
        %v5567 = vsub.f32 %v936, %v5566
        %v5568 = vand.u32 %v5567, 4294901760
        %5569 = vmatmul.f32.gmra.mxu0 %v5568
        %v5570 = vpop.f32.mrf.mxu0
        %v5571 = vadd.f32 %v5503, %v5570
        %v5572 = vand.u32 %v939, 4294901760
        %v5573 = vsub.f32 %v939, %v5572
        %v5574 = vand.u32 %v5573, 4294901760
        %5575 = vmatmul.f32.gmra.mxu0 %v5574
        %v5576 = vpop.f32.mrf.mxu0
        %v5577 = vadd.f32 %v5508, %v5576
        %v5578 = vand.u32 %v942, 4294901760
        %v5579 = vsub.f32 %v942, %v5578
        %v5580 = vand.u32 %v5579, 4294901760
        %5581 = vmatmul.f32.gmra.mxu0 %v5580
        %v5582 = vpop.f32.mrf.mxu0
        %v5583 = vadd.f32 %v5513, %v5582
        %v5584 = vand.u32 %v945, 4294901760
        %v5585 = vsub.f32 %v945, %v5584
        %v5586 = vand.u32 %v5585, 4294901760
        %5587 = vmatmul.f32.gmra.mxu0 %v5586
        %v5588 = vpop.f32.mrf.mxu0
        %v5589 = vadd.f32 %v5518, %v5588
        %v5590 = vand.u32 %v948, 4294901760
        %v5591 = vsub.f32 %v948, %v5590
        %v5592 = vand.u32 %v5591, 4294901760
        %5593 = vmatmul.f32.gmra.mxu0 %v5592
        %v5594 = vpop.f32.mrf.mxu0
        %v5595 = vadd.f32 %v5523, %v5594
        %v5596 = vand.u32 %v951, 4294901760
        %v5597 = vsub.f32 %v951, %v5596
        %v5598 = vand.u32 %v5597, 4294901760
        %5599 = vmatmul.f32.gmra.mxu0 %v5598
        %v5600 = vpop.f32.mrf.mxu0
        %v5601 = vadd.f32 %v5528, %v5600
        %5602 = vdwg.mxu0
        %5603 = vmatpush.msra.mxu0 0.0
        %5604 = vmatpush.msra.mxu0 0.0
        %5605 = vmatpush.msra.mxu0 0.0
        %5606 = vmatpush.msra.mxu0 0.0
        %5607 = vmatpush.msra.mxu0 0.0
        %5608 = vmatpush.msra.mxu0 0.0
        %5609 = vmatpush.msra.mxu0 0.0
        %5610 = vmatpush.msra.mxu0 0.0
        %v5611 = vand.u32 %v4703, 4294901760
        %v5612 = vsub.f32 %v4703, %v5611
        %v5613 = vand.u32 %v5612, 4294901760
        %5614 = vmatpush.msra.mxu0 %v5613
        %v5615 = vand.u32 %v4702, 4294901760
        %v5616 = vsub.f32 %v4702, %v5615
        %v5617 = vand.u32 %v5616, 4294901760
        %5618 = vmatpush.msra.mxu0 %v5617
        %v5619 = vand.u32 %v4701, 4294901760
        %v5620 = vsub.f32 %v4701, %v5619
        %v5621 = vand.u32 %v5620, 4294901760
        %5622 = vmatpush.msra.mxu0 %v5621
        %v5623 = vand.u32 %v4700, 4294901760
        %v5624 = vsub.f32 %v4700, %v5623
        %v5625 = vand.u32 %v5624, 4294901760
        %5626 = vmatpush.msra.mxu0 %v5625
        %v5627 = vand.u32 %v4699, 4294901760
        %v5628 = vsub.f32 %v4699, %v5627
        %v5629 = vand.u32 %v5628, 4294901760
        %5630 = vmatpush.msra.mxu0 %v5629
        %v5631 = vand.u32 %v4698, 4294901760
        %v5632 = vsub.f32 %v4698, %v5631
        %v5633 = vand.u32 %v5632, 4294901760
        %5634 = vmatpush.msra.mxu0 %v5633
        %v5635 = vand.u32 %v4697, 4294901760
        %v5636 = vsub.f32 %v4697, %v5635
        %v5637 = vand.u32 %v5636, 4294901760
        %5638 = vmatpush.msra.mxu0 %v5637
        %v5639 = vand.u32 %v4696, 4294901760
        %v5640 = vsub.f32 %v4696, %v5639
        %v5641 = vand.u32 %v5640, 4294901760
        %5642 = vmatpush.msra.mxu0 %v5641
        %v5643 = vand.u32 %v930, 4294901760
        %5644 = vmatmul.f32.gmra.mxu0 %v5643
        %v5645 = vpop.f32.mrf.mxu0
        %v5646 = vadd.f32 %v5559, %v5645
        %v5647 = vand.u32 %v933, 4294901760
        %5648 = vmatmul.f32.gmra.mxu0 %v5647
        %v5649 = vpop.f32.mrf.mxu0
        %v5650 = vadd.f32 %v5565, %v5649
        %v5651 = vand.u32 %v936, 4294901760
        %5652 = vmatmul.f32.gmra.mxu0 %v5651
        %v5653 = vpop.f32.mrf.mxu0
        %v5654 = vadd.f32 %v5571, %v5653
        %v5655 = vand.u32 %v939, 4294901760
        %5656 = vmatmul.f32.gmra.mxu0 %v5655
        %v5657 = vpop.f32.mrf.mxu0
        %v5658 = vadd.f32 %v5577, %v5657
        %v5659 = vand.u32 %v942, 4294901760
        %5660 = vmatmul.f32.gmra.mxu0 %v5659
        %v5661 = vpop.f32.mrf.mxu0
        %v5662 = vadd.f32 %v5583, %v5661
        %v5663 = vand.u32 %v945, 4294901760
        %5664 = vmatmul.f32.gmra.mxu0 %v5663
        %v5665 = vpop.f32.mrf.mxu0
        %v5666 = vadd.f32 %v5589, %v5665
        %v5667 = vand.u32 %v948, 4294901760
        %5668 = vmatmul.f32.gmra.mxu0 %v5667
        %v5669 = vpop.f32.mrf.mxu0
        %v5670 = vadd.f32 %v5595, %v5669
        %v5671 = vand.u32 %v951, 4294901760
        %5672 = vmatmul.f32.gmra.mxu0 %v5671
        %v5673 = vpop.f32.mrf.mxu0
        %v5674 = vadd.f32 %v5601, %v5673
        %5675 = vdwg.mxu0
        %5676 = vmatpush.msra.mxu0 0.0
        %5677 = vmatpush.msra.mxu0 0.0
        %5678 = vmatpush.msra.mxu0 0.0
        %5679 = vmatpush.msra.mxu0 0.0
        %5680 = vmatpush.msra.mxu0 0.0
        %5681 = vmatpush.msra.mxu0 0.0
        %5682 = vmatpush.msra.mxu0 0.0
        %5683 = vmatpush.msra.mxu0 0.0
        %v5684 = vand.u32 %v4703, 4294901760
        %5685 = vmatpush.msra.mxu0 %v5684
        %v5686 = vand.u32 %v4702, 4294901760
        %5687 = vmatpush.msra.mxu0 %v5686
        %v5688 = vand.u32 %v4701, 4294901760
        %5689 = vmatpush.msra.mxu0 %v5688
        %v5690 = vand.u32 %v4700, 4294901760
        %5691 = vmatpush.msra.mxu0 %v5690
        %v5692 = vand.u32 %v4699, 4294901760
        %5693 = vmatpush.msra.mxu0 %v5692
        %v5694 = vand.u32 %v4698, 4294901760
        %5695 = vmatpush.msra.mxu0 %v5694
        %v5696 = vand.u32 %v4697, 4294901760
        %5697 = vmatpush.msra.mxu0 %v5696
        %v5698 = vand.u32 %v4696, 4294901760
        %5699 = vmatpush.msra.mxu0 %v5698
        %v5700 = vand.u32 %v930, 4294901760
        %5701 = vmatmul.f32.gmra.mxu0 %v5700
        %v5702 = vpop.f32.mrf.mxu0
        %v5703 = vadd.f32 %v5646, %v5702
        %v5704 = vand.u32 %v933, 4294901760
        %5705 = vmatmul.f32.gmra.mxu0 %v5704
        %v5706 = vpop.f32.mrf.mxu0
        %v5707 = vadd.f32 %v5650, %v5706
        %v5708 = vand.u32 %v936, 4294901760
        %5709 = vmatmul.f32.gmra.mxu0 %v5708
        %v5710 = vpop.f32.mrf.mxu0
        %v5711 = vadd.f32 %v5654, %v5710
        %v5712 = vand.u32 %v939, 4294901760
        %5713 = vmatmul.f32.gmra.mxu0 %v5712
        %v5714 = vpop.f32.mrf.mxu0
        %v5715 = vadd.f32 %v5658, %v5714
        %v5716 = vand.u32 %v942, 4294901760
        %5717 = vmatmul.f32.gmra.mxu0 %v5716
        %v5718 = vpop.f32.mrf.mxu0
        %v5719 = vadd.f32 %v5662, %v5718
        %v5720 = vand.u32 %v945, 4294901760
        %5721 = vmatmul.f32.gmra.mxu0 %v5720
        %v5722 = vpop.f32.mrf.mxu0
        %v5723 = vadd.f32 %v5666, %v5722
        %v5724 = vand.u32 %v948, 4294901760
        %5725 = vmatmul.f32.gmra.mxu0 %v5724
        %v5726 = vpop.f32.mrf.mxu0
        %v5727 = vadd.f32 %v5670, %v5726
        %v5728 = vand.u32 %v951, 4294901760
        %5729 = vmatmul.f32.gmra.mxu0 %v5728
        %v5730 = vpop.f32.mrf.mxu0
        %v5731 = vadd.f32 %v5674, %v5730
        %5732 = vdwg.mxu0
        %s5733 = scalar_lea.vmem %s241, 4 [#allocation10]
        %v5734 = vld [vmem:[%s5733] sm:$0x1]
        %v5736 = vperm.slane %v5734, 0
        %v5738 = vmul.f32 %v346, %v5736
        %v5739 = vmul.f32 %v347, %v5736
        %v5740 = vmul.f32 %v348, %v5736
        %v5741 = vmul.f32 %v349, %v5736
        %v5742 = vmul.f32 %v350, %v5736
        %v5743 = vmul.f32 %v351, %v5736
        %v5744 = vmul.f32 %v352, %v5736
        %v5745 = vmul.f32 %v353, %v5736
        %v5746 = vmul.f32 %v4696, 2.0
        %v5747 = vmul.f32 %v4697, 2.0
        %v5748 = vmul.f32 %v4698, 2.0
        %v5749 = vmul.f32 %v4699, 2.0
        %v5750 = vmul.f32 %v4700, 2.0
        %v5751 = vmul.f32 %v4701, 2.0
        %v5752 = vmul.f32 %v4702, 2.0
        %v5753 = vmul.f32 %v4703, 2.0
        %v5754 = vsub.f32 %v5746, %v3614
        %v5755 = vsub.f32 %v5747, %v3615
        %v5756 = vsub.f32 %v5748, %v3616
        %v5757 = vsub.f32 %v5749, %v3617
        %v5758 = vsub.f32 %v5750, %v3618
        %v5759 = vsub.f32 %v5751, %v3619
        %v5760 = vsub.f32 %v5752, %v3620
        %v5761 = vsub.f32 %v5753, %v3621
        %v5762 = vadd.f32 %v5703, %v5738
        %v5763 = vadd.f32 %v5707, %v5739
        %v5764 = vadd.f32 %v5711, %v5740
        %v5765 = vadd.f32 %v5715, %v5741
        %v5766 = vadd.f32 %v5719, %v5742
        %v5767 = vadd.f32 %v5723, %v5743
        %v5768 = vadd.f32 %v5727, %v5744
        %v5769 = vadd.f32 %v5731, %v5745
        %v5770 = vmul.f32 %v289, %v5762
        %v5771 = vmul.f32 %v290, %v5763
        %v5772 = vmul.f32 %v291, %v5764
        %v5773 = vmul.f32 %v292, %v5765
        %v5774 = vmul.f32 %v293, %v5766
        %v5775 = vmul.f32 %v294, %v5767
        %v5776 = vmul.f32 %v295, %v5768
        %v5777 = vmul.f32 %v296, %v5769
        %v5778 = vadd.f32 %v5754, %v5770
        %v5779 = vadd.f32 %v5755, %v5771
        %v5780 = vadd.f32 %v5756, %v5772
        %v5781 = vadd.f32 %v5757, %v5773
        %v5782 = vadd.f32 %v5758, %v5774
        %v5783 = vadd.f32 %v5759, %v5775
        %v5784 = vadd.f32 %v5760, %v5776
        %v5785 = vadd.f32 %v5761, %v5777
        %v5786 = vpack.c.bf16 %v5778, %v5778
        %v5787 = vpack.c.bf16 %v5779, %v5779
        %v5788 = vpack.c.bf16 %v5780, %v5780
        %v5789 = vpack.c.bf16 %v5781, %v5781
        %v5790 = vpack.c.bf16 %v5782, %v5782
        %v5791 = vpack.c.bf16 %v5783, %v5783
        %v5792 = vpack.c.bf16 %v5784, %v5784
        %v5793 = vpack.c.bf16 %v5785, %v5785
        %s5794 = scalar_lea.vmem %s266, 128 [#allocation12]
        %5795 = vst [vmem:[%s5794] sm:$0xf] %v5786
        %5796 = vst [vmem:[%s5794 + $0x4] sm:$0xf] %v5787
        %5797 = vst [vmem:[%s5794 + $0x8] sm:$0xf] %v5788
        %5798 = vst [vmem:[%s5794 + $0xc] sm:$0xf] %v5789
        %5799 = vst [vmem:[%s5794 + $0x10] sm:$0xf] %v5790
        %5800 = vst [vmem:[%s5794 + $0x14] sm:$0xf] %v5791
        %5801 = vst [vmem:[%s5794 + $0x18] sm:$0xf] %v5792
        %5802 = vst [vmem:[%s5794 + $0x1c] sm:$0xf] %v5793
        %v5803 = vand.u32 %v320, 4294901760
        %5804 = vmatpush.msra.mxu0 %v5803
        %v5805 = vand.u32 %v319, 4294901760
        %5806 = vmatpush.msra.mxu0 %v5805
        %v5807 = vand.u32 %v318, 4294901760
        %5808 = vmatpush.msra.mxu0 %v5807
        %v5809 = vand.u32 %v317, 4294901760
        %5810 = vmatpush.msra.mxu0 %v5809
        %v5811 = vand.u32 %v316, 4294901760
        %5812 = vmatpush.msra.mxu0 %v5811
        %v5813 = vand.u32 %v315, 4294901760
        %5814 = vmatpush.msra.mxu0 %v5813
        %v5815 = vand.u32 %v314, 4294901760
        %5816 = vmatpush.msra.mxu0 %v5815
        %v5817 = vand.u32 %v313, 4294901760
        %5818 = vmatpush.msra.mxu0 %v5817
        %v5819 = vand.u32 %v312, 4294901760
        %5820 = vmatpush.msra.mxu0 %v5819
        %v5821 = vand.u32 %v311, 4294901760
        %5822 = vmatpush.msra.mxu0 %v5821
        %v5823 = vand.u32 %v310, 4294901760
        %5824 = vmatpush.msra.mxu0 %v5823
        %v5825 = vand.u32 %v309, 4294901760
        %5826 = vmatpush.msra.mxu0 %v5825
        %v5827 = vand.u32 %v308, 4294901760
        %5828 = vmatpush.msra.mxu0 %v5827
        %v5829 = vand.u32 %v307, 4294901760
        %5830 = vmatpush.msra.mxu0 %v5829
        %v5831 = vand.u32 %v306, 4294901760
        %5832 = vmatpush.msra.mxu0 %v5831
        %v5833 = vand.u32 %v305, 4294901760
        %5834 = vmatpush.msra.mxu0 %v5833
        %v5835 = vand.u32 %v5778, 4294901760
        %v5836 = vsub.f32 %v5778, %v5835
        %v5837 = vand.u32 %v5836, 4294901760
        %v5838 = vsub.f32 %v5836, %v5837
        %v5839 = vand.u32 %v5838, 4294901760
        %5840 = vmatmul.f32.gmra.mxu0 %v5839
        %v5841 = vpop.f32.mrf.mxu0
        %v5842 = vadd.f32 0.0, %v5841
        %v5843 = vand.u32 %v5779, 4294901760
        %v5844 = vsub.f32 %v5779, %v5843
        %v5845 = vand.u32 %v5844, 4294901760
        %v5846 = vsub.f32 %v5844, %v5845
        %v5847 = vand.u32 %v5846, 4294901760
        %5848 = vmatmul.f32.gmra.mxu0 %v5847
        %v5849 = vpop.f32.mrf.mxu0
        %v5850 = vadd.f32 0.0, %v5849
        %v5851 = vand.u32 %v5780, 4294901760
        %v5852 = vsub.f32 %v5780, %v5851
        %v5853 = vand.u32 %v5852, 4294901760
        %v5854 = vsub.f32 %v5852, %v5853
        %v5855 = vand.u32 %v5854, 4294901760
        %5856 = vmatmul.f32.gmra.mxu0 %v5855
        %v5857 = vpop.f32.mrf.mxu0
        %v5858 = vadd.f32 0.0, %v5857
        %v5859 = vand.u32 %v5781, 4294901760
        %v5860 = vsub.f32 %v5781, %v5859
        %v5861 = vand.u32 %v5860, 4294901760
        %v5862 = vsub.f32 %v5860, %v5861
        %v5863 = vand.u32 %v5862, 4294901760
        %5864 = vmatmul.f32.gmra.mxu0 %v5863
        %v5865 = vpop.f32.mrf.mxu0
        %v5866 = vadd.f32 0.0, %v5865
        %v5867 = vand.u32 %v5782, 4294901760
        %v5868 = vsub.f32 %v5782, %v5867
        %v5869 = vand.u32 %v5868, 4294901760
        %v5870 = vsub.f32 %v5868, %v5869
        %v5871 = vand.u32 %v5870, 4294901760
        %5872 = vmatmul.f32.gmra.mxu0 %v5871
        %v5873 = vpop.f32.mrf.mxu0
        %v5874 = vadd.f32 0.0, %v5873
        %v5875 = vand.u32 %v5783, 4294901760
        %v5876 = vsub.f32 %v5783, %v5875
        %v5877 = vand.u32 %v5876, 4294901760
        %v5878 = vsub.f32 %v5876, %v5877
        %v5879 = vand.u32 %v5878, 4294901760
        %5880 = vmatmul.f32.gmra.mxu0 %v5879
        %v5881 = vpop.f32.mrf.mxu0
        %v5882 = vadd.f32 0.0, %v5881
        %v5883 = vand.u32 %v5784, 4294901760
        %v5884 = vsub.f32 %v5784, %v5883
        %v5885 = vand.u32 %v5884, 4294901760
        %v5886 = vsub.f32 %v5884, %v5885
        %v5887 = vand.u32 %v5886, 4294901760
        %5888 = vmatmul.f32.gmra.mxu0 %v5887
        %v5889 = vpop.f32.mrf.mxu0
        %v5890 = vadd.f32 0.0, %v5889
        %v5891 = vand.u32 %v5785, 4294901760
        %v5892 = vsub.f32 %v5785, %v5891
        %v5893 = vand.u32 %v5892, 4294901760
        %v5894 = vsub.f32 %v5892, %v5893
        %v5895 = vand.u32 %v5894, 4294901760
        %5896 = vmatmul.f32.gmra.mxu0 %v5895
        %v5897 = vpop.f32.mrf.mxu0
        %v5898 = vadd.f32 0.0, %v5897
        %5899 = vdwg.mxu0
        %v5900 = vand.u32 %v320, 4294901760
        %v5901 = vsub.f32 %v320, %v5900
        %v5902 = vand.u32 %v5901, 4294901760
        %v5903 = vsub.f32 %v5901, %v5902
        %v5904 = vand.u32 %v5903, 4294901760
        %5905 = vmatpush.msra.mxu0 %v5904
        %v5906 = vand.u32 %v319, 4294901760
        %v5907 = vsub.f32 %v319, %v5906
        %v5908 = vand.u32 %v5907, 4294901760
        %v5909 = vsub.f32 %v5907, %v5908
        %v5910 = vand.u32 %v5909, 4294901760
        %5911 = vmatpush.msra.mxu0 %v5910
        %v5912 = vand.u32 %v318, 4294901760
        %v5913 = vsub.f32 %v318, %v5912
        %v5914 = vand.u32 %v5913, 4294901760
        %v5915 = vsub.f32 %v5913, %v5914
        %v5916 = vand.u32 %v5915, 4294901760
        %5917 = vmatpush.msra.mxu0 %v5916
        %v5918 = vand.u32 %v317, 4294901760
        %v5919 = vsub.f32 %v317, %v5918
        %v5920 = vand.u32 %v5919, 4294901760
        %v5921 = vsub.f32 %v5919, %v5920
        %v5922 = vand.u32 %v5921, 4294901760
        %5923 = vmatpush.msra.mxu0 %v5922
        %v5924 = vand.u32 %v316, 4294901760
        %v5925 = vsub.f32 %v316, %v5924
        %v5926 = vand.u32 %v5925, 4294901760
        %v5927 = vsub.f32 %v5925, %v5926
        %v5928 = vand.u32 %v5927, 4294901760
        %5929 = vmatpush.msra.mxu0 %v5928
        %v5930 = vand.u32 %v315, 4294901760
        %v5931 = vsub.f32 %v315, %v5930
        %v5932 = vand.u32 %v5931, 4294901760
        %v5933 = vsub.f32 %v5931, %v5932
        %v5934 = vand.u32 %v5933, 4294901760
        %5935 = vmatpush.msra.mxu0 %v5934
        %v5936 = vand.u32 %v314, 4294901760
        %v5937 = vsub.f32 %v314, %v5936
        %v5938 = vand.u32 %v5937, 4294901760
        %v5939 = vsub.f32 %v5937, %v5938
        %v5940 = vand.u32 %v5939, 4294901760
        %5941 = vmatpush.msra.mxu0 %v5940
        %v5942 = vand.u32 %v313, 4294901760
        %v5943 = vsub.f32 %v313, %v5942
        %v5944 = vand.u32 %v5943, 4294901760
        %v5945 = vsub.f32 %v5943, %v5944
        %v5946 = vand.u32 %v5945, 4294901760
        %5947 = vmatpush.msra.mxu0 %v5946
        %v5948 = vand.u32 %v312, 4294901760
        %v5949 = vsub.f32 %v312, %v5948
        %v5950 = vand.u32 %v5949, 4294901760
        %v5951 = vsub.f32 %v5949, %v5950
        %v5952 = vand.u32 %v5951, 4294901760
        %5953 = vmatpush.msra.mxu0 %v5952
        %v5954 = vand.u32 %v311, 4294901760
        %v5955 = vsub.f32 %v311, %v5954
        %v5956 = vand.u32 %v5955, 4294901760
        %v5957 = vsub.f32 %v5955, %v5956
        %v5958 = vand.u32 %v5957, 4294901760
        %5959 = vmatpush.msra.mxu0 %v5958
        %v5960 = vand.u32 %v310, 4294901760
        %v5961 = vsub.f32 %v310, %v5960
        %v5962 = vand.u32 %v5961, 4294901760
        %v5963 = vsub.f32 %v5961, %v5962
        %v5964 = vand.u32 %v5963, 4294901760
        %5965 = vmatpush.msra.mxu0 %v5964
        %v5966 = vand.u32 %v309, 4294901760
        %v5967 = vsub.f32 %v309, %v5966
        %v5968 = vand.u32 %v5967, 4294901760
        %v5969 = vsub.f32 %v5967, %v5968
        %v5970 = vand.u32 %v5969, 4294901760
        %5971 = vmatpush.msra.mxu0 %v5970
        %v5972 = vand.u32 %v308, 4294901760
        %v5973 = vsub.f32 %v308, %v5972
        %v5974 = vand.u32 %v5973, 4294901760
        %v5975 = vsub.f32 %v5973, %v5974
        %v5976 = vand.u32 %v5975, 4294901760
        %5977 = vmatpush.msra.mxu0 %v5976
        %v5978 = vand.u32 %v307, 4294901760
        %v5979 = vsub.f32 %v307, %v5978
        %v5980 = vand.u32 %v5979, 4294901760
        %v5981 = vsub.f32 %v5979, %v5980
        %v5982 = vand.u32 %v5981, 4294901760
        %5983 = vmatpush.msra.mxu0 %v5982
        %v5984 = vand.u32 %v306, 4294901760
        %v5985 = vsub.f32 %v306, %v5984
        %v5986 = vand.u32 %v5985, 4294901760
        %v5987 = vsub.f32 %v5985, %v5986
        %v5988 = vand.u32 %v5987, 4294901760
        %5989 = vmatpush.msra.mxu0 %v5988
        %v5990 = vand.u32 %v305, 4294901760
        %v5991 = vsub.f32 %v305, %v5990
        %v5992 = vand.u32 %v5991, 4294901760
        %v5993 = vsub.f32 %v5991, %v5992
        %v5994 = vand.u32 %v5993, 4294901760
        %5995 = vmatpush.msra.mxu0 %v5994
        %v5996 = vand.u32 %v5778, 4294901760
        %5997 = vmatmul.f32.gmra.mxu0 %v5996
        %v5998 = vpop.f32.mrf.mxu0
        %v5999 = vadd.f32 %v5842, %v5998
        %v6000 = vand.u32 %v5779, 4294901760
        %6001 = vmatmul.f32.gmra.mxu0 %v6000
        %v6002 = vpop.f32.mrf.mxu0
        %v6003 = vadd.f32 %v5850, %v6002
        %v6004 = vand.u32 %v5780, 4294901760
        %6005 = vmatmul.f32.gmra.mxu0 %v6004
        %v6006 = vpop.f32.mrf.mxu0
        %v6007 = vadd.f32 %v5858, %v6006
        %v6008 = vand.u32 %v5781, 4294901760
        %6009 = vmatmul.f32.gmra.mxu0 %v6008
        %v6010 = vpop.f32.mrf.mxu0
        %v6011 = vadd.f32 %v5866, %v6010
        %v6012 = vand.u32 %v5782, 4294901760
        %6013 = vmatmul.f32.gmra.mxu0 %v6012
        %v6014 = vpop.f32.mrf.mxu0
        %v6015 = vadd.f32 %v5874, %v6014
        %v6016 = vand.u32 %v5783, 4294901760
        %6017 = vmatmul.f32.gmra.mxu0 %v6016
        %v6018 = vpop.f32.mrf.mxu0
        %v6019 = vadd.f32 %v5882, %v6018
        %v6020 = vand.u32 %v5784, 4294901760
        %6021 = vmatmul.f32.gmra.mxu0 %v6020
        %v6022 = vpop.f32.mrf.mxu0
        %v6023 = vadd.f32 %v5890, %v6022
        %v6024 = vand.u32 %v5785, 4294901760
        %6025 = vmatmul.f32.gmra.mxu0 %v6024
        %v6026 = vpop.f32.mrf.mxu0
        %v6027 = vadd.f32 %v5898, %v6026
        %6028 = vdwg.mxu0
        %v6029 = vand.u32 %v320, 4294901760
        %v6030 = vsub.f32 %v320, %v6029
        %6031 = vmatpush.msra.mxu0 %v6030
        %v6032 = vand.u32 %v319, 4294901760
        %v6033 = vsub.f32 %v319, %v6032
        %6034 = vmatpush.msra.mxu0 %v6033
        %v6035 = vand.u32 %v318, 4294901760
        %v6036 = vsub.f32 %v318, %v6035
        %6037 = vmatpush.msra.mxu0 %v6036
        %v6038 = vand.u32 %v317, 4294901760
        %v6039 = vsub.f32 %v317, %v6038
        %6040 = vmatpush.msra.mxu0 %v6039
        %v6041 = vand.u32 %v316, 4294901760
        %v6042 = vsub.f32 %v316, %v6041
        %6043 = vmatpush.msra.mxu0 %v6042
        %v6044 = vand.u32 %v315, 4294901760
        %v6045 = vsub.f32 %v315, %v6044
        %6046 = vmatpush.msra.mxu0 %v6045
        %v6047 = vand.u32 %v314, 4294901760
        %v6048 = vsub.f32 %v314, %v6047
        %6049 = vmatpush.msra.mxu0 %v6048
        %v6050 = vand.u32 %v313, 4294901760
        %v6051 = vsub.f32 %v313, %v6050
        %6052 = vmatpush.msra.mxu0 %v6051
        %v6053 = vand.u32 %v312, 4294901760
        %v6054 = vsub.f32 %v312, %v6053
        %6055 = vmatpush.msra.mxu0 %v6054
        %v6056 = vand.u32 %v311, 4294901760
        %v6057 = vsub.f32 %v311, %v6056
        %6058 = vmatpush.msra.mxu0 %v6057
        %v6059 = vand.u32 %v310, 4294901760
        %v6060 = vsub.f32 %v310, %v6059
        %6061 = vmatpush.msra.mxu0 %v6060
        %v6062 = vand.u32 %v309, 4294901760
        %v6063 = vsub.f32 %v309, %v6062
        %6064 = vmatpush.msra.mxu0 %v6063
        %v6065 = vand.u32 %v308, 4294901760
        %v6066 = vsub.f32 %v308, %v6065
        %6067 = vmatpush.msra.mxu0 %v6066
        %v6068 = vand.u32 %v307, 4294901760
        %v6069 = vsub.f32 %v307, %v6068
        %6070 = vmatpush.msra.mxu0 %v6069
        %v6071 = vand.u32 %v306, 4294901760
        %v6072 = vsub.f32 %v306, %v6071
        %6073 = vmatpush.msra.mxu0 %v6072
        %v6074 = vand.u32 %v305, 4294901760
        %v6075 = vsub.f32 %v305, %v6074
        %6076 = vmatpush.msra.mxu0 %v6075
        %v6077 = vand.u32 %v5778, 4294901760
        %v6078 = vsub.f32 %v5778, %v6077
        %6079 = vmatmul.f32.gmra.mxu0 %v6078
        %v6080 = vpop.f32.mrf.mxu0
        %v6081 = vadd.f32 %v5999, %v6080
        %v6082 = vand.u32 %v5779, 4294901760
        %v6083 = vsub.f32 %v5779, %v6082
        %6084 = vmatmul.f32.gmra.mxu0 %v6083
        %v6085 = vpop.f32.mrf.mxu0
        %v6086 = vadd.f32 %v6003, %v6085
        %v6087 = vand.u32 %v5780, 4294901760
        %v6088 = vsub.f32 %v5780, %v6087
        %6089 = vmatmul.f32.gmra.mxu0 %v6088
        %v6090 = vpop.f32.mrf.mxu0
        %v6091 = vadd.f32 %v6007, %v6090
        %v6092 = vand.u32 %v5781, 4294901760
        %v6093 = vsub.f32 %v5781, %v6092
        %6094 = vmatmul.f32.gmra.mxu0 %v6093
        %v6095 = vpop.f32.mrf.mxu0
        %v6096 = vadd.f32 %v6011, %v6095
        %v6097 = vand.u32 %v5782, 4294901760
        %v6098 = vsub.f32 %v5782, %v6097
        %6099 = vmatmul.f32.gmra.mxu0 %v6098
        %v6100 = vpop.f32.mrf.mxu0
        %v6101 = vadd.f32 %v6015, %v6100
        %v6102 = vand.u32 %v5783, 4294901760
        %v6103 = vsub.f32 %v5783, %v6102
        %6104 = vmatmul.f32.gmra.mxu0 %v6103
        %v6105 = vpop.f32.mrf.mxu0
        %v6106 = vadd.f32 %v6019, %v6105
        %v6107 = vand.u32 %v5784, 4294901760
        %v6108 = vsub.f32 %v5784, %v6107
        %6109 = vmatmul.f32.gmra.mxu0 %v6108
        %v6110 = vpop.f32.mrf.mxu0
        %v6111 = vadd.f32 %v6023, %v6110
        %v6112 = vand.u32 %v5785, 4294901760
        %v6113 = vsub.f32 %v5785, %v6112
        %6114 = vmatmul.f32.gmra.mxu0 %v6113
        %v6115 = vpop.f32.mrf.mxu0
        %v6116 = vadd.f32 %v6027, %v6115
        %6117 = vdwg.mxu0
        %v6118 = vand.u32 %v320, 4294901760
        %6119 = vmatpush.msra.mxu0 %v6118
        %v6120 = vand.u32 %v319, 4294901760
        %6121 = vmatpush.msra.mxu0 %v6120
        %v6122 = vand.u32 %v318, 4294901760
        %6123 = vmatpush.msra.mxu0 %v6122
        %v6124 = vand.u32 %v317, 4294901760
        %6125 = vmatpush.msra.mxu0 %v6124
        %v6126 = vand.u32 %v316, 4294901760
        %6127 = vmatpush.msra.mxu0 %v6126
        %v6128 = vand.u32 %v315, 4294901760
        %6129 = vmatpush.msra.mxu0 %v6128
        %v6130 = vand.u32 %v314, 4294901760
        %6131 = vmatpush.msra.mxu0 %v6130
        %v6132 = vand.u32 %v313, 4294901760
        %6133 = vmatpush.msra.mxu0 %v6132
        %v6134 = vand.u32 %v312, 4294901760
        %6135 = vmatpush.msra.mxu0 %v6134
        %v6136 = vand.u32 %v311, 4294901760
        %6137 = vmatpush.msra.mxu0 %v6136
        %v6138 = vand.u32 %v310, 4294901760
        %6139 = vmatpush.msra.mxu0 %v6138
        %v6140 = vand.u32 %v309, 4294901760
        %6141 = vmatpush.msra.mxu0 %v6140
        %v6142 = vand.u32 %v308, 4294901760
        %6143 = vmatpush.msra.mxu0 %v6142
        %v6144 = vand.u32 %v307, 4294901760
        %6145 = vmatpush.msra.mxu0 %v6144
        %v6146 = vand.u32 %v306, 4294901760
        %6147 = vmatpush.msra.mxu0 %v6146
        %v6148 = vand.u32 %v305, 4294901760
        %6149 = vmatpush.msra.mxu0 %v6148
        %v6150 = vand.u32 %v5778, 4294901760
        %v6151 = vsub.f32 %v5778, %v6150
        %v6152 = vand.u32 %v6151, 4294901760
        %6153 = vmatmul.f32.gmra.mxu0 %v6152
        %v6154 = vpop.f32.mrf.mxu0
        %v6155 = vadd.f32 %v6081, %v6154
        %v6156 = vand.u32 %v5779, 4294901760
        %v6157 = vsub.f32 %v5779, %v6156
        %v6158 = vand.u32 %v6157, 4294901760
        %6159 = vmatmul.f32.gmra.mxu0 %v6158
        %v6160 = vpop.f32.mrf.mxu0
        %v6161 = vadd.f32 %v6086, %v6160
        %v6162 = vand.u32 %v5780, 4294901760
        %v6163 = vsub.f32 %v5780, %v6162
        %v6164 = vand.u32 %v6163, 4294901760
        %6165 = vmatmul.f32.gmra.mxu0 %v6164
        %v6166 = vpop.f32.mrf.mxu0
        %v6167 = vadd.f32 %v6091, %v6166
        %v6168 = vand.u32 %v5781, 4294901760
        %v6169 = vsub.f32 %v5781, %v6168
        %v6170 = vand.u32 %v6169, 4294901760
        %6171 = vmatmul.f32.gmra.mxu0 %v6170
        %v6172 = vpop.f32.mrf.mxu0
        %v6173 = vadd.f32 %v6096, %v6172
        %v6174 = vand.u32 %v5782, 4294901760
        %v6175 = vsub.f32 %v5782, %v6174
        %v6176 = vand.u32 %v6175, 4294901760
        %6177 = vmatmul.f32.gmra.mxu0 %v6176
        %v6178 = vpop.f32.mrf.mxu0
        %v6179 = vadd.f32 %v6101, %v6178
        %v6180 = vand.u32 %v5783, 4294901760
        %v6181 = vsub.f32 %v5783, %v6180
        %v6182 = vand.u32 %v6181, 4294901760
        %6183 = vmatmul.f32.gmra.mxu0 %v6182
        %v6184 = vpop.f32.mrf.mxu0
        %v6185 = vadd.f32 %v6106, %v6184
        %v6186 = vand.u32 %v5784, 4294901760
        %v6187 = vsub.f32 %v5784, %v6186
        %v6188 = vand.u32 %v6187, 4294901760
        %6189 = vmatmul.f32.gmra.mxu0 %v6188
        %v6190 = vpop.f32.mrf.mxu0
        %v6191 = vadd.f32 %v6111, %v6190
        %v6192 = vand.u32 %v5785, 4294901760
        %v6193 = vsub.f32 %v5785, %v6192
        %v6194 = vand.u32 %v6193, 4294901760
        %6195 = vmatmul.f32.gmra.mxu0 %v6194
        %v6196 = vpop.f32.mrf.mxu0
        %v6197 = vadd.f32 %v6116, %v6196
        %6198 = vdwg.mxu0
        %v6199 = vand.u32 %v320, 4294901760
        %v6200 = vsub.f32 %v320, %v6199
        %v6201 = vand.u32 %v6200, 4294901760
        %6202 = vmatpush.msra.mxu0 %v6201
        %v6203 = vand.u32 %v319, 4294901760
        %v6204 = vsub.f32 %v319, %v6203
        %v6205 = vand.u32 %v6204, 4294901760
        %6206 = vmatpush.msra.mxu0 %v6205
        %v6207 = vand.u32 %v318, 4294901760
        %v6208 = vsub.f32 %v318, %v6207
        %v6209 = vand.u32 %v6208, 4294901760
        %6210 = vmatpush.msra.mxu0 %v6209
        %v6211 = vand.u32 %v317, 4294901760
        %v6212 = vsub.f32 %v317, %v6211
        %v6213 = vand.u32 %v6212, 4294901760
        %6214 = vmatpush.msra.mxu0 %v6213
        %v6215 = vand.u32 %v316, 4294901760
        %v6216 = vsub.f32 %v316, %v6215
        %v6217 = vand.u32 %v6216, 4294901760
        %6218 = vmatpush.msra.mxu0 %v6217
        %v6219 = vand.u32 %v315, 4294901760
        %v6220 = vsub.f32 %v315, %v6219
        %v6221 = vand.u32 %v6220, 4294901760
        %6222 = vmatpush.msra.mxu0 %v6221
        %v6223 = vand.u32 %v314, 4294901760
        %v6224 = vsub.f32 %v314, %v6223
        %v6225 = vand.u32 %v6224, 4294901760
        %6226 = vmatpush.msra.mxu0 %v6225
        %v6227 = vand.u32 %v313, 4294901760
        %v6228 = vsub.f32 %v313, %v6227
        %v6229 = vand.u32 %v6228, 4294901760
        %6230 = vmatpush.msra.mxu0 %v6229
        %v6231 = vand.u32 %v312, 4294901760
        %v6232 = vsub.f32 %v312, %v6231
        %v6233 = vand.u32 %v6232, 4294901760
        %6234 = vmatpush.msra.mxu0 %v6233
        %v6235 = vand.u32 %v311, 4294901760
        %v6236 = vsub.f32 %v311, %v6235
        %v6237 = vand.u32 %v6236, 4294901760
        %6238 = vmatpush.msra.mxu0 %v6237
        %v6239 = vand.u32 %v310, 4294901760
        %v6240 = vsub.f32 %v310, %v6239
        %v6241 = vand.u32 %v6240, 4294901760
        %6242 = vmatpush.msra.mxu0 %v6241
        %v6243 = vand.u32 %v309, 4294901760
        %v6244 = vsub.f32 %v309, %v6243
        %v6245 = vand.u32 %v6244, 4294901760
        %6246 = vmatpush.msra.mxu0 %v6245
        %v6247 = vand.u32 %v308, 4294901760
        %v6248 = vsub.f32 %v308, %v6247
        %v6249 = vand.u32 %v6248, 4294901760
        %6250 = vmatpush.msra.mxu0 %v6249
        %v6251 = vand.u32 %v307, 4294901760
        %v6252 = vsub.f32 %v307, %v6251
        %v6253 = vand.u32 %v6252, 4294901760
        %6254 = vmatpush.msra.mxu0 %v6253
        %v6255 = vand.u32 %v306, 4294901760
        %v6256 = vsub.f32 %v306, %v6255
        %v6257 = vand.u32 %v6256, 4294901760
        %6258 = vmatpush.msra.mxu0 %v6257
        %v6259 = vand.u32 %v305, 4294901760
        %v6260 = vsub.f32 %v305, %v6259
        %v6261 = vand.u32 %v6260, 4294901760
        %6262 = vmatpush.msra.mxu0 %v6261
        %v6263 = vand.u32 %v5778, 4294901760
        %6264 = vmatmul.f32.gmra.mxu0 %v6263
        %v6265 = vpop.f32.mrf.mxu0
        %v6266 = vadd.f32 %v6155, %v6265
        %v6267 = vand.u32 %v5779, 4294901760
        %6268 = vmatmul.f32.gmra.mxu0 %v6267
        %v6269 = vpop.f32.mrf.mxu0
        %v6270 = vadd.f32 %v6161, %v6269
        %v6271 = vand.u32 %v5780, 4294901760
        %6272 = vmatmul.f32.gmra.mxu0 %v6271
        %v6273 = vpop.f32.mrf.mxu0
        %v6274 = vadd.f32 %v6167, %v6273
        %v6275 = vand.u32 %v5781, 4294901760
        %6276 = vmatmul.f32.gmra.mxu0 %v6275
        %v6277 = vpop.f32.mrf.mxu0
        %v6278 = vadd.f32 %v6173, %v6277
        %v6279 = vand.u32 %v5782, 4294901760
        %6280 = vmatmul.f32.gmra.mxu0 %v6279
        %v6281 = vpop.f32.mrf.mxu0
        %v6282 = vadd.f32 %v6179, %v6281
        %v6283 = vand.u32 %v5783, 4294901760
        %6284 = vmatmul.f32.gmra.mxu0 %v6283
        %v6285 = vpop.f32.mrf.mxu0
        %v6286 = vadd.f32 %v6185, %v6285
        %v6287 = vand.u32 %v5784, 4294901760
        %6288 = vmatmul.f32.gmra.mxu0 %v6287
        %v6289 = vpop.f32.mrf.mxu0
        %v6290 = vadd.f32 %v6191, %v6289
        %v6291 = vand.u32 %v5785, 4294901760
        %6292 = vmatmul.f32.gmra.mxu0 %v6291
        %v6293 = vpop.f32.mrf.mxu0
        %v6294 = vadd.f32 %v6197, %v6293
        %6295 = vdwg.mxu0
        %v6296 = vand.u32 %v320, 4294901760
        %6297 = vmatpush.msra.mxu0 %v6296
        %v6298 = vand.u32 %v319, 4294901760
        %6299 = vmatpush.msra.mxu0 %v6298
        %v6300 = vand.u32 %v318, 4294901760
        %6301 = vmatpush.msra.mxu0 %v6300
        %v6302 = vand.u32 %v317, 4294901760
        %6303 = vmatpush.msra.mxu0 %v6302
        %v6304 = vand.u32 %v316, 4294901760
        %6305 = vmatpush.msra.mxu0 %v6304
        %v6306 = vand.u32 %v315, 4294901760
        %6307 = vmatpush.msra.mxu0 %v6306
        %v6308 = vand.u32 %v314, 4294901760
        %6309 = vmatpush.msra.mxu0 %v6308
        %v6310 = vand.u32 %v313, 4294901760
        %6311 = vmatpush.msra.mxu0 %v6310
        %v6312 = vand.u32 %v312, 4294901760
        %6313 = vmatpush.msra.mxu0 %v6312
        %v6314 = vand.u32 %v311, 4294901760
        %6315 = vmatpush.msra.mxu0 %v6314
        %v6316 = vand.u32 %v310, 4294901760
        %6317 = vmatpush.msra.mxu0 %v6316
        %v6318 = vand.u32 %v309, 4294901760
        %6319 = vmatpush.msra.mxu0 %v6318
        %v6320 = vand.u32 %v308, 4294901760
        %6321 = vmatpush.msra.mxu0 %v6320
        %v6322 = vand.u32 %v307, 4294901760
        %6323 = vmatpush.msra.mxu0 %v6322
        %v6324 = vand.u32 %v306, 4294901760
        %6325 = vmatpush.msra.mxu0 %v6324
        %v6326 = vand.u32 %v305, 4294901760
        %6327 = vmatpush.msra.mxu0 %v6326
        %v6328 = vand.u32 %v5778, 4294901760
        %6329 = vmatmul.f32.gmra.mxu0 %v6328
        %v6330 = vpop.f32.mrf.mxu0
        %v6331 = vadd.f32 %v6266, %v6330
        %v6332 = vand.u32 %v5779, 4294901760
        %6333 = vmatmul.f32.gmra.mxu0 %v6332
        %v6334 = vpop.f32.mrf.mxu0
        %v6335 = vadd.f32 %v6270, %v6334
        %v6336 = vand.u32 %v5780, 4294901760
        %6337 = vmatmul.f32.gmra.mxu0 %v6336
        %v6338 = vpop.f32.mrf.mxu0
        %v6339 = vadd.f32 %v6274, %v6338
        %v6340 = vand.u32 %v5781, 4294901760
        %6341 = vmatmul.f32.gmra.mxu0 %v6340
        %v6342 = vpop.f32.mrf.mxu0
        %v6343 = vadd.f32 %v6278, %v6342
        %v6344 = vand.u32 %v5782, 4294901760
        %6345 = vmatmul.f32.gmra.mxu0 %v6344
        %v6346 = vpop.f32.mrf.mxu0
        %v6347 = vadd.f32 %v6282, %v6346
        %v6348 = vand.u32 %v5783, 4294901760
        %6349 = vmatmul.f32.gmra.mxu0 %v6348
        %v6350 = vpop.f32.mrf.mxu0
        %v6351 = vadd.f32 %v6286, %v6350
        %v6352 = vand.u32 %v5784, 4294901760
        %6353 = vmatmul.f32.gmra.mxu0 %v6352
        %v6354 = vpop.f32.mrf.mxu0
        %v6355 = vadd.f32 %v6290, %v6354
        %v6356 = vand.u32 %v5785, 4294901760
        %6357 = vmatmul.f32.gmra.mxu0 %v6356
        %v6358 = vpop.f32.mrf.mxu0
        %v6359 = vadd.f32 %v6294, %v6358
        %6360 = vdwg.mxu0
        %6361 = vmatpush.msra.mxu0 0.0
        %6362 = vmatpush.msra.mxu0 0.0
        %6363 = vmatpush.msra.mxu0 0.0
        %6364 = vmatpush.msra.mxu0 0.0
        %6365 = vmatpush.msra.mxu0 0.0
        %6366 = vmatpush.msra.mxu0 0.0
        %6367 = vmatpush.msra.mxu0 0.0
        %6368 = vmatpush.msra.mxu0 0.0
        %v6369 = vand.u32 %v5785, 4294901760
        %6370 = vmatpush.msra.mxu0 %v6369
        %v6371 = vand.u32 %v5784, 4294901760
        %6372 = vmatpush.msra.mxu0 %v6371
        %v6373 = vand.u32 %v5783, 4294901760
        %6374 = vmatpush.msra.mxu0 %v6373
        %v6375 = vand.u32 %v5782, 4294901760
        %6376 = vmatpush.msra.mxu0 %v6375
        %v6377 = vand.u32 %v5781, 4294901760
        %6378 = vmatpush.msra.mxu0 %v6377
        %v6379 = vand.u32 %v5780, 4294901760
        %6380 = vmatpush.msra.mxu0 %v6379
        %v6381 = vand.u32 %v5779, 4294901760
        %6382 = vmatpush.msra.mxu0 %v6381
        %v6383 = vand.u32 %v5778, 4294901760
        %6384 = vmatpush.msra.mxu0 %v6383
        %v6385 = vand.u32 %v930, 4294901760
        %v6386 = vsub.f32 %v930, %v6385
        %v6387 = vand.u32 %v6386, 4294901760
        %v6388 = vsub.f32 %v6386, %v6387
        %v6389 = vand.u32 %v6388, 4294901760
        %6390 = vmatmul.f32.gmra.mxu0 %v6389
        %v6391 = vpop.f32.mrf.mxu0
        %v6392 = vadd.f32 %v6331, %v6391
        %v6393 = vand.u32 %v933, 4294901760
        %v6394 = vsub.f32 %v933, %v6393
        %v6395 = vand.u32 %v6394, 4294901760
        %v6396 = vsub.f32 %v6394, %v6395
        %v6397 = vand.u32 %v6396, 4294901760
        %6398 = vmatmul.f32.gmra.mxu0 %v6397
        %v6399 = vpop.f32.mrf.mxu0
        %v6400 = vadd.f32 %v6335, %v6399
        %v6401 = vand.u32 %v936, 4294901760
        %v6402 = vsub.f32 %v936, %v6401
        %v6403 = vand.u32 %v6402, 4294901760
        %v6404 = vsub.f32 %v6402, %v6403
        %v6405 = vand.u32 %v6404, 4294901760
        %6406 = vmatmul.f32.gmra.mxu0 %v6405
        %v6407 = vpop.f32.mrf.mxu0
        %v6408 = vadd.f32 %v6339, %v6407
        %v6409 = vand.u32 %v939, 4294901760
        %v6410 = vsub.f32 %v939, %v6409
        %v6411 = vand.u32 %v6410, 4294901760
        %v6412 = vsub.f32 %v6410, %v6411
        %v6413 = vand.u32 %v6412, 4294901760
        %6414 = vmatmul.f32.gmra.mxu0 %v6413
        %v6415 = vpop.f32.mrf.mxu0
        %v6416 = vadd.f32 %v6343, %v6415
        %v6417 = vand.u32 %v942, 4294901760
        %v6418 = vsub.f32 %v942, %v6417
        %v6419 = vand.u32 %v6418, 4294901760
        %v6420 = vsub.f32 %v6418, %v6419
        %v6421 = vand.u32 %v6420, 4294901760
        %6422 = vmatmul.f32.gmra.mxu0 %v6421
        %v6423 = vpop.f32.mrf.mxu0
        %v6424 = vadd.f32 %v6347, %v6423
        %v6425 = vand.u32 %v945, 4294901760
        %v6426 = vsub.f32 %v945, %v6425
        %v6427 = vand.u32 %v6426, 4294901760
        %v6428 = vsub.f32 %v6426, %v6427
        %v6429 = vand.u32 %v6428, 4294901760
        %6430 = vmatmul.f32.gmra.mxu0 %v6429
        %v6431 = vpop.f32.mrf.mxu0
        %v6432 = vadd.f32 %v6351, %v6431
        %v6433 = vand.u32 %v948, 4294901760
        %v6434 = vsub.f32 %v948, %v6433
        %v6435 = vand.u32 %v6434, 4294901760
        %v6436 = vsub.f32 %v6434, %v6435
        %v6437 = vand.u32 %v6436, 4294901760
        %6438 = vmatmul.f32.gmra.mxu0 %v6437
        %v6439 = vpop.f32.mrf.mxu0
        %v6440 = vadd.f32 %v6355, %v6439
        %v6441 = vand.u32 %v951, 4294901760
        %v6442 = vsub.f32 %v951, %v6441
        %v6443 = vand.u32 %v6442, 4294901760
        %v6444 = vsub.f32 %v6442, %v6443
        %v6445 = vand.u32 %v6444, 4294901760
        %6446 = vmatmul.f32.gmra.mxu0 %v6445
        %v6447 = vpop.f32.mrf.mxu0
        %v6448 = vadd.f32 %v6359, %v6447
        %6449 = vdwg.mxu0
        %6450 = vmatpush.msra.mxu0 0.0
        %6451 = vmatpush.msra.mxu0 0.0
        %6452 = vmatpush.msra.mxu0 0.0
        %6453 = vmatpush.msra.mxu0 0.0
        %6454 = vmatpush.msra.mxu0 0.0
        %6455 = vmatpush.msra.mxu0 0.0
        %6456 = vmatpush.msra.mxu0 0.0
        %6457 = vmatpush.msra.mxu0 0.0
        %v6458 = vand.u32 %v5785, 4294901760
        %v6459 = vsub.f32 %v5785, %v6458
        %v6460 = vand.u32 %v6459, 4294901760
        %v6461 = vsub.f32 %v6459, %v6460
        %v6462 = vand.u32 %v6461, 4294901760
        %6463 = vmatpush.msra.mxu0 %v6462
        %v6464 = vand.u32 %v5784, 4294901760
        %v6465 = vsub.f32 %v5784, %v6464
        %v6466 = vand.u32 %v6465, 4294901760
        %v6467 = vsub.f32 %v6465, %v6466
        %v6468 = vand.u32 %v6467, 4294901760
        %6469 = vmatpush.msra.mxu0 %v6468
        %v6470 = vand.u32 %v5783, 4294901760
        %v6471 = vsub.f32 %v5783, %v6470
        %v6472 = vand.u32 %v6471, 4294901760
        %v6473 = vsub.f32 %v6471, %v6472
        %v6474 = vand.u32 %v6473, 4294901760
        %6475 = vmatpush.msra.mxu0 %v6474
        %v6476 = vand.u32 %v5782, 4294901760
        %v6477 = vsub.f32 %v5782, %v6476
        %v6478 = vand.u32 %v6477, 4294901760
        %v6479 = vsub.f32 %v6477, %v6478
        %v6480 = vand.u32 %v6479, 4294901760
        %6481 = vmatpush.msra.mxu0 %v6480
        %v6482 = vand.u32 %v5781, 4294901760
        %v6483 = vsub.f32 %v5781, %v6482
        %v6484 = vand.u32 %v6483, 4294901760
        %v6485 = vsub.f32 %v6483, %v6484
        %v6486 = vand.u32 %v6485, 4294901760
        %6487 = vmatpush.msra.mxu0 %v6486
        %v6488 = vand.u32 %v5780, 4294901760
        %v6489 = vsub.f32 %v5780, %v6488
        %v6490 = vand.u32 %v6489, 4294901760
        %v6491 = vsub.f32 %v6489, %v6490
        %v6492 = vand.u32 %v6491, 4294901760
        %6493 = vmatpush.msra.mxu0 %v6492
        %v6494 = vand.u32 %v5779, 4294901760
        %v6495 = vsub.f32 %v5779, %v6494
        %v6496 = vand.u32 %v6495, 4294901760
        %v6497 = vsub.f32 %v6495, %v6496
        %v6498 = vand.u32 %v6497, 4294901760
        %6499 = vmatpush.msra.mxu0 %v6498
        %v6500 = vand.u32 %v5778, 4294901760
        %v6501 = vsub.f32 %v5778, %v6500
        %v6502 = vand.u32 %v6501, 4294901760
        %v6503 = vsub.f32 %v6501, %v6502
        %v6504 = vand.u32 %v6503, 4294901760
        %6505 = vmatpush.msra.mxu0 %v6504
        %v6506 = vand.u32 %v930, 4294901760
        %6507 = vmatmul.f32.gmra.mxu0 %v6506
        %v6508 = vpop.f32.mrf.mxu0
        %v6509 = vadd.f32 %v6392, %v6508
        %v6510 = vand.u32 %v933, 4294901760
        %6511 = vmatmul.f32.gmra.mxu0 %v6510
        %v6512 = vpop.f32.mrf.mxu0
        %v6513 = vadd.f32 %v6400, %v6512
        %v6514 = vand.u32 %v936, 4294901760
        %6515 = vmatmul.f32.gmra.mxu0 %v6514
        %v6516 = vpop.f32.mrf.mxu0
        %v6517 = vadd.f32 %v6408, %v6516
        %v6518 = vand.u32 %v939, 4294901760
        %6519 = vmatmul.f32.gmra.mxu0 %v6518
        %v6520 = vpop.f32.mrf.mxu0
        %v6521 = vadd.f32 %v6416, %v6520
        %v6522 = vand.u32 %v942, 4294901760
        %6523 = vmatmul.f32.gmra.mxu0 %v6522
        %v6524 = vpop.f32.mrf.mxu0
        %v6525 = vadd.f32 %v6424, %v6524
        %v6526 = vand.u32 %v945, 4294901760
        %6527 = vmatmul.f32.gmra.mxu0 %v6526
        %v6528 = vpop.f32.mrf.mxu0
        %v6529 = vadd.f32 %v6432, %v6528
        %v6530 = vand.u32 %v948, 4294901760
        %6531 = vmatmul.f32.gmra.mxu0 %v6530
        %v6532 = vpop.f32.mrf.mxu0
        %v6533 = vadd.f32 %v6440, %v6532
        %v6534 = vand.u32 %v951, 4294901760
        %6535 = vmatmul.f32.gmra.mxu0 %v6534
        %v6536 = vpop.f32.mrf.mxu0
        %v6537 = vadd.f32 %v6448, %v6536
        %6538 = vdwg.mxu0
        %6539 = vmatpush.msra.mxu0 0.0
        %6540 = vmatpush.msra.mxu0 0.0
        %6541 = vmatpush.msra.mxu0 0.0
        %6542 = vmatpush.msra.mxu0 0.0
        %6543 = vmatpush.msra.mxu0 0.0
        %6544 = vmatpush.msra.mxu0 0.0
        %6545 = vmatpush.msra.mxu0 0.0
        %6546 = vmatpush.msra.mxu0 0.0
        %v6547 = vand.u32 %v5785, 4294901760
        %v6548 = vsub.f32 %v5785, %v6547
        %6549 = vmatpush.msra.mxu0 %v6548
        %v6550 = vand.u32 %v5784, 4294901760
        %v6551 = vsub.f32 %v5784, %v6550
        %6552 = vmatpush.msra.mxu0 %v6551
        %v6553 = vand.u32 %v5783, 4294901760
        %v6554 = vsub.f32 %v5783, %v6553
        %6555 = vmatpush.msra.mxu0 %v6554
        %v6556 = vand.u32 %v5782, 4294901760
        %v6557 = vsub.f32 %v5782, %v6556
        %6558 = vmatpush.msra.mxu0 %v6557
        %v6559 = vand.u32 %v5781, 4294901760
        %v6560 = vsub.f32 %v5781, %v6559
        %6561 = vmatpush.msra.mxu0 %v6560
        %v6562 = vand.u32 %v5780, 4294901760
        %v6563 = vsub.f32 %v5780, %v6562
        %6564 = vmatpush.msra.mxu0 %v6563
        %v6565 = vand.u32 %v5779, 4294901760
        %v6566 = vsub.f32 %v5779, %v6565
        %6567 = vmatpush.msra.mxu0 %v6566
        %v6568 = vand.u32 %v5778, 4294901760
        %v6569 = vsub.f32 %v5778, %v6568
        %6570 = vmatpush.msra.mxu0 %v6569
        %v6571 = vand.u32 %v930, 4294901760
        %v6572 = vsub.f32 %v930, %v6571
        %6573 = vmatmul.f32.gmra.mxu0 %v6572
        %v6574 = vpop.f32.mrf.mxu0
        %v6575 = vadd.f32 %v6509, %v6574
        %v6576 = vand.u32 %v933, 4294901760
        %v6577 = vsub.f32 %v933, %v6576
        %6578 = vmatmul.f32.gmra.mxu0 %v6577
        %v6579 = vpop.f32.mrf.mxu0
        %v6580 = vadd.f32 %v6513, %v6579
        %v6581 = vand.u32 %v936, 4294901760
        %v6582 = vsub.f32 %v936, %v6581
        %6583 = vmatmul.f32.gmra.mxu0 %v6582
        %v6584 = vpop.f32.mrf.mxu0
        %v6585 = vadd.f32 %v6517, %v6584
        %v6586 = vand.u32 %v939, 4294901760
        %v6587 = vsub.f32 %v939, %v6586
        %6588 = vmatmul.f32.gmra.mxu0 %v6587
        %v6589 = vpop.f32.mrf.mxu0
        %v6590 = vadd.f32 %v6521, %v6589
        %v6591 = vand.u32 %v942, 4294901760
        %v6592 = vsub.f32 %v942, %v6591
        %6593 = vmatmul.f32.gmra.mxu0 %v6592
        %v6594 = vpop.f32.mrf.mxu0
        %v6595 = vadd.f32 %v6525, %v6594
        %v6596 = vand.u32 %v945, 4294901760
        %v6597 = vsub.f32 %v945, %v6596
        %6598 = vmatmul.f32.gmra.mxu0 %v6597
        %v6599 = vpop.f32.mrf.mxu0
        %v6600 = vadd.f32 %v6529, %v6599
        %v6601 = vand.u32 %v948, 4294901760
        %v6602 = vsub.f32 %v948, %v6601
        %6603 = vmatmul.f32.gmra.mxu0 %v6602
        %v6604 = vpop.f32.mrf.mxu0
        %v6605 = vadd.f32 %v6533, %v6604
        %v6606 = vand.u32 %v951, 4294901760
        %v6607 = vsub.f32 %v951, %v6606
        %6608 = vmatmul.f32.gmra.mxu0 %v6607
        %v6609 = vpop.f32.mrf.mxu0
        %v6610 = vadd.f32 %v6537, %v6609
        %6611 = vdwg.mxu0
        %6612 = vmatpush.msra.mxu0 0.0
        %6613 = vmatpush.msra.mxu0 0.0
        %6614 = vmatpush.msra.mxu0 0.0
        %6615 = vmatpush.msra.mxu0 0.0
        %6616 = vmatpush.msra.mxu0 0.0
        %6617 = vmatpush.msra.mxu0 0.0
        %6618 = vmatpush.msra.mxu0 0.0
        %6619 = vmatpush.msra.mxu0 0.0
        %v6620 = vand.u32 %v5785, 4294901760
        %6621 = vmatpush.msra.mxu0 %v6620
        %v6622 = vand.u32 %v5784, 4294901760
        %6623 = vmatpush.msra.mxu0 %v6622
        %v6624 = vand.u32 %v5783, 4294901760
        %6625 = vmatpush.msra.mxu0 %v6624
        %v6626 = vand.u32 %v5782, 4294901760
        %6627 = vmatpush.msra.mxu0 %v6626
        %v6628 = vand.u32 %v5781, 4294901760
        %6629 = vmatpush.msra.mxu0 %v6628
        %v6630 = vand.u32 %v5780, 4294901760
        %6631 = vmatpush.msra.mxu0 %v6630
        %v6632 = vand.u32 %v5779, 4294901760
        %6633 = vmatpush.msra.mxu0 %v6632
        %v6634 = vand.u32 %v5778, 4294901760
        %6635 = vmatpush.msra.mxu0 %v6634
        %v6636 = vand.u32 %v930, 4294901760
        %v6637 = vsub.f32 %v930, %v6636
        %v6638 = vand.u32 %v6637, 4294901760
        %6639 = vmatmul.f32.gmra.mxu0 %v6638
        %v6640 = vpop.f32.mrf.mxu0
        %v6641 = vadd.f32 %v6575, %v6640
        %v6642 = vand.u32 %v933, 4294901760
        %v6643 = vsub.f32 %v933, %v6642
        %v6644 = vand.u32 %v6643, 4294901760
        %6645 = vmatmul.f32.gmra.mxu0 %v6644
        %v6646 = vpop.f32.mrf.mxu0
        %v6647 = vadd.f32 %v6580, %v6646
        %v6648 = vand.u32 %v936, 4294901760
        %v6649 = vsub.f32 %v936, %v6648
        %v6650 = vand.u32 %v6649, 4294901760
        %6651 = vmatmul.f32.gmra.mxu0 %v6650
        %v6652 = vpop.f32.mrf.mxu0
        %v6653 = vadd.f32 %v6585, %v6652
        %v6654 = vand.u32 %v939, 4294901760
        %v6655 = vsub.f32 %v939, %v6654
        %v6656 = vand.u32 %v6655, 4294901760
        %6657 = vmatmul.f32.gmra.mxu0 %v6656
        %v6658 = vpop.f32.mrf.mxu0
        %v6659 = vadd.f32 %v6590, %v6658
        %v6660 = vand.u32 %v942, 4294901760
        %v6661 = vsub.f32 %v942, %v6660
        %v6662 = vand.u32 %v6661, 4294901760
        %6663 = vmatmul.f32.gmra.mxu0 %v6662
        %v6664 = vpop.f32.mrf.mxu0
        %v6665 = vadd.f32 %v6595, %v6664
        %v6666 = vand.u32 %v945, 4294901760
        %v6667 = vsub.f32 %v945, %v6666
        %v6668 = vand.u32 %v6667, 4294901760
        %6669 = vmatmul.f32.gmra.mxu0 %v6668
        %v6670 = vpop.f32.mrf.mxu0
        %v6671 = vadd.f32 %v6600, %v6670
        %v6672 = vand.u32 %v948, 4294901760
        %v6673 = vsub.f32 %v948, %v6672
        %v6674 = vand.u32 %v6673, 4294901760
        %6675 = vmatmul.f32.gmra.mxu0 %v6674
        %v6676 = vpop.f32.mrf.mxu0
        %v6677 = vadd.f32 %v6605, %v6676
        %v6678 = vand.u32 %v951, 4294901760
        %v6679 = vsub.f32 %v951, %v6678
        %v6680 = vand.u32 %v6679, 4294901760
        %6681 = vmatmul.f32.gmra.mxu0 %v6680
        %v6682 = vpop.f32.mrf.mxu0
        %v6683 = vadd.f32 %v6610, %v6682
        %6684 = vdwg.mxu0
        %6685 = vmatpush.msra.mxu0 0.0
        %6686 = vmatpush.msra.mxu0 0.0
        %6687 = vmatpush.msra.mxu0 0.0
        %6688 = vmatpush.msra.mxu0 0.0
        %6689 = vmatpush.msra.mxu0 0.0
        %6690 = vmatpush.msra.mxu0 0.0
        %6691 = vmatpush.msra.mxu0 0.0
        %6692 = vmatpush.msra.mxu0 0.0
        %v6693 = vand.u32 %v5785, 4294901760
        %v6694 = vsub.f32 %v5785, %v6693
        %v6695 = vand.u32 %v6694, 4294901760
        %6696 = vmatpush.msra.mxu0 %v6695
        %v6697 = vand.u32 %v5784, 4294901760
        %v6698 = vsub.f32 %v5784, %v6697
        %v6699 = vand.u32 %v6698, 4294901760
        %6700 = vmatpush.msra.mxu0 %v6699
        %v6701 = vand.u32 %v5783, 4294901760
        %v6702 = vsub.f32 %v5783, %v6701
        %v6703 = vand.u32 %v6702, 4294901760
        %6704 = vmatpush.msra.mxu0 %v6703
        %v6705 = vand.u32 %v5782, 4294901760
        %v6706 = vsub.f32 %v5782, %v6705
        %v6707 = vand.u32 %v6706, 4294901760
        %6708 = vmatpush.msra.mxu0 %v6707
        %v6709 = vand.u32 %v5781, 4294901760
        %v6710 = vsub.f32 %v5781, %v6709
        %v6711 = vand.u32 %v6710, 4294901760
        %6712 = vmatpush.msra.mxu0 %v6711
        %v6713 = vand.u32 %v5780, 4294901760
        %v6714 = vsub.f32 %v5780, %v6713
        %v6715 = vand.u32 %v6714, 4294901760
        %6716 = vmatpush.msra.mxu0 %v6715
        %v6717 = vand.u32 %v5779, 4294901760
        %v6718 = vsub.f32 %v5779, %v6717
        %v6719 = vand.u32 %v6718, 4294901760
        %6720 = vmatpush.msra.mxu0 %v6719
        %v6721 = vand.u32 %v5778, 4294901760
        %v6722 = vsub.f32 %v5778, %v6721
        %v6723 = vand.u32 %v6722, 4294901760
        %6724 = vmatpush.msra.mxu0 %v6723
        %v6725 = vand.u32 %v930, 4294901760
        %6726 = vmatmul.f32.gmra.mxu0 %v6725
        %v6727 = vpop.f32.mrf.mxu0
        %v6728 = vadd.f32 %v6641, %v6727
        %v6729 = vand.u32 %v933, 4294901760
        %6730 = vmatmul.f32.gmra.mxu0 %v6729
        %v6731 = vpop.f32.mrf.mxu0
        %v6732 = vadd.f32 %v6647, %v6731
        %v6733 = vand.u32 %v936, 4294901760
        %6734 = vmatmul.f32.gmra.mxu0 %v6733
        %v6735 = vpop.f32.mrf.mxu0
        %v6736 = vadd.f32 %v6653, %v6735
        %v6737 = vand.u32 %v939, 4294901760
        %6738 = vmatmul.f32.gmra.mxu0 %v6737
        %v6739 = vpop.f32.mrf.mxu0
        %v6740 = vadd.f32 %v6659, %v6739
        %v6741 = vand.u32 %v942, 4294901760
        %6742 = vmatmul.f32.gmra.mxu0 %v6741
        %v6743 = vpop.f32.mrf.mxu0
        %v6744 = vadd.f32 %v6665, %v6743
        %v6745 = vand.u32 %v945, 4294901760
        %6746 = vmatmul.f32.gmra.mxu0 %v6745
        %v6747 = vpop.f32.mrf.mxu0
        %v6748 = vadd.f32 %v6671, %v6747
        %v6749 = vand.u32 %v948, 4294901760
        %6750 = vmatmul.f32.gmra.mxu0 %v6749
        %v6751 = vpop.f32.mrf.mxu0
        %v6752 = vadd.f32 %v6677, %v6751
        %v6753 = vand.u32 %v951, 4294901760
        %6754 = vmatmul.f32.gmra.mxu0 %v6753
        %v6755 = vpop.f32.mrf.mxu0
        %v6756 = vadd.f32 %v6683, %v6755
        %6757 = vdwg.mxu0
        %6758 = vmatpush.msra.mxu0 0.0
        %6759 = vmatpush.msra.mxu0 0.0
        %6760 = vmatpush.msra.mxu0 0.0
        %6761 = vmatpush.msra.mxu0 0.0
        %6762 = vmatpush.msra.mxu0 0.0
        %6763 = vmatpush.msra.mxu0 0.0
        %6764 = vmatpush.msra.mxu0 0.0
        %6765 = vmatpush.msra.mxu0 0.0
        %v6766 = vand.u32 %v5785, 4294901760
        %6767 = vmatpush.msra.mxu0 %v6766
        %v6768 = vand.u32 %v5784, 4294901760
        %6769 = vmatpush.msra.mxu0 %v6768
        %v6770 = vand.u32 %v5783, 4294901760
        %6771 = vmatpush.msra.mxu0 %v6770
        %v6772 = vand.u32 %v5782, 4294901760
        %6773 = vmatpush.msra.mxu0 %v6772
        %v6774 = vand.u32 %v5781, 4294901760
        %6775 = vmatpush.msra.mxu0 %v6774
        %v6776 = vand.u32 %v5780, 4294901760
        %6777 = vmatpush.msra.mxu0 %v6776
        %v6778 = vand.u32 %v5779, 4294901760
        %6779 = vmatpush.msra.mxu0 %v6778
        %v6780 = vand.u32 %v5778, 4294901760
        %6781 = vmatpush.msra.mxu0 %v6780
        %v6782 = vand.u32 %v930, 4294901760
        %6783 = vmatmul.f32.gmra.mxu0 %v6782
        %v6784 = vpop.f32.mrf.mxu0
        %v6785 = vadd.f32 %v6728, %v6784
        %v6786 = vand.u32 %v933, 4294901760
        %6787 = vmatmul.f32.gmra.mxu0 %v6786
        %v6788 = vpop.f32.mrf.mxu0
        %v6789 = vadd.f32 %v6732, %v6788
        %v6790 = vand.u32 %v936, 4294901760
        %6791 = vmatmul.f32.gmra.mxu0 %v6790
        %v6792 = vpop.f32.mrf.mxu0
        %v6793 = vadd.f32 %v6736, %v6792
        %v6794 = vand.u32 %v939, 4294901760
        %6795 = vmatmul.f32.gmra.mxu0 %v6794
        %v6796 = vpop.f32.mrf.mxu0
        %v6797 = vadd.f32 %v6740, %v6796
        %v6798 = vand.u32 %v942, 4294901760
        %6799 = vmatmul.f32.gmra.mxu0 %v6798
        %v6800 = vpop.f32.mrf.mxu0
        %v6801 = vadd.f32 %v6744, %v6800
        %v6802 = vand.u32 %v945, 4294901760
        %6803 = vmatmul.f32.gmra.mxu0 %v6802
        %v6804 = vpop.f32.mrf.mxu0
        %v6805 = vadd.f32 %v6748, %v6804
        %v6806 = vand.u32 %v948, 4294901760
        %6807 = vmatmul.f32.gmra.mxu0 %v6806
        %v6808 = vpop.f32.mrf.mxu0
        %v6809 = vadd.f32 %v6752, %v6808
        %v6810 = vand.u32 %v951, 4294901760
        %6811 = vmatmul.f32.gmra.mxu0 %v6810
        %v6812 = vpop.f32.mrf.mxu0
        %v6813 = vadd.f32 %v6756, %v6812
        %6814 = vdwg.mxu0
        %s6815 = scalar_lea.vmem %s241, 5 [#allocation10]
        %v6816 = vld [vmem:[%s6815] sm:$0x1]
        %v6818 = vperm.slane %v6816, 0
        %v6820 = vmul.f32 %v346, %v6818
        %v6821 = vmul.f32 %v347, %v6818
        %v6822 = vmul.f32 %v348, %v6818
        %v6823 = vmul.f32 %v349, %v6818
        %v6824 = vmul.f32 %v350, %v6818
        %v6825 = vmul.f32 %v351, %v6818
        %v6826 = vmul.f32 %v352, %v6818
        %v6827 = vmul.f32 %v353, %v6818
        %v6828 = vmul.f32 %v5778, 2.0
        %v6829 = vmul.f32 %v5779, 2.0
        %v6830 = vmul.f32 %v5780, 2.0
        %v6831 = vmul.f32 %v5781, 2.0
        %v6832 = vmul.f32 %v5782, 2.0
        %v6833 = vmul.f32 %v5783, 2.0
        %v6834 = vmul.f32 %v5784, 2.0
        %v6835 = vmul.f32 %v5785, 2.0
        %v6836 = vsub.f32 %v6828, %v4696
        %v6837 = vsub.f32 %v6829, %v4697
        %v6838 = vsub.f32 %v6830, %v4698
        %v6839 = vsub.f32 %v6831, %v4699
        %v6840 = vsub.f32 %v6832, %v4700
        %v6841 = vsub.f32 %v6833, %v4701
        %v6842 = vsub.f32 %v6834, %v4702
        %v6843 = vsub.f32 %v6835, %v4703
        %v6844 = vadd.f32 %v6785, %v6820
        %v6845 = vadd.f32 %v6789, %v6821
        %v6846 = vadd.f32 %v6793, %v6822
        %v6847 = vadd.f32 %v6797, %v6823
        %v6848 = vadd.f32 %v6801, %v6824
        %v6849 = vadd.f32 %v6805, %v6825
        %v6850 = vadd.f32 %v6809, %v6826
        %v6851 = vadd.f32 %v6813, %v6827
        %v6852 = vmul.f32 %v289, %v6844
        %v6853 = vmul.f32 %v290, %v6845
        %v6854 = vmul.f32 %v291, %v6846
        %v6855 = vmul.f32 %v292, %v6847
        %v6856 = vmul.f32 %v293, %v6848
        %v6857 = vmul.f32 %v294, %v6849
        %v6858 = vmul.f32 %v295, %v6850
        %v6859 = vmul.f32 %v296, %v6851
        %v6860 = vadd.f32 %v6836, %v6852
        %v6861 = vadd.f32 %v6837, %v6853
        %v6862 = vadd.f32 %v6838, %v6854
        %v6863 = vadd.f32 %v6839, %v6855
        %v6864 = vadd.f32 %v6840, %v6856
        %v6865 = vadd.f32 %v6841, %v6857
        %v6866 = vadd.f32 %v6842, %v6858
        %v6867 = vadd.f32 %v6843, %v6859
        %v6868 = vpack.c.bf16 %v6860, %v6860
        %v6869 = vpack.c.bf16 %v6861, %v6861
        %v6870 = vpack.c.bf16 %v6862, %v6862
        %v6871 = vpack.c.bf16 %v6863, %v6863
        %v6872 = vpack.c.bf16 %v6864, %v6864
        %v6873 = vpack.c.bf16 %v6865, %v6865
        %v6874 = vpack.c.bf16 %v6866, %v6866
        %v6875 = vpack.c.bf16 %v6867, %v6867
        %s6876 = scalar_lea.vmem %s266, 160 [#allocation12]
        %6877 = vst [vmem:[%s6876] sm:$0xf] %v6868
        %6878 = vst [vmem:[%s6876 + $0x4] sm:$0xf] %v6869
        %6879 = vst [vmem:[%s6876 + $0x8] sm:$0xf] %v6870
        %6880 = vst [vmem:[%s6876 + $0xc] sm:$0xf] %v6871
        %6881 = vst [vmem:[%s6876 + $0x10] sm:$0xf] %v6872
        %6882 = vst [vmem:[%s6876 + $0x14] sm:$0xf] %v6873
        %6883 = vst [vmem:[%s6876 + $0x18] sm:$0xf] %v6874
        %6884 = vst [vmem:[%s6876 + $0x1c] sm:$0xf] %v6875
        %v6885 = vand.u32 %v320, 4294901760
        %6886 = vmatpush.msra.mxu0 %v6885
        %v6887 = vand.u32 %v319, 4294901760
        %6888 = vmatpush.msra.mxu0 %v6887
        %v6889 = vand.u32 %v318, 4294901760
        %6890 = vmatpush.msra.mxu0 %v6889
        %v6891 = vand.u32 %v317, 4294901760
        %6892 = vmatpush.msra.mxu0 %v6891
        %v6893 = vand.u32 %v316, 4294901760
        %6894 = vmatpush.msra.mxu0 %v6893
        %v6895 = vand.u32 %v315, 4294901760
        %6896 = vmatpush.msra.mxu0 %v6895
        %v6897 = vand.u32 %v314, 4294901760
        %6898 = vmatpush.msra.mxu0 %v6897
        %v6899 = vand.u32 %v313, 4294901760
        %6900 = vmatpush.msra.mxu0 %v6899
        %v6901 = vand.u32 %v312, 4294901760
        %6902 = vmatpush.msra.mxu0 %v6901
        %v6903 = vand.u32 %v311, 4294901760
        %6904 = vmatpush.msra.mxu0 %v6903
        %v6905 = vand.u32 %v310, 4294901760
        %6906 = vmatpush.msra.mxu0 %v6905
        %v6907 = vand.u32 %v309, 4294901760
        %6908 = vmatpush.msra.mxu0 %v6907
        %v6909 = vand.u32 %v308, 4294901760
        %6910 = vmatpush.msra.mxu0 %v6909
        %v6911 = vand.u32 %v307, 4294901760
        %6912 = vmatpush.msra.mxu0 %v6911
        %v6913 = vand.u32 %v306, 4294901760
        %6914 = vmatpush.msra.mxu0 %v6913
        %v6915 = vand.u32 %v305, 4294901760
        %6916 = vmatpush.msra.mxu0 %v6915
        %v6917 = vand.u32 %v6860, 4294901760
        %v6918 = vsub.f32 %v6860, %v6917
        %v6919 = vand.u32 %v6918, 4294901760
        %v6920 = vsub.f32 %v6918, %v6919
        %v6921 = vand.u32 %v6920, 4294901760
        %6922 = vmatmul.f32.gmra.mxu0 %v6921
        %v6923 = vpop.f32.mrf.mxu0
        %v6924 = vadd.f32 0.0, %v6923
        %v6925 = vand.u32 %v6861, 4294901760
        %v6926 = vsub.f32 %v6861, %v6925
        %v6927 = vand.u32 %v6926, 4294901760
        %v6928 = vsub.f32 %v6926, %v6927
        %v6929 = vand.u32 %v6928, 4294901760
        %6930 = vmatmul.f32.gmra.mxu0 %v6929
        %v6931 = vpop.f32.mrf.mxu0
        %v6932 = vadd.f32 0.0, %v6931
        %v6933 = vand.u32 %v6862, 4294901760
        %v6934 = vsub.f32 %v6862, %v6933
        %v6935 = vand.u32 %v6934, 4294901760
        %v6936 = vsub.f32 %v6934, %v6935
        %v6937 = vand.u32 %v6936, 4294901760
        %6938 = vmatmul.f32.gmra.mxu0 %v6937
        %v6939 = vpop.f32.mrf.mxu0
        %v6940 = vadd.f32 0.0, %v6939
        %v6941 = vand.u32 %v6863, 4294901760
        %v6942 = vsub.f32 %v6863, %v6941
        %v6943 = vand.u32 %v6942, 4294901760
        %v6944 = vsub.f32 %v6942, %v6943
        %v6945 = vand.u32 %v6944, 4294901760
        %6946 = vmatmul.f32.gmra.mxu0 %v6945
        %v6947 = vpop.f32.mrf.mxu0
        %v6948 = vadd.f32 0.0, %v6947
        %v6949 = vand.u32 %v6864, 4294901760
        %v6950 = vsub.f32 %v6864, %v6949
        %v6951 = vand.u32 %v6950, 4294901760
        %v6952 = vsub.f32 %v6950, %v6951
        %v6953 = vand.u32 %v6952, 4294901760
        %6954 = vmatmul.f32.gmra.mxu0 %v6953
        %v6955 = vpop.f32.mrf.mxu0
        %v6956 = vadd.f32 0.0, %v6955
        %v6957 = vand.u32 %v6865, 4294901760
        %v6958 = vsub.f32 %v6865, %v6957
        %v6959 = vand.u32 %v6958, 4294901760
        %v6960 = vsub.f32 %v6958, %v6959
        %v6961 = vand.u32 %v6960, 4294901760
        %6962 = vmatmul.f32.gmra.mxu0 %v6961
        %v6963 = vpop.f32.mrf.mxu0
        %v6964 = vadd.f32 0.0, %v6963
        %v6965 = vand.u32 %v6866, 4294901760
        %v6966 = vsub.f32 %v6866, %v6965
        %v6967 = vand.u32 %v6966, 4294901760
        %v6968 = vsub.f32 %v6966, %v6967
        %v6969 = vand.u32 %v6968, 4294901760
        %6970 = vmatmul.f32.gmra.mxu0 %v6969
        %v6971 = vpop.f32.mrf.mxu0
        %v6972 = vadd.f32 0.0, %v6971
        %v6973 = vand.u32 %v6867, 4294901760
        %v6974 = vsub.f32 %v6867, %v6973
        %v6975 = vand.u32 %v6974, 4294901760
        %v6976 = vsub.f32 %v6974, %v6975
        %v6977 = vand.u32 %v6976, 4294901760
        %6978 = vmatmul.f32.gmra.mxu0 %v6977
        %v6979 = vpop.f32.mrf.mxu0
        %v6980 = vadd.f32 0.0, %v6979
        %6981 = vdwg.mxu0
        %v6982 = vand.u32 %v320, 4294901760
        %v6983 = vsub.f32 %v320, %v6982
        %v6984 = vand.u32 %v6983, 4294901760
        %v6985 = vsub.f32 %v6983, %v6984
        %v6986 = vand.u32 %v6985, 4294901760
        %6987 = vmatpush.msra.mxu0 %v6986
        %v6988 = vand.u32 %v319, 4294901760
        %v6989 = vsub.f32 %v319, %v6988
        %v6990 = vand.u32 %v6989, 4294901760
        %v6991 = vsub.f32 %v6989, %v6990
        %v6992 = vand.u32 %v6991, 4294901760
        %6993 = vmatpush.msra.mxu0 %v6992
        %v6994 = vand.u32 %v318, 4294901760
        %v6995 = vsub.f32 %v318, %v6994
        %v6996 = vand.u32 %v6995, 4294901760
        %v6997 = vsub.f32 %v6995, %v6996
        %v6998 = vand.u32 %v6997, 4294901760
        %6999 = vmatpush.msra.mxu0 %v6998
        %v7000 = vand.u32 %v317, 4294901760
        %v7001 = vsub.f32 %v317, %v7000
        %v7002 = vand.u32 %v7001, 4294901760
        %v7003 = vsub.f32 %v7001, %v7002
        %v7004 = vand.u32 %v7003, 4294901760
        %7005 = vmatpush.msra.mxu0 %v7004
        %v7006 = vand.u32 %v316, 4294901760
        %v7007 = vsub.f32 %v316, %v7006
        %v7008 = vand.u32 %v7007, 4294901760
        %v7009 = vsub.f32 %v7007, %v7008
        %v7010 = vand.u32 %v7009, 4294901760
        %7011 = vmatpush.msra.mxu0 %v7010
        %v7012 = vand.u32 %v315, 4294901760
        %v7013 = vsub.f32 %v315, %v7012
        %v7014 = vand.u32 %v7013, 4294901760
        %v7015 = vsub.f32 %v7013, %v7014
        %v7016 = vand.u32 %v7015, 4294901760
        %7017 = vmatpush.msra.mxu0 %v7016
        %v7018 = vand.u32 %v314, 4294901760
        %v7019 = vsub.f32 %v314, %v7018
        %v7020 = vand.u32 %v7019, 4294901760
        %v7021 = vsub.f32 %v7019, %v7020
        %v7022 = vand.u32 %v7021, 4294901760
        %7023 = vmatpush.msra.mxu0 %v7022
        %v7024 = vand.u32 %v313, 4294901760
        %v7025 = vsub.f32 %v313, %v7024
        %v7026 = vand.u32 %v7025, 4294901760
        %v7027 = vsub.f32 %v7025, %v7026
        %v7028 = vand.u32 %v7027, 4294901760
        %7029 = vmatpush.msra.mxu0 %v7028
        %v7030 = vand.u32 %v312, 4294901760
        %v7031 = vsub.f32 %v312, %v7030
        %v7032 = vand.u32 %v7031, 4294901760
        %v7033 = vsub.f32 %v7031, %v7032
        %v7034 = vand.u32 %v7033, 4294901760
        %7035 = vmatpush.msra.mxu0 %v7034
        %v7036 = vand.u32 %v311, 4294901760
        %v7037 = vsub.f32 %v311, %v7036
        %v7038 = vand.u32 %v7037, 4294901760
        %v7039 = vsub.f32 %v7037, %v7038
        %v7040 = vand.u32 %v7039, 4294901760
        %7041 = vmatpush.msra.mxu0 %v7040
        %v7042 = vand.u32 %v310, 4294901760
        %v7043 = vsub.f32 %v310, %v7042
        %v7044 = vand.u32 %v7043, 4294901760
        %v7045 = vsub.f32 %v7043, %v7044
        %v7046 = vand.u32 %v7045, 4294901760
        %7047 = vmatpush.msra.mxu0 %v7046
        %v7048 = vand.u32 %v309, 4294901760
        %v7049 = vsub.f32 %v309, %v7048
        %v7050 = vand.u32 %v7049, 4294901760
        %v7051 = vsub.f32 %v7049, %v7050
        %v7052 = vand.u32 %v7051, 4294901760
        %7053 = vmatpush.msra.mxu0 %v7052
        %v7054 = vand.u32 %v308, 4294901760
        %v7055 = vsub.f32 %v308, %v7054
        %v7056 = vand.u32 %v7055, 4294901760
        %v7057 = vsub.f32 %v7055, %v7056
        %v7058 = vand.u32 %v7057, 4294901760
        %7059 = vmatpush.msra.mxu0 %v7058
        %v7060 = vand.u32 %v307, 4294901760
        %v7061 = vsub.f32 %v307, %v7060
        %v7062 = vand.u32 %v7061, 4294901760
        %v7063 = vsub.f32 %v7061, %v7062
        %v7064 = vand.u32 %v7063, 4294901760
        %7065 = vmatpush.msra.mxu0 %v7064
        %v7066 = vand.u32 %v306, 4294901760
        %v7067 = vsub.f32 %v306, %v7066
        %v7068 = vand.u32 %v7067, 4294901760
        %v7069 = vsub.f32 %v7067, %v7068
        %v7070 = vand.u32 %v7069, 4294901760
        %7071 = vmatpush.msra.mxu0 %v7070
        %v7072 = vand.u32 %v305, 4294901760
        %v7073 = vsub.f32 %v305, %v7072
        %v7074 = vand.u32 %v7073, 4294901760
        %v7075 = vsub.f32 %v7073, %v7074
        %v7076 = vand.u32 %v7075, 4294901760
        %7077 = vmatpush.msra.mxu0 %v7076
        %v7078 = vand.u32 %v6860, 4294901760
        %7079 = vmatmul.f32.gmra.mxu0 %v7078
        %v7080 = vpop.f32.mrf.mxu0
        %v7081 = vadd.f32 %v6924, %v7080
        %v7082 = vand.u32 %v6861, 4294901760
        %7083 = vmatmul.f32.gmra.mxu0 %v7082
        %v7084 = vpop.f32.mrf.mxu0
        %v7085 = vadd.f32 %v6932, %v7084
        %v7086 = vand.u32 %v6862, 4294901760
        %7087 = vmatmul.f32.gmra.mxu0 %v7086
        %v7088 = vpop.f32.mrf.mxu0
        %v7089 = vadd.f32 %v6940, %v7088
        %v7090 = vand.u32 %v6863, 4294901760
        %7091 = vmatmul.f32.gmra.mxu0 %v7090
        %v7092 = vpop.f32.mrf.mxu0
        %v7093 = vadd.f32 %v6948, %v7092
        %v7094 = vand.u32 %v6864, 4294901760
        %7095 = vmatmul.f32.gmra.mxu0 %v7094
        %v7096 = vpop.f32.mrf.mxu0
        %v7097 = vadd.f32 %v6956, %v7096
        %v7098 = vand.u32 %v6865, 4294901760
        %7099 = vmatmul.f32.gmra.mxu0 %v7098
        %v7100 = vpop.f32.mrf.mxu0
        %v7101 = vadd.f32 %v6964, %v7100
        %v7102 = vand.u32 %v6866, 4294901760
        %7103 = vmatmul.f32.gmra.mxu0 %v7102
        %v7104 = vpop.f32.mrf.mxu0
        %v7105 = vadd.f32 %v6972, %v7104
        %v7106 = vand.u32 %v6867, 4294901760
        %7107 = vmatmul.f32.gmra.mxu0 %v7106
        %v7108 = vpop.f32.mrf.mxu0
        %v7109 = vadd.f32 %v6980, %v7108
        %7110 = vdwg.mxu0
        %v7111 = vand.u32 %v320, 4294901760
        %v7112 = vsub.f32 %v320, %v7111
        %7113 = vmatpush.msra.mxu0 %v7112
        %v7114 = vand.u32 %v319, 4294901760
        %v7115 = vsub.f32 %v319, %v7114
        %7116 = vmatpush.msra.mxu0 %v7115
        %v7117 = vand.u32 %v318, 4294901760
        %v7118 = vsub.f32 %v318, %v7117
        %7119 = vmatpush.msra.mxu0 %v7118
        %v7120 = vand.u32 %v317, 4294901760
        %v7121 = vsub.f32 %v317, %v7120
        %7122 = vmatpush.msra.mxu0 %v7121
        %v7123 = vand.u32 %v316, 4294901760
        %v7124 = vsub.f32 %v316, %v7123
        %7125 = vmatpush.msra.mxu0 %v7124
        %v7126 = vand.u32 %v315, 4294901760
        %v7127 = vsub.f32 %v315, %v7126
        %7128 = vmatpush.msra.mxu0 %v7127
        %v7129 = vand.u32 %v314, 4294901760
        %v7130 = vsub.f32 %v314, %v7129
        %7131 = vmatpush.msra.mxu0 %v7130
        %v7132 = vand.u32 %v313, 4294901760
        %v7133 = vsub.f32 %v313, %v7132
        %7134 = vmatpush.msra.mxu0 %v7133
        %v7135 = vand.u32 %v312, 4294901760
        %v7136 = vsub.f32 %v312, %v7135
        %7137 = vmatpush.msra.mxu0 %v7136
        %v7138 = vand.u32 %v311, 4294901760
        %v7139 = vsub.f32 %v311, %v7138
        %7140 = vmatpush.msra.mxu0 %v7139
        %v7141 = vand.u32 %v310, 4294901760
        %v7142 = vsub.f32 %v310, %v7141
        %7143 = vmatpush.msra.mxu0 %v7142
        %v7144 = vand.u32 %v309, 4294901760
        %v7145 = vsub.f32 %v309, %v7144
        %7146 = vmatpush.msra.mxu0 %v7145
        %v7147 = vand.u32 %v308, 4294901760
        %v7148 = vsub.f32 %v308, %v7147
        %7149 = vmatpush.msra.mxu0 %v7148
        %v7150 = vand.u32 %v307, 4294901760
        %v7151 = vsub.f32 %v307, %v7150
        %7152 = vmatpush.msra.mxu0 %v7151
        %v7153 = vand.u32 %v306, 4294901760
        %v7154 = vsub.f32 %v306, %v7153
        %7155 = vmatpush.msra.mxu0 %v7154
        %v7156 = vand.u32 %v305, 4294901760
        %v7157 = vsub.f32 %v305, %v7156
        %7158 = vmatpush.msra.mxu0 %v7157
        %v7159 = vand.u32 %v6860, 4294901760
        %v7160 = vsub.f32 %v6860, %v7159
        %7161 = vmatmul.f32.gmra.mxu0 %v7160
        %v7162 = vpop.f32.mrf.mxu0
        %v7163 = vadd.f32 %v7081, %v7162
        %v7164 = vand.u32 %v6861, 4294901760
        %v7165 = vsub.f32 %v6861, %v7164
        %7166 = vmatmul.f32.gmra.mxu0 %v7165
        %v7167 = vpop.f32.mrf.mxu0
        %v7168 = vadd.f32 %v7085, %v7167
        %v7169 = vand.u32 %v6862, 4294901760
        %v7170 = vsub.f32 %v6862, %v7169
        %7171 = vmatmul.f32.gmra.mxu0 %v7170
        %v7172 = vpop.f32.mrf.mxu0
        %v7173 = vadd.f32 %v7089, %v7172
        %v7174 = vand.u32 %v6863, 4294901760
        %v7175 = vsub.f32 %v6863, %v7174
        %7176 = vmatmul.f32.gmra.mxu0 %v7175
        %v7177 = vpop.f32.mrf.mxu0
        %v7178 = vadd.f32 %v7093, %v7177
        %v7179 = vand.u32 %v6864, 4294901760
        %v7180 = vsub.f32 %v6864, %v7179
        %7181 = vmatmul.f32.gmra.mxu0 %v7180
        %v7182 = vpop.f32.mrf.mxu0
        %v7183 = vadd.f32 %v7097, %v7182
        %v7184 = vand.u32 %v6865, 4294901760
        %v7185 = vsub.f32 %v6865, %v7184
        %7186 = vmatmul.f32.gmra.mxu0 %v7185
        %v7187 = vpop.f32.mrf.mxu0
        %v7188 = vadd.f32 %v7101, %v7187
        %v7189 = vand.u32 %v6866, 4294901760
        %v7190 = vsub.f32 %v6866, %v7189
        %7191 = vmatmul.f32.gmra.mxu0 %v7190
        %v7192 = vpop.f32.mrf.mxu0
        %v7193 = vadd.f32 %v7105, %v7192
        %v7194 = vand.u32 %v6867, 4294901760
        %v7195 = vsub.f32 %v6867, %v7194
        %7196 = vmatmul.f32.gmra.mxu0 %v7195
        %v7197 = vpop.f32.mrf.mxu0
        %v7198 = vadd.f32 %v7109, %v7197
        %7199 = vdwg.mxu0
        %v7200 = vand.u32 %v320, 4294901760
        %7201 = vmatpush.msra.mxu0 %v7200
        %v7202 = vand.u32 %v319, 4294901760
        %7203 = vmatpush.msra.mxu0 %v7202
        %v7204 = vand.u32 %v318, 4294901760
        %7205 = vmatpush.msra.mxu0 %v7204
        %v7206 = vand.u32 %v317, 4294901760
        %7207 = vmatpush.msra.mxu0 %v7206
        %v7208 = vand.u32 %v316, 4294901760
        %7209 = vmatpush.msra.mxu0 %v7208
        %v7210 = vand.u32 %v315, 4294901760
        %7211 = vmatpush.msra.mxu0 %v7210
        %v7212 = vand.u32 %v314, 4294901760
        %7213 = vmatpush.msra.mxu0 %v7212
        %v7214 = vand.u32 %v313, 4294901760
        %7215 = vmatpush.msra.mxu0 %v7214
        %v7216 = vand.u32 %v312, 4294901760
        %7217 = vmatpush.msra.mxu0 %v7216
        %v7218 = vand.u32 %v311, 4294901760
        %7219 = vmatpush.msra.mxu0 %v7218
        %v7220 = vand.u32 %v310, 4294901760
        %7221 = vmatpush.msra.mxu0 %v7220
        %v7222 = vand.u32 %v309, 4294901760
        %7223 = vmatpush.msra.mxu0 %v7222
        %v7224 = vand.u32 %v308, 4294901760
        %7225 = vmatpush.msra.mxu0 %v7224
        %v7226 = vand.u32 %v307, 4294901760
        %7227 = vmatpush.msra.mxu0 %v7226
        %v7228 = vand.u32 %v306, 4294901760
        %7229 = vmatpush.msra.mxu0 %v7228
        %v7230 = vand.u32 %v305, 4294901760
        %7231 = vmatpush.msra.mxu0 %v7230
        %v7232 = vand.u32 %v6860, 4294901760
        %v7233 = vsub.f32 %v6860, %v7232
        %v7234 = vand.u32 %v7233, 4294901760
        %7235 = vmatmul.f32.gmra.mxu0 %v7234
        %v7236 = vpop.f32.mrf.mxu0
        %v7237 = vadd.f32 %v7163, %v7236
        %v7238 = vand.u32 %v6861, 4294901760
        %v7239 = vsub.f32 %v6861, %v7238
        %v7240 = vand.u32 %v7239, 4294901760
        %7241 = vmatmul.f32.gmra.mxu0 %v7240
        %v7242 = vpop.f32.mrf.mxu0
        %v7243 = vadd.f32 %v7168, %v7242
        %v7244 = vand.u32 %v6862, 4294901760
        %v7245 = vsub.f32 %v6862, %v7244
        %v7246 = vand.u32 %v7245, 4294901760
        %7247 = vmatmul.f32.gmra.mxu0 %v7246
        %v7248 = vpop.f32.mrf.mxu0
        %v7249 = vadd.f32 %v7173, %v7248
        %v7250 = vand.u32 %v6863, 4294901760
        %v7251 = vsub.f32 %v6863, %v7250
        %v7252 = vand.u32 %v7251, 4294901760
        %7253 = vmatmul.f32.gmra.mxu0 %v7252
        %v7254 = vpop.f32.mrf.mxu0
        %v7255 = vadd.f32 %v7178, %v7254
        %v7256 = vand.u32 %v6864, 4294901760
        %v7257 = vsub.f32 %v6864, %v7256
        %v7258 = vand.u32 %v7257, 4294901760
        %7259 = vmatmul.f32.gmra.mxu0 %v7258
        %v7260 = vpop.f32.mrf.mxu0
        %v7261 = vadd.f32 %v7183, %v7260
        %v7262 = vand.u32 %v6865, 4294901760
        %v7263 = vsub.f32 %v6865, %v7262
        %v7264 = vand.u32 %v7263, 4294901760
        %7265 = vmatmul.f32.gmra.mxu0 %v7264
        %v7266 = vpop.f32.mrf.mxu0
        %v7267 = vadd.f32 %v7188, %v7266
        %v7268 = vand.u32 %v6866, 4294901760
        %v7269 = vsub.f32 %v6866, %v7268
        %v7270 = vand.u32 %v7269, 4294901760
        %7271 = vmatmul.f32.gmra.mxu0 %v7270
        %v7272 = vpop.f32.mrf.mxu0
        %v7273 = vadd.f32 %v7193, %v7272
        %v7274 = vand.u32 %v6867, 4294901760
        %v7275 = vsub.f32 %v6867, %v7274
        %v7276 = vand.u32 %v7275, 4294901760
        %7277 = vmatmul.f32.gmra.mxu0 %v7276
        %v7278 = vpop.f32.mrf.mxu0
        %v7279 = vadd.f32 %v7198, %v7278
        %7280 = vdwg.mxu0
        %v7281 = vand.u32 %v320, 4294901760
        %v7282 = vsub.f32 %v320, %v7281
        %v7283 = vand.u32 %v7282, 4294901760
        %7284 = vmatpush.msra.mxu0 %v7283
        %v7285 = vand.u32 %v319, 4294901760
        %v7286 = vsub.f32 %v319, %v7285
        %v7287 = vand.u32 %v7286, 4294901760
        %7288 = vmatpush.msra.mxu0 %v7287
        %v7289 = vand.u32 %v318, 4294901760
        %v7290 = vsub.f32 %v318, %v7289
        %v7291 = vand.u32 %v7290, 4294901760
        %7292 = vmatpush.msra.mxu0 %v7291
        %v7293 = vand.u32 %v317, 4294901760
        %v7294 = vsub.f32 %v317, %v7293
        %v7295 = vand.u32 %v7294, 4294901760
        %7296 = vmatpush.msra.mxu0 %v7295
        %v7297 = vand.u32 %v316, 4294901760
        %v7298 = vsub.f32 %v316, %v7297
        %v7299 = vand.u32 %v7298, 4294901760
        %7300 = vmatpush.msra.mxu0 %v7299
        %v7301 = vand.u32 %v315, 4294901760
        %v7302 = vsub.f32 %v315, %v7301
        %v7303 = vand.u32 %v7302, 4294901760
        %7304 = vmatpush.msra.mxu0 %v7303
        %v7305 = vand.u32 %v314, 4294901760
        %v7306 = vsub.f32 %v314, %v7305
        %v7307 = vand.u32 %v7306, 4294901760
        %7308 = vmatpush.msra.mxu0 %v7307
        %v7309 = vand.u32 %v313, 4294901760
        %v7310 = vsub.f32 %v313, %v7309
        %v7311 = vand.u32 %v7310, 4294901760
        %7312 = vmatpush.msra.mxu0 %v7311
        %v7313 = vand.u32 %v312, 4294901760
        %v7314 = vsub.f32 %v312, %v7313
        %v7315 = vand.u32 %v7314, 4294901760
        %7316 = vmatpush.msra.mxu0 %v7315
        %v7317 = vand.u32 %v311, 4294901760
        %v7318 = vsub.f32 %v311, %v7317
        %v7319 = vand.u32 %v7318, 4294901760
        %7320 = vmatpush.msra.mxu0 %v7319
        %v7321 = vand.u32 %v310, 4294901760
        %v7322 = vsub.f32 %v310, %v7321
        %v7323 = vand.u32 %v7322, 4294901760
        %7324 = vmatpush.msra.mxu0 %v7323
        %v7325 = vand.u32 %v309, 4294901760
        %v7326 = vsub.f32 %v309, %v7325
        %v7327 = vand.u32 %v7326, 4294901760
        %7328 = vmatpush.msra.mxu0 %v7327
        %v7329 = vand.u32 %v308, 4294901760
        %v7330 = vsub.f32 %v308, %v7329
        %v7331 = vand.u32 %v7330, 4294901760
        %7332 = vmatpush.msra.mxu0 %v7331
        %v7333 = vand.u32 %v307, 4294901760
        %v7334 = vsub.f32 %v307, %v7333
        %v7335 = vand.u32 %v7334, 4294901760
        %7336 = vmatpush.msra.mxu0 %v7335
        %v7337 = vand.u32 %v306, 4294901760
        %v7338 = vsub.f32 %v306, %v7337
        %v7339 = vand.u32 %v7338, 4294901760
        %7340 = vmatpush.msra.mxu0 %v7339
        %v7341 = vand.u32 %v305, 4294901760
        %v7342 = vsub.f32 %v305, %v7341
        %v7343 = vand.u32 %v7342, 4294901760
        %7344 = vmatpush.msra.mxu0 %v7343
        %v7345 = vand.u32 %v6860, 4294901760
        %7346 = vmatmul.f32.gmra.mxu0 %v7345
        %v7347 = vpop.f32.mrf.mxu0
        %v7348 = vadd.f32 %v7237, %v7347
        %v7349 = vand.u32 %v6861, 4294901760
        %7350 = vmatmul.f32.gmra.mxu0 %v7349
        %v7351 = vpop.f32.mrf.mxu0
        %v7352 = vadd.f32 %v7243, %v7351
        %v7353 = vand.u32 %v6862, 4294901760
        %7354 = vmatmul.f32.gmra.mxu0 %v7353
        %v7355 = vpop.f32.mrf.mxu0
        %v7356 = vadd.f32 %v7249, %v7355
        %v7357 = vand.u32 %v6863, 4294901760
        %7358 = vmatmul.f32.gmra.mxu0 %v7357
        %v7359 = vpop.f32.mrf.mxu0
        %v7360 = vadd.f32 %v7255, %v7359
        %v7361 = vand.u32 %v6864, 4294901760
        %7362 = vmatmul.f32.gmra.mxu0 %v7361
        %v7363 = vpop.f32.mrf.mxu0
        %v7364 = vadd.f32 %v7261, %v7363
        %v7365 = vand.u32 %v6865, 4294901760
        %7366 = vmatmul.f32.gmra.mxu0 %v7365
        %v7367 = vpop.f32.mrf.mxu0
        %v7368 = vadd.f32 %v7267, %v7367
        %v7369 = vand.u32 %v6866, 4294901760
        %7370 = vmatmul.f32.gmra.mxu0 %v7369
        %v7371 = vpop.f32.mrf.mxu0
        %v7372 = vadd.f32 %v7273, %v7371
        %v7373 = vand.u32 %v6867, 4294901760
        %7374 = vmatmul.f32.gmra.mxu0 %v7373
        %v7375 = vpop.f32.mrf.mxu0
        %v7376 = vadd.f32 %v7279, %v7375
        %7377 = vdwg.mxu0
        %v7378 = vand.u32 %v320, 4294901760
        %7379 = vmatpush.msra.mxu0 %v7378
        %v7380 = vand.u32 %v319, 4294901760
        %7381 = vmatpush.msra.mxu0 %v7380
        %v7382 = vand.u32 %v318, 4294901760
        %7383 = vmatpush.msra.mxu0 %v7382
        %v7384 = vand.u32 %v317, 4294901760
        %7385 = vmatpush.msra.mxu0 %v7384
        %v7386 = vand.u32 %v316, 4294901760
        %7387 = vmatpush.msra.mxu0 %v7386
        %v7388 = vand.u32 %v315, 4294901760
        %7389 = vmatpush.msra.mxu0 %v7388
        %v7390 = vand.u32 %v314, 4294901760
        %7391 = vmatpush.msra.mxu0 %v7390
        %v7392 = vand.u32 %v313, 4294901760
        %7393 = vmatpush.msra.mxu0 %v7392
        %v7394 = vand.u32 %v312, 4294901760
        %7395 = vmatpush.msra.mxu0 %v7394
        %v7396 = vand.u32 %v311, 4294901760
        %7397 = vmatpush.msra.mxu0 %v7396
        %v7398 = vand.u32 %v310, 4294901760
        %7399 = vmatpush.msra.mxu0 %v7398
        %v7400 = vand.u32 %v309, 4294901760
        %7401 = vmatpush.msra.mxu0 %v7400
        %v7402 = vand.u32 %v308, 4294901760
        %7403 = vmatpush.msra.mxu0 %v7402
        %v7404 = vand.u32 %v307, 4294901760
        %7405 = vmatpush.msra.mxu0 %v7404
        %v7406 = vand.u32 %v306, 4294901760
        %7407 = vmatpush.msra.mxu0 %v7406
        %v7408 = vand.u32 %v305, 4294901760
        %7409 = vmatpush.msra.mxu0 %v7408
        %v7410 = vand.u32 %v6860, 4294901760
        %7411 = vmatmul.f32.gmra.mxu0 %v7410
        %v7412 = vpop.f32.mrf.mxu0
        %v7413 = vadd.f32 %v7348, %v7412
        %v7414 = vand.u32 %v6861, 4294901760
        %7415 = vmatmul.f32.gmra.mxu0 %v7414
        %v7416 = vpop.f32.mrf.mxu0
        %v7417 = vadd.f32 %v7352, %v7416
        %v7418 = vand.u32 %v6862, 4294901760
        %7419 = vmatmul.f32.gmra.mxu0 %v7418
        %v7420 = vpop.f32.mrf.mxu0
        %v7421 = vadd.f32 %v7356, %v7420
        %v7422 = vand.u32 %v6863, 4294901760
        %7423 = vmatmul.f32.gmra.mxu0 %v7422
        %v7424 = vpop.f32.mrf.mxu0
        %v7425 = vadd.f32 %v7360, %v7424
        %v7426 = vand.u32 %v6864, 4294901760
        %7427 = vmatmul.f32.gmra.mxu0 %v7426
        %v7428 = vpop.f32.mrf.mxu0
        %v7429 = vadd.f32 %v7364, %v7428
        %v7430 = vand.u32 %v6865, 4294901760
        %7431 = vmatmul.f32.gmra.mxu0 %v7430
        %v7432 = vpop.f32.mrf.mxu0
        %v7433 = vadd.f32 %v7368, %v7432
        %v7434 = vand.u32 %v6866, 4294901760
        %7435 = vmatmul.f32.gmra.mxu0 %v7434
        %v7436 = vpop.f32.mrf.mxu0
        %v7437 = vadd.f32 %v7372, %v7436
        %v7438 = vand.u32 %v6867, 4294901760
        %7439 = vmatmul.f32.gmra.mxu0 %v7438
        %v7440 = vpop.f32.mrf.mxu0
        %v7441 = vadd.f32 %v7376, %v7440
        %7442 = vdwg.mxu0
        %7443 = vmatpush.msra.mxu0 0.0
        %7444 = vmatpush.msra.mxu0 0.0
        %7445 = vmatpush.msra.mxu0 0.0
        %7446 = vmatpush.msra.mxu0 0.0
        %7447 = vmatpush.msra.mxu0 0.0
        %7448 = vmatpush.msra.mxu0 0.0
        %7449 = vmatpush.msra.mxu0 0.0
        %7450 = vmatpush.msra.mxu0 0.0
        %v7451 = vand.u32 %v6867, 4294901760
        %7452 = vmatpush.msra.mxu0 %v7451
        %v7453 = vand.u32 %v6866, 4294901760
        %7454 = vmatpush.msra.mxu0 %v7453
        %v7455 = vand.u32 %v6865, 4294901760
        %7456 = vmatpush.msra.mxu0 %v7455
        %v7457 = vand.u32 %v6864, 4294901760
        %7458 = vmatpush.msra.mxu0 %v7457
        %v7459 = vand.u32 %v6863, 4294901760
        %7460 = vmatpush.msra.mxu0 %v7459
        %v7461 = vand.u32 %v6862, 4294901760
        %7462 = vmatpush.msra.mxu0 %v7461
        %v7463 = vand.u32 %v6861, 4294901760
        %7464 = vmatpush.msra.mxu0 %v7463
        %v7465 = vand.u32 %v6860, 4294901760
        %7466 = vmatpush.msra.mxu0 %v7465
        %v7467 = vand.u32 %v930, 4294901760
        %v7468 = vsub.f32 %v930, %v7467
        %v7469 = vand.u32 %v7468, 4294901760
        %v7470 = vsub.f32 %v7468, %v7469
        %v7471 = vand.u32 %v7470, 4294901760
        %7472 = vmatmul.f32.gmra.mxu0 %v7471
        %v7473 = vpop.f32.mrf.mxu0
        %v7474 = vadd.f32 %v7413, %v7473
        %v7475 = vand.u32 %v933, 4294901760
        %v7476 = vsub.f32 %v933, %v7475
        %v7477 = vand.u32 %v7476, 4294901760
        %v7478 = vsub.f32 %v7476, %v7477
        %v7479 = vand.u32 %v7478, 4294901760
        %7480 = vmatmul.f32.gmra.mxu0 %v7479
        %v7481 = vpop.f32.mrf.mxu0
        %v7482 = vadd.f32 %v7417, %v7481
        %v7483 = vand.u32 %v936, 4294901760
        %v7484 = vsub.f32 %v936, %v7483
        %v7485 = vand.u32 %v7484, 4294901760
        %v7486 = vsub.f32 %v7484, %v7485
        %v7487 = vand.u32 %v7486, 4294901760
        %7488 = vmatmul.f32.gmra.mxu0 %v7487
        %v7489 = vpop.f32.mrf.mxu0
        %v7490 = vadd.f32 %v7421, %v7489
        %v7491 = vand.u32 %v939, 4294901760
        %v7492 = vsub.f32 %v939, %v7491
        %v7493 = vand.u32 %v7492, 4294901760
        %v7494 = vsub.f32 %v7492, %v7493
        %v7495 = vand.u32 %v7494, 4294901760
        %7496 = vmatmul.f32.gmra.mxu0 %v7495
        %v7497 = vpop.f32.mrf.mxu0
        %v7498 = vadd.f32 %v7425, %v7497
        %v7499 = vand.u32 %v942, 4294901760
        %v7500 = vsub.f32 %v942, %v7499
        %v7501 = vand.u32 %v7500, 4294901760
        %v7502 = vsub.f32 %v7500, %v7501
        %v7503 = vand.u32 %v7502, 4294901760
        %7504 = vmatmul.f32.gmra.mxu0 %v7503
        %v7505 = vpop.f32.mrf.mxu0
        %v7506 = vadd.f32 %v7429, %v7505
        %v7507 = vand.u32 %v945, 4294901760
        %v7508 = vsub.f32 %v945, %v7507
        %v7509 = vand.u32 %v7508, 4294901760
        %v7510 = vsub.f32 %v7508, %v7509
        %v7511 = vand.u32 %v7510, 4294901760
        %7512 = vmatmul.f32.gmra.mxu0 %v7511
        %v7513 = vpop.f32.mrf.mxu0
        %v7514 = vadd.f32 %v7433, %v7513
        %v7515 = vand.u32 %v948, 4294901760
        %v7516 = vsub.f32 %v948, %v7515
        %v7517 = vand.u32 %v7516, 4294901760
        %v7518 = vsub.f32 %v7516, %v7517
        %v7519 = vand.u32 %v7518, 4294901760
        %7520 = vmatmul.f32.gmra.mxu0 %v7519
        %v7521 = vpop.f32.mrf.mxu0
        %v7522 = vadd.f32 %v7437, %v7521
        %v7523 = vand.u32 %v951, 4294901760
        %v7524 = vsub.f32 %v951, %v7523
        %v7525 = vand.u32 %v7524, 4294901760
        %v7526 = vsub.f32 %v7524, %v7525
        %v7527 = vand.u32 %v7526, 4294901760
        %7528 = vmatmul.f32.gmra.mxu0 %v7527
        %v7529 = vpop.f32.mrf.mxu0
        %v7530 = vadd.f32 %v7441, %v7529
        %7531 = vdwg.mxu0
        %7532 = vmatpush.msra.mxu0 0.0
        %7533 = vmatpush.msra.mxu0 0.0
        %7534 = vmatpush.msra.mxu0 0.0
        %7535 = vmatpush.msra.mxu0 0.0
        %7536 = vmatpush.msra.mxu0 0.0
        %7537 = vmatpush.msra.mxu0 0.0
        %7538 = vmatpush.msra.mxu0 0.0
        %7539 = vmatpush.msra.mxu0 0.0
        %v7540 = vand.u32 %v6867, 4294901760
        %v7541 = vsub.f32 %v6867, %v7540
        %v7542 = vand.u32 %v7541, 4294901760
        %v7543 = vsub.f32 %v7541, %v7542
        %v7544 = vand.u32 %v7543, 4294901760
        %7545 = vmatpush.msra.mxu0 %v7544
        %v7546 = vand.u32 %v6866, 4294901760
        %v7547 = vsub.f32 %v6866, %v7546
        %v7548 = vand.u32 %v7547, 4294901760
        %v7549 = vsub.f32 %v7547, %v7548
        %v7550 = vand.u32 %v7549, 4294901760
        %7551 = vmatpush.msra.mxu0 %v7550
        %v7552 = vand.u32 %v6865, 4294901760
        %v7553 = vsub.f32 %v6865, %v7552
        %v7554 = vand.u32 %v7553, 4294901760
        %v7555 = vsub.f32 %v7553, %v7554
        %v7556 = vand.u32 %v7555, 4294901760
        %7557 = vmatpush.msra.mxu0 %v7556
        %v7558 = vand.u32 %v6864, 4294901760
        %v7559 = vsub.f32 %v6864, %v7558
        %v7560 = vand.u32 %v7559, 4294901760
        %v7561 = vsub.f32 %v7559, %v7560
        %v7562 = vand.u32 %v7561, 4294901760
        %7563 = vmatpush.msra.mxu0 %v7562
        %v7564 = vand.u32 %v6863, 4294901760
        %v7565 = vsub.f32 %v6863, %v7564
        %v7566 = vand.u32 %v7565, 4294901760
        %v7567 = vsub.f32 %v7565, %v7566
        %v7568 = vand.u32 %v7567, 4294901760
        %7569 = vmatpush.msra.mxu0 %v7568
        %v7570 = vand.u32 %v6862, 4294901760
        %v7571 = vsub.f32 %v6862, %v7570
        %v7572 = vand.u32 %v7571, 4294901760
        %v7573 = vsub.f32 %v7571, %v7572
        %v7574 = vand.u32 %v7573, 4294901760
        %7575 = vmatpush.msra.mxu0 %v7574
        %v7576 = vand.u32 %v6861, 4294901760
        %v7577 = vsub.f32 %v6861, %v7576
        %v7578 = vand.u32 %v7577, 4294901760
        %v7579 = vsub.f32 %v7577, %v7578
        %v7580 = vand.u32 %v7579, 4294901760
        %7581 = vmatpush.msra.mxu0 %v7580
        %v7582 = vand.u32 %v6860, 4294901760
        %v7583 = vsub.f32 %v6860, %v7582
        %v7584 = vand.u32 %v7583, 4294901760
        %v7585 = vsub.f32 %v7583, %v7584
        %v7586 = vand.u32 %v7585, 4294901760
        %7587 = vmatpush.msra.mxu0 %v7586
        %v7588 = vand.u32 %v930, 4294901760
        %7589 = vmatmul.f32.gmra.mxu0 %v7588
        %v7590 = vpop.f32.mrf.mxu0
        %v7591 = vadd.f32 %v7474, %v7590
        %v7592 = vand.u32 %v933, 4294901760
        %7593 = vmatmul.f32.gmra.mxu0 %v7592
        %v7594 = vpop.f32.mrf.mxu0
        %v7595 = vadd.f32 %v7482, %v7594
        %v7596 = vand.u32 %v936, 4294901760
        %7597 = vmatmul.f32.gmra.mxu0 %v7596
        %v7598 = vpop.f32.mrf.mxu0
        %v7599 = vadd.f32 %v7490, %v7598
        %v7600 = vand.u32 %v939, 4294901760
        %7601 = vmatmul.f32.gmra.mxu0 %v7600
        %v7602 = vpop.f32.mrf.mxu0
        %v7603 = vadd.f32 %v7498, %v7602
        %v7604 = vand.u32 %v942, 4294901760
        %7605 = vmatmul.f32.gmra.mxu0 %v7604
        %v7606 = vpop.f32.mrf.mxu0
        %v7607 = vadd.f32 %v7506, %v7606
        %v7608 = vand.u32 %v945, 4294901760
        %7609 = vmatmul.f32.gmra.mxu0 %v7608
        %v7610 = vpop.f32.mrf.mxu0
        %v7611 = vadd.f32 %v7514, %v7610
        %v7612 = vand.u32 %v948, 4294901760
        %7613 = vmatmul.f32.gmra.mxu0 %v7612
        %v7614 = vpop.f32.mrf.mxu0
        %v7615 = vadd.f32 %v7522, %v7614
        %v7616 = vand.u32 %v951, 4294901760
        %7617 = vmatmul.f32.gmra.mxu0 %v7616
        %v7618 = vpop.f32.mrf.mxu0
        %v7619 = vadd.f32 %v7530, %v7618
        %7620 = vdwg.mxu0
        %7621 = vmatpush.msra.mxu0 0.0
        %7622 = vmatpush.msra.mxu0 0.0
        %7623 = vmatpush.msra.mxu0 0.0
        %7624 = vmatpush.msra.mxu0 0.0
        %7625 = vmatpush.msra.mxu0 0.0
        %7626 = vmatpush.msra.mxu0 0.0
        %7627 = vmatpush.msra.mxu0 0.0
        %7628 = vmatpush.msra.mxu0 0.0
        %v7629 = vand.u32 %v6867, 4294901760
        %v7630 = vsub.f32 %v6867, %v7629
        %7631 = vmatpush.msra.mxu0 %v7630
        %v7632 = vand.u32 %v6866, 4294901760
        %v7633 = vsub.f32 %v6866, %v7632
        %7634 = vmatpush.msra.mxu0 %v7633
        %v7635 = vand.u32 %v6865, 4294901760
        %v7636 = vsub.f32 %v6865, %v7635
        %7637 = vmatpush.msra.mxu0 %v7636
        %v7638 = vand.u32 %v6864, 4294901760
        %v7639 = vsub.f32 %v6864, %v7638
        %7640 = vmatpush.msra.mxu0 %v7639
        %v7641 = vand.u32 %v6863, 4294901760
        %v7642 = vsub.f32 %v6863, %v7641
        %7643 = vmatpush.msra.mxu0 %v7642
        %v7644 = vand.u32 %v6862, 4294901760
        %v7645 = vsub.f32 %v6862, %v7644
        %7646 = vmatpush.msra.mxu0 %v7645
        %v7647 = vand.u32 %v6861, 4294901760
        %v7648 = vsub.f32 %v6861, %v7647
        %7649 = vmatpush.msra.mxu0 %v7648
        %v7650 = vand.u32 %v6860, 4294901760
        %v7651 = vsub.f32 %v6860, %v7650
        %7652 = vmatpush.msra.mxu0 %v7651
        %v7653 = vand.u32 %v930, 4294901760
        %v7654 = vsub.f32 %v930, %v7653
        %7655 = vmatmul.f32.gmra.mxu0 %v7654
        %v7656 = vpop.f32.mrf.mxu0
        %v7657 = vadd.f32 %v7591, %v7656
        %v7658 = vand.u32 %v933, 4294901760
        %v7659 = vsub.f32 %v933, %v7658
        %7660 = vmatmul.f32.gmra.mxu0 %v7659
        %v7661 = vpop.f32.mrf.mxu0
        %v7662 = vadd.f32 %v7595, %v7661
        %v7663 = vand.u32 %v936, 4294901760
        %v7664 = vsub.f32 %v936, %v7663
        %7665 = vmatmul.f32.gmra.mxu0 %v7664
        %v7666 = vpop.f32.mrf.mxu0
        %v7667 = vadd.f32 %v7599, %v7666
        %v7668 = vand.u32 %v939, 4294901760
        %v7669 = vsub.f32 %v939, %v7668
        %7670 = vmatmul.f32.gmra.mxu0 %v7669
        %v7671 = vpop.f32.mrf.mxu0
        %v7672 = vadd.f32 %v7603, %v7671
        %v7673 = vand.u32 %v942, 4294901760
        %v7674 = vsub.f32 %v942, %v7673
        %7675 = vmatmul.f32.gmra.mxu0 %v7674
        %v7676 = vpop.f32.mrf.mxu0
        %v7677 = vadd.f32 %v7607, %v7676
        %v7678 = vand.u32 %v945, 4294901760
        %v7679 = vsub.f32 %v945, %v7678
        %7680 = vmatmul.f32.gmra.mxu0 %v7679
        %v7681 = vpop.f32.mrf.mxu0
        %v7682 = vadd.f32 %v7611, %v7681
        %v7683 = vand.u32 %v948, 4294901760
        %v7684 = vsub.f32 %v948, %v7683
        %7685 = vmatmul.f32.gmra.mxu0 %v7684
        %v7686 = vpop.f32.mrf.mxu0
        %v7687 = vadd.f32 %v7615, %v7686
        %v7688 = vand.u32 %v951, 4294901760
        %v7689 = vsub.f32 %v951, %v7688
        %7690 = vmatmul.f32.gmra.mxu0 %v7689
        %v7691 = vpop.f32.mrf.mxu0
        %v7692 = vadd.f32 %v7619, %v7691
        %7693 = vdwg.mxu0
        %7694 = vmatpush.msra.mxu0 0.0
        %7695 = vmatpush.msra.mxu0 0.0
        %7696 = vmatpush.msra.mxu0 0.0
        %7697 = vmatpush.msra.mxu0 0.0
        %7698 = vmatpush.msra.mxu0 0.0
        %7699 = vmatpush.msra.mxu0 0.0
        %7700 = vmatpush.msra.mxu0 0.0
        %7701 = vmatpush.msra.mxu0 0.0
        %v7702 = vand.u32 %v6867, 4294901760
        %7703 = vmatpush.msra.mxu0 %v7702
        %v7704 = vand.u32 %v6866, 4294901760
        %7705 = vmatpush.msra.mxu0 %v7704
        %v7706 = vand.u32 %v6865, 4294901760
        %7707 = vmatpush.msra.mxu0 %v7706
        %v7708 = vand.u32 %v6864, 4294901760
        %7709 = vmatpush.msra.mxu0 %v7708
        %v7710 = vand.u32 %v6863, 4294901760
        %7711 = vmatpush.msra.mxu0 %v7710
        %v7712 = vand.u32 %v6862, 4294901760
        %7713 = vmatpush.msra.mxu0 %v7712
        %v7714 = vand.u32 %v6861, 4294901760
        %7715 = vmatpush.msra.mxu0 %v7714
        %v7716 = vand.u32 %v6860, 4294901760
        %7717 = vmatpush.msra.mxu0 %v7716
        %v7718 = vand.u32 %v930, 4294901760
        %v7719 = vsub.f32 %v930, %v7718
        %v7720 = vand.u32 %v7719, 4294901760
        %7721 = vmatmul.f32.gmra.mxu0 %v7720
        %v7722 = vpop.f32.mrf.mxu0
        %v7723 = vadd.f32 %v7657, %v7722
        %v7724 = vand.u32 %v933, 4294901760
        %v7725 = vsub.f32 %v933, %v7724
        %v7726 = vand.u32 %v7725, 4294901760
        %7727 = vmatmul.f32.gmra.mxu0 %v7726
        %v7728 = vpop.f32.mrf.mxu0
        %v7729 = vadd.f32 %v7662, %v7728
        %v7730 = vand.u32 %v936, 4294901760
        %v7731 = vsub.f32 %v936, %v7730
        %v7732 = vand.u32 %v7731, 4294901760
        %7733 = vmatmul.f32.gmra.mxu0 %v7732
        %v7734 = vpop.f32.mrf.mxu0
        %v7735 = vadd.f32 %v7667, %v7734
        %v7736 = vand.u32 %v939, 4294901760
        %v7737 = vsub.f32 %v939, %v7736
        %v7738 = vand.u32 %v7737, 4294901760
        %7739 = vmatmul.f32.gmra.mxu0 %v7738
        %v7740 = vpop.f32.mrf.mxu0
        %v7741 = vadd.f32 %v7672, %v7740
        %v7742 = vand.u32 %v942, 4294901760
        %v7743 = vsub.f32 %v942, %v7742
        %v7744 = vand.u32 %v7743, 4294901760
        %7745 = vmatmul.f32.gmra.mxu0 %v7744
        %v7746 = vpop.f32.mrf.mxu0
        %v7747 = vadd.f32 %v7677, %v7746
        %v7748 = vand.u32 %v945, 4294901760
        %v7749 = vsub.f32 %v945, %v7748
        %v7750 = vand.u32 %v7749, 4294901760
        %7751 = vmatmul.f32.gmra.mxu0 %v7750
        %v7752 = vpop.f32.mrf.mxu0
        %v7753 = vadd.f32 %v7682, %v7752
        %v7754 = vand.u32 %v948, 4294901760
        %v7755 = vsub.f32 %v948, %v7754
        %v7756 = vand.u32 %v7755, 4294901760
        %7757 = vmatmul.f32.gmra.mxu0 %v7756
        %v7758 = vpop.f32.mrf.mxu0
        %v7759 = vadd.f32 %v7687, %v7758
        %v7760 = vand.u32 %v951, 4294901760
        %v7761 = vsub.f32 %v951, %v7760
        %v7762 = vand.u32 %v7761, 4294901760
        %7763 = vmatmul.f32.gmra.mxu0 %v7762
        %v7764 = vpop.f32.mrf.mxu0
        %v7765 = vadd.f32 %v7692, %v7764
        %7766 = vdwg.mxu0
        %7767 = vmatpush.msra.mxu0 0.0
        %7768 = vmatpush.msra.mxu0 0.0
        %7769 = vmatpush.msra.mxu0 0.0
        %7770 = vmatpush.msra.mxu0 0.0
        %7771 = vmatpush.msra.mxu0 0.0
        %7772 = vmatpush.msra.mxu0 0.0
        %7773 = vmatpush.msra.mxu0 0.0
        %7774 = vmatpush.msra.mxu0 0.0
        %v7775 = vand.u32 %v6867, 4294901760
        %v7776 = vsub.f32 %v6867, %v7775
        %v7777 = vand.u32 %v7776, 4294901760
        %7778 = vmatpush.msra.mxu0 %v7777
        %v7779 = vand.u32 %v6866, 4294901760
        %v7780 = vsub.f32 %v6866, %v7779
        %v7781 = vand.u32 %v7780, 4294901760
        %7782 = vmatpush.msra.mxu0 %v7781
        %v7783 = vand.u32 %v6865, 4294901760
        %v7784 = vsub.f32 %v6865, %v7783
        %v7785 = vand.u32 %v7784, 4294901760
        %7786 = vmatpush.msra.mxu0 %v7785
        %v7787 = vand.u32 %v6864, 4294901760
        %v7788 = vsub.f32 %v6864, %v7787
        %v7789 = vand.u32 %v7788, 4294901760
        %7790 = vmatpush.msra.mxu0 %v7789
        %v7791 = vand.u32 %v6863, 4294901760
        %v7792 = vsub.f32 %v6863, %v7791
        %v7793 = vand.u32 %v7792, 4294901760
        %7794 = vmatpush.msra.mxu0 %v7793
        %v7795 = vand.u32 %v6862, 4294901760
        %v7796 = vsub.f32 %v6862, %v7795
        %v7797 = vand.u32 %v7796, 4294901760
        %7798 = vmatpush.msra.mxu0 %v7797
        %v7799 = vand.u32 %v6861, 4294901760
        %v7800 = vsub.f32 %v6861, %v7799
        %v7801 = vand.u32 %v7800, 4294901760
        %7802 = vmatpush.msra.mxu0 %v7801
        %v7803 = vand.u32 %v6860, 4294901760
        %v7804 = vsub.f32 %v6860, %v7803
        %v7805 = vand.u32 %v7804, 4294901760
        %7806 = vmatpush.msra.mxu0 %v7805
        %v7807 = vand.u32 %v930, 4294901760
        %7808 = vmatmul.f32.gmra.mxu0 %v7807
        %v7809 = vpop.f32.mrf.mxu0
        %v7810 = vadd.f32 %v7723, %v7809
        %v7811 = vand.u32 %v933, 4294901760
        %7812 = vmatmul.f32.gmra.mxu0 %v7811
        %v7813 = vpop.f32.mrf.mxu0
        %v7814 = vadd.f32 %v7729, %v7813
        %v7815 = vand.u32 %v936, 4294901760
        %7816 = vmatmul.f32.gmra.mxu0 %v7815
        %v7817 = vpop.f32.mrf.mxu0
        %v7818 = vadd.f32 %v7735, %v7817
        %v7819 = vand.u32 %v939, 4294901760
        %7820 = vmatmul.f32.gmra.mxu0 %v7819
        %v7821 = vpop.f32.mrf.mxu0
        %v7822 = vadd.f32 %v7741, %v7821
        %v7823 = vand.u32 %v942, 4294901760
        %7824 = vmatmul.f32.gmra.mxu0 %v7823
        %v7825 = vpop.f32.mrf.mxu0
        %v7826 = vadd.f32 %v7747, %v7825
        %v7827 = vand.u32 %v945, 4294901760
        %7828 = vmatmul.f32.gmra.mxu0 %v7827
        %v7829 = vpop.f32.mrf.mxu0
        %v7830 = vadd.f32 %v7753, %v7829
        %v7831 = vand.u32 %v948, 4294901760
        %7832 = vmatmul.f32.gmra.mxu0 %v7831
        %v7833 = vpop.f32.mrf.mxu0
        %v7834 = vadd.f32 %v7759, %v7833
        %v7835 = vand.u32 %v951, 4294901760
        %7836 = vmatmul.f32.gmra.mxu0 %v7835
        %v7837 = vpop.f32.mrf.mxu0
        %v7838 = vadd.f32 %v7765, %v7837
        %7839 = vdwg.mxu0
        %7840 = vmatpush.msra.mxu0 0.0
        %7841 = vmatpush.msra.mxu0 0.0
        %7842 = vmatpush.msra.mxu0 0.0
        %7843 = vmatpush.msra.mxu0 0.0
        %7844 = vmatpush.msra.mxu0 0.0
        %7845 = vmatpush.msra.mxu0 0.0
        %7846 = vmatpush.msra.mxu0 0.0
        %7847 = vmatpush.msra.mxu0 0.0
        %v7848 = vand.u32 %v6867, 4294901760
        %7849 = vmatpush.msra.mxu0 %v7848
        %v7850 = vand.u32 %v6866, 4294901760
        %7851 = vmatpush.msra.mxu0 %v7850
        %v7852 = vand.u32 %v6865, 4294901760
        %7853 = vmatpush.msra.mxu0 %v7852
        %v7854 = vand.u32 %v6864, 4294901760
        %7855 = vmatpush.msra.mxu0 %v7854
        %v7856 = vand.u32 %v6863, 4294901760
        %7857 = vmatpush.msra.mxu0 %v7856
        %v7858 = vand.u32 %v6862, 4294901760
        %7859 = vmatpush.msra.mxu0 %v7858
        %v7860 = vand.u32 %v6861, 4294901760
        %7861 = vmatpush.msra.mxu0 %v7860
        %v7862 = vand.u32 %v6860, 4294901760
        %7863 = vmatpush.msra.mxu0 %v7862
        %v7864 = vand.u32 %v930, 4294901760
        %7865 = vmatmul.f32.gmra.mxu0 %v7864
        %v7866 = vpop.f32.mrf.mxu0
        %v7867 = vadd.f32 %v7810, %v7866
        %v7868 = vand.u32 %v933, 4294901760
        %7869 = vmatmul.f32.gmra.mxu0 %v7868
        %v7870 = vpop.f32.mrf.mxu0
        %v7871 = vadd.f32 %v7814, %v7870
        %v7872 = vand.u32 %v936, 4294901760
        %7873 = vmatmul.f32.gmra.mxu0 %v7872
        %v7874 = vpop.f32.mrf.mxu0
        %v7875 = vadd.f32 %v7818, %v7874
        %v7876 = vand.u32 %v939, 4294901760
        %7877 = vmatmul.f32.gmra.mxu0 %v7876
        %v7878 = vpop.f32.mrf.mxu0
        %v7879 = vadd.f32 %v7822, %v7878
        %v7880 = vand.u32 %v942, 4294901760
        %7881 = vmatmul.f32.gmra.mxu0 %v7880
        %v7882 = vpop.f32.mrf.mxu0
        %v7883 = vadd.f32 %v7826, %v7882
        %v7884 = vand.u32 %v945, 4294901760
        %7885 = vmatmul.f32.gmra.mxu0 %v7884
        %v7886 = vpop.f32.mrf.mxu0
        %v7887 = vadd.f32 %v7830, %v7886
        %v7888 = vand.u32 %v948, 4294901760
        %7889 = vmatmul.f32.gmra.mxu0 %v7888
        %v7890 = vpop.f32.mrf.mxu0
        %v7891 = vadd.f32 %v7834, %v7890
        %v7892 = vand.u32 %v951, 4294901760
        %7893 = vmatmul.f32.gmra.mxu0 %v7892
        %v7894 = vpop.f32.mrf.mxu0
        %v7895 = vadd.f32 %v7838, %v7894
        %7896 = vdwg.mxu0
        %s7897 = scalar_lea.vmem %s241, 6 [#allocation10]
        %v7898 = vld [vmem:[%s7897] sm:$0x1]
        %v7900 = vperm.slane %v7898, 0
        %v7902 = vmul.f32 %v346, %v7900
        %v7903 = vmul.f32 %v347, %v7900
        %v7904 = vmul.f32 %v348, %v7900
        %v7905 = vmul.f32 %v349, %v7900
        %v7906 = vmul.f32 %v350, %v7900
        %v7907 = vmul.f32 %v351, %v7900
        %v7908 = vmul.f32 %v352, %v7900
        %v7909 = vmul.f32 %v353, %v7900
        %v7910 = vmul.f32 %v6860, 2.0
        %v7911 = vmul.f32 %v6861, 2.0
        %v7912 = vmul.f32 %v6862, 2.0
        %v7913 = vmul.f32 %v6863, 2.0
        %v7914 = vmul.f32 %v6864, 2.0
        %v7915 = vmul.f32 %v6865, 2.0
        %v7916 = vmul.f32 %v6866, 2.0
        %v7917 = vmul.f32 %v6867, 2.0
        %v7918 = vsub.f32 %v7910, %v5778
        %v7919 = vsub.f32 %v7911, %v5779
        %v7920 = vsub.f32 %v7912, %v5780
        %v7921 = vsub.f32 %v7913, %v5781
        %v7922 = vsub.f32 %v7914, %v5782
        %v7923 = vsub.f32 %v7915, %v5783
        %v7924 = vsub.f32 %v7916, %v5784
        %v7925 = vsub.f32 %v7917, %v5785
        %v7926 = vadd.f32 %v7867, %v7902
        %v7927 = vadd.f32 %v7871, %v7903
        %v7928 = vadd.f32 %v7875, %v7904
        %v7929 = vadd.f32 %v7879, %v7905
        %v7930 = vadd.f32 %v7883, %v7906
        %v7931 = vadd.f32 %v7887, %v7907
        %v7932 = vadd.f32 %v7891, %v7908
        %v7933 = vadd.f32 %v7895, %v7909
        %v7934 = vmul.f32 %v289, %v7926
        %v7935 = vmul.f32 %v290, %v7927
        %v7936 = vmul.f32 %v291, %v7928
        %v7937 = vmul.f32 %v292, %v7929
        %v7938 = vmul.f32 %v293, %v7930
        %v7939 = vmul.f32 %v294, %v7931
        %v7940 = vmul.f32 %v295, %v7932
        %v7941 = vmul.f32 %v296, %v7933
        %v7942 = vadd.f32 %v7918, %v7934
        %v7943 = vadd.f32 %v7919, %v7935
        %v7944 = vadd.f32 %v7920, %v7936
        %v7945 = vadd.f32 %v7921, %v7937
        %v7946 = vadd.f32 %v7922, %v7938
        %v7947 = vadd.f32 %v7923, %v7939
        %v7948 = vadd.f32 %v7924, %v7940
        %v7949 = vadd.f32 %v7925, %v7941
        %v7950 = vpack.c.bf16 %v7942, %v7942
        %v7951 = vpack.c.bf16 %v7943, %v7943
        %v7952 = vpack.c.bf16 %v7944, %v7944
        %v7953 = vpack.c.bf16 %v7945, %v7945
        %v7954 = vpack.c.bf16 %v7946, %v7946
        %v7955 = vpack.c.bf16 %v7947, %v7947
        %v7956 = vpack.c.bf16 %v7948, %v7948
        %v7957 = vpack.c.bf16 %v7949, %v7949
        %s7958 = scalar_lea.vmem %s266, 192 [#allocation12]
        %7959 = vst [vmem:[%s7958] sm:$0xf] %v7950
        %7960 = vst [vmem:[%s7958 + $0x4] sm:$0xf] %v7951
        %7961 = vst [vmem:[%s7958 + $0x8] sm:$0xf] %v7952
        %7962 = vst [vmem:[%s7958 + $0xc] sm:$0xf] %v7953
        %7963 = vst [vmem:[%s7958 + $0x10] sm:$0xf] %v7954
        %7964 = vst [vmem:[%s7958 + $0x14] sm:$0xf] %v7955
        %7965 = vst [vmem:[%s7958 + $0x18] sm:$0xf] %v7956
        %7966 = vst [vmem:[%s7958 + $0x1c] sm:$0xf] %v7957
        %v7967 = vand.u32 %v320, 4294901760
        %7968 = vmatpush.msra.mxu0 %v7967
        %v7969 = vand.u32 %v319, 4294901760
        %7970 = vmatpush.msra.mxu0 %v7969
        %v7971 = vand.u32 %v318, 4294901760
        %7972 = vmatpush.msra.mxu0 %v7971
        %v7973 = vand.u32 %v317, 4294901760
        %7974 = vmatpush.msra.mxu0 %v7973
        %v7975 = vand.u32 %v316, 4294901760
        %7976 = vmatpush.msra.mxu0 %v7975
        %v7977 = vand.u32 %v315, 4294901760
        %7978 = vmatpush.msra.mxu0 %v7977
        %v7979 = vand.u32 %v314, 4294901760
        %7980 = vmatpush.msra.mxu0 %v7979
        %v7981 = vand.u32 %v313, 4294901760
        %7982 = vmatpush.msra.mxu0 %v7981
        %v7983 = vand.u32 %v312, 4294901760
        %7984 = vmatpush.msra.mxu0 %v7983
        %v7985 = vand.u32 %v311, 4294901760
        %7986 = vmatpush.msra.mxu0 %v7985
        %v7987 = vand.u32 %v310, 4294901760
        %7988 = vmatpush.msra.mxu0 %v7987
        %v7989 = vand.u32 %v309, 4294901760
        %7990 = vmatpush.msra.mxu0 %v7989
        %v7991 = vand.u32 %v308, 4294901760
        %7992 = vmatpush.msra.mxu0 %v7991
        %v7993 = vand.u32 %v307, 4294901760
        %7994 = vmatpush.msra.mxu0 %v7993
        %v7995 = vand.u32 %v306, 4294901760
        %7996 = vmatpush.msra.mxu0 %v7995
        %v7997 = vand.u32 %v305, 4294901760
        %7998 = vmatpush.msra.mxu0 %v7997
        %v7999 = vand.u32 %v7942, 4294901760
        %v8000 = vsub.f32 %v7942, %v7999
        %v8001 = vand.u32 %v8000, 4294901760
        %v8002 = vsub.f32 %v8000, %v8001
        %v8003 = vand.u32 %v8002, 4294901760
        %8004 = vmatmul.f32.gmra.mxu0 %v8003
        %v8005 = vpop.f32.mrf.mxu0
        %v8006 = vadd.f32 0.0, %v8005
        %v8007 = vand.u32 %v7943, 4294901760
        %v8008 = vsub.f32 %v7943, %v8007
        %v8009 = vand.u32 %v8008, 4294901760
        %v8010 = vsub.f32 %v8008, %v8009
        %v8011 = vand.u32 %v8010, 4294901760
        %8012 = vmatmul.f32.gmra.mxu0 %v8011
        %v8013 = vpop.f32.mrf.mxu0
        %v8014 = vadd.f32 0.0, %v8013
        %v8015 = vand.u32 %v7944, 4294901760
        %v8016 = vsub.f32 %v7944, %v8015
        %v8017 = vand.u32 %v8016, 4294901760
        %v8018 = vsub.f32 %v8016, %v8017
        %v8019 = vand.u32 %v8018, 4294901760
        %8020 = vmatmul.f32.gmra.mxu0 %v8019
        %v8021 = vpop.f32.mrf.mxu0
        %v8022 = vadd.f32 0.0, %v8021
        %v8023 = vand.u32 %v7945, 4294901760
        %v8024 = vsub.f32 %v7945, %v8023
        %v8025 = vand.u32 %v8024, 4294901760
        %v8026 = vsub.f32 %v8024, %v8025
        %v8027 = vand.u32 %v8026, 4294901760
        %8028 = vmatmul.f32.gmra.mxu0 %v8027
        %v8029 = vpop.f32.mrf.mxu0
        %v8030 = vadd.f32 0.0, %v8029
        %v8031 = vand.u32 %v7946, 4294901760
        %v8032 = vsub.f32 %v7946, %v8031
        %v8033 = vand.u32 %v8032, 4294901760
        %v8034 = vsub.f32 %v8032, %v8033
        %v8035 = vand.u32 %v8034, 4294901760
        %8036 = vmatmul.f32.gmra.mxu0 %v8035
        %v8037 = vpop.f32.mrf.mxu0
        %v8038 = vadd.f32 0.0, %v8037
        %v8039 = vand.u32 %v7947, 4294901760
        %v8040 = vsub.f32 %v7947, %v8039
        %v8041 = vand.u32 %v8040, 4294901760
        %v8042 = vsub.f32 %v8040, %v8041
        %v8043 = vand.u32 %v8042, 4294901760
        %8044 = vmatmul.f32.gmra.mxu0 %v8043
        %v8045 = vpop.f32.mrf.mxu0
        %v8046 = vadd.f32 0.0, %v8045
        %v8047 = vand.u32 %v7948, 4294901760
        %v8048 = vsub.f32 %v7948, %v8047
        %v8049 = vand.u32 %v8048, 4294901760
        %v8050 = vsub.f32 %v8048, %v8049
        %v8051 = vand.u32 %v8050, 4294901760
        %8052 = vmatmul.f32.gmra.mxu0 %v8051
        %v8053 = vpop.f32.mrf.mxu0
        %v8054 = vadd.f32 0.0, %v8053
        %v8055 = vand.u32 %v7949, 4294901760
        %v8056 = vsub.f32 %v7949, %v8055
        %v8057 = vand.u32 %v8056, 4294901760
        %v8058 = vsub.f32 %v8056, %v8057
        %v8059 = vand.u32 %v8058, 4294901760
        %8060 = vmatmul.f32.gmra.mxu0 %v8059
        %v8061 = vpop.f32.mrf.mxu0
        %v8062 = vadd.f32 0.0, %v8061
        %8063 = vdwg.mxu0
        %v8064 = vand.u32 %v320, 4294901760
        %v8065 = vsub.f32 %v320, %v8064
        %v8066 = vand.u32 %v8065, 4294901760
        %v8067 = vsub.f32 %v8065, %v8066
        %v8068 = vand.u32 %v8067, 4294901760
        %8069 = vmatpush.msra.mxu0 %v8068
        %v8070 = vand.u32 %v319, 4294901760
        %v8071 = vsub.f32 %v319, %v8070
        %v8072 = vand.u32 %v8071, 4294901760
        %v8073 = vsub.f32 %v8071, %v8072
        %v8074 = vand.u32 %v8073, 4294901760
        %8075 = vmatpush.msra.mxu0 %v8074
        %v8076 = vand.u32 %v318, 4294901760
        %v8077 = vsub.f32 %v318, %v8076
        %v8078 = vand.u32 %v8077, 4294901760
        %v8079 = vsub.f32 %v8077, %v8078
        %v8080 = vand.u32 %v8079, 4294901760
        %8081 = vmatpush.msra.mxu0 %v8080
        %v8082 = vand.u32 %v317, 4294901760
        %v8083 = vsub.f32 %v317, %v8082
        %v8084 = vand.u32 %v8083, 4294901760
        %v8085 = vsub.f32 %v8083, %v8084
        %v8086 = vand.u32 %v8085, 4294901760
        %8087 = vmatpush.msra.mxu0 %v8086
        %v8088 = vand.u32 %v316, 4294901760
        %v8089 = vsub.f32 %v316, %v8088
        %v8090 = vand.u32 %v8089, 4294901760
        %v8091 = vsub.f32 %v8089, %v8090
        %v8092 = vand.u32 %v8091, 4294901760
        %8093 = vmatpush.msra.mxu0 %v8092
        %v8094 = vand.u32 %v315, 4294901760
        %v8095 = vsub.f32 %v315, %v8094
        %v8096 = vand.u32 %v8095, 4294901760
        %v8097 = vsub.f32 %v8095, %v8096
        %v8098 = vand.u32 %v8097, 4294901760
        %8099 = vmatpush.msra.mxu0 %v8098
        %v8100 = vand.u32 %v314, 4294901760
        %v8101 = vsub.f32 %v314, %v8100
        %v8102 = vand.u32 %v8101, 4294901760
        %v8103 = vsub.f32 %v8101, %v8102
        %v8104 = vand.u32 %v8103, 4294901760
        %8105 = vmatpush.msra.mxu0 %v8104
        %v8106 = vand.u32 %v313, 4294901760
        %v8107 = vsub.f32 %v313, %v8106
        %v8108 = vand.u32 %v8107, 4294901760
        %v8109 = vsub.f32 %v8107, %v8108
        %v8110 = vand.u32 %v8109, 4294901760
        %8111 = vmatpush.msra.mxu0 %v8110
        %v8112 = vand.u32 %v312, 4294901760
        %v8113 = vsub.f32 %v312, %v8112
        %v8114 = vand.u32 %v8113, 4294901760
        %v8115 = vsub.f32 %v8113, %v8114
        %v8116 = vand.u32 %v8115, 4294901760
        %8117 = vmatpush.msra.mxu0 %v8116
        %v8118 = vand.u32 %v311, 4294901760
        %v8119 = vsub.f32 %v311, %v8118
        %v8120 = vand.u32 %v8119, 4294901760
        %v8121 = vsub.f32 %v8119, %v8120
        %v8122 = vand.u32 %v8121, 4294901760
        %8123 = vmatpush.msra.mxu0 %v8122
        %v8124 = vand.u32 %v310, 4294901760
        %v8125 = vsub.f32 %v310, %v8124
        %v8126 = vand.u32 %v8125, 4294901760
        %v8127 = vsub.f32 %v8125, %v8126
        %v8128 = vand.u32 %v8127, 4294901760
        %8129 = vmatpush.msra.mxu0 %v8128
        %v8130 = vand.u32 %v309, 4294901760
        %v8131 = vsub.f32 %v309, %v8130
        %v8132 = vand.u32 %v8131, 4294901760
        %v8133 = vsub.f32 %v8131, %v8132
        %v8134 = vand.u32 %v8133, 4294901760
        %8135 = vmatpush.msra.mxu0 %v8134
        %v8136 = vand.u32 %v308, 4294901760
        %v8137 = vsub.f32 %v308, %v8136
        %v8138 = vand.u32 %v8137, 4294901760
        %v8139 = vsub.f32 %v8137, %v8138
        %v8140 = vand.u32 %v8139, 4294901760
        %8141 = vmatpush.msra.mxu0 %v8140
        %v8142 = vand.u32 %v307, 4294901760
        %v8143 = vsub.f32 %v307, %v8142
        %v8144 = vand.u32 %v8143, 4294901760
        %v8145 = vsub.f32 %v8143, %v8144
        %v8146 = vand.u32 %v8145, 4294901760
        %8147 = vmatpush.msra.mxu0 %v8146
        %v8148 = vand.u32 %v306, 4294901760
        %v8149 = vsub.f32 %v306, %v8148
        %v8150 = vand.u32 %v8149, 4294901760
        %v8151 = vsub.f32 %v8149, %v8150
        %v8152 = vand.u32 %v8151, 4294901760
        %8153 = vmatpush.msra.mxu0 %v8152
        %v8154 = vand.u32 %v305, 4294901760
        %v8155 = vsub.f32 %v305, %v8154
        %v8156 = vand.u32 %v8155, 4294901760
        %v8157 = vsub.f32 %v8155, %v8156
        %v8158 = vand.u32 %v8157, 4294901760
        %8159 = vmatpush.msra.mxu0 %v8158
        %v8160 = vand.u32 %v7942, 4294901760
        %8161 = vmatmul.f32.gmra.mxu0 %v8160
        %v8162 = vpop.f32.mrf.mxu0
        %v8163 = vadd.f32 %v8006, %v8162
        %v8164 = vand.u32 %v7943, 4294901760
        %8165 = vmatmul.f32.gmra.mxu0 %v8164
        %v8166 = vpop.f32.mrf.mxu0
        %v8167 = vadd.f32 %v8014, %v8166
        %v8168 = vand.u32 %v7944, 4294901760
        %8169 = vmatmul.f32.gmra.mxu0 %v8168
        %v8170 = vpop.f32.mrf.mxu0
        %v8171 = vadd.f32 %v8022, %v8170
        %v8172 = vand.u32 %v7945, 4294901760
        %8173 = vmatmul.f32.gmra.mxu0 %v8172
        %v8174 = vpop.f32.mrf.mxu0
        %v8175 = vadd.f32 %v8030, %v8174
        %v8176 = vand.u32 %v7946, 4294901760
        %8177 = vmatmul.f32.gmra.mxu0 %v8176
        %v8178 = vpop.f32.mrf.mxu0
        %v8179 = vadd.f32 %v8038, %v8178
        %v8180 = vand.u32 %v7947, 4294901760
        %8181 = vmatmul.f32.gmra.mxu0 %v8180
        %v8182 = vpop.f32.mrf.mxu0
        %v8183 = vadd.f32 %v8046, %v8182
        %v8184 = vand.u32 %v7948, 4294901760
        %8185 = vmatmul.f32.gmra.mxu0 %v8184
        %v8186 = vpop.f32.mrf.mxu0
        %v8187 = vadd.f32 %v8054, %v8186
        %v8188 = vand.u32 %v7949, 4294901760
        %8189 = vmatmul.f32.gmra.mxu0 %v8188
        %v8190 = vpop.f32.mrf.mxu0
        %v8191 = vadd.f32 %v8062, %v8190
        %8192 = vdwg.mxu0
        %v8193 = vand.u32 %v320, 4294901760
        %v8194 = vsub.f32 %v320, %v8193
        %8195 = vmatpush.msra.mxu0 %v8194
        %v8196 = vand.u32 %v319, 4294901760
        %v8197 = vsub.f32 %v319, %v8196
        %8198 = vmatpush.msra.mxu0 %v8197
        %v8199 = vand.u32 %v318, 4294901760
        %v8200 = vsub.f32 %v318, %v8199
        %8201 = vmatpush.msra.mxu0 %v8200
        %v8202 = vand.u32 %v317, 4294901760
        %v8203 = vsub.f32 %v317, %v8202
        %8204 = vmatpush.msra.mxu0 %v8203
        %v8205 = vand.u32 %v316, 4294901760
        %v8206 = vsub.f32 %v316, %v8205
        %8207 = vmatpush.msra.mxu0 %v8206
        %v8208 = vand.u32 %v315, 4294901760
        %v8209 = vsub.f32 %v315, %v8208
        %8210 = vmatpush.msra.mxu0 %v8209
        %v8211 = vand.u32 %v314, 4294901760
        %v8212 = vsub.f32 %v314, %v8211
        %8213 = vmatpush.msra.mxu0 %v8212
        %v8214 = vand.u32 %v313, 4294901760
        %v8215 = vsub.f32 %v313, %v8214
        %8216 = vmatpush.msra.mxu0 %v8215
        %v8217 = vand.u32 %v312, 4294901760
        %v8218 = vsub.f32 %v312, %v8217
        %8219 = vmatpush.msra.mxu0 %v8218
        %v8220 = vand.u32 %v311, 4294901760
        %v8221 = vsub.f32 %v311, %v8220
        %8222 = vmatpush.msra.mxu0 %v8221
        %v8223 = vand.u32 %v310, 4294901760
        %v8224 = vsub.f32 %v310, %v8223
        %8225 = vmatpush.msra.mxu0 %v8224
        %v8226 = vand.u32 %v309, 4294901760
        %v8227 = vsub.f32 %v309, %v8226
        %8228 = vmatpush.msra.mxu0 %v8227
        %v8229 = vand.u32 %v308, 4294901760
        %v8230 = vsub.f32 %v308, %v8229
        %8231 = vmatpush.msra.mxu0 %v8230
        %v8232 = vand.u32 %v307, 4294901760
        %v8233 = vsub.f32 %v307, %v8232
        %8234 = vmatpush.msra.mxu0 %v8233
        %v8235 = vand.u32 %v306, 4294901760
        %v8236 = vsub.f32 %v306, %v8235
        %8237 = vmatpush.msra.mxu0 %v8236
        %v8238 = vand.u32 %v305, 4294901760
        %v8239 = vsub.f32 %v305, %v8238
        %8240 = vmatpush.msra.mxu0 %v8239
        %v8241 = vand.u32 %v7942, 4294901760
        %v8242 = vsub.f32 %v7942, %v8241
        %8243 = vmatmul.f32.gmra.mxu0 %v8242
        %v8244 = vpop.f32.mrf.mxu0
        %v8245 = vadd.f32 %v8163, %v8244
        %v8246 = vand.u32 %v7943, 4294901760
        %v8247 = vsub.f32 %v7943, %v8246
        %8248 = vmatmul.f32.gmra.mxu0 %v8247
        %v8249 = vpop.f32.mrf.mxu0
        %v8250 = vadd.f32 %v8167, %v8249
        %v8251 = vand.u32 %v7944, 4294901760
        %v8252 = vsub.f32 %v7944, %v8251
        %8253 = vmatmul.f32.gmra.mxu0 %v8252
        %v8254 = vpop.f32.mrf.mxu0
        %v8255 = vadd.f32 %v8171, %v8254
        %v8256 = vand.u32 %v7945, 4294901760
        %v8257 = vsub.f32 %v7945, %v8256
        %8258 = vmatmul.f32.gmra.mxu0 %v8257
        %v8259 = vpop.f32.mrf.mxu0
        %v8260 = vadd.f32 %v8175, %v8259
        %v8261 = vand.u32 %v7946, 4294901760
        %v8262 = vsub.f32 %v7946, %v8261
        %8263 = vmatmul.f32.gmra.mxu0 %v8262
        %v8264 = vpop.f32.mrf.mxu0
        %v8265 = vadd.f32 %v8179, %v8264
        %v8266 = vand.u32 %v7947, 4294901760
        %v8267 = vsub.f32 %v7947, %v8266
        %8268 = vmatmul.f32.gmra.mxu0 %v8267
        %v8269 = vpop.f32.mrf.mxu0
        %v8270 = vadd.f32 %v8183, %v8269
        %v8271 = vand.u32 %v7948, 4294901760
        %v8272 = vsub.f32 %v7948, %v8271
        %8273 = vmatmul.f32.gmra.mxu0 %v8272
        %v8274 = vpop.f32.mrf.mxu0
        %v8275 = vadd.f32 %v8187, %v8274
        %v8276 = vand.u32 %v7949, 4294901760
        %v8277 = vsub.f32 %v7949, %v8276
        %8278 = vmatmul.f32.gmra.mxu0 %v8277
        %v8279 = vpop.f32.mrf.mxu0
        %v8280 = vadd.f32 %v8191, %v8279
        %8281 = vdwg.mxu0
        %v8282 = vand.u32 %v320, 4294901760
        %8283 = vmatpush.msra.mxu0 %v8282
        %v8284 = vand.u32 %v319, 4294901760
        %8285 = vmatpush.msra.mxu0 %v8284
        %v8286 = vand.u32 %v318, 4294901760
        %8287 = vmatpush.msra.mxu0 %v8286
        %v8288 = vand.u32 %v317, 4294901760
        %8289 = vmatpush.msra.mxu0 %v8288
        %v8290 = vand.u32 %v316, 4294901760
        %8291 = vmatpush.msra.mxu0 %v8290
        %v8292 = vand.u32 %v315, 4294901760
        %8293 = vmatpush.msra.mxu0 %v8292
        %v8294 = vand.u32 %v314, 4294901760
        %8295 = vmatpush.msra.mxu0 %v8294
        %v8296 = vand.u32 %v313, 4294901760
        %8297 = vmatpush.msra.mxu0 %v8296
        %v8298 = vand.u32 %v312, 4294901760
        %8299 = vmatpush.msra.mxu0 %v8298
        %v8300 = vand.u32 %v311, 4294901760
        %8301 = vmatpush.msra.mxu0 %v8300
        %v8302 = vand.u32 %v310, 4294901760
        %8303 = vmatpush.msra.mxu0 %v8302
        %v8304 = vand.u32 %v309, 4294901760
        %8305 = vmatpush.msra.mxu0 %v8304
        %v8306 = vand.u32 %v308, 4294901760
        %8307 = vmatpush.msra.mxu0 %v8306
        %v8308 = vand.u32 %v307, 4294901760
        %8309 = vmatpush.msra.mxu0 %v8308
        %v8310 = vand.u32 %v306, 4294901760
        %8311 = vmatpush.msra.mxu0 %v8310
        %v8312 = vand.u32 %v305, 4294901760
        %8313 = vmatpush.msra.mxu0 %v8312
        %v8314 = vand.u32 %v7942, 4294901760
        %v8315 = vsub.f32 %v7942, %v8314
        %v8316 = vand.u32 %v8315, 4294901760
        %8317 = vmatmul.f32.gmra.mxu0 %v8316
        %v8318 = vpop.f32.mrf.mxu0
        %v8319 = vadd.f32 %v8245, %v8318
        %v8320 = vand.u32 %v7943, 4294901760
        %v8321 = vsub.f32 %v7943, %v8320
        %v8322 = vand.u32 %v8321, 4294901760
        %8323 = vmatmul.f32.gmra.mxu0 %v8322
        %v8324 = vpop.f32.mrf.mxu0
        %v8325 = vadd.f32 %v8250, %v8324
        %v8326 = vand.u32 %v7944, 4294901760
        %v8327 = vsub.f32 %v7944, %v8326
        %v8328 = vand.u32 %v8327, 4294901760
        %8329 = vmatmul.f32.gmra.mxu0 %v8328
        %v8330 = vpop.f32.mrf.mxu0
        %v8331 = vadd.f32 %v8255, %v8330
        %v8332 = vand.u32 %v7945, 4294901760
        %v8333 = vsub.f32 %v7945, %v8332
        %v8334 = vand.u32 %v8333, 4294901760
        %8335 = vmatmul.f32.gmra.mxu0 %v8334
        %v8336 = vpop.f32.mrf.mxu0
        %v8337 = vadd.f32 %v8260, %v8336
        %v8338 = vand.u32 %v7946, 4294901760
        %v8339 = vsub.f32 %v7946, %v8338
        %v8340 = vand.u32 %v8339, 4294901760
        %8341 = vmatmul.f32.gmra.mxu0 %v8340
        %v8342 = vpop.f32.mrf.mxu0
        %v8343 = vadd.f32 %v8265, %v8342
        %v8344 = vand.u32 %v7947, 4294901760
        %v8345 = vsub.f32 %v7947, %v8344
        %v8346 = vand.u32 %v8345, 4294901760
        %8347 = vmatmul.f32.gmra.mxu0 %v8346
        %v8348 = vpop.f32.mrf.mxu0
        %v8349 = vadd.f32 %v8270, %v8348
        %v8350 = vand.u32 %v7948, 4294901760
        %v8351 = vsub.f32 %v7948, %v8350
        %v8352 = vand.u32 %v8351, 4294901760
        %8353 = vmatmul.f32.gmra.mxu0 %v8352
        %v8354 = vpop.f32.mrf.mxu0
        %v8355 = vadd.f32 %v8275, %v8354
        %v8356 = vand.u32 %v7949, 4294901760
        %v8357 = vsub.f32 %v7949, %v8356
        %v8358 = vand.u32 %v8357, 4294901760
        %8359 = vmatmul.f32.gmra.mxu0 %v8358
        %v8360 = vpop.f32.mrf.mxu0
        %v8361 = vadd.f32 %v8280, %v8360
        %8362 = vdwg.mxu0
        %v8363 = vand.u32 %v320, 4294901760
        %v8364 = vsub.f32 %v320, %v8363
        %v8365 = vand.u32 %v8364, 4294901760
        %8366 = vmatpush.msra.mxu0 %v8365
        %v8367 = vand.u32 %v319, 4294901760
        %v8368 = vsub.f32 %v319, %v8367
        %v8369 = vand.u32 %v8368, 4294901760
        %8370 = vmatpush.msra.mxu0 %v8369
        %v8371 = vand.u32 %v318, 4294901760
        %v8372 = vsub.f32 %v318, %v8371
        %v8373 = vand.u32 %v8372, 4294901760
        %8374 = vmatpush.msra.mxu0 %v8373
        %v8375 = vand.u32 %v317, 4294901760
        %v8376 = vsub.f32 %v317, %v8375
        %v8377 = vand.u32 %v8376, 4294901760
        %8378 = vmatpush.msra.mxu0 %v8377
        %v8379 = vand.u32 %v316, 4294901760
        %v8380 = vsub.f32 %v316, %v8379
        %v8381 = vand.u32 %v8380, 4294901760
        %8382 = vmatpush.msra.mxu0 %v8381
        %v8383 = vand.u32 %v315, 4294901760
        %v8384 = vsub.f32 %v315, %v8383
        %v8385 = vand.u32 %v8384, 4294901760
        %8386 = vmatpush.msra.mxu0 %v8385
        %v8387 = vand.u32 %v314, 4294901760
        %v8388 = vsub.f32 %v314, %v8387
        %v8389 = vand.u32 %v8388, 4294901760
        %8390 = vmatpush.msra.mxu0 %v8389
        %v8391 = vand.u32 %v313, 4294901760
        %v8392 = vsub.f32 %v313, %v8391
        %v8393 = vand.u32 %v8392, 4294901760
        %8394 = vmatpush.msra.mxu0 %v8393
        %v8395 = vand.u32 %v312, 4294901760
        %v8396 = vsub.f32 %v312, %v8395
        %v8397 = vand.u32 %v8396, 4294901760
        %8398 = vmatpush.msra.mxu0 %v8397
        %v8399 = vand.u32 %v311, 4294901760
        %v8400 = vsub.f32 %v311, %v8399
        %v8401 = vand.u32 %v8400, 4294901760
        %8402 = vmatpush.msra.mxu0 %v8401
        %v8403 = vand.u32 %v310, 4294901760
        %v8404 = vsub.f32 %v310, %v8403
        %v8405 = vand.u32 %v8404, 4294901760
        %8406 = vmatpush.msra.mxu0 %v8405
        %v8407 = vand.u32 %v309, 4294901760
        %v8408 = vsub.f32 %v309, %v8407
        %v8409 = vand.u32 %v8408, 4294901760
        %8410 = vmatpush.msra.mxu0 %v8409
        %v8411 = vand.u32 %v308, 4294901760
        %v8412 = vsub.f32 %v308, %v8411
        %v8413 = vand.u32 %v8412, 4294901760
        %8414 = vmatpush.msra.mxu0 %v8413
        %v8415 = vand.u32 %v307, 4294901760
        %v8416 = vsub.f32 %v307, %v8415
        %v8417 = vand.u32 %v8416, 4294901760
        %8418 = vmatpush.msra.mxu0 %v8417
        %v8419 = vand.u32 %v306, 4294901760
        %v8420 = vsub.f32 %v306, %v8419
        %v8421 = vand.u32 %v8420, 4294901760
        %8422 = vmatpush.msra.mxu0 %v8421
        %v8423 = vand.u32 %v305, 4294901760
        %v8424 = vsub.f32 %v305, %v8423
        %v8425 = vand.u32 %v8424, 4294901760
        %8426 = vmatpush.msra.mxu0 %v8425
        %v8427 = vand.u32 %v7942, 4294901760
        %8428 = vmatmul.f32.gmra.mxu0 %v8427
        %v8429 = vpop.f32.mrf.mxu0
        %v8430 = vadd.f32 %v8319, %v8429
        %v8431 = vand.u32 %v7943, 4294901760
        %8432 = vmatmul.f32.gmra.mxu0 %v8431
        %v8433 = vpop.f32.mrf.mxu0
        %v8434 = vadd.f32 %v8325, %v8433
        %v8435 = vand.u32 %v7944, 4294901760
        %8436 = vmatmul.f32.gmra.mxu0 %v8435
        %v8437 = vpop.f32.mrf.mxu0
        %v8438 = vadd.f32 %v8331, %v8437
        %v8439 = vand.u32 %v7945, 4294901760
        %8440 = vmatmul.f32.gmra.mxu0 %v8439
        %v8441 = vpop.f32.mrf.mxu0
        %v8442 = vadd.f32 %v8337, %v8441
        %v8443 = vand.u32 %v7946, 4294901760
        %8444 = vmatmul.f32.gmra.mxu0 %v8443
        %v8445 = vpop.f32.mrf.mxu0
        %v8446 = vadd.f32 %v8343, %v8445
        %v8447 = vand.u32 %v7947, 4294901760
        %8448 = vmatmul.f32.gmra.mxu0 %v8447
        %v8449 = vpop.f32.mrf.mxu0
        %v8450 = vadd.f32 %v8349, %v8449
        %v8451 = vand.u32 %v7948, 4294901760
        %8452 = vmatmul.f32.gmra.mxu0 %v8451
        %v8453 = vpop.f32.mrf.mxu0
        %v8454 = vadd.f32 %v8355, %v8453
        %v8455 = vand.u32 %v7949, 4294901760
        %8456 = vmatmul.f32.gmra.mxu0 %v8455
        %v8457 = vpop.f32.mrf.mxu0
        %v8458 = vadd.f32 %v8361, %v8457
        %8459 = vdwg.mxu0
        %v8460 = vand.u32 %v320, 4294901760
        %8461 = vmatpush.msra.mxu0 %v8460
        %v8462 = vand.u32 %v319, 4294901760
        %8463 = vmatpush.msra.mxu0 %v8462
        %v8464 = vand.u32 %v318, 4294901760
        %8465 = vmatpush.msra.mxu0 %v8464
        %v8466 = vand.u32 %v317, 4294901760
        %8467 = vmatpush.msra.mxu0 %v8466
        %v8468 = vand.u32 %v316, 4294901760
        %8469 = vmatpush.msra.mxu0 %v8468
        %v8470 = vand.u32 %v315, 4294901760
        %8471 = vmatpush.msra.mxu0 %v8470
        %v8472 = vand.u32 %v314, 4294901760
        %8473 = vmatpush.msra.mxu0 %v8472
        %v8474 = vand.u32 %v313, 4294901760
        %8475 = vmatpush.msra.mxu0 %v8474
        %v8476 = vand.u32 %v312, 4294901760
        %8477 = vmatpush.msra.mxu0 %v8476
        %v8478 = vand.u32 %v311, 4294901760
        %8479 = vmatpush.msra.mxu0 %v8478
        %v8480 = vand.u32 %v310, 4294901760
        %8481 = vmatpush.msra.mxu0 %v8480
        %v8482 = vand.u32 %v309, 4294901760
        %8483 = vmatpush.msra.mxu0 %v8482
        %v8484 = vand.u32 %v308, 4294901760
        %8485 = vmatpush.msra.mxu0 %v8484
        %v8486 = vand.u32 %v307, 4294901760
        %8487 = vmatpush.msra.mxu0 %v8486
        %v8488 = vand.u32 %v306, 4294901760
        %8489 = vmatpush.msra.mxu0 %v8488
        %v8490 = vand.u32 %v305, 4294901760
        %8491 = vmatpush.msra.mxu0 %v8490
        %v8492 = vand.u32 %v7942, 4294901760
        %8493 = vmatmul.f32.gmra.mxu0 %v8492
        %v8494 = vpop.f32.mrf.mxu0
        %v8495 = vadd.f32 %v8430, %v8494
        %v8496 = vand.u32 %v7943, 4294901760
        %8497 = vmatmul.f32.gmra.mxu0 %v8496
        %v8498 = vpop.f32.mrf.mxu0
        %v8499 = vadd.f32 %v8434, %v8498
        %v8500 = vand.u32 %v7944, 4294901760
        %8501 = vmatmul.f32.gmra.mxu0 %v8500
        %v8502 = vpop.f32.mrf.mxu0
        %v8503 = vadd.f32 %v8438, %v8502
        %v8504 = vand.u32 %v7945, 4294901760
        %8505 = vmatmul.f32.gmra.mxu0 %v8504
        %v8506 = vpop.f32.mrf.mxu0
        %v8507 = vadd.f32 %v8442, %v8506
        %v8508 = vand.u32 %v7946, 4294901760
        %8509 = vmatmul.f32.gmra.mxu0 %v8508
        %v8510 = vpop.f32.mrf.mxu0
        %v8511 = vadd.f32 %v8446, %v8510
        %v8512 = vand.u32 %v7947, 4294901760
        %8513 = vmatmul.f32.gmra.mxu0 %v8512
        %v8514 = vpop.f32.mrf.mxu0
        %v8515 = vadd.f32 %v8450, %v8514
        %v8516 = vand.u32 %v7948, 4294901760
        %8517 = vmatmul.f32.gmra.mxu0 %v8516
        %v8518 = vpop.f32.mrf.mxu0
        %v8519 = vadd.f32 %v8454, %v8518
        %v8520 = vand.u32 %v7949, 4294901760
        %8521 = vmatmul.f32.gmra.mxu0 %v8520
        %v8522 = vpop.f32.mrf.mxu0
        %v8523 = vadd.f32 %v8458, %v8522
        %8524 = vdwg.mxu0
        %8525 = vmatpush.msra.mxu0 0.0
        %8526 = vmatpush.msra.mxu0 0.0
        %8527 = vmatpush.msra.mxu0 0.0
        %8528 = vmatpush.msra.mxu0 0.0
        %8529 = vmatpush.msra.mxu0 0.0
        %8530 = vmatpush.msra.mxu0 0.0
        %8531 = vmatpush.msra.mxu0 0.0
        %8532 = vmatpush.msra.mxu0 0.0
        %v8533 = vand.u32 %v7949, 4294901760
        %8534 = vmatpush.msra.mxu0 %v8533
        %v8535 = vand.u32 %v7948, 4294901760
        %8536 = vmatpush.msra.mxu0 %v8535
        %v8537 = vand.u32 %v7947, 4294901760
        %8538 = vmatpush.msra.mxu0 %v8537
        %v8539 = vand.u32 %v7946, 4294901760
        %8540 = vmatpush.msra.mxu0 %v8539
        %v8541 = vand.u32 %v7945, 4294901760
        %8542 = vmatpush.msra.mxu0 %v8541
        %v8543 = vand.u32 %v7944, 4294901760
        %8544 = vmatpush.msra.mxu0 %v8543
        %v8545 = vand.u32 %v7943, 4294901760
        %8546 = vmatpush.msra.mxu0 %v8545
        %v8547 = vand.u32 %v7942, 4294901760
        %8548 = vmatpush.msra.mxu0 %v8547
        %v8549 = vand.u32 %v930, 4294901760
        %v8550 = vsub.f32 %v930, %v8549
        %v8551 = vand.u32 %v8550, 4294901760
        %v8552 = vsub.f32 %v8550, %v8551
        %v8553 = vand.u32 %v8552, 4294901760
        %8554 = vmatmul.f32.gmra.mxu0 %v8553
        %v8555 = vpop.f32.mrf.mxu0
        %v8556 = vadd.f32 %v8495, %v8555
        %v8557 = vand.u32 %v933, 4294901760
        %v8558 = vsub.f32 %v933, %v8557
        %v8559 = vand.u32 %v8558, 4294901760
        %v8560 = vsub.f32 %v8558, %v8559
        %v8561 = vand.u32 %v8560, 4294901760
        %8562 = vmatmul.f32.gmra.mxu0 %v8561
        %v8563 = vpop.f32.mrf.mxu0
        %v8564 = vadd.f32 %v8499, %v8563
        %v8565 = vand.u32 %v936, 4294901760
        %v8566 = vsub.f32 %v936, %v8565
        %v8567 = vand.u32 %v8566, 4294901760
        %v8568 = vsub.f32 %v8566, %v8567
        %v8569 = vand.u32 %v8568, 4294901760
        %8570 = vmatmul.f32.gmra.mxu0 %v8569
        %v8571 = vpop.f32.mrf.mxu0
        %v8572 = vadd.f32 %v8503, %v8571
        %v8573 = vand.u32 %v939, 4294901760
        %v8574 = vsub.f32 %v939, %v8573
        %v8575 = vand.u32 %v8574, 4294901760
        %v8576 = vsub.f32 %v8574, %v8575
        %v8577 = vand.u32 %v8576, 4294901760
        %8578 = vmatmul.f32.gmra.mxu0 %v8577
        %v8579 = vpop.f32.mrf.mxu0
        %v8580 = vadd.f32 %v8507, %v8579
        %v8581 = vand.u32 %v942, 4294901760
        %v8582 = vsub.f32 %v942, %v8581
        %v8583 = vand.u32 %v8582, 4294901760
        %v8584 = vsub.f32 %v8582, %v8583
        %v8585 = vand.u32 %v8584, 4294901760
        %8586 = vmatmul.f32.gmra.mxu0 %v8585
        %v8587 = vpop.f32.mrf.mxu0
        %v8588 = vadd.f32 %v8511, %v8587
        %v8589 = vand.u32 %v945, 4294901760
        %v8590 = vsub.f32 %v945, %v8589
        %v8591 = vand.u32 %v8590, 4294901760
        %v8592 = vsub.f32 %v8590, %v8591
        %v8593 = vand.u32 %v8592, 4294901760
        %8594 = vmatmul.f32.gmra.mxu0 %v8593
        %v8595 = vpop.f32.mrf.mxu0
        %v8596 = vadd.f32 %v8515, %v8595
        %v8597 = vand.u32 %v948, 4294901760
        %v8598 = vsub.f32 %v948, %v8597
        %v8599 = vand.u32 %v8598, 4294901760
        %v8600 = vsub.f32 %v8598, %v8599
        %v8601 = vand.u32 %v8600, 4294901760
        %8602 = vmatmul.f32.gmra.mxu0 %v8601
        %v8603 = vpop.f32.mrf.mxu0
        %v8604 = vadd.f32 %v8519, %v8603
        %v8605 = vand.u32 %v951, 4294901760
        %v8606 = vsub.f32 %v951, %v8605
        %v8607 = vand.u32 %v8606, 4294901760
        %v8608 = vsub.f32 %v8606, %v8607
        %v8609 = vand.u32 %v8608, 4294901760
        %8610 = vmatmul.f32.gmra.mxu0 %v8609
        %v8611 = vpop.f32.mrf.mxu0
        %v8612 = vadd.f32 %v8523, %v8611
        %8613 = vdwg.mxu0
        %8614 = vmatpush.msra.mxu0 0.0
        %8615 = vmatpush.msra.mxu0 0.0
        %8616 = vmatpush.msra.mxu0 0.0
        %8617 = vmatpush.msra.mxu0 0.0
        %8618 = vmatpush.msra.mxu0 0.0
        %8619 = vmatpush.msra.mxu0 0.0
        %8620 = vmatpush.msra.mxu0 0.0
        %8621 = vmatpush.msra.mxu0 0.0
        %v8622 = vand.u32 %v7949, 4294901760
        %v8623 = vsub.f32 %v7949, %v8622
        %v8624 = vand.u32 %v8623, 4294901760
        %v8625 = vsub.f32 %v8623, %v8624
        %v8626 = vand.u32 %v8625, 4294901760
        %8627 = vmatpush.msra.mxu0 %v8626
        %v8628 = vand.u32 %v7948, 4294901760
        %v8629 = vsub.f32 %v7948, %v8628
        %v8630 = vand.u32 %v8629, 4294901760
        %v8631 = vsub.f32 %v8629, %v8630
        %v8632 = vand.u32 %v8631, 4294901760
        %8633 = vmatpush.msra.mxu0 %v8632
        %v8634 = vand.u32 %v7947, 4294901760
        %v8635 = vsub.f32 %v7947, %v8634
        %v8636 = vand.u32 %v8635, 4294901760
        %v8637 = vsub.f32 %v8635, %v8636
        %v8638 = vand.u32 %v8637, 4294901760
        %8639 = vmatpush.msra.mxu0 %v8638
        %v8640 = vand.u32 %v7946, 4294901760
        %v8641 = vsub.f32 %v7946, %v8640
        %v8642 = vand.u32 %v8641, 4294901760
        %v8643 = vsub.f32 %v8641, %v8642
        %v8644 = vand.u32 %v8643, 4294901760
        %8645 = vmatpush.msra.mxu0 %v8644
        %v8646 = vand.u32 %v7945, 4294901760
        %v8647 = vsub.f32 %v7945, %v8646
        %v8648 = vand.u32 %v8647, 4294901760
        %v8649 = vsub.f32 %v8647, %v8648
        %v8650 = vand.u32 %v8649, 4294901760
        %8651 = vmatpush.msra.mxu0 %v8650
        %v8652 = vand.u32 %v7944, 4294901760
        %v8653 = vsub.f32 %v7944, %v8652
        %v8654 = vand.u32 %v8653, 4294901760
        %v8655 = vsub.f32 %v8653, %v8654
        %v8656 = vand.u32 %v8655, 4294901760
        %8657 = vmatpush.msra.mxu0 %v8656
        %v8658 = vand.u32 %v7943, 4294901760
        %v8659 = vsub.f32 %v7943, %v8658
        %v8660 = vand.u32 %v8659, 4294901760
        %v8661 = vsub.f32 %v8659, %v8660
        %v8662 = vand.u32 %v8661, 4294901760
        %8663 = vmatpush.msra.mxu0 %v8662
        %v8664 = vand.u32 %v7942, 4294901760
        %v8665 = vsub.f32 %v7942, %v8664
        %v8666 = vand.u32 %v8665, 4294901760
        %v8667 = vsub.f32 %v8665, %v8666
        %v8668 = vand.u32 %v8667, 4294901760
        %8669 = vmatpush.msra.mxu0 %v8668
        %v8670 = vand.u32 %v930, 4294901760
        %8671 = vmatmul.f32.gmra.mxu0 %v8670
        %v8672 = vpop.f32.mrf.mxu0
        %v8673 = vadd.f32 %v8556, %v8672
        %v8674 = vand.u32 %v933, 4294901760
        %8675 = vmatmul.f32.gmra.mxu0 %v8674
        %v8676 = vpop.f32.mrf.mxu0
        %v8677 = vadd.f32 %v8564, %v8676
        %v8678 = vand.u32 %v936, 4294901760
        %8679 = vmatmul.f32.gmra.mxu0 %v8678
        %v8680 = vpop.f32.mrf.mxu0
        %v8681 = vadd.f32 %v8572, %v8680
        %v8682 = vand.u32 %v939, 4294901760
        %8683 = vmatmul.f32.gmra.mxu0 %v8682
        %v8684 = vpop.f32.mrf.mxu0
        %v8685 = vadd.f32 %v8580, %v8684
        %v8686 = vand.u32 %v942, 4294901760
        %8687 = vmatmul.f32.gmra.mxu0 %v8686
        %v8688 = vpop.f32.mrf.mxu0
        %v8689 = vadd.f32 %v8588, %v8688
        %v8690 = vand.u32 %v945, 4294901760
        %8691 = vmatmul.f32.gmra.mxu0 %v8690
        %v8692 = vpop.f32.mrf.mxu0
        %v8693 = vadd.f32 %v8596, %v8692
        %v8694 = vand.u32 %v948, 4294901760
        %8695 = vmatmul.f32.gmra.mxu0 %v8694
        %v8696 = vpop.f32.mrf.mxu0
        %v8697 = vadd.f32 %v8604, %v8696
        %v8698 = vand.u32 %v951, 4294901760
        %8699 = vmatmul.f32.gmra.mxu0 %v8698
        %v8700 = vpop.f32.mrf.mxu0
        %v8701 = vadd.f32 %v8612, %v8700
        %8702 = vdwg.mxu0
        %8703 = vmatpush.msra.mxu0 0.0
        %8704 = vmatpush.msra.mxu0 0.0
        %8705 = vmatpush.msra.mxu0 0.0
        %8706 = vmatpush.msra.mxu0 0.0
        %8707 = vmatpush.msra.mxu0 0.0
        %8708 = vmatpush.msra.mxu0 0.0
        %8709 = vmatpush.msra.mxu0 0.0
        %8710 = vmatpush.msra.mxu0 0.0
        %v8711 = vand.u32 %v7949, 4294901760
        %v8712 = vsub.f32 %v7949, %v8711
        %8713 = vmatpush.msra.mxu0 %v8712
        %v8714 = vand.u32 %v7948, 4294901760
        %v8715 = vsub.f32 %v7948, %v8714
        %8716 = vmatpush.msra.mxu0 %v8715
        %v8717 = vand.u32 %v7947, 4294901760
        %v8718 = vsub.f32 %v7947, %v8717
        %8719 = vmatpush.msra.mxu0 %v8718
        %v8720 = vand.u32 %v7946, 4294901760
        %v8721 = vsub.f32 %v7946, %v8720
        %8722 = vmatpush.msra.mxu0 %v8721
        %v8723 = vand.u32 %v7945, 4294901760
        %v8724 = vsub.f32 %v7945, %v8723
        %8725 = vmatpush.msra.mxu0 %v8724
        %v8726 = vand.u32 %v7944, 4294901760
        %v8727 = vsub.f32 %v7944, %v8726
        %8728 = vmatpush.msra.mxu0 %v8727
        %v8729 = vand.u32 %v7943, 4294901760
        %v8730 = vsub.f32 %v7943, %v8729
        %8731 = vmatpush.msra.mxu0 %v8730
        %v8732 = vand.u32 %v7942, 4294901760
        %v8733 = vsub.f32 %v7942, %v8732
        %8734 = vmatpush.msra.mxu0 %v8733
        %v8735 = vand.u32 %v930, 4294901760
        %v8736 = vsub.f32 %v930, %v8735
        %8737 = vmatmul.f32.gmra.mxu0 %v8736
        %v8738 = vpop.f32.mrf.mxu0
        %v8739 = vadd.f32 %v8673, %v8738
        %v8740 = vand.u32 %v933, 4294901760
        %v8741 = vsub.f32 %v933, %v8740
        %8742 = vmatmul.f32.gmra.mxu0 %v8741
        %v8743 = vpop.f32.mrf.mxu0
        %v8744 = vadd.f32 %v8677, %v8743
        %v8745 = vand.u32 %v936, 4294901760
        %v8746 = vsub.f32 %v936, %v8745
        %8747 = vmatmul.f32.gmra.mxu0 %v8746
        %v8748 = vpop.f32.mrf.mxu0
        %v8749 = vadd.f32 %v8681, %v8748
        %v8750 = vand.u32 %v939, 4294901760
        %v8751 = vsub.f32 %v939, %v8750
        %8752 = vmatmul.f32.gmra.mxu0 %v8751
        %v8753 = vpop.f32.mrf.mxu0
        %v8754 = vadd.f32 %v8685, %v8753
        %v8755 = vand.u32 %v942, 4294901760
        %v8756 = vsub.f32 %v942, %v8755
        %8757 = vmatmul.f32.gmra.mxu0 %v8756
        %v8758 = vpop.f32.mrf.mxu0
        %v8759 = vadd.f32 %v8689, %v8758
        %v8760 = vand.u32 %v945, 4294901760
        %v8761 = vsub.f32 %v945, %v8760
        %8762 = vmatmul.f32.gmra.mxu0 %v8761
        %v8763 = vpop.f32.mrf.mxu0
        %v8764 = vadd.f32 %v8693, %v8763
        %v8765 = vand.u32 %v948, 4294901760
        %v8766 = vsub.f32 %v948, %v8765
        %8767 = vmatmul.f32.gmra.mxu0 %v8766
        %v8768 = vpop.f32.mrf.mxu0
        %v8769 = vadd.f32 %v8697, %v8768
        %v8770 = vand.u32 %v951, 4294901760
        %v8771 = vsub.f32 %v951, %v8770
        %8772 = vmatmul.f32.gmra.mxu0 %v8771
        %v8773 = vpop.f32.mrf.mxu0
        %v8774 = vadd.f32 %v8701, %v8773
        %8775 = vdwg.mxu0
        %8776 = vmatpush.msra.mxu0 0.0
        %8777 = vmatpush.msra.mxu0 0.0
        %8778 = vmatpush.msra.mxu0 0.0
        %8779 = vmatpush.msra.mxu0 0.0
        %8780 = vmatpush.msra.mxu0 0.0
        %8781 = vmatpush.msra.mxu0 0.0
        %8782 = vmatpush.msra.mxu0 0.0
        %8783 = vmatpush.msra.mxu0 0.0
        %v8784 = vand.u32 %v7949, 4294901760
        %8785 = vmatpush.msra.mxu0 %v8784
        %v8786 = vand.u32 %v7948, 4294901760
        %8787 = vmatpush.msra.mxu0 %v8786
        %v8788 = vand.u32 %v7947, 4294901760
        %8789 = vmatpush.msra.mxu0 %v8788
        %v8790 = vand.u32 %v7946, 4294901760
        %8791 = vmatpush.msra.mxu0 %v8790
        %v8792 = vand.u32 %v7945, 4294901760
        %8793 = vmatpush.msra.mxu0 %v8792
        %v8794 = vand.u32 %v7944, 4294901760
        %8795 = vmatpush.msra.mxu0 %v8794
        %v8796 = vand.u32 %v7943, 4294901760
        %8797 = vmatpush.msra.mxu0 %v8796
        %v8798 = vand.u32 %v7942, 4294901760
        %8799 = vmatpush.msra.mxu0 %v8798
        %v8800 = vand.u32 %v930, 4294901760
        %v8801 = vsub.f32 %v930, %v8800
        %v8802 = vand.u32 %v8801, 4294901760
        %8803 = vmatmul.f32.gmra.mxu0 %v8802
        %v8804 = vpop.f32.mrf.mxu0
        %v8805 = vadd.f32 %v8739, %v8804
        %v8806 = vand.u32 %v933, 4294901760
        %v8807 = vsub.f32 %v933, %v8806
        %v8808 = vand.u32 %v8807, 4294901760
        %8809 = vmatmul.f32.gmra.mxu0 %v8808
        %v8810 = vpop.f32.mrf.mxu0
        %v8811 = vadd.f32 %v8744, %v8810
        %v8812 = vand.u32 %v936, 4294901760
        %v8813 = vsub.f32 %v936, %v8812
        %v8814 = vand.u32 %v8813, 4294901760
        %8815 = vmatmul.f32.gmra.mxu0 %v8814
        %v8816 = vpop.f32.mrf.mxu0
        %v8817 = vadd.f32 %v8749, %v8816
        %v8818 = vand.u32 %v939, 4294901760
        %v8819 = vsub.f32 %v939, %v8818
        %v8820 = vand.u32 %v8819, 4294901760
        %8821 = vmatmul.f32.gmra.mxu0 %v8820
        %v8822 = vpop.f32.mrf.mxu0
        %v8823 = vadd.f32 %v8754, %v8822
        %v8824 = vand.u32 %v942, 4294901760
        %v8825 = vsub.f32 %v942, %v8824
        %v8826 = vand.u32 %v8825, 4294901760
        %8827 = vmatmul.f32.gmra.mxu0 %v8826
        %v8828 = vpop.f32.mrf.mxu0
        %v8829 = vadd.f32 %v8759, %v8828
        %v8830 = vand.u32 %v945, 4294901760
        %v8831 = vsub.f32 %v945, %v8830
        %v8832 = vand.u32 %v8831, 4294901760
        %8833 = vmatmul.f32.gmra.mxu0 %v8832
        %v8834 = vpop.f32.mrf.mxu0
        %v8835 = vadd.f32 %v8764, %v8834
        %v8836 = vand.u32 %v948, 4294901760
        %v8837 = vsub.f32 %v948, %v8836
        %v8838 = vand.u32 %v8837, 4294901760
        %8839 = vmatmul.f32.gmra.mxu0 %v8838
        %v8840 = vpop.f32.mrf.mxu0
        %v8841 = vadd.f32 %v8769, %v8840
        %v8842 = vand.u32 %v951, 4294901760
        %v8843 = vsub.f32 %v951, %v8842
        %v8844 = vand.u32 %v8843, 4294901760
        %8845 = vmatmul.f32.gmra.mxu0 %v8844
        %v8846 = vpop.f32.mrf.mxu0
        %v8847 = vadd.f32 %v8774, %v8846
        %8848 = vdwg.mxu0
        %8849 = vmatpush.msra.mxu0 0.0
        %8850 = vmatpush.msra.mxu0 0.0
        %8851 = vmatpush.msra.mxu0 0.0
        %8852 = vmatpush.msra.mxu0 0.0
        %8853 = vmatpush.msra.mxu0 0.0
        %8854 = vmatpush.msra.mxu0 0.0
        %8855 = vmatpush.msra.mxu0 0.0
        %8856 = vmatpush.msra.mxu0 0.0
        %v8857 = vand.u32 %v7949, 4294901760
        %v8858 = vsub.f32 %v7949, %v8857
        %v8859 = vand.u32 %v8858, 4294901760
        %8860 = vmatpush.msra.mxu0 %v8859
        %v8861 = vand.u32 %v7948, 4294901760
        %v8862 = vsub.f32 %v7948, %v8861
        %v8863 = vand.u32 %v8862, 4294901760
        %8864 = vmatpush.msra.mxu0 %v8863
        %v8865 = vand.u32 %v7947, 4294901760
        %v8866 = vsub.f32 %v7947, %v8865
        %v8867 = vand.u32 %v8866, 4294901760
        %8868 = vmatpush.msra.mxu0 %v8867
        %v8869 = vand.u32 %v7946, 4294901760
        %v8870 = vsub.f32 %v7946, %v8869
        %v8871 = vand.u32 %v8870, 4294901760
        %8872 = vmatpush.msra.mxu0 %v8871
        %v8873 = vand.u32 %v7945, 4294901760
        %v8874 = vsub.f32 %v7945, %v8873
        %v8875 = vand.u32 %v8874, 4294901760
        %8876 = vmatpush.msra.mxu0 %v8875
        %v8877 = vand.u32 %v7944, 4294901760
        %v8878 = vsub.f32 %v7944, %v8877
        %v8879 = vand.u32 %v8878, 4294901760
        %8880 = vmatpush.msra.mxu0 %v8879
        %v8881 = vand.u32 %v7943, 4294901760
        %v8882 = vsub.f32 %v7943, %v8881
        %v8883 = vand.u32 %v8882, 4294901760
        %8884 = vmatpush.msra.mxu0 %v8883
        %v8885 = vand.u32 %v7942, 4294901760
        %v8886 = vsub.f32 %v7942, %v8885
        %v8887 = vand.u32 %v8886, 4294901760
        %8888 = vmatpush.msra.mxu0 %v8887
        %v8889 = vand.u32 %v930, 4294901760
        %8890 = vmatmul.f32.gmra.mxu0 %v8889
        %v8891 = vpop.f32.mrf.mxu0
        %v8892 = vadd.f32 %v8805, %v8891
        %v8893 = vand.u32 %v933, 4294901760
        %8894 = vmatmul.f32.gmra.mxu0 %v8893
        %v8895 = vpop.f32.mrf.mxu0
        %v8896 = vadd.f32 %v8811, %v8895
        %v8897 = vand.u32 %v936, 4294901760
        %8898 = vmatmul.f32.gmra.mxu0 %v8897
        %v8899 = vpop.f32.mrf.mxu0
        %v8900 = vadd.f32 %v8817, %v8899
        %v8901 = vand.u32 %v939, 4294901760
        %8902 = vmatmul.f32.gmra.mxu0 %v8901
        %v8903 = vpop.f32.mrf.mxu0
        %v8904 = vadd.f32 %v8823, %v8903
        %v8905 = vand.u32 %v942, 4294901760
        %8906 = vmatmul.f32.gmra.mxu0 %v8905
        %v8907 = vpop.f32.mrf.mxu0
        %v8908 = vadd.f32 %v8829, %v8907
        %v8909 = vand.u32 %v945, 4294901760
        %8910 = vmatmul.f32.gmra.mxu0 %v8909
        %v8911 = vpop.f32.mrf.mxu0
        %v8912 = vadd.f32 %v8835, %v8911
        %v8913 = vand.u32 %v948, 4294901760
        %8914 = vmatmul.f32.gmra.mxu0 %v8913
        %v8915 = vpop.f32.mrf.mxu0
        %v8916 = vadd.f32 %v8841, %v8915
        %v8917 = vand.u32 %v951, 4294901760
        %8918 = vmatmul.f32.gmra.mxu0 %v8917
        %v8919 = vpop.f32.mrf.mxu0
        %v8920 = vadd.f32 %v8847, %v8919
        %8921 = vdwg.mxu0
        %8922 = vmatpush.msra.mxu0 0.0
        %8923 = vmatpush.msra.mxu0 0.0
        %8924 = vmatpush.msra.mxu0 0.0
        %8925 = vmatpush.msra.mxu0 0.0
        %8926 = vmatpush.msra.mxu0 0.0
        %8927 = vmatpush.msra.mxu0 0.0
        %8928 = vmatpush.msra.mxu0 0.0
        %8929 = vmatpush.msra.mxu0 0.0
        %v8930 = vand.u32 %v7949, 4294901760
        %8931 = vmatpush.msra.mxu0 %v8930
        %v8932 = vand.u32 %v7948, 4294901760
        %8933 = vmatpush.msra.mxu0 %v8932
        %v8934 = vand.u32 %v7947, 4294901760
        %8935 = vmatpush.msra.mxu0 %v8934
        %v8936 = vand.u32 %v7946, 4294901760
        %8937 = vmatpush.msra.mxu0 %v8936
        %v8938 = vand.u32 %v7945, 4294901760
        %8939 = vmatpush.msra.mxu0 %v8938
        %v8940 = vand.u32 %v7944, 4294901760
        %8941 = vmatpush.msra.mxu0 %v8940
        %v8942 = vand.u32 %v7943, 4294901760
        %8943 = vmatpush.msra.mxu0 %v8942
        %v8944 = vand.u32 %v7942, 4294901760
        %8945 = vmatpush.msra.mxu0 %v8944
        %v8946 = vand.u32 %v930, 4294901760
        %8947 = vmatmul.f32.gmra.mxu0 %v8946
        %v8948 = vpop.f32.mrf.mxu0
        %v8949 = vadd.f32 %v8892, %v8948
        %v8950 = vand.u32 %v933, 4294901760
        %8951 = vmatmul.f32.gmra.mxu0 %v8950
        %v8952 = vpop.f32.mrf.mxu0
        %v8953 = vadd.f32 %v8896, %v8952
        %v8954 = vand.u32 %v936, 4294901760
        %8955 = vmatmul.f32.gmra.mxu0 %v8954
        %v8956 = vpop.f32.mrf.mxu0
        %v8957 = vadd.f32 %v8900, %v8956
        %v8958 = vand.u32 %v939, 4294901760
        %8959 = vmatmul.f32.gmra.mxu0 %v8958
        %v8960 = vpop.f32.mrf.mxu0
        %v8961 = vadd.f32 %v8904, %v8960
        %v8962 = vand.u32 %v942, 4294901760
        %8963 = vmatmul.f32.gmra.mxu0 %v8962
        %v8964 = vpop.f32.mrf.mxu0
        %v8965 = vadd.f32 %v8908, %v8964
        %v8966 = vand.u32 %v945, 4294901760
        %8967 = vmatmul.f32.gmra.mxu0 %v8966
        %v8968 = vpop.f32.mrf.mxu0
        %v8969 = vadd.f32 %v8912, %v8968
        %v8970 = vand.u32 %v948, 4294901760
        %8971 = vmatmul.f32.gmra.mxu0 %v8970
        %v8972 = vpop.f32.mrf.mxu0
        %v8973 = vadd.f32 %v8916, %v8972
        %v8974 = vand.u32 %v951, 4294901760
        %8975 = vmatmul.f32.gmra.mxu0 %v8974
        %v8976 = vpop.f32.mrf.mxu0
        %v8977 = vadd.f32 %v8920, %v8976
        %8978 = vdwg.mxu0
        %s8979 = scalar_lea.vmem %s241, 7 [#allocation10]
        %v8980 = vld [vmem:[%s8979] sm:$0x1]
        %v8982 = vperm.slane %v8980, 0
        %v8984 = vmul.f32 %v346, %v8982
        %v8985 = vmul.f32 %v347, %v8982
        %v8986 = vmul.f32 %v348, %v8982
        %v8987 = vmul.f32 %v349, %v8982
        %v8988 = vmul.f32 %v350, %v8982
        %v8989 = vmul.f32 %v351, %v8982
        %v8990 = vmul.f32 %v352, %v8982
        %v8991 = vmul.f32 %v353, %v8982
        %v8992 = vmul.f32 %v7942, 2.0
        %v8993 = vmul.f32 %v7943, 2.0
        %v8994 = vmul.f32 %v7944, 2.0
        %v8995 = vmul.f32 %v7945, 2.0
        %v8996 = vmul.f32 %v7946, 2.0
        %v8997 = vmul.f32 %v7947, 2.0
        %v8998 = vmul.f32 %v7948, 2.0
        %v8999 = vmul.f32 %v7949, 2.0
        %v9000 = vsub.f32 %v8992, %v6860
        %v9001 = vsub.f32 %v8993, %v6861
        %v9002 = vsub.f32 %v8994, %v6862
        %v9003 = vsub.f32 %v8995, %v6863
        %v9004 = vsub.f32 %v8996, %v6864
        %v9005 = vsub.f32 %v8997, %v6865
        %v9006 = vsub.f32 %v8998, %v6866
        %v9007 = vsub.f32 %v8999, %v6867
        %v9008 = vadd.f32 %v8949, %v8984
        %v9009 = vadd.f32 %v8953, %v8985
        %v9010 = vadd.f32 %v8957, %v8986
        %v9011 = vadd.f32 %v8961, %v8987
        %v9012 = vadd.f32 %v8965, %v8988
        %v9013 = vadd.f32 %v8969, %v8989
        %v9014 = vadd.f32 %v8973, %v8990
        %v9015 = vadd.f32 %v8977, %v8991
        %v9016 = vmul.f32 %v289, %v9008
        %v9017 = vmul.f32 %v290, %v9009
        %v9018 = vmul.f32 %v291, %v9010
        %v9019 = vmul.f32 %v292, %v9011
        %v9020 = vmul.f32 %v293, %v9012
        %v9021 = vmul.f32 %v294, %v9013
        %v9022 = vmul.f32 %v295, %v9014
        %v9023 = vmul.f32 %v296, %v9015
        %v9024 = vadd.f32 %v9000, %v9016
        %v9025 = vadd.f32 %v9001, %v9017
        %v9026 = vadd.f32 %v9002, %v9018
        %v9027 = vadd.f32 %v9003, %v9019
        %v9028 = vadd.f32 %v9004, %v9020
        %v9029 = vadd.f32 %v9005, %v9021
        %v9030 = vadd.f32 %v9006, %v9022
        %v9031 = vadd.f32 %v9007, %v9023
        %v9032 = vpack.c.bf16 %v9024, %v9024
        %v9033 = vpack.c.bf16 %v9025, %v9025
        %v9034 = vpack.c.bf16 %v9026, %v9026
        %v9035 = vpack.c.bf16 %v9027, %v9027
        %v9036 = vpack.c.bf16 %v9028, %v9028
        %v9037 = vpack.c.bf16 %v9029, %v9029
        %v9038 = vpack.c.bf16 %v9030, %v9030
        %v9039 = vpack.c.bf16 %v9031, %v9031
        %s9040 = scalar_lea.vmem %s266, 224 [#allocation12]
        %9041 = vst [vmem:[%s9040] sm:$0xf] %v9032
        %9042 = vst [vmem:[%s9040 + $0x4] sm:$0xf] %v9033
        %9043 = vst [vmem:[%s9040 + $0x8] sm:$0xf] %v9034
        %9044 = vst [vmem:[%s9040 + $0xc] sm:$0xf] %v9035
        %9045 = vst [vmem:[%s9040 + $0x10] sm:$0xf] %v9036
        %9046 = vst [vmem:[%s9040 + $0x14] sm:$0xf] %v9037
        %9047 = vst [vmem:[%s9040 + $0x18] sm:$0xf] %v9038
        %9048 = vst [vmem:[%s9040 + $0x1c] sm:$0xf] %v9039
        %9049 = vst [vmem:[#allocation2] sm:$0xff] %v7942
        %9050 = vst [vmem:[#allocation2 + $0x8] sm:$0xff] %v7943
        %9051 = vst [vmem:[#allocation2 + $0x10] sm:$0xff] %v7944
        %9052 = vst [vmem:[#allocation2 + $0x18] sm:$0xff] %v7945
        %9053 = vst [vmem:[#allocation2 + $0x20] sm:$0xff] %v7946
        %9054 = vst [vmem:[#allocation2 + $0x28] sm:$0xff] %v7947
        %9055 = vst [vmem:[#allocation2 + $0x30] sm:$0xff] %v7948
        %9056 = vst [vmem:[#allocation2 + $0x38] sm:$0xff] %v7949
        %9057 = vst [vmem:[#allocation3] sm:$0xff] %v9024
        %9058 = vst [vmem:[#allocation3 + $0x8] sm:$0xff] %v9025
        %9059 = vst [vmem:[#allocation3 + $0x10] sm:$0xff] %v9026
        %9060 = vst [vmem:[#allocation3 + $0x18] sm:$0xff] %v9027
        %9061 = vst [vmem:[#allocation3 + $0x20] sm:$0xff] %v9028
        %9062 = vst [vmem:[#allocation3 + $0x28] sm:$0xff] %v9029
        %9063 = vst [vmem:[#allocation3 + $0x30] sm:$0xff] %v9030
        %9064 = vst [vmem:[#allocation3 + $0x38] sm:$0xff] %v9031
        %s9065 = sand.u32 %s120, 1
        %s9066 = scalar_lea.sflag [#allocation6], %s9065
        %s9067 = sand.u32 %s120, 1
        %s9068 = smul.addr %s9067, 256
        %s9069 = scalar_lea.vmem [#allocation12], %s9068
        // Predicated region
        $region57: #{tpu_custom_call.1} parent=35 // pred_check
          %p9070 = pneg %p130
        $region58: #{tpu_custom_call.1} parent=35 // pred_check_branch
          %9072 = sbr.rel (%p9070) target = $region60
        $region59: #{tpu_custom_call.1} parent=35 // pred_region
          %s9073 = smul.u32 8, %s23
          %9075 = vsyncadd %s9066, 0
          %s9076 = smul.addr %s9073, 8
          %s9077 = smul.addr %s9076, 4
          %s9078 = scalar_lea.hbm %s4, %s9077
          %s9079 = sshll.u32 %s9069, 4
          %s9080 = int_to_ptr.vmem [resolvable:$true] %s9079
          %s9081 = sshll.u32 %s9078, 4
          %s9082 = int_to_ptr.hbm [resolvable:$true] %s9081
          %9087 = dma.vmem_to_hbm [thread:$0]  %s9080, 4096, %s9082, %s9066, 64, 64, 4
        $region60: #{tpu_custom_call.1} parent=35 // pred_fallthru
          _
      $region36: #{tpu_custom_call.1} parent=5 // pred_fallthru
        _
      %p9088 = scmp.le.s32.totalorder 2, %s18
      // Predicated region
      $region61: #{tpu_custom_call.1} parent=5 // pred_check
        %p9089 = pneg %p9088
      $region62: #{tpu_custom_call.1} parent=5 // pred_check_branch
        %9091 = sbr.rel (%p9089) target = $region64
      $region63: #{tpu_custom_call.1} parent=5 // pred_region
        %s9092 = ssub.s32 %s18, 2
        // Predicated region
        $region65: #{tpu_custom_call.1} parent=63 // pred_check
          %p9093 = pneg %p136
        $region66: #{tpu_custom_call.1} parent=63 // pred_check_branch
          %9095 = sbr.rel (%p9093) target = $region68
        $region67: #{tpu_custom_call.1} parent=63 // pred_region
          %s9096 = sand.u32 %s121, 1
          %s9097 = scalar_lea.sflag [#allocation6], %s9096
          %s9098 = sand.u32 %s121, 1
          %s9099 = smul.addr %s9098, 256
          %s9100 = scalar_lea.vmem [#allocation12], %s9099
          %9102 = dma.done %s9097, 4096
        $region68: #{tpu_custom_call.1} parent=63 // pred_fallthru
          _
      $region64: #{tpu_custom_call.1} parent=5 // pred_fallthru
        _
    $region6: #{tpu_custom_call.1} parent=1 // loop_footer
      %s22 = sadd.s32 1, %s18
    $region7: #{tpu_custom_call.1} parent=1 // loop_footer_branch
      %17 = sbr.rel target = $region3
    $region8: #{tpu_custom_call.1} parent=1 // loop_exit
      _
    %9103 = vsyncpa [#allocation5], 1
    %s9104 = scalar_lea.sflag [#allocation5], 1
    %9105 = vsyncpa %s9104, 1
    %9106 = vsyncpa [#allocation8], 1
    %9107 = vsyncpa [#allocation11], 1
    %s9108 = scalar_lea.sflag [#allocation11], 1
    %9109 = vsyncpa %s9108, 1
    %9110 = vsyncpa [#allocation6], 1
    %s9111 = scalar_lea.sflag [#allocation6], 1
    %9112 = vsyncpa %s9111, 1

</llo_original>
